<compile_context>
chip_gen: v7x
topology: tpu7x:2x2x1
jax: 0.10.0
libtpu: 0.0.40
codegen_flags: <defaults>
</compile_context>

<pallas_src>
import functools
import numpy as np

import jax
import jax.numpy as jnp
from jax import lax
from jax.experimental import pallas as pl
from jax.experimental.pallas import tpu as pltpu

# ----------------------------- model config (small) -----------------------------
IMG = 16          # img_size
PATCH = 4         # patch_size
IN_CH = 3         # in_chans
EMBED = 32        # embed_dim
DEPTHS = (2, 2)
HEADS = (2, 4)
WINDOW = 2        # window_size
MLP_RATIO = 4.0
NUM_CLASSES = 10
BATCH = 2

# bf16 matmul operands = native MXU dtype on v5e/v6e/v7x (review #6/#7/#8).
# Accumulation is always f32 (preferred_element_type); LN / softmax stats and
# additive biases are always f32.  Set to jnp.float32 for closest-to-torch math.
MATMUL_DTYPE = jnp.bfloat16


# ----------------------------- in-kernel helpers ---------------------------------
def _mm(a, b):
    return jnp.dot(a.astype(MATMUL_DTYPE), b.astype(MATMUL_DTYPE),
                   preferred_element_type=jnp.float32)


def _mm_t(a, b):
    # a @ b^T without materializing the transpose
    return lax.dot_general(a.astype(MATMUL_DTYPE), b.astype(MATMUL_DTYPE),
                           (((1,), (1,)), ((), ())),
                           preferred_element_type=jnp.float32)


def _ln(x, g, b, eps=1e-5):                       # torch LayerNorm default eps
    mean = jnp.mean(x, axis=-1, keepdims=True)
    xc = x - mean
    var = jnp.mean(xc * xc, axis=-1, keepdims=True)
    return xc * lax.rsqrt(var + eps) * g + b


def _gelu_erf(x):
    # TODO(synk): lax.erf has no Mosaic lowering rule; exact erf-GELU is
    # approximated in-kernel (Abramowitz & Stegun 7.1.26, |err| < 1.5e-7 ~ f32 eps).
    a1, a2, a3 = 0.254829592, -0.284496736, 1.421413741
    a4, a5, pco = -1.453152027, 1.061405429, 0.3275911
    z = x * 0.7071067811865476
    az = jnp.abs(z)
    t = 1.0 / (1.0 + pco * az)
    poly = ((((a5 * t + a4) * t + a3) * t + a2) * t + a1) * t
    erf_abs = 1.0 - poly * jnp.exp(-az * az)
    erf = jnp.where(z >= 0, erf_abs, -erf_abs)
    return 0.5 * x * (1.0 + erf)


# ----------------------------- the single fused kernel ----------------------------
def _swin_forward_kernel(*refs, cfg):
    """Whole SwinTransformer forward on VMEM-resident operands (no grid)."""
    it = iter(refs[:-1])
    out_ref = refs[-1]

    def take():                       # load the next full operand
        return next(it)[...]

    # ---- PatchEmbed2D: im2col'd pixels @ W + b, then LayerNorm (ape=False) ----
    xp = take()                                             # (M0, C_in*P*P) f32
    pw, pb, pg, pbb = take(), take(), take(), take()
    tok = _ln(_mm(xp, pw) + pb, pg, pbb)                    # (M0, EMBED) f32, raster order

    # ---- Swin stages ----
    for stage in cfg["stages"]:
        for blk in stage["blocks"]:
            heads, hd, dim, scale = blk["heads"], blk["hd"], blk["dim"], blk["scale"]
            n1g, n1b = take(), take()
            qkv_w, qkv_b = take(), take()
            bias_ref = next(it)                             # (heads, M, M) f32, per-head indexed
            proj_w, proj_b = take(), take()
            n2g, n2b = take(), take()
            fc1_w, fc1_b = take(), take()
            fc2_w, fc2_b = take(), take()

            # ----- (S)W-MSA: fused QKV, dense folded-bias attention, fused proj -----
            xn = _ln(tok, n1g, n1b)
            qkv = _mm(xn, qkv_w) + qkv_b                    # ONE (M, dim) @ (dim, 3*dim)
            ctx = []
            for h in range(heads):                          # static unroll (2 or 4)
                q = qkv[:, h * hd:(h + 1) * hd]
                k = qkv[:, dim + h * hd:dim + (h + 1) * hd]
                v = qkv[:, 2 * dim + h * hd:2 * dim + (h + 1) * hd]
                # rel-pos bias + shift mask + cross-window mask, all folded (f32)
                s = _mm_t(q, k) * scale + bias_ref[h]
                s = s - jnp.max(s, axis=-1, keepdims=True)  # stable softmax (matches torch)
                p = jnp.exp(s)                              # off-window terms -> exactly 0
                p = p / jnp.sum(p, axis=-1, keepdims=True)
                ctx.append(_mm(p, v))
            ctx = jnp.concatenate(ctx, axis=-1)             # (M, dim)
            tok = tok + (_mm(ctx, proj_w) + proj_b)         # ONE (M, dim) @ (dim, dim) + residual

            # ----- MLP (+ residual), erf-GELU fused in-kernel -----
            xn2 = _ln(tok, n2g, n2b)
            h1 = _gelu_erf(_mm(xn2, fc1_w) + fc1_b)
            tok = tok + (_mm(h1, fc2_w) + fc2_b)

        mg_cfg = stage["merge"]
        if mg_cfg is not None:
            # PatchMerging: in-kernel 2x2 neighbourhood gather (static row slices
            # + lane concat), LayerNorm(4*dim), Linear(4*dim -> 2*dim, bias=False).
            B_, H_, W_ = mg_cfg["B"], mg_cfg["H"], mg_cfg["W"]
            mg, mb, mred = take(), take(), take()
            rows = []
            for b in range(B_):
                for i in range(H_ // 2):
                    for j in range(W_ // 2):
                        r00 = b * H_ * W_ + (2 * i) * W_ + 2 * j    # (2i,   2j)
                        r10 = r00 + W_                              # (2i+1, 2j)
                        r01 = r00 + 1                               # (2i,   2j+1)
                        r11 = r00 + W_ + 1                          # (2i+1, 2j+1)
                        rows.append(jnp.concatenate(
                            [tok[r00:r00 + 1], tok[r10:r10 + 1],
                             tok[r01:r01 + 1], tok[r11:r11 + 1]], axis=-1))
            cat = jnp.concatenate(rows, axis=0)             # (B*H/2*W/2, 4*dim), raster order
            tok = _mm(_ln(cat, mg, mb), mred)

    # ---- final LayerNorm + AdaptiveAvgPool1d over tokens + classifier head ----
    ng, nb = take(), take()
    pool = take()                                           # (B, M_final) with 1/L entries
    hw, hb = take(), take()
    xn = _ln(tok, ng, nb)
    pooled = _mm(pool, xn)                                  # token mean per image
    out_ref[...] = _mm(pooled, hw) + hb

    # trace-time sanity check that the flat operand order matched exactly
    _sentinel = object()
    assert next(it, _sentinel) is _sentinel, "flat param order mismatch"


# ----------------------------- static helpers (numpy, build-time) -----------------
def _relative_position_index(ws):
    coords = np.stack(np.meshgrid(np.arange(ws), np.arange(ws), indexing="ij"))
    coords_flat = coords.reshape(2, -1)
    rel = coords_flat[:, :, None] - coords_flat[:, None, :]          # (2, N, N)
    rel = rel.transpose(1, 2, 0).astype(np.int64)
    rel[:, :, 0] += ws - 1
    rel[:, :, 1] += ws - 1
    rel[:, :, 0] *= 2 * ws - 1
    return rel.sum(-1)                                               # (N, N)


def _shift_mask_np(H, W, ws, shift):
    """torch-style per-window attention mask: (nW, N, N) with 0 / -100."""
    nW = (H // ws) * (W // ws)
    N = ws * ws
    if shift == 0:
        return np.zeros((nW, N, N), np.float32)
    img = np.zeros((H, W), np.float32)
    cnt = 0
    for hs in (slice(0, -ws), slice(-ws, -shift), slice(-shift, None)):
        for wsl in (slice(0, -ws), slice(-ws, -shift), slice(-shift, None)):
            img[hs, wsl] = cnt
            cnt += 1
    nWh, nWw = H // ws, W // ws
    mw = img.reshape(nWh, ws, nWw, ws).transpose(0, 2, 1, 3).reshape(nW, N)
    am = mw[:, None, :] - mw[:, :, None]
    return np.where(am != 0, -100.0, 0.0).astype(np.float32)


def _raster_to_window_index(B, H, W, ws, shift):
    """wp[raster_idx] = window-partition-order index after roll(-shift)."""
    L = H * W
    nWw = W // ws
    idx = np.zeros(B * L, np.int64)
    for b in range(B):
        for i in range(H):
            for j in range(W):
                i_s = (i - shift) % H
                j_s = (j - shift) % W
                wh, ww = i_s // ws, j_s // ws
                n = (i_s % ws) * ws + (j_s % ws)
                idx[b * L + i * W + j] = b * L + (wh * nWw + ww) * ws * ws + n
    return idx


def _dense_attn_bias_raster(rel_table, ws, heads, B, H, W, shift):
    """(heads, B*L, B*L) additive bias in *raster token order*: relative-position
    bias + torch -100 shift mask inside each (shifted) window, -1e9 outside —
    so one dense softmax reproduces per-window attention exactly."""
    N = ws * ws
    nW = (H // ws) * (W // ws)
    L = H * W
    M = B * L
    idx = _relative_position_index(ws).reshape(-1)
    rel = np.asarray(rel_table)[idx].reshape(N, N, heads).transpose(2, 0, 1)  # (heads, N, N)
    sm = _shift_mask_np(H, W, ws, shift)                                      # (nW, N, N)
    bias_w = np.full((heads, M, M), -1e9, np.float32)                          # window order
    for g in range(B * nW):
        w = g % nW
        bias_w[:, g * N:(g + 1) * N, g * N:(g + 1) * N] = rel + sm[w][None]
    wp = _raster_to_window_index(B, H, W, ws, shift)                           # -> raster order
    return jnp.asarray(bias_w[:, wp[:, None], wp[None, :]])


# ----------------------------- parameters ------------------------------------------
class ParamGen:
    def __init__(self, key):
        self.key = key
        self.count = 0

    def normal(self, shape, std=0.02, dtype=jnp.float32):
        self.count += 1
        k = jax.random.fold_in(self.key, self.count)
        return (std * jax.random.normal(k, shape)).astype(dtype)

    def zeros(self, shape, dtype=jnp.float32):
        return jnp.zeros(shape, dtype)

    def ones(self, shape, dtype=jnp.float32):
        return jnp.ones(shape, dtype)


def build_params(pg, batch):
    wdt = MATMUL_DTYPE
    params = {}
    params["patch_w"] = pg.normal((IN_CH * PATCH * PATCH, EMBED), dtype=wdt)
    params["patch_b"] = pg.zeros((1, EMBED))
    params["patch_norm_g"] = pg.ones((1, EMBED))
    params["patch_norm_b"] = pg.zeros((1, EMBED))

    Gh = Gw = IMG // PATCH
    layers, stages_cfg = [], []
    for i, (depth, heads) in enumerate(zip(DEPTHS, HEADS)):
        dim = EMBED * (2 ** i)
        H, W = Gh // (2 ** i), Gw // (2 ** i)
        ws = WINDOW if min(H, W) > WINDOW else min(H, W)      # SwinTransformerBlock adjustment
        hd = dim // heads
        hidden = int(dim * MLP_RATIO)
        blocks, blocks_cfg = [], []
        for d in range(depth):
            shift = 0 if (d % 2 == 0 or min(H, W) <= WINDOW) else ws // 2
            rel_table = pg.normal(((2 * ws - 1) ** 2, heads))  # f32
            blocks.append(dict(
                norm1_g=pg.ones((1, dim)), norm1_b=pg.zeros((1, dim)),
                qkv_w=pg.normal((dim, 3 * dim), dtype=wdt),
                qkv_b=pg.zeros((1, 3 * dim)),
                attn_bias=_dense_attn_bias_raster(rel_table, ws, heads, batch, H, W, shift),
                proj_w=pg.normal((dim, dim), dtype=wdt),
                proj_b=pg.zeros((1, dim)),
                norm2_g=pg.ones((1, dim)), norm2_b=pg.zeros((1, dim)),
                fc1_w=pg.normal((dim, hidden), dtype=wdt), fc1_b=pg.zeros((1, hidden)),
                fc2_w=pg.normal((hidden, dim), dtype=wdt), fc2_b=pg.zeros((1, dim)),
            ))
            blocks_cfg.append(dict(heads=heads, hd=hd, dim=dim, scale=hd ** -0.5))
        layer = dict(blocks=blocks)
        merge_cfg = None
        if i < len(DEPTHS) - 1:                               # PatchMerging
            layer["merge_norm_g"] = pg.ones((1, 4 * dim))
            layer["merge_norm_b"] = pg.zeros((1, 4 * dim))
            layer["merge_red_w"] = pg.normal((4 * dim, 2 * dim), dtype=wdt)   # bias=False
            merge_cfg = dict(B=batch, H=H, W=W)
        layers.append(layer)
        stages_cfg.append(dict(blocks=blocks_cfg, merge=merge_cfg))
    params["layers"] = layers

    num_features = EMBED * (2 ** (len(DEPTHS) - 1))
    params["norm_g"] = pg.ones((1, num_features))
    params["norm_b"] = pg.zeros((1, num_features))
    params["head_w"] = pg.normal((num_features, NUM_CLASSES), dtype=wdt)
    params["head_b"] = pg.zeros((1, NUM_CLASSES))

    # AdaptiveAvgPool1d(1) over tokens as a tiny (B, B*L) matmul with 1/L weights
    L_final = (Gh // 2 ** (len(DEPTHS) - 1)) * (Gw // 2 ** (len(DEPTHS) - 1))
    pool = np.zeros((batch, batch * L_final), np.float32)
    for b in range(batch):
        pool[b, b * L_final:(b + 1) * L_final] = 1.0 / L_final
    params["pool"] = jnp.asarray(pool)

    params["cfg"] = dict(stages=stages_cfg)                   # static plan for the kernel
    return params


# ----------------------------- forward pass ----------------------------------------
def swin_forward(params, x):
    """x: NCHW image tensor [B, IN_CH, IMG, IMG] -> logits [B, NUM_CLASSES].
    Single pallas_call; all operands whole-array VMEM-resident (no grid)."""
    B = x.shape[0]
    Gh = Gw = IMG // PATCH

    # PatchEmbed2D: 4x4 stride-4 Conv2d == im2col (one XLA reshape of the input)
    xp = x.reshape(B, IN_CH, Gh, PATCH, Gw, PATCH).transpose(0, 2, 4, 1, 3, 5)
    xp = xp.reshape(B * Gh * Gw, IN_CH * PATCH * PATCH)

    flat = [xp, params["patch_w"], params["patch_b"],
            params["patch_norm_g"], params["patch_norm_b"]]
    for layer in params["layers"]:
        for blk in layer["blocks"]:
            flat += [blk["norm1_g"], blk["norm1_b"], blk["qkv_w"], blk["qkv_b"],
                     blk["attn_bias"], blk["proj_w"], blk["proj_b"],
                     blk["norm2_g"], blk["norm2_b"],
                     blk["fc1_w"], blk["fc1_b"], blk["fc2_w"], blk["fc2_b"]]
        if "merge_red_w" in layer:
            flat += [layer["merge_norm_g"], layer["merge_norm_b"], layer["merge_red_w"]]
    flat += [params["norm_g"], params["norm_b"], params["pool"],
             params["head_w"], params["head_b"]]

    return pl.pallas_call(
        functools.partial(_swin_forward_kernel, cfg=params["cfg"]),
        out_shape=jax.ShapeDtypeStruct((B, NUM_CLASSES), jnp.float32),
        in_specs=[pl.BlockSpec(memory_space=pltpu.MemorySpace.VMEM) for _ in flat],
        out_specs=pl.BlockSpec(memory_space=pltpu.MemorySpace.VMEM),
        # all weights + activations are ~1 MiB; leave headroom vs v7x's 64 MiB VMEM
        compiler_params=pltpu.CompilerParams(vmem_limit_bytes=32 * 1024 * 1024),
    )(*flat)


# ----------------------------- main -------------------------------------------------
if __name__ == "__main__":
    key = jax.random.PRNGKey(0)
    k_params, k_input = jax.random.split(key)

    params = build_params(ParamGen(k_params), BATCH)
    x = jax.random.normal(k_input, (BATCH, IN_CH, IMG, IMG), jnp.float32)  # NCHW

    logits = jax.block_until_ready(swin_forward(params, x))
    assert logits.shape == (BATCH, NUM_CLASSES)
    assert bool(jnp.all(jnp.isfinite(logits)))
    print("KERNEL_OK")
</pallas_src>

<mosaic_0001>
module attributes {stable_mosaic.version = 11 : i64} {
  func.func @_swin_forward_kernel(%arg0: memref<32x48xf32, #tpu.memory_space<vmem>>, %arg1: memref<48x32xbf16, #tpu.memory_space<vmem>>, %arg2: memref<1x32xf32, #tpu.memory_space<vmem>>, %arg3: memref<1x32xf32, #tpu.memory_space<vmem>>, %arg4: memref<1x32xf32, #tpu.memory_space<vmem>>, %arg5: memref<1x32xf32, #tpu.memory_space<vmem>>, %arg6: memref<1x32xf32, #tpu.memory_space<vmem>>, %arg7: memref<32x96xbf16, #tpu.memory_space<vmem>>, %arg8: memref<1x96xf32, #tpu.memory_space<vmem>>, %arg9: memref<2x32x32xf32, #tpu.memory_space<vmem>>, %arg10: memref<32x32xbf16, #tpu.memory_space<vmem>>, %arg11: memref<1x32xf32, #tpu.memory_space<vmem>>, %arg12: memref<1x32xf32, #tpu.memory_space<vmem>>, %arg13: memref<1x32xf32, #tpu.memory_space<vmem>>, %arg14: memref<32x128xbf16, #tpu.memory_space<vmem>>, %arg15: memref<1x128xf32, #tpu.memory_space<vmem>>, %arg16: memref<128x32xbf16, #tpu.memory_space<vmem>>, %arg17: memref<1x32xf32, #tpu.memory_space<vmem>>, %arg18: memref<1x32xf32, #tpu.memory_space<vmem>>, %arg19: memref<1x32xf32, #tpu.memory_space<vmem>>, %arg20: memref<32x96xbf16, #tpu.memory_space<vmem>>, %arg21: memref<1x96xf32, #tpu.memory_space<vmem>>, %arg22: memref<2x32x32xf32, #tpu.memory_space<vmem>>, %arg23: memref<32x32xbf16, #tpu.memory_space<vmem>>, %arg24: memref<1x32xf32, #tpu.memory_space<vmem>>, %arg25: memref<1x32xf32, #tpu.memory_space<vmem>>, %arg26: memref<1x32xf32, #tpu.memory_space<vmem>>, %arg27: memref<32x128xbf16, #tpu.memory_space<vmem>>, %arg28: memref<1x128xf32, #tpu.memory_space<vmem>>, %arg29: memref<128x32xbf16, #tpu.memory_space<vmem>>, %arg30: memref<1x32xf32, #tpu.memory_space<vmem>>, %arg31: memref<1x128xf32, #tpu.memory_space<vmem>>, %arg32: memref<1x128xf32, #tpu.memory_space<vmem>>, %arg33: memref<128x64xbf16, #tpu.memory_space<vmem>>, %arg34: memref<1x64xf32, #tpu.memory_space<vmem>>, %arg35: memref<1x64xf32, #tpu.memory_space<vmem>>, %arg36: memref<64x192xbf16, #tpu.memory_space<vmem>>, %arg37: memref<1x192xf32, #tpu.memory_space<vmem>>, %arg38: memref<4x8x8xf32, #tpu.memory_space<vmem>>, %arg39: memref<64x64xbf16, #tpu.memory_space<vmem>>, %arg40: memref<1x64xf32, #tpu.memory_space<vmem>>, %arg41: memref<1x64xf32, #tpu.memory_space<vmem>>, %arg42: memref<1x64xf32, #tpu.memory_space<vmem>>, %arg43: memref<64x256xbf16, #tpu.memory_space<vmem>>, %arg44: memref<1x256xf32, #tpu.memory_space<vmem>>, %arg45: memref<256x64xbf16, #tpu.memory_space<vmem>>, %arg46: memref<1x64xf32, #tpu.memory_space<vmem>>, %arg47: memref<1x64xf32, #tpu.memory_space<vmem>>, %arg48: memref<1x64xf32, #tpu.memory_space<vmem>>, %arg49: memref<64x192xbf16, #tpu.memory_space<vmem>>, %arg50: memref<1x192xf32, #tpu.memory_space<vmem>>, %arg51: memref<4x8x8xf32, #tpu.memory_space<vmem>>, %arg52: memref<64x64xbf16, #tpu.memory_space<vmem>>, %arg53: memref<1x64xf32, #tpu.memory_space<vmem>>, %arg54: memref<1x64xf32, #tpu.memory_space<vmem>>, %arg55: memref<1x64xf32, #tpu.memory_space<vmem>>, %arg56: memref<64x256xbf16, #tpu.memory_space<vmem>>, %arg57: memref<1x256xf32, #tpu.memory_space<vmem>>, %arg58: memref<256x64xbf16, #tpu.memory_space<vmem>>, %arg59: memref<1x64xf32, #tpu.memory_space<vmem>>, %arg60: memref<1x64xf32, #tpu.memory_space<vmem>>, %arg61: memref<1x64xf32, #tpu.memory_space<vmem>>, %arg62: memref<2x8xf32, #tpu.memory_space<vmem>>, %arg63: memref<64x10xbf16, #tpu.memory_space<vmem>>, %arg64: memref<1x10xf32, #tpu.memory_space<vmem>>, %arg65: memref<2x10xf32, #tpu.memory_space<vmem>>) attributes {dimension_semantics = [], scalar_prefetch = 0 : i64, scratch_operands = 0 : i64, tpu.core_type = #tpu.core_type<tc>} {
    %c0 = arith.constant 0 : index
    %c0_0 = arith.constant 0 : index
    %0 = vector.load %arg0[%c0, %c0_0] : memref<32x48xf32, #tpu.memory_space<vmem>>, vector<32x48xf32>
    %c0_1 = arith.constant 0 : index
    %c0_2 = arith.constant 0 : index
    %1 = vector.load %arg1[%c0_1, %c0_2] : memref<48x32xbf16, #tpu.memory_space<vmem>>, vector<48x32xbf16>
    %c0_3 = arith.constant 0 : index
    %c0_4 = arith.constant 0 : index
    %2 = vector.load %arg2[%c0_3, %c0_4] : memref<1x32xf32, #tpu.memory_space<vmem>>, vector<1x32xf32>
    %c0_5 = arith.constant 0 : index
    %c0_6 = arith.constant 0 : index
    %3 = vector.load %arg3[%c0_5, %c0_6] : memref<1x32xf32, #tpu.memory_space<vmem>>, vector<1x32xf32>
    %c0_7 = arith.constant 0 : index
    %c0_8 = arith.constant 0 : index
    %4 = vector.load %arg4[%c0_7, %c0_8] : memref<1x32xf32, #tpu.memory_space<vmem>>, vector<1x32xf32>
    %5 = arith.truncf %0 : vector<32x48xf32> to vector<32x48xbf16>
    %cst = arith.constant dense<0.000000e+00> : vector<32x32xf32>
    %6 = tpu.matmul %5, %1, %cst {dimension_numbers = #tpu.dot_dimension_numbers<[1], [0], [0], [1], [0, 0, 1, 1], [], []>} : vector<32x48xbf16>, vector<48x32xbf16>, vector<32x32xf32> -> vector<32x32xf32>
    %7 = vector.broadcast %2 : vector<1x32xf32> to vector<32x32xf32>
    %8 = arith.addf %6, %7 : vector<32x32xf32>
    %cst_9 = arith.constant dense<0.000000e+00> : vector<32xf32>
    %9 = vector.multi_reduction <add>, %8, %cst_9 [1] : vector<32x32xf32> to vector<32xf32>
    %10 = vector.shape_cast %9 : vector<32xf32> to vector<32x1xf32>
    %cst_10 = arith.constant 3.200000e+01 : f32
    %11 = vector.broadcast %cst_10 : f32 to vector<32x1xf32>
    %12 = arith.divf %10, %11 : vector<32x1xf32>
    %13 = vector.broadcast %12 : vector<32x1xf32> to vector<32x32xf32>
    %14 = arith.subf %8, %13 : vector<32x32xf32>
    %15 = arith.mulf %14, %14 : vector<32x32xf32>
    %cst_11 = arith.constant dense<0.000000e+00> : vector<32xf32>
    %16 = vector.multi_reduction <add>, %15, %cst_11 [1] : vector<32x32xf32> to vector<32xf32>
    %17 = vector.shape_cast %16 : vector<32xf32> to vector<32x1xf32>
    %cst_12 = arith.constant 3.200000e+01 : f32
    %18 = vector.broadcast %cst_12 : f32 to vector<32x1xf32>
    %19 = arith.divf %17, %18 : vector<32x1xf32>
    %cst_13 = arith.constant 9.99999974E-6 : f32
    %20 = vector.broadcast %cst_13 : f32 to vector<32x1xf32>
    %21 = arith.addf %19, %20 : vector<32x1xf32>
    %22 = math.rsqrt %21 : vector<32x1xf32>
    %23 = vector.broadcast %22 : vector<32x1xf32> to vector<32x32xf32>
    %24 = arith.mulf %14, %23 : vector<32x32xf32>
    %25 = vector.broadcast %3 : vector<1x32xf32> to vector<32x32xf32>
    %26 = arith.mulf %24, %25 : vector<32x32xf32>
    %27 = vector.broadcast %4 : vector<1x32xf32> to vector<32x32xf32>
    %28 = arith.addf %26, %27 : vector<32x32xf32>
    %c0_14 = arith.constant 0 : index
    %c0_15 = arith.constant 0 : index
    %29 = vector.load %arg5[%c0_14, %c0_15] : memref<1x32xf32, #tpu.memory_space<vmem>>, vector<1x32xf32>
    %c0_16 = arith.constant 0 : index
    %c0_17 = arith.constant 0 : index
    %30 = vector.load %arg6[%c0_16, %c0_17] : memref<1x32xf32, #tpu.memory_space<vmem>>, vector<1x32xf32>
    %c0_18 = arith.constant 0 : index
    %c0_19 = arith.constant 0 : index
    %31 = vector.load %arg7[%c0_18, %c0_19] : memref<32x96xbf16, #tpu.memory_space<vmem>>, vector<32x96xbf16>
    %c0_20 = arith.constant 0 : index
    %c0_21 = arith.constant 0 : index
    %32 = vector.load %arg8[%c0_20, %c0_21] : memref<1x96xf32, #tpu.memory_space<vmem>>, vector<1x96xf32>
    %c0_22 = arith.constant 0 : index
    %c0_23 = arith.constant 0 : index
    %33 = vector.load %arg10[%c0_22, %c0_23] : memref<32x32xbf16, #tpu.memory_space<vmem>>, vector<32x32xbf16>
    %c0_24 = arith.constant 0 : index
    %c0_25 = arith.constant 0 : index
    %34 = vector.load %arg11[%c0_24, %c0_25] : memref<1x32xf32, #tpu.memory_space<vmem>>, vector<1x32xf32>
    %c0_26 = arith.constant 0 : index
    %c0_27 = arith.constant 0 : index
    %35 = vector.load %arg12[%c0_26, %c0_27] : memref<1x32xf32, #tpu.memory_space<vmem>>, vector<1x32xf32>
    %c0_28 = arith.constant 0 : index
    %c0_29 = arith.constant 0 : index
    %36 = vector.load %arg13[%c0_28, %c0_29] : memref<1x32xf32, #tpu.memory_space<vmem>>, vector<1x32xf32>
    %c0_30 = arith.constant 0 : index
    %c0_31 = arith.constant 0 : index
    %37 = vector.load %arg14[%c0_30, %c0_31] : memref<32x128xbf16, #tpu.memory_space<vmem>>, vector<32x128xbf16>
    %c0_32 = arith.constant 0 : index
    %c0_33 = arith.constant 0 : index
    %38 = vector.load %arg15[%c0_32, %c0_33] : memref<1x128xf32, #tpu.memory_space<vmem>>, vector<1x128xf32>
    %c0_34 = arith.constant 0 : index
    %c0_35 = arith.constant 0 : index
    %39 = vector.load %arg16[%c0_34, %c0_35] : memref<128x32xbf16, #tpu.memory_space<vmem>>, vector<128x32xbf16>
    %c0_36 = arith.constant 0 : index
    %c0_37 = arith.constant 0 : index
    %40 = vector.load %arg17[%c0_36, %c0_37] : memref<1x32xf32, #tpu.memory_space<vmem>>, vector<1x32xf32>
    %cst_38 = arith.constant dense<0.000000e+00> : vector<32xf32>
    %41 = vector.multi_reduction <add>, %28, %cst_38 [1] : vector<32x32xf32> to vector<32xf32>
    %42 = vector.shape_cast %41 : vector<32xf32> to vector<32x1xf32>
    %cst_39 = arith.constant 3.200000e+01 : f32
    %43 = vector.broadcast %cst_39 : f32 to vector<32x1xf32>
    %44 = arith.divf %42, %43 : vector<32x1xf32>
    %45 = vector.broadcast %44 : vector<32x1xf32> to vector<32x32xf32>
    %46 = arith.subf %28, %45 : vector<32x32xf32>
    %47 = arith.mulf %46, %46 : vector<32x32xf32>
    %cst_40 = arith.constant dense<0.000000e+00> : vector<32xf32>
    %48 = vector.multi_reduction <add>, %47, %cst_40 [1] : vector<32x32xf32> to vector<32xf32>
    %49 = vector.shape_cast %48 : vector<32xf32> to vector<32x1xf32>
    %cst_41 = arith.constant 3.200000e+01 : f32
    %50 = vector.broadcast %cst_41 : f32 to vector<32x1xf32>
    %51 = arith.divf %49, %50 : vector<32x1xf32>
    %cst_42 = arith.constant 9.99999974E-6 : f32
    %52 = vector.broadcast %cst_42 : f32 to vector<32x1xf32>
    %53 = arith.addf %51, %52 : vector<32x1xf32>
    %54 = math.rsqrt %53 : vector<32x1xf32>
    %55 = vector.broadcast %54 : vector<32x1xf32> to vector<32x32xf32>
    %56 = arith.mulf %46, %55 : vector<32x32xf32>
    %57 = vector.broadcast %29 : vector<1x32xf32> to vector<32x32xf32>
    %58 = arith.mulf %56, %57 : vector<32x32xf32>
    %59 = vector.broadcast %30 : vector<1x32xf32> to vector<32x32xf32>
    %60 = arith.addf %58, %59 : vector<32x32xf32>
    %61 = arith.truncf %60 : vector<32x32xf32> to vector<32x32xbf16>
    %cst_43 = arith.constant dense<0.000000e+00> : vector<32x96xf32>
    %62 = tpu.matmul %61, %31, %cst_43 {dimension_numbers = #tpu.dot_dimension_numbers<[1], [0], [0], [1], [0, 0, 1, 1], [], []>} : vector<32x32xbf16>, vector<32x96xbf16>, vector<32x96xf32> -> vector<32x96xf32>
    %63 = vector.broadcast %32 : vector<1x96xf32> to vector<32x96xf32>
    %64 = arith.addf %62, %63 : vector<32x96xf32>
    %65 = vector.extract_strided_slice %64 {offsets = [0, 0], sizes = [32, 16], strides = [1, 1]} : vector<32x96xf32> to vector<32x16xf32>
    %66 = vector.extract_strided_slice %64 {offsets = [0, 32], sizes = [32, 16], strides = [1, 1]} : vector<32x96xf32> to vector<32x16xf32>
    %67 = vector.extract_strided_slice %64 {offsets = [0, 64], sizes = [32, 16], strides = [1, 1]} : vector<32x96xf32> to vector<32x16xf32>
    %68 = arith.truncf %65 : vector<32x16xf32> to vector<32x16xbf16>
    %69 = arith.truncf %66 : vector<32x16xf32> to vector<32x16xbf16>
    %cst_44 = arith.constant dense<0.000000e+00> : vector<32x32xf32>
    %70 = tpu.matmul %68, %69, %cst_44 {dimension_numbers = #tpu.dot_dimension_numbers<[1], [1], [0], [0], [0, 0, 1, 0], [], []>} : vector<32x16xbf16>, vector<32x16xbf16>, vector<32x32xf32> -> vector<32x32xf32>
    %cst_45 = arith.constant 2.500000e-01 : f32
    %71 = vector.broadcast %cst_45 : f32 to vector<32x32xf32>
    %72 = arith.mulf %70, %71 : vector<32x32xf32>
    %c0_46 = arith.constant 0 : index
    %c0_47 = arith.constant 0 : index
    %c0_48 = arith.constant 0 : index
    %73 = vector.load %arg9[%c0_46, %c0_47, %c0_48] : memref<2x32x32xf32, #tpu.memory_space<vmem>>, vector<1x32x32xf32>
    %74 = vector.shape_cast %73 : vector<1x32x32xf32> to vector<32x32xf32>
    %75 = arith.addf %72, %74 : vector<32x32xf32>
    %cst_49 = arith.constant dense<0xFF800000> : vector<32xf32>
    %76 = vector.multi_reduction <maximumf>, %75, %cst_49 [1] : vector<32x32xf32> to vector<32xf32>
    %77 = vector.shape_cast %76 : vector<32xf32> to vector<32x1xf32>
    %78 = vector.broadcast %77 : vector<32x1xf32> to vector<32x32xf32>
    %79 = arith.subf %75, %78 : vector<32x32xf32>
    %80 = math.exp %79 : vector<32x32xf32>
    %cst_50 = arith.constant dense<0.000000e+00> : vector<32xf32>
    %81 = vector.multi_reduction <add>, %80, %cst_50 [1] : vector<32x32xf32> to vector<32xf32>
    %82 = vector.shape_cast %81 : vector<32xf32> to vector<32x1xf32>
    %83 = vector.broadcast %82 : vector<32x1xf32> to vector<32x32xf32>
    %84 = arith.divf %80, %83 : vector<32x32xf32>
    %85 = arith.truncf %84 : vector<32x32xf32> to vector<32x32xbf16>
    %86 = arith.truncf %67 : vector<32x16xf32> to vector<32x16xbf16>
    %cst_51 = arith.constant dense<0.000000e+00> : vector<32x16xf32>
    %87 = tpu.matmul %85, %86, %cst_51 {dimension_numbers = #tpu.dot_dimension_numbers<[1], [0], [0], [1], [0, 0, 1, 1], [], []>} : vector<32x32xbf16>, vector<32x16xbf16>, vector<32x16xf32> -> vector<32x16xf32>
    %88 = vector.extract_strided_slice %64 {offsets = [0, 16], sizes = [32, 16], strides = [1, 1]} : vector<32x96xf32> to vector<32x16xf32>
    %89 = vector.extract_strided_slice %64 {offsets = [0, 48], sizes = [32, 16], strides = [1, 1]} : vector<32x96xf32> to vector<32x16xf32>
    %90 = vector.extract_strided_slice %64 {offsets = [0, 80], sizes = [32, 16], strides = [1, 1]} : vector<32x96xf32> to vector<32x16xf32>
    %91 = arith.truncf %88 : vector<32x16xf32> to vector<32x16xbf16>
    %92 = arith.truncf %89 : vector<32x16xf32> to vector<32x16xbf16>
    %cst_52 = arith.constant dense<0.000000e+00> : vector<32x32xf32>
    %93 = tpu.matmul %91, %92, %cst_52 {dimension_numbers = #tpu.dot_dimension_numbers<[1], [1], [0], [0], [0, 0, 1, 0], [], []>} : vector<32x16xbf16>, vector<32x16xbf16>, vector<32x32xf32> -> vector<32x32xf32>
    %cst_53 = arith.constant 2.500000e-01 : f32
    %94 = vector.broadcast %cst_53 : f32 to vector<32x32xf32>
    %95 = arith.mulf %93, %94 : vector<32x32xf32>
    %c1 = arith.constant 1 : index
    %c0_54 = arith.constant 0 : index
    %c0_55 = arith.constant 0 : index
    %96 = vector.load %arg9[%c1, %c0_54, %c0_55] : memref<2x32x32xf32, #tpu.memory_space<vmem>>, vector<1x32x32xf32>
    %97 = vector.shape_cast %96 : vector<1x32x32xf32> to vector<32x32xf32>
    %98 = arith.addf %95, %97 : vector<32x32xf32>
    %cst_56 = arith.constant dense<0xFF800000> : vector<32xf32>
    %99 = vector.multi_reduction <maximumf>, %98, %cst_56 [1] : vector<32x32xf32> to vector<32xf32>
    %100 = vector.shape_cast %99 : vector<32xf32> to vector<32x1xf32>
    %101 = vector.broadcast %100 : vector<32x1xf32> to vector<32x32xf32>
    %102 = arith.subf %98, %101 : vector<32x32xf32>
    %103 = math.exp %102 : vector<32x32xf32>
    %cst_57 = arith.constant dense<0.000000e+00> : vector<32xf32>
    %104 = vector.multi_reduction <add>, %103, %cst_57 [1] : vector<32x32xf32> to vector<32xf32>
    %105 = vector.shape_cast %104 : vector<32xf32> to vector<32x1xf32>
    %106 = vector.broadcast %105 : vector<32x1xf32> to vector<32x32xf32>
    %107 = arith.divf %103, %106 : vector<32x32xf32>
    %108 = arith.truncf %107 : vector<32x32xf32> to vector<32x32xbf16>
    %109 = arith.truncf %90 : vector<32x16xf32> to vector<32x16xbf16>
    %cst_58 = arith.constant dense<0.000000e+00> : vector<32x16xf32>
    %110 = tpu.matmul %108, %109, %cst_58 {dimension_numbers = #tpu.dot_dimension_numbers<[1], [0], [0], [1], [0, 0, 1, 1], [], []>} : vector<32x32xbf16>, vector<32x16xbf16>, vector<32x16xf32> -> vector<32x16xf32>
    %111 = tpu.concatenate %87, %110 in 1 : vector<32x16xf32>, vector<32x16xf32> -> vector<32x32xf32>
    %112 = arith.truncf %111 : vector<32x32xf32> to vector<32x32xbf16>
    %cst_59 = arith.constant dense<0.000000e+00> : vector<32x32xf32>
    %113 = tpu.matmul %112, %33, %cst_59 {dimension_numbers = #tpu.dot_dimension_numbers<[1], [0], [0], [1], [0, 0, 1, 1], [], []>} : vector<32x32xbf16>, vector<32x32xbf16>, vector<32x32xf32> -> vector<32x32xf32>
    %114 = vector.broadcast %34 : vector<1x32xf32> to vector<32x32xf32>
    %115 = arith.addf %113, %114 : vector<32x32xf32>
    %116 = arith.addf %28, %115 : vector<32x32xf32>
    %cst_60 = arith.constant dense<0.000000e+00> : vector<32xf32>
    %117 = vector.multi_reduction <add>, %116, %cst_60 [1] : vector<32x32xf32> to vector<32xf32>
    %118 = vector.shape_cast %117 : vector<32xf32> to vector<32x1xf32>
    %cst_61 = arith.constant 3.200000e+01 : f32
    %119 = vector.broadcast %cst_61 : f32 to vector<32x1xf32>
    %120 = arith.divf %118, %119 : vector<32x1xf32>
    %121 = vector.broadcast %120 : vector<32x1xf32> to vector<32x32xf32>
    %122 = arith.subf %116, %121 : vector<32x32xf32>
    %123 = arith.mulf %122, %122 : vector<32x32xf32>
    %cst_62 = arith.constant dense<0.000000e+00> : vector<32xf32>
    %124 = vector.multi_reduction <add>, %123, %cst_62 [1] : vector<32x32xf32> to vector<32xf32>
    %125 = vector.shape_cast %124 : vector<32xf32> to vector<32x1xf32>
    %cst_63 = arith.constant 3.200000e+01 : f32
    %126 = vector.broadcast %cst_63 : f32 to vector<32x1xf32>
    %127 = arith.divf %125, %126 : vector<32x1xf32>
    %cst_64 = arith.constant 9.99999974E-6 : f32
    %128 = vector.broadcast %cst_64 : f32 to vector<32x1xf32>
    %129 = arith.addf %127, %128 : vector<32x1xf32>
    %130 = math.rsqrt %129 : vector<32x1xf32>
    %131 = vector.broadcast %130 : vector<32x1xf32> to vector<32x32xf32>
    %132 = arith.mulf %122, %131 : vector<32x32xf32>
    %133 = vector.broadcast %35 : vector<1x32xf32> to vector<32x32xf32>
    %134 = arith.mulf %132, %133 : vector<32x32xf32>
    %135 = vector.broadcast %36 : vector<1x32xf32> to vector<32x32xf32>
    %136 = arith.addf %134, %135 : vector<32x32xf32>
    %137 = arith.truncf %136 : vector<32x32xf32> to vector<32x32xbf16>
    %cst_65 = arith.constant dense<0.000000e+00> : vector<32x128xf32>
    %138 = tpu.matmul %137, %37, %cst_65 {dimension_numbers = #tpu.dot_dimension_numbers<[1], [0], [0], [1], [0, 0, 1, 1], [], []>} : vector<32x32xbf16>, vector<32x128xbf16>, vector<32x128xf32> -> vector<32x128xf32>
    %139 = vector.broadcast %38 : vector<1x128xf32> to vector<32x128xf32>
    %140 = arith.addf %138, %139 : vector<32x128xf32>
    %cst_66 = arith.constant 0.707106769 : f32
    %141 = vector.broadcast %cst_66 : f32 to vector<32x128xf32>
    %142 = arith.mulf %140, %141 : vector<32x128xf32>
    %143 = math.absf %142 : vector<32x128xf32>
    %cst_67 = arith.constant 0.327591091 : f32
    %144 = vector.broadcast %cst_67 : f32 to vector<32x128xf32>
    %145 = arith.mulf %144, %143 : vector<32x128xf32>
    %cst_68 = arith.constant 1.000000e+00 : f32
    %146 = vector.broadcast %cst_68 : f32 to vector<32x128xf32>
    %147 = arith.addf %146, %145 : vector<32x128xf32>
    %cst_69 = arith.constant 1.000000e+00 : f32
    %148 = vector.broadcast %cst_69 : f32 to vector<32x128xf32>
    %149 = arith.divf %148, %147 : vector<32x128xf32>
    %cst_70 = arith.constant 1.06140542 : f32
    %150 = vector.broadcast %cst_70 : f32 to vector<32x128xf32>
    %151 = arith.mulf %150, %149 : vector<32x128xf32>
    %cst_71 = arith.constant -1.45315206 : f32
    %152 = vector.broadcast %cst_71 : f32 to vector<32x128xf32>
    %153 = arith.addf %151, %152 : vector<32x128xf32>
    %154 = arith.mulf %153, %149 : vector<32x128xf32>
    %cst_72 = arith.constant 1.42141378 : f32
    %155 = vector.broadcast %cst_72 : f32 to vector<32x128xf32>
    %156 = arith.addf %154, %155 : vector<32x128xf32>
    %157 = arith.mulf %156, %149 : vector<32x128xf32>
    %cst_73 = arith.constant -0.284496725 : f32
    %158 = vector.broadcast %cst_73 : f32 to vector<32x128xf32>
    %159 = arith.addf %157, %158 : vector<32x128xf32>
    %160 = arith.mulf %159, %149 : vector<32x128xf32>
    %cst_74 = arith.constant 0.254829586 : f32
    %161 = vector.broadcast %cst_74 : f32 to vector<32x128xf32>
    %162 = arith.addf %160, %161 : vector<32x128xf32>
    %163 = arith.mulf %162, %149 : vector<32x128xf32>
    %cst_75 = arith.constant 0.000000e+00 : f32
    %164 = vector.broadcast %cst_75 : f32 to vector<32x128xf32>
    %165 = arith.subf %164, %143 : vector<32x128xf32>
    %166 = arith.mulf %165, %143 : vector<32x128xf32>
    %167 = math.exp %166 : vector<32x128xf32>
    %168 = arith.mulf %163, %167 : vector<32x128xf32>
    %cst_76 = arith.constant 1.000000e+00 : f32
    %169 = vector.broadcast %cst_76 : f32 to vector<32x128xf32>
    %170 = arith.subf %169, %168 : vector<32x128xf32>
    %cst_77 = arith.constant 0.000000e+00 : f32
    %171 = vector.broadcast %cst_77 : f32 to vector<32x128xf32>
    %172 = arith.cmpf oge, %142, %171 : vector<32x128xf32>
    %cst_78 = arith.constant 0.000000e+00 : f32
    %173 = vector.broadcast %cst_78 : f32 to vector<32x128xf32>
    %174 = arith.subf %173, %170 : vector<32x128xf32>
    %175 = arith.select %172, %170, %174 : vector<32x128xi1>, vector<32x128xf32>
    %cst_79 = arith.constant 5.000000e-01 : f32
    %176 = vector.broadcast %cst_79 : f32 to vector<32x128xf32>
    %177 = arith.mulf %176, %140 : vector<32x128xf32>
    %cst_80 = arith.constant 1.000000e+00 : f32
    %178 = vector.broadcast %cst_80 : f32 to vector<32x128xf32>
    %179 = arith.addf %178, %175 : vector<32x128xf32>
    %180 = arith.mulf %177, %179 : vector<32x128xf32>
    %181 = arith.truncf %180 : vector<32x128xf32> to vector<32x128xbf16>
    %cst_81 = arith.constant dense<0.000000e+00> : vector<32x32xf32>
    %182 = tpu.matmul %181, %39, %cst_81 {dimension_numbers = #tpu.dot_dimension_numbers<[1], [0], [0], [1], [0, 0, 1, 1], [], []>} : vector<32x128xbf16>, vector<128x32xbf16>, vector<32x32xf32> -> vector<32x32xf32>
    %183 = vector.broadcast %40 : vector<1x32xf32> to vector<32x32xf32>
    %184 = arith.addf %182, %183 : vector<32x32xf32>
    %185 = arith.addf %116, %184 : vector<32x32xf32>
    %c0_82 = arith.constant 0 : index
    %c0_83 = arith.constant 0 : index
    %186 = vector.load %arg18[%c0_82, %c0_83] : memref<1x32xf32, #tpu.memory_space<vmem>>, vector<1x32xf32>
    %c0_84 = arith.constant 0 : index
    %c0_85 = arith.constant 0 : index
    %187 = vector.load %arg19[%c0_84, %c0_85] : memref<1x32xf32, #tpu.memory_space<vmem>>, vector<1x32xf32>
    %c0_86 = arith.constant 0 : index
    %c0_87 = arith.constant 0 : index
    %188 = vector.load %arg20[%c0_86, %c0_87] : memref<32x96xbf16, #tpu.memory_space<vmem>>, vector<32x96xbf16>
    %c0_88 = arith.constant 0 : index
    %c0_89 = arith.constant 0 : index
    %189 = vector.load %arg21[%c0_88, %c0_89] : memref<1x96xf32, #tpu.memory_space<vmem>>, vector<1x96xf32>
    %c0_90 = arith.constant 0 : index
    %c0_91 = arith.constant 0 : index
    %190 = vector.load %arg23[%c0_90, %c0_91] : memref<32x32xbf16, #tpu.memory_space<vmem>>, vector<32x32xbf16>
    %c0_92 = arith.constant 0 : index
    %c0_93 = arith.constant 0 : index
    %191 = vector.load %arg24[%c0_92, %c0_93] : memref<1x32xf32, #tpu.memory_space<vmem>>, vector<1x32xf32>
    %c0_94 = arith.constant 0 : index
    %c0_95 = arith.constant 0 : index
    %192 = vector.load %arg25[%c0_94, %c0_95] : memref<1x32xf32, #tpu.memory_space<vmem>>, vector<1x32xf32>
    %c0_96 = arith.constant 0 : index
    %c0_97 = arith.constant 0 : index
    %193 = vector.load %arg26[%c0_96, %c0_97] : memref<1x32xf32, #tpu.memory_space<vmem>>, vector<1x32xf32>
    %c0_98 = arith.constant 0 : index
    %c0_99 = arith.constant 0 : index
    %194 = vector.load %arg27[%c0_98, %c0_99] : memref<32x128xbf16, #tpu.memory_space<vmem>>, vector<32x128xbf16>
    %c0_100 = arith.constant 0 : index
    %c0_101 = arith.constant 0 : index
    %195 = vector.load %arg28[%c0_100, %c0_101] : memref<1x128xf32, #tpu.memory_space<vmem>>, vector<1x128xf32>
    %c0_102 = arith.constant 0 : index
    %c0_103 = arith.constant 0 : index
    %196 = vector.load %arg29[%c0_102, %c0_103] : memref<128x32xbf16, #tpu.memory_space<vmem>>, vector<128x32xbf16>
    %c0_104 = arith.constant 0 : index
    %c0_105 = arith.constant 0 : index
    %197 = vector.load %arg30[%c0_104, %c0_105] : memref<1x32xf32, #tpu.memory_space<vmem>>, vector<1x32xf32>
    %cst_106 = arith.constant dense<0.000000e+00> : vector<32xf32>
    %198 = vector.multi_reduction <add>, %185, %cst_106 [1] : vector<32x32xf32> to vector<32xf32>
    %199 = vector.shape_cast %198 : vector<32xf32> to vector<32x1xf32>
    %cst_107 = arith.constant 3.200000e+01 : f32
    %200 = vector.broadcast %cst_107 : f32 to vector<32x1xf32>
    %201 = arith.divf %199, %200 : vector<32x1xf32>
    %202 = vector.broadcast %201 : vector<32x1xf32> to vector<32x32xf32>
    %203 = arith.subf %185, %202 : vector<32x32xf32>
    %204 = arith.mulf %203, %203 : vector<32x32xf32>
    %cst_108 = arith.constant dense<0.000000e+00> : vector<32xf32>
    %205 = vector.multi_reduction <add>, %204, %cst_108 [1] : vector<32x32xf32> to vector<32xf32>
    %206 = vector.shape_cast %205 : vector<32xf32> to vector<32x1xf32>
    %cst_109 = arith.constant 3.200000e+01 : f32
    %207 = vector.broadcast %cst_109 : f32 to vector<32x1xf32>
    %208 = arith.divf %206, %207 : vector<32x1xf32>
    %cst_110 = arith.constant 9.99999974E-6 : f32
    %209 = vector.broadcast %cst_110 : f32 to vector<32x1xf32>
    %210 = arith.addf %208, %209 : vector<32x1xf32>
    %211 = math.rsqrt %210 : vector<32x1xf32>
    %212 = vector.broadcast %211 : vector<32x1xf32> to vector<32x32xf32>
    %213 = arith.mulf %203, %212 : vector<32x32xf32>
    %214 = vector.broadcast %186 : vector<1x32xf32> to vector<32x32xf32>
    %215 = arith.mulf %213, %214 : vector<32x32xf32>
    %216 = vector.broadcast %187 : vector<1x32xf32> to vector<32x32xf32>
    %217 = arith.addf %215, %216 : vector<32x32xf32>
    %218 = arith.truncf %217 : vector<32x32xf32> to vector<32x32xbf16>
    %cst_111 = arith.constant dense<0.000000e+00> : vector<32x96xf32>
    %219 = tpu.matmul %218, %188, %cst_111 {dimension_numbers = #tpu.dot_dimension_numbers<[1], [0], [0], [1], [0, 0, 1, 1], [], []>} : vector<32x32xbf16>, vector<32x96xbf16>, vector<32x96xf32> -> vector<32x96xf32>
    %220 = vector.broadcast %189 : vector<1x96xf32> to vector<32x96xf32>
    %221 = arith.addf %219, %220 : vector<32x96xf32>
    %222 = vector.extract_strided_slice %221 {offsets = [0, 0], sizes = [32, 16], strides = [1, 1]} : vector<32x96xf32> to vector<32x16xf32>
    %223 = vector.extract_strided_slice %221 {offsets = [0, 32], sizes = [32, 16], strides = [1, 1]} : vector<32x96xf32> to vector<32x16xf32>
    %224 = vector.extract_strided_slice %221 {offsets = [0, 64], sizes = [32, 16], strides = [1, 1]} : vector<32x96xf32> to vector<32x16xf32>
    %225 = arith.truncf %222 : vector<32x16xf32> to vector<32x16xbf16>
    %226 = arith.truncf %223 : vector<32x16xf32> to vector<32x16xbf16>
    %cst_112 = arith.constant dense<0.000000e+00> : vector<32x32xf32>
    %227 = tpu.matmul %225, %226, %cst_112 {dimension_numbers = #tpu.dot_dimension_numbers<[1], [1], [0], [0], [0, 0, 1, 0], [], []>} : vector<32x16xbf16>, vector<32x16xbf16>, vector<32x32xf32> -> vector<32x32xf32>
    %cst_113 = arith.constant 2.500000e-01 : f32
    %228 = vector.broadcast %cst_113 : f32 to vector<32x32xf32>
    %229 = arith.mulf %227, %228 : vector<32x32xf32>
    %c0_114 = arith.constant 0 : index
    %c0_115 = arith.constant 0 : index
    %c0_116 = arith.constant 0 : index
    %230 = vector.load %arg22[%c0_114, %c0_115, %c0_116] : memref<2x32x32xf32, #tpu.memory_space<vmem>>, vector<1x32x32xf32>
    %231 = vector.shape_cast %230 : vector<1x32x32xf32> to vector<32x32xf32>
    %232 = arith.addf %229, %231 : vector<32x32xf32>
    %cst_117 = arith.constant dense<0xFF800000> : vector<32xf32>
    %233 = vector.multi_reduction <maximumf>, %232, %cst_117 [1] : vector<32x32xf32> to vector<32xf32>
    %234 = vector.shape_cast %233 : vector<32xf32> to vector<32x1xf32>
    %235 = vector.broadcast %234 : vector<32x1xf32> to vector<32x32xf32>
    %236 = arith.subf %232, %235 : vector<32x32xf32>
    %237 = math.exp %236 : vector<32x32xf32>
    %cst_118 = arith.constant dense<0.000000e+00> : vector<32xf32>
    %238 = vector.multi_reduction <add>, %237, %cst_118 [1] : vector<32x32xf32> to vector<32xf32>
    %239 = vector.shape_cast %238 : vector<32xf32> to vector<32x1xf32>
    %240 = vector.broadcast %239 : vector<32x1xf32> to vector<32x32xf32>
    %241 = arith.divf %237, %240 : vector<32x32xf32>
    %242 = arith.truncf %241 : vector<32x32xf32> to vector<32x32xbf16>
    %243 = arith.truncf %224 : vector<32x16xf32> to vector<32x16xbf16>
    %cst_119 = arith.constant dense<0.000000e+00> : vector<32x16xf32>
    %244 = tpu.matmul %242, %243, %cst_119 {dimension_numbers = #tpu.dot_dimension_numbers<[1], [0], [0], [1], [0, 0, 1, 1], [], []>} : vector<32x32xbf16>, vector<32x16xbf16>, vector<32x16xf32> -> vector<32x16xf32>
    %245 = vector.extract_strided_slice %221 {offsets = [0, 16], sizes = [32, 16], strides = [1, 1]} : vector<32x96xf32> to vector<32x16xf32>
    %246 = vector.extract_strided_slice %221 {offsets = [0, 48], sizes = [32, 16], strides = [1, 1]} : vector<32x96xf32> to vector<32x16xf32>
    %247 = vector.extract_strided_slice %221 {offsets = [0, 80], sizes = [32, 16], strides = [1, 1]} : vector<32x96xf32> to vector<32x16xf32>
    %248 = arith.truncf %245 : vector<32x16xf32> to vector<32x16xbf16>
    %249 = arith.truncf %246 : vector<32x16xf32> to vector<32x16xbf16>
    %cst_120 = arith.constant dense<0.000000e+00> : vector<32x32xf32>
    %250 = tpu.matmul %248, %249, %cst_120 {dimension_numbers = #tpu.dot_dimension_numbers<[1], [1], [0], [0], [0, 0, 1, 0], [], []>} : vector<32x16xbf16>, vector<32x16xbf16>, vector<32x32xf32> -> vector<32x32xf32>
    %cst_121 = arith.constant 2.500000e-01 : f32
    %251 = vector.broadcast %cst_121 : f32 to vector<32x32xf32>
    %252 = arith.mulf %250, %251 : vector<32x32xf32>
    %c1_122 = arith.constant 1 : index
    %c0_123 = arith.constant 0 : index
    %c0_124 = arith.constant 0 : index
    %253 = vector.load %arg22[%c1_122, %c0_123, %c0_124] : memref<2x32x32xf32, #tpu.memory_space<vmem>>, vector<1x32x32xf32>
    %254 = vector.shape_cast %253 : vector<1x32x32xf32> to vector<32x32xf32>
    %255 = arith.addf %252, %254 : vector<32x32xf32>
    %cst_125 = arith.constant dense<0xFF800000> : vector<32xf32>
    %256 = vector.multi_reduction <maximumf>, %255, %cst_125 [1] : vector<32x32xf32> to vector<32xf32>
    %257 = vector.shape_cast %256 : vector<32xf32> to vector<32x1xf32>
    %258 = vector.broadcast %257 : vector<32x1xf32> to vector<32x32xf32>
    %259 = arith.subf %255, %258 : vector<32x32xf32>
    %260 = math.exp %259 : vector<32x32xf32>
    %cst_126 = arith.constant dense<0.000000e+00> : vector<32xf32>
    %261 = vector.multi_reduction <add>, %260, %cst_126 [1] : vector<32x32xf32> to vector<32xf32>
    %262 = vector.shape_cast %261 : vector<32xf32> to vector<32x1xf32>
    %263 = vector.broadcast %262 : vector<32x1xf32> to vector<32x32xf32>
    %264 = arith.divf %260, %263 : vector<32x32xf32>
    %265 = arith.truncf %264 : vector<32x32xf32> to vector<32x32xbf16>
    %266 = arith.truncf %247 : vector<32x16xf32> to vector<32x16xbf16>
    %cst_127 = arith.constant dense<0.000000e+00> : vector<32x16xf32>
    %267 = tpu.matmul %265, %266, %cst_127 {dimension_numbers = #tpu.dot_dimension_numbers<[1], [0], [0], [1], [0, 0, 1, 1], [], []>} : vector<32x32xbf16>, vector<32x16xbf16>, vector<32x16xf32> -> vector<32x16xf32>
    %268 = tpu.concatenate %244, %267 in 1 : vector<32x16xf32>, vector<32x16xf32> -> vector<32x32xf32>
    %269 = arith.truncf %268 : vector<32x32xf32> to vector<32x32xbf16>
    %cst_128 = arith.constant dense<0.000000e+00> : vector<32x32xf32>
    %270 = tpu.matmul %269, %190, %cst_128 {dimension_numbers = #tpu.dot_dimension_numbers<[1], [0], [0], [1], [0, 0, 1, 1], [], []>} : vector<32x32xbf16>, vector<32x32xbf16>, vector<32x32xf32> -> vector<32x32xf32>
    %271 = vector.broadcast %191 : vector<1x32xf32> to vector<32x32xf32>
    %272 = arith.addf %270, %271 : vector<32x32xf32>
    %273 = arith.addf %185, %272 : vector<32x32xf32>
    %cst_129 = arith.constant dense<0.000000e+00> : vector<32xf32>
    %274 = vector.multi_reduction <add>, %273, %cst_129 [1] : vector<32x32xf32> to vector<32xf32>
    %275 = vector.shape_cast %274 : vector<32xf32> to vector<32x1xf32>
    %cst_130 = arith.constant 3.200000e+01 : f32
    %276 = vector.broadcast %cst_130 : f32 to vector<32x1xf32>
    %277 = arith.divf %275, %276 : vector<32x1xf32>
    %278 = vector.broadcast %277 : vector<32x1xf32> to vector<32x32xf32>
    %279 = arith.subf %273, %278 : vector<32x32xf32>
    %280 = arith.mulf %279, %279 : vector<32x32xf32>
    %cst_131 = arith.constant dense<0.000000e+00> : vector<32xf32>
    %281 = vector.multi_reduction <add>, %280, %cst_131 [1] : vector<32x32xf32> to vector<32xf32>
    %282 = vector.shape_cast %281 : vector<32xf32> to vector<32x1xf32>
    %cst_132 = arith.constant 3.200000e+01 : f32
    %283 = vector.broadcast %cst_132 : f32 to vector<32x1xf32>
    %284 = arith.divf %282, %283 : vector<32x1xf32>
    %cst_133 = arith.constant 9.99999974E-6 : f32
    %285 = vector.broadcast %cst_133 : f32 to vector<32x1xf32>
    %286 = arith.addf %284, %285 : vector<32x1xf32>
    %287 = math.rsqrt %286 : vector<32x1xf32>
    %288 = vector.broadcast %287 : vector<32x1xf32> to vector<32x32xf32>
    %289 = arith.mulf %279, %288 : vector<32x32xf32>
    %290 = vector.broadcast %192 : vector<1x32xf32> to vector<32x32xf32>
    %291 = arith.mulf %289, %290 : vector<32x32xf32>
    %292 = vector.broadcast %193 : vector<1x32xf32> to vector<32x32xf32>
    %293 = arith.addf %291, %292 : vector<32x32xf32>
    %294 = arith.truncf %293 : vector<32x32xf32> to vector<32x32xbf16>
    %cst_134 = arith.constant dense<0.000000e+00> : vector<32x128xf32>
    %295 = tpu.matmul %294, %194, %cst_134 {dimension_numbers = #tpu.dot_dimension_numbers<[1], [0], [0], [1], [0, 0, 1, 1], [], []>} : vector<32x32xbf16>, vector<32x128xbf16>, vector<32x128xf32> -> vector<32x128xf32>
    %296 = vector.broadcast %195 : vector<1x128xf32> to vector<32x128xf32>
    %297 = arith.addf %295, %296 : vector<32x128xf32>
    %cst_135 = arith.constant 0.707106769 : f32
    %298 = vector.broadcast %cst_135 : f32 to vector<32x128xf32>
    %299 = arith.mulf %297, %298 : vector<32x128xf32>
    %300 = math.absf %299 : vector<32x128xf32>
    %cst_136 = arith.constant 0.327591091 : f32
    %301 = vector.broadcast %cst_136 : f32 to vector<32x128xf32>
    %302 = arith.mulf %301, %300 : vector<32x128xf32>
    %cst_137 = arith.constant 1.000000e+00 : f32
    %303 = vector.broadcast %cst_137 : f32 to vector<32x128xf32>
    %304 = arith.addf %303, %302 : vector<32x128xf32>
    %cst_138 = arith.constant 1.000000e+00 : f32
    %305 = vector.broadcast %cst_138 : f32 to vector<32x128xf32>
    %306 = arith.divf %305, %304 : vector<32x128xf32>
    %cst_139 = arith.constant 1.06140542 : f32
    %307 = vector.broadcast %cst_139 : f32 to vector<32x128xf32>
    %308 = arith.mulf %307, %306 : vector<32x128xf32>
    %cst_140 = arith.constant -1.45315206 : f32
    %309 = vector.broadcast %cst_140 : f32 to vector<32x128xf32>
    %310 = arith.addf %308, %309 : vector<32x128xf32>
    %311 = arith.mulf %310, %306 : vector<32x128xf32>
    %cst_141 = arith.constant 1.42141378 : f32
    %312 = vector.broadcast %cst_141 : f32 to vector<32x128xf32>
    %313 = arith.addf %311, %312 : vector<32x128xf32>
    %314 = arith.mulf %313, %306 : vector<32x128xf32>
    %cst_142 = arith.constant -0.284496725 : f32
    %315 = vector.broadcast %cst_142 : f32 to vector<32x128xf32>
    %316 = arith.addf %314, %315 : vector<32x128xf32>
    %317 = arith.mulf %316, %306 : vector<32x128xf32>
    %cst_143 = arith.constant 0.254829586 : f32
    %318 = vector.broadcast %cst_143 : f32 to vector<32x128xf32>
    %319 = arith.addf %317, %318 : vector<32x128xf32>
    %320 = arith.mulf %319, %306 : vector<32x128xf32>
    %cst_144 = arith.constant 0.000000e+00 : f32
    %321 = vector.broadcast %cst_144 : f32 to vector<32x128xf32>
    %322 = arith.subf %321, %300 : vector<32x128xf32>
    %323 = arith.mulf %322, %300 : vector<32x128xf32>
    %324 = math.exp %323 : vector<32x128xf32>
    %325 = arith.mulf %320, %324 : vector<32x128xf32>
    %cst_145 = arith.constant 1.000000e+00 : f32
    %326 = vector.broadcast %cst_145 : f32 to vector<32x128xf32>
    %327 = arith.subf %326, %325 : vector<32x128xf32>
    %cst_146 = arith.constant 0.000000e+00 : f32
    %328 = vector.broadcast %cst_146 : f32 to vector<32x128xf32>
    %329 = arith.cmpf oge, %299, %328 : vector<32x128xf32>
    %cst_147 = arith.constant 0.000000e+00 : f32
    %330 = vector.broadcast %cst_147 : f32 to vector<32x128xf32>
    %331 = arith.subf %330, %327 : vector<32x128xf32>
    %332 = arith.select %329, %327, %331 : vector<32x128xi1>, vector<32x128xf32>
    %cst_148 = arith.constant 5.000000e-01 : f32
    %333 = vector.broadcast %cst_148 : f32 to vector<32x128xf32>
    %334 = arith.mulf %333, %297 : vector<32x128xf32>
    %cst_149 = arith.constant 1.000000e+00 : f32
    %335 = vector.broadcast %cst_149 : f32 to vector<32x128xf32>
    %336 = arith.addf %335, %332 : vector<32x128xf32>
    %337 = arith.mulf %334, %336 : vector<32x128xf32>
    %338 = arith.truncf %337 : vector<32x128xf32> to vector<32x128xbf16>
    %cst_150 = arith.constant dense<0.000000e+00> : vector<32x32xf32>
    %339 = tpu.matmul %338, %196, %cst_150 {dimension_numbers = #tpu.dot_dimension_numbers<[1], [0], [0], [1], [0, 0, 1, 1], [], []>} : vector<32x128xbf16>, vector<128x32xbf16>, vector<32x32xf32> -> vector<32x32xf32>
    %340 = vector.broadcast %197 : vector<1x32xf32> to vector<32x32xf32>
    %341 = arith.addf %339, %340 : vector<32x32xf32>
    %342 = arith.addf %273, %341 : vector<32x32xf32>
    %c0_151 = arith.constant 0 : index
    %c0_152 = arith.constant 0 : index
    %343 = vector.load %arg31[%c0_151, %c0_152] : memref<1x128xf32, #tpu.memory_space<vmem>>, vector<1x128xf32>
    %c0_153 = arith.constant 0 : index
    %c0_154 = arith.constant 0 : index
    %344 = vector.load %arg32[%c0_153, %c0_154] : memref<1x128xf32, #tpu.memory_space<vmem>>, vector<1x128xf32>
    %c0_155 = arith.constant 0 : index
    %c0_156 = arith.constant 0 : index
    %345 = vector.load %arg33[%c0_155, %c0_156] : memref<128x64xbf16, #tpu.memory_space<vmem>>, vector<128x64xbf16>
    %346 = vector.extract_strided_slice %342 {offsets = [0, 0], sizes = [1, 32], strides = [1, 1]} : vector<32x32xf32> to vector<1x32xf32>
    %347 = vector.extract_strided_slice %342 {offsets = [4, 0], sizes = [1, 32], strides = [1, 1]} : vector<32x32xf32> to vector<1x32xf32>
    %348 = vector.extract_strided_slice %342 {offsets = [1, 0], sizes = [1, 32], strides = [1, 1]} : vector<32x32xf32> to vector<1x32xf32>
    %349 = vector.extract_strided_slice %342 {offsets = [5, 0], sizes = [1, 32], strides = [1, 1]} : vector<32x32xf32> to vector<1x32xf32>
    %350 = tpu.concatenate %346, %347, %348, %349 in 1 : vector<1x32xf32>, vector<1x32xf32>, vector<1x32xf32>, vector<1x32xf32> -> vector<1x128xf32>
    %351 = vector.extract_strided_slice %342 {offsets = [2, 0], sizes = [1, 32], strides = [1, 1]} : vector<32x32xf32> to vector<1x32xf32>
    %352 = vector.extract_strided_slice %342 {offsets = [6, 0], sizes = [1, 32], strides = [1, 1]} : vector<32x32xf32> to vector<1x32xf32>
    %353 = vector.extract_strided_slice %342 {offsets = [3, 0], sizes = [1, 32], strides = [1, 1]} : vector<32x32xf32> to vector<1x32xf32>
    %354 = vector.extract_strided_slice %342 {offsets = [7, 0], sizes = [1, 32], strides = [1, 1]} : vector<32x32xf32> to vector<1x32xf32>
    %355 = tpu.concatenate %351, %352, %353, %354 in 1 : vector<1x32xf32>, vector<1x32xf32>, vector<1x32xf32>, vector<1x32xf32> -> vector<1x128xf32>
    %356 = vector.extract_strided_slice %342 {offsets = [8, 0], sizes = [1, 32], strides = [1, 1]} : vector<32x32xf32> to vector<1x32xf32>
    %357 = vector.extract_strided_slice %342 {offsets = [12, 0], sizes = [1, 32], strides = [1, 1]} : vector<32x32xf32> to vector<1x32xf32>
    %358 = vector.extract_strided_slice %342 {offsets = [9, 0], sizes = [1, 32], strides = [1, 1]} : vector<32x32xf32> to vector<1x32xf32>
    %359 = vector.extract_strided_slice %342 {offsets = [13, 0], sizes = [1, 32], strides = [1, 1]} : vector<32x32xf32> to vector<1x32xf32>
    %360 = tpu.concatenate %356, %357, %358, %359 in 1 : vector<1x32xf32>, vector<1x32xf32>, vector<1x32xf32>, vector<1x32xf32> -> vector<1x128xf32>
    %361 = vector.extract_strided_slice %342 {offsets = [10, 0], sizes = [1, 32], strides = [1, 1]} : vector<32x32xf32> to vector<1x32xf32>
    %362 = vector.extract_strided_slice %342 {offsets = [14, 0], sizes = [1, 32], strides = [1, 1]} : vector<32x32xf32> to vector<1x32xf32>
    %363 = vector.extract_strided_slice %342 {offsets = [11, 0], sizes = [1, 32], strides = [1, 1]} : vector<32x32xf32> to vector<1x32xf32>
    %364 = vector.extract_strided_slice %342 {offsets = [15, 0], sizes = [1, 32], strides = [1, 1]} : vector<32x32xf32> to vector<1x32xf32>
    %365 = tpu.concatenate %361, %362, %363, %364 in 1 : vector<1x32xf32>, vector<1x32xf32>, vector<1x32xf32>, vector<1x32xf32> -> vector<1x128xf32>
    %366 = vector.extract_strided_slice %342 {offsets = [16, 0], sizes = [1, 32], strides = [1, 1]} : vector<32x32xf32> to vector<1x32xf32>
    %367 = vector.extract_strided_slice %342 {offsets = [20, 0], sizes = [1, 32], strides = [1, 1]} : vector<32x32xf32> to vector<1x32xf32>
    %368 = vector.extract_strided_slice %342 {offsets = [17, 0], sizes = [1, 32], strides = [1, 1]} : vector<32x32xf32> to vector<1x32xf32>
    %369 = vector.extract_strided_slice %342 {offsets = [21, 0], sizes = [1, 32], strides = [1, 1]} : vector<32x32xf32> to vector<1x32xf32>
    %370 = tpu.concatenate %366, %367, %368, %369 in 1 : vector<1x32xf32>, vector<1x32xf32>, vector<1x32xf32>, vector<1x32xf32> -> vector<1x128xf32>
    %371 = vector.extract_strided_slice %342 {offsets = [18, 0], sizes = [1, 32], strides = [1, 1]} : vector<32x32xf32> to vector<1x32xf32>
    %372 = vector.extract_strided_slice %342 {offsets = [22, 0], sizes = [1, 32], strides = [1, 1]} : vector<32x32xf32> to vector<1x32xf32>
    %373 = vector.extract_strided_slice %342 {offsets = [19, 0], sizes = [1, 32], strides = [1, 1]} : vector<32x32xf32> to vector<1x32xf32>
    %374 = vector.extract_strided_slice %342 {offsets = [23, 0], sizes = [1, 32], strides = [1, 1]} : vector<32x32xf32> to vector<1x32xf32>
    %375 = tpu.concatenate %371, %372, %373, %374 in 1 : vector<1x32xf32>, vector<1x32xf32>, vector<1x32xf32>, vector<1x32xf32> -> vector<1x128xf32>
    %376 = vector.extract_strided_slice %342 {offsets = [24, 0], sizes = [1, 32], strides = [1, 1]} : vector<32x32xf32> to vector<1x32xf32>
    %377 = vector.extract_strided_slice %342 {offsets = [28, 0], sizes = [1, 32], strides = [1, 1]} : vector<32x32xf32> to vector<1x32xf32>
    %378 = vector.extract_strided_slice %342 {offsets = [25, 0], sizes = [1, 32], strides = [1, 1]} : vector<32x32xf32> to vector<1x32xf32>
    %379 = vector.extract_strided_slice %342 {offsets = [29, 0], sizes = [1, 32], strides = [1, 1]} : vector<32x32xf32> to vector<1x32xf32>
    %380 = tpu.concatenate %376, %377, %378, %379 in 1 : vector<1x32xf32>, vector<1x32xf32>, vector<1x32xf32>, vector<1x32xf32> -> vector<1x128xf32>
    %381 = vector.extract_strided_slice %342 {offsets = [26, 0], sizes = [1, 32], strides = [1, 1]} : vector<32x32xf32> to vector<1x32xf32>
    %382 = vector.extract_strided_slice %342 {offsets = [30, 0], sizes = [1, 32], strides = [1, 1]} : vector<32x32xf32> to vector<1x32xf32>
    %383 = vector.extract_strided_slice %342 {offsets = [27, 0], sizes = [1, 32], strides = [1, 1]} : vector<32x32xf32> to vector<1x32xf32>
    %384 = vector.extract_strided_slice %342 {offsets = [31, 0], sizes = [1, 32], strides = [1, 1]} : vector<32x32xf32> to vector<1x32xf32>
    %385 = tpu.concatenate %381, %382, %383, %384 in 1 : vector<1x32xf32>, vector<1x32xf32>, vector<1x32xf32>, vector<1x32xf32> -> vector<1x128xf32>
    %386 = tpu.concatenate %350, %355, %360, %365, %370, %375, %380, %385 in 0 : vector<1x128xf32>, vector<1x128xf32>, vector<1x128xf32>, vector<1x128xf32>, vector<1x128xf32>, vector<1x128xf32>, vector<1x128xf32>, vector<1x128xf32> -> vector<8x128xf32>
    %cst_157 = arith.constant dense<0.000000e+00> : vector<8xf32>
    %387 = vector.multi_reduction <add>, %386, %cst_157 [1] : vector<8x128xf32> to vector<8xf32>
    %388 = vector.shape_cast %387 : vector<8xf32> to vector<8x1xf32>
    %cst_158 = arith.constant 1.280000e+02 : f32
    %389 = vector.broadcast %cst_158 : f32 to vector<8x1xf32>
    %390 = arith.divf %388, %389 : vector<8x1xf32>
    %391 = vector.broadcast %390 : vector<8x1xf32> to vector<8x128xf32>
    %392 = arith.subf %386, %391 : vector<8x128xf32>
    %393 = arith.mulf %392, %392 : vector<8x128xf32>
    %cst_159 = arith.constant dense<0.000000e+00> : vector<8xf32>
    %394 = vector.multi_reduction <add>, %393, %cst_159 [1] : vector<8x128xf32> to vector<8xf32>
    %395 = vector.shape_cast %394 : vector<8xf32> to vector<8x1xf32>
    %cst_160 = arith.constant 1.280000e+02 : f32
    %396 = vector.broadcast %cst_160 : f32 to vector<8x1xf32>
    %397 = arith.divf %395, %396 : vector<8x1xf32>
    %cst_161 = arith.constant 9.99999974E-6 : f32
    %398 = vector.broadcast %cst_161 : f32 to vector<8x1xf32>
    %399 = arith.addf %397, %398 : vector<8x1xf32>
    %400 = math.rsqrt %399 : vector<8x1xf32>
    %401 = vector.broadcast %400 : vector<8x1xf32> to vector<8x128xf32>
    %402 = arith.mulf %392, %401 : vector<8x128xf32>
    %403 = vector.broadcast %343 : vector<1x128xf32> to vector<8x128xf32>
    %404 = arith.mulf %402, %403 : vector<8x128xf32>
    %405 = vector.broadcast %344 : vector<1x128xf32> to vector<8x128xf32>
    %406 = arith.addf %404, %405 : vector<8x128xf32>
    %407 = arith.truncf %406 : vector<8x128xf32> to vector<8x128xbf16>
    %cst_162 = arith.constant dense<0.000000e+00> : vector<8x64xf32>
    %408 = tpu.matmul %407, %345, %cst_162 {dimension_numbers = #tpu.dot_dimension_numbers<[1], [0], [0], [1], [0, 0, 1, 1], [], []>} : vector<8x128xbf16>, vector<128x64xbf16>, vector<8x64xf32> -> vector<8x64xf32>
    %c0_163 = arith.constant 0 : index
    %c0_164 = arith.constant 0 : index
    %409 = vector.load %arg34[%c0_163, %c0_164] : memref<1x64xf32, #tpu.memory_space<vmem>>, vector<1x64xf32>
    %c0_165 = arith.constant 0 : index
    %c0_166 = arith.constant 0 : index
    %410 = vector.load %arg35[%c0_165, %c0_166] : memref<1x64xf32, #tpu.memory_space<vmem>>, vector<1x64xf32>
    %c0_167 = arith.constant 0 : index
    %c0_168 = arith.constant 0 : index
    %411 = vector.load %arg36[%c0_167, %c0_168] : memref<64x192xbf16, #tpu.memory_space<vmem>>, vector<64x192xbf16>
    %c0_169 = arith.constant 0 : index
    %c0_170 = arith.constant 0 : index
    %412 = vector.load %arg37[%c0_169, %c0_170] : memref<1x192xf32, #tpu.memory_space<vmem>>, vector<1x192xf32>
    %c0_171 = arith.constant 0 : index
    %c0_172 = arith.constant 0 : index
    %413 = vector.load %arg39[%c0_171, %c0_172] : memref<64x64xbf16, #tpu.memory_space<vmem>>, vector<64x64xbf16>
    %c0_173 = arith.constant 0 : index
    %c0_174 = arith.constant 0 : index
    %414 = vector.load %arg40[%c0_173, %c0_174] : memref<1x64xf32, #tpu.memory_space<vmem>>, vector<1x64xf32>
    %c0_175 = arith.constant 0 : index
    %c0_176 = arith.constant 0 : index
    %415 = vector.load %arg41[%c0_175, %c0_176] : memref<1x64xf32, #tpu.memory_space<vmem>>, vector<1x64xf32>
    %c0_177 = arith.constant 0 : index
    %c0_178 = arith.constant 0 : index
    %416 = vector.load %arg42[%c0_177, %c0_178] : memref<1x64xf32, #tpu.memory_space<vmem>>, vector<1x64xf32>
    %c0_179 = arith.constant 0 : index
    %c0_180 = arith.constant 0 : index
    %417 = vector.load %arg43[%c0_179, %c0_180] : memref<64x256xbf16, #tpu.memory_space<vmem>>, vector<64x256xbf16>
    %c0_181 = arith.constant 0 : index
    %c0_182 = arith.constant 0 : index
    %418 = vector.load %arg44[%c0_181, %c0_182] : memref<1x256xf32, #tpu.memory_space<vmem>>, vector<1x256xf32>
    %c0_183 = arith.constant 0 : index
    %c0_184 = arith.constant 0 : index
    %419 = vector.load %arg45[%c0_183, %c0_184] : memref<256x64xbf16, #tpu.memory_space<vmem>>, vector<256x64xbf16>
    %c0_185 = arith.constant 0 : index
    %c0_186 = arith.constant 0 : index
    %420 = vector.load %arg46[%c0_185, %c0_186] : memref<1x64xf32, #tpu.memory_space<vmem>>, vector<1x64xf32>
    %cst_187 = arith.constant dense<0.000000e+00> : vector<8xf32>
    %421 = vector.multi_reduction <add>, %408, %cst_187 [1] : vector<8x64xf32> to vector<8xf32>
    %422 = vector.shape_cast %421 : vector<8xf32> to vector<8x1xf32>
    %cst_188 = arith.constant 6.400000e+01 : f32
    %423 = vector.broadcast %cst_188 : f32 to vector<8x1xf32>
    %424 = arith.divf %422, %423 : vector<8x1xf32>
    %425 = vector.broadcast %424 : vector<8x1xf32> to vector<8x64xf32>
    %426 = arith.subf %408, %425 : vector<8x64xf32>
    %427 = arith.mulf %426, %426 : vector<8x64xf32>
    %cst_189 = arith.constant dense<0.000000e+00> : vector<8xf32>
    %428 = vector.multi_reduction <add>, %427, %cst_189 [1] : vector<8x64xf32> to vector<8xf32>
    %429 = vector.shape_cast %428 : vector<8xf32> to vector<8x1xf32>
    %cst_190 = arith.constant 6.400000e+01 : f32
    %430 = vector.broadcast %cst_190 : f32 to vector<8x1xf32>
    %431 = arith.divf %429, %430 : vector<8x1xf32>
    %cst_191 = arith.constant 9.99999974E-6 : f32
    %432 = vector.broadcast %cst_191 : f32 to vector<8x1xf32>
    %433 = arith.addf %431, %432 : vector<8x1xf32>
    %434 = math.rsqrt %433 : vector<8x1xf32>
    %435 = vector.broadcast %434 : vector<8x1xf32> to vector<8x64xf32>
    %436 = arith.mulf %426, %435 : vector<8x64xf32>
    %437 = vector.broadcast %409 : vector<1x64xf32> to vector<8x64xf32>
    %438 = arith.mulf %436, %437 : vector<8x64xf32>
    %439 = vector.broadcast %410 : vector<1x64xf32> to vector<8x64xf32>
    %440 = arith.addf %438, %439 : vector<8x64xf32>
    %441 = arith.truncf %440 : vector<8x64xf32> to vector<8x64xbf16>
    %cst_192 = arith.constant dense<0.000000e+00> : vector<8x192xf32>
    %442 = tpu.matmul %441, %411, %cst_192 {dimension_numbers = #tpu.dot_dimension_numbers<[1], [0], [0], [1], [0, 0, 1, 1], [], []>} : vector<8x64xbf16>, vector<64x192xbf16>, vector<8x192xf32> -> vector<8x192xf32>
    %443 = vector.broadcast %412 : vector<1x192xf32> to vector<8x192xf32>
    %444 = arith.addf %442, %443 : vector<8x192xf32>
    %445 = vector.extract_strided_slice %444 {offsets = [0, 0], sizes = [8, 16], strides = [1, 1]} : vector<8x192xf32> to vector<8x16xf32>
    %446 = vector.extract_strided_slice %444 {offsets = [0, 64], sizes = [8, 16], strides = [1, 1]} : vector<8x192xf32> to vector<8x16xf32>
    %447 = vector.extract_strided_slice %444 {offsets = [0, 128], sizes = [8, 16], strides = [1, 1]} : vector<8x192xf32> to vector<8x16xf32>
    %448 = arith.truncf %445 : vector<8x16xf32> to vector<8x16xbf16>
    %449 = arith.truncf %446 : vector<8x16xf32> to vector<8x16xbf16>
    %cst_193 = arith.constant dense<0.000000e+00> : vector<8x8xf32>
    %450 = tpu.matmul %448, %449, %cst_193 {dimension_numbers = #tpu.dot_dimension_numbers<[1], [1], [0], [0], [0, 0, 1, 0], [], []>} : vector<8x16xbf16>, vector<8x16xbf16>, vector<8x8xf32> -> vector<8x8xf32>
    %cst_194 = arith.constant 2.500000e-01 : f32
    %451 = vector.broadcast %cst_194 : f32 to vector<8x8xf32>
    %452 = arith.mulf %450, %451 : vector<8x8xf32>
    %c0_195 = arith.constant 0 : index
    %c0_196 = arith.constant 0 : index
    %c0_197 = arith.constant 0 : index
    %453 = vector.load %arg38[%c0_195, %c0_196, %c0_197] : memref<4x8x8xf32, #tpu.memory_space<vmem>>, vector<1x8x8xf32>
    %454 = vector.shape_cast %453 : vector<1x8x8xf32> to vector<8x8xf32>
    %455 = arith.addf %452, %454 : vector<8x8xf32>
    %cst_198 = arith.constant dense<0xFF800000> : vector<8xf32>
    %456 = vector.multi_reduction <maximumf>, %455, %cst_198 [1] : vector<8x8xf32> to vector<8xf32>
    %457 = vector.shape_cast %456 : vector<8xf32> to vector<8x1xf32>
    %458 = vector.broadcast %457 : vector<8x1xf32> to vector<8x8xf32>
    %459 = arith.subf %455, %458 : vector<8x8xf32>
    %460 = math.exp %459 : vector<8x8xf32>
    %cst_199 = arith.constant dense<0.000000e+00> : vector<8xf32>
    %461 = vector.multi_reduction <add>, %460, %cst_199 [1] : vector<8x8xf32> to vector<8xf32>
    %462 = vector.shape_cast %461 : vector<8xf32> to vector<8x1xf32>
    %463 = vector.broadcast %462 : vector<8x1xf32> to vector<8x8xf32>
    %464 = arith.divf %460, %463 : vector<8x8xf32>
    %465 = arith.truncf %464 : vector<8x8xf32> to vector<8x8xbf16>
    %466 = arith.truncf %447 : vector<8x16xf32> to vector<8x16xbf16>
    %cst_200 = arith.constant dense<0.000000e+00> : vector<8x16xf32>
    %467 = tpu.matmul %465, %466, %cst_200 {dimension_numbers = #tpu.dot_dimension_numbers<[1], [0], [0], [1], [0, 0, 1, 1], [], []>} : vector<8x8xbf16>, vector<8x16xbf16>, vector<8x16xf32> -> vector<8x16xf32>
    %468 = vector.extract_strided_slice %444 {offsets = [0, 16], sizes = [8, 16], strides = [1, 1]} : vector<8x192xf32> to vector<8x16xf32>
    %469 = vector.extract_strided_slice %444 {offsets = [0, 80], sizes = [8, 16], strides = [1, 1]} : vector<8x192xf32> to vector<8x16xf32>
    %470 = vector.extract_strided_slice %444 {offsets = [0, 144], sizes = [8, 16], strides = [1, 1]} : vector<8x192xf32> to vector<8x16xf32>
    %471 = arith.truncf %468 : vector<8x16xf32> to vector<8x16xbf16>
    %472 = arith.truncf %469 : vector<8x16xf32> to vector<8x16xbf16>
    %cst_201 = arith.constant dense<0.000000e+00> : vector<8x8xf32>
    %473 = tpu.matmul %471, %472, %cst_201 {dimension_numbers = #tpu.dot_dimension_numbers<[1], [1], [0], [0], [0, 0, 1, 0], [], []>} : vector<8x16xbf16>, vector<8x16xbf16>, vector<8x8xf32> -> vector<8x8xf32>
    %cst_202 = arith.constant 2.500000e-01 : f32
    %474 = vector.broadcast %cst_202 : f32 to vector<8x8xf32>
    %475 = arith.mulf %473, %474 : vector<8x8xf32>
    %c1_203 = arith.constant 1 : index
    %c0_204 = arith.constant 0 : index
    %c0_205 = arith.constant 0 : index
    %476 = vector.load %arg38[%c1_203, %c0_204, %c0_205] : memref<4x8x8xf32, #tpu.memory_space<vmem>>, vector<1x8x8xf32>
    %477 = vector.shape_cast %476 : vector<1x8x8xf32> to vector<8x8xf32>
    %478 = arith.addf %475, %477 : vector<8x8xf32>
    %cst_206 = arith.constant dense<0xFF800000> : vector<8xf32>
    %479 = vector.multi_reduction <maximumf>, %478, %cst_206 [1] : vector<8x8xf32> to vector<8xf32>
    %480 = vector.shape_cast %479 : vector<8xf32> to vector<8x1xf32>
    %481 = vector.broadcast %480 : vector<8x1xf32> to vector<8x8xf32>
    %482 = arith.subf %478, %481 : vector<8x8xf32>
    %483 = math.exp %482 : vector<8x8xf32>
    %cst_207 = arith.constant dense<0.000000e+00> : vector<8xf32>
    %484 = vector.multi_reduction <add>, %483, %cst_207 [1] : vector<8x8xf32> to vector<8xf32>
    %485 = vector.shape_cast %484 : vector<8xf32> to vector<8x1xf32>
    %486 = vector.broadcast %485 : vector<8x1xf32> to vector<8x8xf32>
    %487 = arith.divf %483, %486 : vector<8x8xf32>
    %488 = arith.truncf %487 : vector<8x8xf32> to vector<8x8xbf16>
    %489 = arith.truncf %470 : vector<8x16xf32> to vector<8x16xbf16>
    %cst_208 = arith.constant dense<0.000000e+00> : vector<8x16xf32>
    %490 = tpu.matmul %488, %489, %cst_208 {dimension_numbers = #tpu.dot_dimension_numbers<[1], [0], [0], [1], [0, 0, 1, 1], [], []>} : vector<8x8xbf16>, vector<8x16xbf16>, vector<8x16xf32> -> vector<8x16xf32>
    %491 = vector.extract_strided_slice %444 {offsets = [0, 32], sizes = [8, 16], strides = [1, 1]} : vector<8x192xf32> to vector<8x16xf32>
    %492 = vector.extract_strided_slice %444 {offsets = [0, 96], sizes = [8, 16], strides = [1, 1]} : vector<8x192xf32> to vector<8x16xf32>
    %493 = vector.extract_strided_slice %444 {offsets = [0, 160], sizes = [8, 16], strides = [1, 1]} : vector<8x192xf32> to vector<8x16xf32>
    %494 = arith.truncf %491 : vector<8x16xf32> to vector<8x16xbf16>
    %495 = arith.truncf %492 : vector<8x16xf32> to vector<8x16xbf16>
    %cst_209 = arith.constant dense<0.000000e+00> : vector<8x8xf32>
    %496 = tpu.matmul %494, %495, %cst_209 {dimension_numbers = #tpu.dot_dimension_numbers<[1], [1], [0], [0], [0, 0, 1, 0], [], []>} : vector<8x16xbf16>, vector<8x16xbf16>, vector<8x8xf32> -> vector<8x8xf32>
    %cst_210 = arith.constant 2.500000e-01 : f32
    %497 = vector.broadcast %cst_210 : f32 to vector<8x8xf32>
    %498 = arith.mulf %496, %497 : vector<8x8xf32>
    %c2 = arith.constant 2 : index
    %c0_211 = arith.constant 0 : index
    %c0_212 = arith.constant 0 : index
    %499 = vector.load %arg38[%c2, %c0_211, %c0_212] : memref<4x8x8xf32, #tpu.memory_space<vmem>>, vector<1x8x8xf32>
    %500 = vector.shape_cast %499 : vector<1x8x8xf32> to vector<8x8xf32>
    %501 = arith.addf %498, %500 : vector<8x8xf32>
    %cst_213 = arith.constant dense<0xFF800000> : vector<8xf32>
    %502 = vector.multi_reduction <maximumf>, %501, %cst_213 [1] : vector<8x8xf32> to vector<8xf32>
    %503 = vector.shape_cast %502 : vector<8xf32> to vector<8x1xf32>
    %504 = vector.broadcast %503 : vector<8x1xf32> to vector<8x8xf32>
    %505 = arith.subf %501, %504 : vector<8x8xf32>
    %506 = math.exp %505 : vector<8x8xf32>
    %cst_214 = arith.constant dense<0.000000e+00> : vector<8xf32>
    %507 = vector.multi_reduction <add>, %506, %cst_214 [1] : vector<8x8xf32> to vector<8xf32>
    %508 = vector.shape_cast %507 : vector<8xf32> to vector<8x1xf32>
    %509 = vector.broadcast %508 : vector<8x1xf32> to vector<8x8xf32>
    %510 = arith.divf %506, %509 : vector<8x8xf32>
    %511 = arith.truncf %510 : vector<8x8xf32> to vector<8x8xbf16>
    %512 = arith.truncf %493 : vector<8x16xf32> to vector<8x16xbf16>
    %cst_215 = arith.constant dense<0.000000e+00> : vector<8x16xf32>
    %513 = tpu.matmul %511, %512, %cst_215 {dimension_numbers = #tpu.dot_dimension_numbers<[1], [0], [0], [1], [0, 0, 1, 1], [], []>} : vector<8x8xbf16>, vector<8x16xbf16>, vector<8x16xf32> -> vector<8x16xf32>
    %514 = vector.extract_strided_slice %444 {offsets = [0, 48], sizes = [8, 16], strides = [1, 1]} : vector<8x192xf32> to vector<8x16xf32>
    %515 = vector.extract_strided_slice %444 {offsets = [0, 112], sizes = [8, 16], strides = [1, 1]} : vector<8x192xf32> to vector<8x16xf32>
    %516 = vector.extract_strided_slice %444 {offsets = [0, 176], sizes = [8, 16], strides = [1, 1]} : vector<8x192xf32> to vector<8x16xf32>
    %517 = arith.truncf %514 : vector<8x16xf32> to vector<8x16xbf16>
    %518 = arith.truncf %515 : vector<8x16xf32> to vector<8x16xbf16>
    %cst_216 = arith.constant dense<0.000000e+00> : vector<8x8xf32>
    %519 = tpu.matmul %517, %518, %cst_216 {dimension_numbers = #tpu.dot_dimension_numbers<[1], [1], [0], [0], [0, 0, 1, 0], [], []>} : vector<8x16xbf16>, vector<8x16xbf16>, vector<8x8xf32> -> vector<8x8xf32>
    %cst_217 = arith.constant 2.500000e-01 : f32
    %520 = vector.broadcast %cst_217 : f32 to vector<8x8xf32>
    %521 = arith.mulf %519, %520 : vector<8x8xf32>
    %c3 = arith.constant 3 : index
    %c0_218 = arith.constant 0 : index
    %c0_219 = arith.constant 0 : index
    %522 = vector.load %arg38[%c3, %c0_218, %c0_219] : memref<4x8x8xf32, #tpu.memory_space<vmem>>, vector<1x8x8xf32>
    %523 = vector.shape_cast %522 : vector<1x8x8xf32> to vector<8x8xf32>
    %524 = arith.addf %521, %523 : vector<8x8xf32>
    %cst_220 = arith.constant dense<0xFF800000> : vector<8xf32>
    %525 = vector.multi_reduction <maximumf>, %524, %cst_220 [1] : vector<8x8xf32> to vector<8xf32>
    %526 = vector.shape_cast %525 : vector<8xf32> to vector<8x1xf32>
    %527 = vector.broadcast %526 : vector<8x1xf32> to vector<8x8xf32>
    %528 = arith.subf %524, %527 : vector<8x8xf32>
    %529 = math.exp %528 : vector<8x8xf32>
    %cst_221 = arith.constant dense<0.000000e+00> : vector<8xf32>
    %530 = vector.multi_reduction <add>, %529, %cst_221 [1] : vector<8x8xf32> to vector<8xf32>
    %531 = vector.shape_cast %530 : vector<8xf32> to vector<8x1xf32>
    %532 = vector.broadcast %531 : vector<8x1xf32> to vector<8x8xf32>
    %533 = arith.divf %529, %532 : vector<8x8xf32>
    %534 = arith.truncf %533 : vector<8x8xf32> to vector<8x8xbf16>
    %535 = arith.truncf %516 : vector<8x16xf32> to vector<8x16xbf16>
    %cst_222 = arith.constant dense<0.000000e+00> : vector<8x16xf32>
    %536 = tpu.matmul %534, %535, %cst_222 {dimension_numbers = #tpu.dot_dimension_numbers<[1], [0], [0], [1], [0, 0, 1, 1], [], []>} : vector<8x8xbf16>, vector<8x16xbf16>, vector<8x16xf32> -> vector<8x16xf32>
    %537 = tpu.concatenate %467, %490, %513, %536 in 1 : vector<8x16xf32>, vector<8x16xf32>, vector<8x16xf32>, vector<8x16xf32> -> vector<8x64xf32>
    %538 = arith.truncf %537 : vector<8x64xf32> to vector<8x64xbf16>
    %cst_223 = arith.constant dense<0.000000e+00> : vector<8x64xf32>
    %539 = tpu.matmul %538, %413, %cst_223 {dimension_numbers = #tpu.dot_dimension_numbers<[1], [0], [0], [1], [0, 0, 1, 1], [], []>} : vector<8x64xbf16>, vector<64x64xbf16>, vector<8x64xf32> -> vector<8x64xf32>
    %540 = vector.broadcast %414 : vector<1x64xf32> to vector<8x64xf32>
    %541 = arith.addf %539, %540 : vector<8x64xf32>
    %542 = arith.addf %408, %541 : vector<8x64xf32>
    %cst_224 = arith.constant dense<0.000000e+00> : vector<8xf32>
    %543 = vector.multi_reduction <add>, %542, %cst_224 [1] : vector<8x64xf32> to vector<8xf32>
    %544 = vector.shape_cast %543 : vector<8xf32> to vector<8x1xf32>
    %cst_225 = arith.constant 6.400000e+01 : f32
    %545 = vector.broadcast %cst_225 : f32 to vector<8x1xf32>
    %546 = arith.divf %544, %545 : vector<8x1xf32>
    %547 = vector.broadcast %546 : vector<8x1xf32> to vector<8x64xf32>
    %548 = arith.subf %542, %547 : vector<8x64xf32>
    %549 = arith.mulf %548, %548 : vector<8x64xf32>
    %cst_226 = arith.constant dense<0.000000e+00> : vector<8xf32>
    %550 = vector.multi_reduction <add>, %549, %cst_226 [1] : vector<8x64xf32> to vector<8xf32>
    %551 = vector.shape_cast %550 : vector<8xf32> to vector<8x1xf32>
    %cst_227 = arith.constant 6.400000e+01 : f32
    %552 = vector.broadcast %cst_227 : f32 to vector<8x1xf32>
    %553 = arith.divf %551, %552 : vector<8x1xf32>
    %cst_228 = arith.constant 9.99999974E-6 : f32
    %554 = vector.broadcast %cst_228 : f32 to vector<8x1xf32>
    %555 = arith.addf %553, %554 : vector<8x1xf32>
    %556 = math.rsqrt %555 : vector<8x1xf32>
    %557 = vector.broadcast %556 : vector<8x1xf32> to vector<8x64xf32>
    %558 = arith.mulf %548, %557 : vector<8x64xf32>
    %559 = vector.broadcast %415 : vector<1x64xf32> to vector<8x64xf32>
    %560 = arith.mulf %558, %559 : vector<8x64xf32>
    %561 = vector.broadcast %416 : vector<1x64xf32> to vector<8x64xf32>
    %562 = arith.addf %560, %561 : vector<8x64xf32>
    %563 = arith.truncf %562 : vector<8x64xf32> to vector<8x64xbf16>
    %cst_229 = arith.constant dense<0.000000e+00> : vector<8x256xf32>
    %564 = tpu.matmul %563, %417, %cst_229 {dimension_numbers = #tpu.dot_dimension_numbers<[1], [0], [0], [1], [0, 0, 1, 1], [], []>} : vector<8x64xbf16>, vector<64x256xbf16>, vector<8x256xf32> -> vector<8x256xf32>
    %565 = vector.broadcast %418 : vector<1x256xf32> to vector<8x256xf32>
    %566 = arith.addf %564, %565 : vector<8x256xf32>
    %cst_230 = arith.constant 0.707106769 : f32
    %567 = vector.broadcast %cst_230 : f32 to vector<8x256xf32>
    %568 = arith.mulf %566, %567 : vector<8x256xf32>
    %569 = math.absf %568 : vector<8x256xf32>
    %cst_231 = arith.constant 0.327591091 : f32
    %570 = vector.broadcast %cst_231 : f32 to vector<8x256xf32>
    %571 = arith.mulf %570, %569 : vector<8x256xf32>
    %cst_232 = arith.constant 1.000000e+00 : f32
    %572 = vector.broadcast %cst_232 : f32 to vector<8x256xf32>
    %573 = arith.addf %572, %571 : vector<8x256xf32>
    %cst_233 = arith.constant 1.000000e+00 : f32
    %574 = vector.broadcast %cst_233 : f32 to vector<8x256xf32>
    %575 = arith.divf %574, %573 : vector<8x256xf32>
    %cst_234 = arith.constant 1.06140542 : f32
    %576 = vector.broadcast %cst_234 : f32 to vector<8x256xf32>
    %577 = arith.mulf %576, %575 : vector<8x256xf32>
    %cst_235 = arith.constant -1.45315206 : f32
    %578 = vector.broadcast %cst_235 : f32 to vector<8x256xf32>
    %579 = arith.addf %577, %578 : vector<8x256xf32>
    %580 = arith.mulf %579, %575 : vector<8x256xf32>
    %cst_236 = arith.constant 1.42141378 : f32
    %581 = vector.broadcast %cst_236 : f32 to vector<8x256xf32>
    %582 = arith.addf %580, %581 : vector<8x256xf32>
    %583 = arith.mulf %582, %575 : vector<8x256xf32>
    %cst_237 = arith.constant -0.284496725 : f32
    %584 = vector.broadcast %cst_237 : f32 to vector<8x256xf32>
    %585 = arith.addf %583, %584 : vector<8x256xf32>
    %586 = arith.mulf %585, %575 : vector<8x256xf32>
    %cst_238 = arith.constant 0.254829586 : f32
    %587 = vector.broadcast %cst_238 : f32 to vector<8x256xf32>
    %588 = arith.addf %586, %587 : vector<8x256xf32>
    %589 = arith.mulf %588, %575 : vector<8x256xf32>
    %cst_239 = arith.constant 0.000000e+00 : f32
    %590 = vector.broadcast %cst_239 : f32 to vector<8x256xf32>
    %591 = arith.subf %590, %569 : vector<8x256xf32>
    %592 = arith.mulf %591, %569 : vector<8x256xf32>
    %593 = math.exp %592 : vector<8x256xf32>
    %594 = arith.mulf %589, %593 : vector<8x256xf32>
    %cst_240 = arith.constant 1.000000e+00 : f32
    %595 = vector.broadcast %cst_240 : f32 to vector<8x256xf32>
    %596 = arith.subf %595, %594 : vector<8x256xf32>
    %cst_241 = arith.constant 0.000000e+00 : f32
    %597 = vector.broadcast %cst_241 : f32 to vector<8x256xf32>
    %598 = arith.cmpf oge, %568, %597 : vector<8x256xf32>
    %cst_242 = arith.constant 0.000000e+00 : f32
    %599 = vector.broadcast %cst_242 : f32 to vector<8x256xf32>
    %600 = arith.subf %599, %596 : vector<8x256xf32>
    %601 = arith.select %598, %596, %600 : vector<8x256xi1>, vector<8x256xf32>
    %cst_243 = arith.constant 5.000000e-01 : f32
    %602 = vector.broadcast %cst_243 : f32 to vector<8x256xf32>
    %603 = arith.mulf %602, %566 : vector<8x256xf32>
    %cst_244 = arith.constant 1.000000e+00 : f32
    %604 = vector.broadcast %cst_244 : f32 to vector<8x256xf32>
    %605 = arith.addf %604, %601 : vector<8x256xf32>
    %606 = arith.mulf %603, %605 : vector<8x256xf32>
    %607 = arith.truncf %606 : vector<8x256xf32> to vector<8x256xbf16>
    %cst_245 = arith.constant dense<0.000000e+00> : vector<8x64xf32>
    %608 = tpu.matmul %607, %419, %cst_245 {dimension_numbers = #tpu.dot_dimension_numbers<[1], [0], [0], [1], [0, 0, 1, 1], [], []>} : vector<8x256xbf16>, vector<256x64xbf16>, vector<8x64xf32> -> vector<8x64xf32>
    %609 = vector.broadcast %420 : vector<1x64xf32> to vector<8x64xf32>
    %610 = arith.addf %608, %609 : vector<8x64xf32>
    %611 = arith.addf %542, %610 : vector<8x64xf32>
    %c0_246 = arith.constant 0 : index
    %c0_247 = arith.constant 0 : index
    %612 = vector.load %arg47[%c0_246, %c0_247] : memref<1x64xf32, #tpu.memory_space<vmem>>, vector<1x64xf32>
    %c0_248 = arith.constant 0 : index
    %c0_249 = arith.constant 0 : index
    %613 = vector.load %arg48[%c0_248, %c0_249] : memref<1x64xf32, #tpu.memory_space<vmem>>, vector<1x64xf32>
    %c0_250 = arith.constant 0 : index
    %c0_251 = arith.constant 0 : index
    %614 = vector.load %arg49[%c0_250, %c0_251] : memref<64x192xbf16, #tpu.memory_space<vmem>>, vector<64x192xbf16>
    %c0_252 = arith.constant 0 : index
    %c0_253 = arith.constant 0 : index
    %615 = vector.load %arg50[%c0_252, %c0_253] : memref<1x192xf32, #tpu.memory_space<vmem>>, vector<1x192xf32>
    %c0_254 = arith.constant 0 : index
    %c0_255 = arith.constant 0 : index
    %616 = vector.load %arg52[%c0_254, %c0_255] : memref<64x64xbf16, #tpu.memory_space<vmem>>, vector<64x64xbf16>
    %c0_256 = arith.constant 0 : index
    %c0_257 = arith.constant 0 : index
    %617 = vector.load %arg53[%c0_256, %c0_257] : memref<1x64xf32, #tpu.memory_space<vmem>>, vector<1x64xf32>
    %c0_258 = arith.constant 0 : index
    %c0_259 = arith.constant 0 : index
    %618 = vector.load %arg54[%c0_258, %c0_259] : memref<1x64xf32, #tpu.memory_space<vmem>>, vector<1x64xf32>
    %c0_260 = arith.constant 0 : index
    %c0_261 = arith.constant 0 : index
    %619 = vector.load %arg55[%c0_260, %c0_261] : memref<1x64xf32, #tpu.memory_space<vmem>>, vector<1x64xf32>
    %c0_262 = arith.constant 0 : index
    %c0_263 = arith.constant 0 : index
    %620 = vector.load %arg56[%c0_262, %c0_263] : memref<64x256xbf16, #tpu.memory_space<vmem>>, vector<64x256xbf16>
    %c0_264 = arith.constant 0 : index
    %c0_265 = arith.constant 0 : index
    %621 = vector.load %arg57[%c0_264, %c0_265] : memref<1x256xf32, #tpu.memory_space<vmem>>, vector<1x256xf32>
    %c0_266 = arith.constant 0 : index
    %c0_267 = arith.constant 0 : index
    %622 = vector.load %arg58[%c0_266, %c0_267] : memref<256x64xbf16, #tpu.memory_space<vmem>>, vector<256x64xbf16>
    %c0_268 = arith.constant 0 : index
    %c0_269 = arith.constant 0 : index
    %623 = vector.load %arg59[%c0_268, %c0_269] : memref<1x64xf32, #tpu.memory_space<vmem>>, vector<1x64xf32>
    %cst_270 = arith.constant dense<0.000000e+00> : vector<8xf32>
    %624 = vector.multi_reduction <add>, %611, %cst_270 [1] : vector<8x64xf32> to vector<8xf32>
    %625 = vector.shape_cast %624 : vector<8xf32> to vector<8x1xf32>
    %cst_271 = arith.constant 6.400000e+01 : f32
    %626 = vector.broadcast %cst_271 : f32 to vector<8x1xf32>
    %627 = arith.divf %625, %626 : vector<8x1xf32>
    %628 = vector.broadcast %627 : vector<8x1xf32> to vector<8x64xf32>
    %629 = arith.subf %611, %628 : vector<8x64xf32>
    %630 = arith.mulf %629, %629 : vector<8x64xf32>
    %cst_272 = arith.constant dense<0.000000e+00> : vector<8xf32>
    %631 = vector.multi_reduction <add>, %630, %cst_272 [1] : vector<8x64xf32> to vector<8xf32>
    %632 = vector.shape_cast %631 : vector<8xf32> to vector<8x1xf32>
    %cst_273 = arith.constant 6.400000e+01 : f32
    %633 = vector.broadcast %cst_273 : f32 to vector<8x1xf32>
    %634 = arith.divf %632, %633 : vector<8x1xf32>
    %cst_274 = arith.constant 9.99999974E-6 : f32
    %635 = vector.broadcast %cst_274 : f32 to vector<8x1xf32>
    %636 = arith.addf %634, %635 : vector<8x1xf32>
    %637 = math.rsqrt %636 : vector<8x1xf32>
    %638 = vector.broadcast %637 : vector<8x1xf32> to vector<8x64xf32>
    %639 = arith.mulf %629, %638 : vector<8x64xf32>
    %640 = vector.broadcast %612 : vector<1x64xf32> to vector<8x64xf32>
    %641 = arith.mulf %639, %640 : vector<8x64xf32>
    %642 = vector.broadcast %613 : vector<1x64xf32> to vector<8x64xf32>
    %643 = arith.addf %641, %642 : vector<8x64xf32>
    %644 = arith.truncf %643 : vector<8x64xf32> to vector<8x64xbf16>
    %cst_275 = arith.constant dense<0.000000e+00> : vector<8x192xf32>
    %645 = tpu.matmul %644, %614, %cst_275 {dimension_numbers = #tpu.dot_dimension_numbers<[1], [0], [0], [1], [0, 0, 1, 1], [], []>} : vector<8x64xbf16>, vector<64x192xbf16>, vector<8x192xf32> -> vector<8x192xf32>
    %646 = vector.broadcast %615 : vector<1x192xf32> to vector<8x192xf32>
    %647 = arith.addf %645, %646 : vector<8x192xf32>
    %648 = vector.extract_strided_slice %647 {offsets = [0, 0], sizes = [8, 16], strides = [1, 1]} : vector<8x192xf32> to vector<8x16xf32>
    %649 = vector.extract_strided_slice %647 {offsets = [0, 64], sizes = [8, 16], strides = [1, 1]} : vector<8x192xf32> to vector<8x16xf32>
    %650 = vector.extract_strided_slice %647 {offsets = [0, 128], sizes = [8, 16], strides = [1, 1]} : vector<8x192xf32> to vector<8x16xf32>
    %651 = arith.truncf %648 : vector<8x16xf32> to vector<8x16xbf16>
    %652 = arith.truncf %649 : vector<8x16xf32> to vector<8x16xbf16>
    %cst_276 = arith.constant dense<0.000000e+00> : vector<8x8xf32>
    %653 = tpu.matmul %651, %652, %cst_276 {dimension_numbers = #tpu.dot_dimension_numbers<[1], [1], [0], [0], [0, 0, 1, 0], [], []>} : vector<8x16xbf16>, vector<8x16xbf16>, vector<8x8xf32> -> vector<8x8xf32>
    %cst_277 = arith.constant 2.500000e-01 : f32
    %654 = vector.broadcast %cst_277 : f32 to vector<8x8xf32>
    %655 = arith.mulf %653, %654 : vector<8x8xf32>
    %c0_278 = arith.constant 0 : index
    %c0_279 = arith.constant 0 : index
    %c0_280 = arith.constant 0 : index
    %656 = vector.load %arg51[%c0_278, %c0_279, %c0_280] : memref<4x8x8xf32, #tpu.memory_space<vmem>>, vector<1x8x8xf32>
    %657 = vector.shape_cast %656 : vector<1x8x8xf32> to vector<8x8xf32>
    %658 = arith.addf %655, %657 : vector<8x8xf32>
    %cst_281 = arith.constant dense<0xFF800000> : vector<8xf32>
    %659 = vector.multi_reduction <maximumf>, %658, %cst_281 [1] : vector<8x8xf32> to vector<8xf32>
    %660 = vector.shape_cast %659 : vector<8xf32> to vector<8x1xf32>
    %661 = vector.broadcast %660 : vector<8x1xf32> to vector<8x8xf32>
    %662 = arith.subf %658, %661 : vector<8x8xf32>
    %663 = math.exp %662 : vector<8x8xf32>
    %cst_282 = arith.constant dense<0.000000e+00> : vector<8xf32>
    %664 = vector.multi_reduction <add>, %663, %cst_282 [1] : vector<8x8xf32> to vector<8xf32>
    %665 = vector.shape_cast %664 : vector<8xf32> to vector<8x1xf32>
    %666 = vector.broadcast %665 : vector<8x1xf32> to vector<8x8xf32>
    %667 = arith.divf %663, %666 : vector<8x8xf32>
    %668 = arith.truncf %667 : vector<8x8xf32> to vector<8x8xbf16>
    %669 = arith.truncf %650 : vector<8x16xf32> to vector<8x16xbf16>
    %cst_283 = arith.constant dense<0.000000e+00> : vector<8x16xf32>
    %670 = tpu.matmul %668, %669, %cst_283 {dimension_numbers = #tpu.dot_dimension_numbers<[1], [0], [0], [1], [0, 0, 1, 1], [], []>} : vector<8x8xbf16>, vector<8x16xbf16>, vector<8x16xf32> -> vector<8x16xf32>
    %671 = vector.extract_strided_slice %647 {offsets = [0, 16], sizes = [8, 16], strides = [1, 1]} : vector<8x192xf32> to vector<8x16xf32>
    %672 = vector.extract_strided_slice %647 {offsets = [0, 80], sizes = [8, 16], strides = [1, 1]} : vector<8x192xf32> to vector<8x16xf32>
    %673 = vector.extract_strided_slice %647 {offsets = [0, 144], sizes = [8, 16], strides = [1, 1]} : vector<8x192xf32> to vector<8x16xf32>
    %674 = arith.truncf %671 : vector<8x16xf32> to vector<8x16xbf16>
    %675 = arith.truncf %672 : vector<8x16xf32> to vector<8x16xbf16>
    %cst_284 = arith.constant dense<0.000000e+00> : vector<8x8xf32>
    %676 = tpu.matmul %674, %675, %cst_284 {dimension_numbers = #tpu.dot_dimension_numbers<[1], [1], [0], [0], [0, 0, 1, 0], [], []>} : vector<8x16xbf16>, vector<8x16xbf16>, vector<8x8xf32> -> vector<8x8xf32>
    %cst_285 = arith.constant 2.500000e-01 : f32
    %677 = vector.broadcast %cst_285 : f32 to vector<8x8xf32>
    %678 = arith.mulf %676, %677 : vector<8x8xf32>
    %c1_286 = arith.constant 1 : index
    %c0_287 = arith.constant 0 : index
    %c0_288 = arith.constant 0 : index
    %679 = vector.load %arg51[%c1_286, %c0_287, %c0_288] : memref<4x8x8xf32, #tpu.memory_space<vmem>>, vector<1x8x8xf32>
    %680 = vector.shape_cast %679 : vector<1x8x8xf32> to vector<8x8xf32>
    %681 = arith.addf %678, %680 : vector<8x8xf32>
    %cst_289 = arith.constant dense<0xFF800000> : vector<8xf32>
    %682 = vector.multi_reduction <maximumf>, %681, %cst_289 [1] : vector<8x8xf32> to vector<8xf32>
    %683 = vector.shape_cast %682 : vector<8xf32> to vector<8x1xf32>
    %684 = vector.broadcast %683 : vector<8x1xf32> to vector<8x8xf32>
    %685 = arith.subf %681, %684 : vector<8x8xf32>
    %686 = math.exp %685 : vector<8x8xf32>
    %cst_290 = arith.constant dense<0.000000e+00> : vector<8xf32>
    %687 = vector.multi_reduction <add>, %686, %cst_290 [1] : vector<8x8xf32> to vector<8xf32>
    %688 = vector.shape_cast %687 : vector<8xf32> to vector<8x1xf32>
    %689 = vector.broadcast %688 : vector<8x1xf32> to vector<8x8xf32>
    %690 = arith.divf %686, %689 : vector<8x8xf32>
    %691 = arith.truncf %690 : vector<8x8xf32> to vector<8x8xbf16>
    %692 = arith.truncf %673 : vector<8x16xf32> to vector<8x16xbf16>
    %cst_291 = arith.constant dense<0.000000e+00> : vector<8x16xf32>
    %693 = tpu.matmul %691, %692, %cst_291 {dimension_numbers = #tpu.dot_dimension_numbers<[1], [0], [0], [1], [0, 0, 1, 1], [], []>} : vector<8x8xbf16>, vector<8x16xbf16>, vector<8x16xf32> -> vector<8x16xf32>
    %694 = vector.extract_strided_slice %647 {offsets = [0, 32], sizes = [8, 16], strides = [1, 1]} : vector<8x192xf32> to vector<8x16xf32>
    %695 = vector.extract_strided_slice %647 {offsets = [0, 96], sizes = [8, 16], strides = [1, 1]} : vector<8x192xf32> to vector<8x16xf32>
    %696 = vector.extract_strided_slice %647 {offsets = [0, 160], sizes = [8, 16], strides = [1, 1]} : vector<8x192xf32> to vector<8x16xf32>
    %697 = arith.truncf %694 : vector<8x16xf32> to vector<8x16xbf16>
    %698 = arith.truncf %695 : vector<8x16xf32> to vector<8x16xbf16>
    %cst_292 = arith.constant dense<0.000000e+00> : vector<8x8xf32>
    %699 = tpu.matmul %697, %698, %cst_292 {dimension_numbers = #tpu.dot_dimension_numbers<[1], [1], [0], [0], [0, 0, 1, 0], [], []>} : vector<8x16xbf16>, vector<8x16xbf16>, vector<8x8xf32> -> vector<8x8xf32>
    %cst_293 = arith.constant 2.500000e-01 : f32
    %700 = vector.broadcast %cst_293 : f32 to vector<8x8xf32>
    %701 = arith.mulf %699, %700 : vector<8x8xf32>
    %c2_294 = arith.constant 2 : index
    %c0_295 = arith.constant 0 : index
    %c0_296 = arith.constant 0 : index
    %702 = vector.load %arg51[%c2_294, %c0_295, %c0_296] : memref<4x8x8xf32, #tpu.memory_space<vmem>>, vector<1x8x8xf32>
    %703 = vector.shape_cast %702 : vector<1x8x8xf32> to vector<8x8xf32>
    %704 = arith.addf %701, %703 : vector<8x8xf32>
    %cst_297 = arith.constant dense<0xFF800000> : vector<8xf32>
    %705 = vector.multi_reduction <maximumf>, %704, %cst_297 [1] : vector<8x8xf32> to vector<8xf32>
    %706 = vector.shape_cast %705 : vector<8xf32> to vector<8x1xf32>
    %707 = vector.broadcast %706 : vector<8x1xf32> to vector<8x8xf32>
    %708 = arith.subf %704, %707 : vector<8x8xf32>
    %709 = math.exp %708 : vector<8x8xf32>
    %cst_298 = arith.constant dense<0.000000e+00> : vector<8xf32>
    %710 = vector.multi_reduction <add>, %709, %cst_298 [1] : vector<8x8xf32> to vector<8xf32>
    %711 = vector.shape_cast %710 : vector<8xf32> to vector<8x1xf32>
    %712 = vector.broadcast %711 : vector<8x1xf32> to vector<8x8xf32>
    %713 = arith.divf %709, %712 : vector<8x8xf32>
    %714 = arith.truncf %713 : vector<8x8xf32> to vector<8x8xbf16>
    %715 = arith.truncf %696 : vector<8x16xf32> to vector<8x16xbf16>
    %cst_299 = arith.constant dense<0.000000e+00> : vector<8x16xf32>
    %716 = tpu.matmul %714, %715, %cst_299 {dimension_numbers = #tpu.dot_dimension_numbers<[1], [0], [0], [1], [0, 0, 1, 1], [], []>} : vector<8x8xbf16>, vector<8x16xbf16>, vector<8x16xf32> -> vector<8x16xf32>
    %717 = vector.extract_strided_slice %647 {offsets = [0, 48], sizes = [8, 16], strides = [1, 1]} : vector<8x192xf32> to vector<8x16xf32>
    %718 = vector.extract_strided_slice %647 {offsets = [0, 112], sizes = [8, 16], strides = [1, 1]} : vector<8x192xf32> to vector<8x16xf32>
    %719 = vector.extract_strided_slice %647 {offsets = [0, 176], sizes = [8, 16], strides = [1, 1]} : vector<8x192xf32> to vector<8x16xf32>
    %720 = arith.truncf %717 : vector<8x16xf32> to vector<8x16xbf16>
    %721 = arith.truncf %718 : vector<8x16xf32> to vector<8x16xbf16>
    %cst_300 = arith.constant dense<0.000000e+00> : vector<8x8xf32>
    %722 = tpu.matmul %720, %721, %cst_300 {dimension_numbers = #tpu.dot_dimension_numbers<[1], [1], [0], [0], [0, 0, 1, 0], [], []>} : vector<8x16xbf16>, vector<8x16xbf16>, vector<8x8xf32> -> vector<8x8xf32>
    %cst_301 = arith.constant 2.500000e-01 : f32
    %723 = vector.broadcast %cst_301 : f32 to vector<8x8xf32>
    %724 = arith.mulf %722, %723 : vector<8x8xf32>
    %c3_302 = arith.constant 3 : index
    %c0_303 = arith.constant 0 : index
    %c0_304 = arith.constant 0 : index
    %725 = vector.load %arg51[%c3_302, %c0_303, %c0_304] : memref<4x8x8xf32, #tpu.memory_space<vmem>>, vector<1x8x8xf32>
    %726 = vector.shape_cast %725 : vector<1x8x8xf32> to vector<8x8xf32>
    %727 = arith.addf %724, %726 : vector<8x8xf32>
    %cst_305 = arith.constant dense<0xFF800000> : vector<8xf32>
    %728 = vector.multi_reduction <maximumf>, %727, %cst_305 [1] : vector<8x8xf32> to vector<8xf32>
    %729 = vector.shape_cast %728 : vector<8xf32> to vector<8x1xf32>
    %730 = vector.broadcast %729 : vector<8x1xf32> to vector<8x8xf32>
    %731 = arith.subf %727, %730 : vector<8x8xf32>
    %732 = math.exp %731 : vector<8x8xf32>
    %cst_306 = arith.constant dense<0.000000e+00> : vector<8xf32>
    %733 = vector.multi_reduction <add>, %732, %cst_306 [1] : vector<8x8xf32> to vector<8xf32>
    %734 = vector.shape_cast %733 : vector<8xf32> to vector<8x1xf32>
    %735 = vector.broadcast %734 : vector<8x1xf32> to vector<8x8xf32>
    %736 = arith.divf %732, %735 : vector<8x8xf32>
    %737 = arith.truncf %736 : vector<8x8xf32> to vector<8x8xbf16>
    %738 = arith.truncf %719 : vector<8x16xf32> to vector<8x16xbf16>
    %cst_307 = arith.constant dense<0.000000e+00> : vector<8x16xf32>
    %739 = tpu.matmul %737, %738, %cst_307 {dimension_numbers = #tpu.dot_dimension_numbers<[1], [0], [0], [1], [0, 0, 1, 1], [], []>} : vector<8x8xbf16>, vector<8x16xbf16>, vector<8x16xf32> -> vector<8x16xf32>
    %740 = tpu.concatenate %670, %693, %716, %739 in 1 : vector<8x16xf32>, vector<8x16xf32>, vector<8x16xf32>, vector<8x16xf32> -> vector<8x64xf32>
    %741 = arith.truncf %740 : vector<8x64xf32> to vector<8x64xbf16>
    %cst_308 = arith.constant dense<0.000000e+00> : vector<8x64xf32>
    %742 = tpu.matmul %741, %616, %cst_308 {dimension_numbers = #tpu.dot_dimension_numbers<[1], [0], [0], [1], [0, 0, 1, 1], [], []>} : vector<8x64xbf16>, vector<64x64xbf16>, vector<8x64xf32> -> vector<8x64xf32>
    %743 = vector.broadcast %617 : vector<1x64xf32> to vector<8x64xf32>
    %744 = arith.addf %742, %743 : vector<8x64xf32>
    %745 = arith.addf %611, %744 : vector<8x64xf32>
    %cst_309 = arith.constant dense<0.000000e+00> : vector<8xf32>
    %746 = vector.multi_reduction <add>, %745, %cst_309 [1] : vector<8x64xf32> to vector<8xf32>
    %747 = vector.shape_cast %746 : vector<8xf32> to vector<8x1xf32>
    %cst_310 = arith.constant 6.400000e+01 : f32
    %748 = vector.broadcast %cst_310 : f32 to vector<8x1xf32>
    %749 = arith.divf %747, %748 : vector<8x1xf32>
    %750 = vector.broadcast %749 : vector<8x1xf32> to vector<8x64xf32>
    %751 = arith.subf %745, %750 : vector<8x64xf32>
    %752 = arith.mulf %751, %751 : vector<8x64xf32>
    %cst_311 = arith.constant dense<0.000000e+00> : vector<8xf32>
    %753 = vector.multi_reduction <add>, %752, %cst_311 [1] : vector<8x64xf32> to vector<8xf32>
    %754 = vector.shape_cast %753 : vector<8xf32> to vector<8x1xf32>
    %cst_312 = arith.constant 6.400000e+01 : f32
    %755 = vector.broadcast %cst_312 : f32 to vector<8x1xf32>
    %756 = arith.divf %754, %755 : vector<8x1xf32>
    %cst_313 = arith.constant 9.99999974E-6 : f32
    %757 = vector.broadcast %cst_313 : f32 to vector<8x1xf32>
    %758 = arith.addf %756, %757 : vector<8x1xf32>
    %759 = math.rsqrt %758 : vector<8x1xf32>
    %760 = vector.broadcast %759 : vector<8x1xf32> to vector<8x64xf32>
    %761 = arith.mulf %751, %760 : vector<8x64xf32>
    %762 = vector.broadcast %618 : vector<1x64xf32> to vector<8x64xf32>
    %763 = arith.mulf %761, %762 : vector<8x64xf32>
    %764 = vector.broadcast %619 : vector<1x64xf32> to vector<8x64xf32>
    %765 = arith.addf %763, %764 : vector<8x64xf32>
    %766 = arith.truncf %765 : vector<8x64xf32> to vector<8x64xbf16>
    %cst_314 = arith.constant dense<0.000000e+00> : vector<8x256xf32>
    %767 = tpu.matmul %766, %620, %cst_314 {dimension_numbers = #tpu.dot_dimension_numbers<[1], [0], [0], [1], [0, 0, 1, 1], [], []>} : vector<8x64xbf16>, vector<64x256xbf16>, vector<8x256xf32> -> vector<8x256xf32>
    %768 = vector.broadcast %621 : vector<1x256xf32> to vector<8x256xf32>
    %769 = arith.addf %767, %768 : vector<8x256xf32>
    %cst_315 = arith.constant 0.707106769 : f32
    %770 = vector.broadcast %cst_315 : f32 to vector<8x256xf32>
    %771 = arith.mulf %769, %770 : vector<8x256xf32>
    %772 = math.absf %771 : vector<8x256xf32>
    %cst_316 = arith.constant 0.327591091 : f32
    %773 = vector.broadcast %cst_316 : f32 to vector<8x256xf32>
    %774 = arith.mulf %773, %772 : vector<8x256xf32>
    %cst_317 = arith.constant 1.000000e+00 : f32
    %775 = vector.broadcast %cst_317 : f32 to vector<8x256xf32>
    %776 = arith.addf %775, %774 : vector<8x256xf32>
    %cst_318 = arith.constant 1.000000e+00 : f32
    %777 = vector.broadcast %cst_318 : f32 to vector<8x256xf32>
    %778 = arith.divf %777, %776 : vector<8x256xf32>
    %cst_319 = arith.constant 1.06140542 : f32
    %779 = vector.broadcast %cst_319 : f32 to vector<8x256xf32>
    %780 = arith.mulf %779, %778 : vector<8x256xf32>
    %cst_320 = arith.constant -1.45315206 : f32
    %781 = vector.broadcast %cst_320 : f32 to vector<8x256xf32>
    %782 = arith.addf %780, %781 : vector<8x256xf32>
    %783 = arith.mulf %782, %778 : vector<8x256xf32>
    %cst_321 = arith.constant 1.42141378 : f32
    %784 = vector.broadcast %cst_321 : f32 to vector<8x256xf32>
    %785 = arith.addf %783, %784 : vector<8x256xf32>
    %786 = arith.mulf %785, %778 : vector<8x256xf32>
    %cst_322 = arith.constant -0.284496725 : f32
    %787 = vector.broadcast %cst_322 : f32 to vector<8x256xf32>
    %788 = arith.addf %786, %787 : vector<8x256xf32>
    %789 = arith.mulf %788, %778 : vector<8x256xf32>
    %cst_323 = arith.constant 0.254829586 : f32
    %790 = vector.broadcast %cst_323 : f32 to vector<8x256xf32>
    %791 = arith.addf %789, %790 : vector<8x256xf32>
    %792 = arith.mulf %791, %778 : vector<8x256xf32>
    %cst_324 = arith.constant 0.000000e+00 : f32
    %793 = vector.broadcast %cst_324 : f32 to vector<8x256xf32>
    %794 = arith.subf %793, %772 : vector<8x256xf32>
    %795 = arith.mulf %794, %772 : vector<8x256xf32>
    %796 = math.exp %795 : vector<8x256xf32>
    %797 = arith.mulf %792, %796 : vector<8x256xf32>
    %cst_325 = arith.constant 1.000000e+00 : f32
    %798 = vector.broadcast %cst_325 : f32 to vector<8x256xf32>
    %799 = arith.subf %798, %797 : vector<8x256xf32>
    %cst_326 = arith.constant 0.000000e+00 : f32
    %800 = vector.broadcast %cst_326 : f32 to vector<8x256xf32>
    %801 = arith.cmpf oge, %771, %800 : vector<8x256xf32>
    %cst_327 = arith.constant 0.000000e+00 : f32
    %802 = vector.broadcast %cst_327 : f32 to vector<8x256xf32>
    %803 = arith.subf %802, %799 : vector<8x256xf32>
    %804 = arith.select %801, %799, %803 : vector<8x256xi1>, vector<8x256xf32>
    %cst_328 = arith.constant 5.000000e-01 : f32
    %805 = vector.broadcast %cst_328 : f32 to vector<8x256xf32>
    %806 = arith.mulf %805, %769 : vector<8x256xf32>
    %cst_329 = arith.constant 1.000000e+00 : f32
    %807 = vector.broadcast %cst_329 : f32 to vector<8x256xf32>
    %808 = arith.addf %807, %804 : vector<8x256xf32>
    %809 = arith.mulf %806, %808 : vector<8x256xf32>
    %810 = arith.truncf %809 : vector<8x256xf32> to vector<8x256xbf16>
    %cst_330 = arith.constant dense<0.000000e+00> : vector<8x64xf32>
    %811 = tpu.matmul %810, %622, %cst_330 {dimension_numbers = #tpu.dot_dimension_numbers<[1], [0], [0], [1], [0, 0, 1, 1], [], []>} : vector<8x256xbf16>, vector<256x64xbf16>, vector<8x64xf32> -> vector<8x64xf32>
    %812 = vector.broadcast %623 : vector<1x64xf32> to vector<8x64xf32>
    %813 = arith.addf %811, %812 : vector<8x64xf32>
    %814 = arith.addf %745, %813 : vector<8x64xf32>
    %c0_331 = arith.constant 0 : index
    %c0_332 = arith.constant 0 : index
    %815 = vector.load %arg60[%c0_331, %c0_332] : memref<1x64xf32, #tpu.memory_space<vmem>>, vector<1x64xf32>
    %c0_333 = arith.constant 0 : index
    %c0_334 = arith.constant 0 : index
    %816 = vector.load %arg61[%c0_333, %c0_334] : memref<1x64xf32, #tpu.memory_space<vmem>>, vector<1x64xf32>
    %c0_335 = arith.constant 0 : index
    %c0_336 = arith.constant 0 : index
    %817 = vector.load %arg62[%c0_335, %c0_336] : memref<2x8xf32, #tpu.memory_space<vmem>>, vector<2x8xf32>
    %c0_337 = arith.constant 0 : index
    %c0_338 = arith.constant 0 : index
    %818 = vector.load %arg63[%c0_337, %c0_338] : memref<64x10xbf16, #tpu.memory_space<vmem>>, vector<64x10xbf16>
    %c0_339 = arith.constant 0 : index
    %c0_340 = arith.constant 0 : index
    %819 = vector.load %arg64[%c0_339, %c0_340] : memref<1x10xf32, #tpu.memory_space<vmem>>, vector<1x10xf32>
    %cst_341 = arith.constant dense<0.000000e+00> : vector<8xf32>
    %820 = vector.multi_reduction <add>, %814, %cst_341 [1] : vector<8x64xf32> to vector<8xf32>
    %821 = vector.shape_cast %820 : vector<8xf32> to vector<8x1xf32>
    %cst_342 = arith.constant 6.400000e+01 : f32
    %822 = vector.broadcast %cst_342 : f32 to vector<8x1xf32>
    %823 = arith.divf %821, %822 : vector<8x1xf32>
    %824 = vector.broadcast %823 : vector<8x1xf32> to vector<8x64xf32>
    %825 = arith.subf %814, %824 : vector<8x64xf32>
    %826 = arith.mulf %825, %825 : vector<8x64xf32>
    %cst_343 = arith.constant dense<0.000000e+00> : vector<8xf32>
    %827 = vector.multi_reduction <add>, %826, %cst_343 [1] : vector<8x64xf32> to vector<8xf32>
    %828 = vector.shape_cast %827 : vector<8xf32> to vector<8x1xf32>
    %cst_344 = arith.constant 6.400000e+01 : f32
    %829 = vector.broadcast %cst_344 : f32 to vector<8x1xf32>
    %830 = arith.divf %828, %829 : vector<8x1xf32>
    %cst_345 = arith.constant 9.99999974E-6 : f32
    %831 = vector.broadcast %cst_345 : f32 to vector<8x1xf32>
    %832 = arith.addf %830, %831 : vector<8x1xf32>
    %833 = math.rsqrt %832 : vector<8x1xf32>
    %834 = vector.broadcast %833 : vector<8x1xf32> to vector<8x64xf32>
    %835 = arith.mulf %825, %834 : vector<8x64xf32>
    %836 = vector.broadcast %815 : vector<1x64xf32> to vector<8x64xf32>
    %837 = arith.mulf %835, %836 : vector<8x64xf32>
    %838 = vector.broadcast %816 : vector<1x64xf32> to vector<8x64xf32>
    %839 = arith.addf %837, %838 : vector<8x64xf32>
    %840 = arith.truncf %817 : vector<2x8xf32> to vector<2x8xbf16>
    %841 = arith.truncf %839 : vector<8x64xf32> to vector<8x64xbf16>
    %cst_346 = arith.constant dense<0.000000e+00> : vector<2x64xf32>
    %842 = tpu.matmul %840, %841, %cst_346 {dimension_numbers = #tpu.dot_dimension_numbers<[1], [0], [0], [1], [0, 0, 1, 1], [], []>} : vector<2x8xbf16>, vector<8x64xbf16>, vector<2x64xf32> -> vector<2x64xf32>
    %843 = arith.truncf %842 : vector<2x64xf32> to vector<2x64xbf16>
    %cst_347 = arith.constant dense<0.000000e+00> : vector<2x10xf32>
    %844 = tpu.matmul %843, %818, %cst_347 {dimension_numbers = #tpu.dot_dimension_numbers<[1], [0], [0], [1], [0, 0, 1, 1], [], []>} : vector<2x64xbf16>, vector<64x10xbf16>, vector<2x10xf32> -> vector<2x10xf32>
    %845 = vector.broadcast %819 : vector<1x10xf32> to vector<2x10xf32>
    %846 = arith.addf %844, %845 : vector<2x10xf32>
    %c0_348 = arith.constant 0 : index
    %c0_349 = arith.constant 0 : index
    %847 = vector.load %arg65[%c0_348, %c0_349] : memref<2x10xf32, #tpu.memory_space<vmem>>, vector<2x10xf32>
    tpu.vector_store %arg65[%c0_348, %c0_349], %846 {strides = array<i32>} : memref<2x10xf32, #tpu.memory_space<vmem>>, vector<2x10xf32>,
    return
  }
}

</mosaic_0001>

<llo_original>
// kernel: tpu_custom_call.1
$region0: #{tpu_custom_call.1}
  #allocation0 [shape = 'u32[]', space=smem, size = 0x4, offset = 0x4, fixed_abs, tag = 'smem constant byte address 0x4 - core index']
  #allocation1 [shape = 'u32[144,128]{1,0:T(1,128)}', space=vmem, size = 0x12000, scoped, tag = 'internal scratch']
  %s0 = inlined_call_operand.smem [shape: u32[66], index: -1, kind: input, shape index: {}]
  %s1 = sld [smem:[%s0]]
  %s2 = scalar_lea.smem %s0, 1
  %s3 = sld [smem:[%s2]]
  %s4 = scalar_lea.smem %s0, 2
  %s5 = sld [smem:[%s4]]
  %s6 = scalar_lea.smem %s0, 3
  %s7 = sld [smem:[%s6]]
  %s8 = scalar_lea.smem %s0, 4
  %s9 = sld [smem:[%s8]]
  %s10 = scalar_lea.smem %s0, 5
  %s11 = sld [smem:[%s10]]
  %s12 = scalar_lea.smem %s0, 6
  %s13 = sld [smem:[%s12]]
  %s14 = scalar_lea.smem %s0, 7
  %s15 = sld [smem:[%s14]]
  %s16 = scalar_lea.smem %s0, 8
  %s17 = sld [smem:[%s16]]
  %s18 = scalar_lea.smem %s0, 9
  %s19 = sld [smem:[%s18]]
  %s20 = scalar_lea.smem %s0, 10
  %s21 = sld [smem:[%s20]]
  %s22 = scalar_lea.smem %s0, 11
  %s23 = sld [smem:[%s22]]
  %s24 = scalar_lea.smem %s0, 12
  %s25 = sld [smem:[%s24]]
  %s26 = scalar_lea.smem %s0, 13
  %s27 = sld [smem:[%s26]]
  %s28 = scalar_lea.smem %s0, 14
  %s29 = sld [smem:[%s28]]
  %s30 = scalar_lea.smem %s0, 15
  %s31 = sld [smem:[%s30]]
  %s32 = scalar_lea.smem %s0, 16
  %s33 = sld [smem:[%s32]]
  %s34 = scalar_lea.smem %s0, 17
  %s35 = sld [smem:[%s34]]
  %s36 = scalar_lea.smem %s0, 18
  %s37 = sld [smem:[%s36]]
  %s38 = scalar_lea.smem %s0, 19
  %s39 = sld [smem:[%s38]]
  %s40 = scalar_lea.smem %s0, 20
  %s41 = sld [smem:[%s40]]
  %s42 = scalar_lea.smem %s0, 21
  %s43 = sld [smem:[%s42]]
  %s44 = scalar_lea.smem %s0, 22
  %s45 = sld [smem:[%s44]]
  %s46 = scalar_lea.smem %s0, 23
  %s47 = sld [smem:[%s46]]
  %s48 = scalar_lea.smem %s0, 24
  %s49 = sld [smem:[%s48]]
  %s50 = scalar_lea.smem %s0, 25
  %s51 = sld [smem:[%s50]]
  %s52 = scalar_lea.smem %s0, 26
  %s53 = sld [smem:[%s52]]
  %s54 = scalar_lea.smem %s0, 27
  %s55 = sld [smem:[%s54]]
  %s56 = scalar_lea.smem %s0, 28
  %s57 = sld [smem:[%s56]]
  %s58 = scalar_lea.smem %s0, 29
  %s59 = sld [smem:[%s58]]
  %s60 = scalar_lea.smem %s0, 30
  %s61 = sld [smem:[%s60]]
  %s62 = scalar_lea.smem %s0, 31
  %s63 = sld [smem:[%s62]]
  %s64 = scalar_lea.smem %s0, 32
  %s65 = sld [smem:[%s64]]
  %s66 = scalar_lea.smem %s0, 33
  %s67 = sld [smem:[%s66]]
  %s68 = scalar_lea.smem %s0, 34
  %s69 = sld [smem:[%s68]]
  %s70 = scalar_lea.smem %s0, 35
  %s71 = sld [smem:[%s70]]
  %s72 = scalar_lea.smem %s0, 36
  %s73 = sld [smem:[%s72]]
  %s74 = scalar_lea.smem %s0, 37
  %s75 = sld [smem:[%s74]]
  %s76 = scalar_lea.smem %s0, 38
  %s77 = sld [smem:[%s76]]
  %s78 = scalar_lea.smem %s0, 39
  %s79 = sld [smem:[%s78]]
  %s80 = scalar_lea.smem %s0, 40
  %s81 = sld [smem:[%s80]]
  %s82 = scalar_lea.smem %s0, 41
  %s83 = sld [smem:[%s82]]
  %s84 = scalar_lea.smem %s0, 42
  %s85 = sld [smem:[%s84]]
  %s86 = scalar_lea.smem %s0, 43
  %s87 = sld [smem:[%s86]]
  %s88 = scalar_lea.smem %s0, 44
  %s89 = sld [smem:[%s88]]
  %s90 = scalar_lea.smem %s0, 45
  %s91 = sld [smem:[%s90]]
  %s92 = scalar_lea.smem %s0, 46
  %s93 = sld [smem:[%s92]]
  %s94 = scalar_lea.smem %s0, 47
  %s95 = sld [smem:[%s94]]
  %s96 = scalar_lea.smem %s0, 48
  %s97 = sld [smem:[%s96]]
  %s98 = scalar_lea.smem %s0, 49
  %s99 = sld [smem:[%s98]]
  %s100 = scalar_lea.smem %s0, 50
  %s101 = sld [smem:[%s100]]
  %s102 = scalar_lea.smem %s0, 51
  %s103 = sld [smem:[%s102]]
  %s104 = scalar_lea.smem %s0, 52
  %s105 = sld [smem:[%s104]]
  %s106 = scalar_lea.smem %s0, 53
  %s107 = sld [smem:[%s106]]
  %s108 = scalar_lea.smem %s0, 54
  %s109 = sld [smem:[%s108]]
  %s110 = scalar_lea.smem %s0, 55
  %s111 = sld [smem:[%s110]]
  %s112 = scalar_lea.smem %s0, 56
  %s113 = sld [smem:[%s112]]
  %s114 = scalar_lea.smem %s0, 57
  %s115 = sld [smem:[%s114]]
  %s116 = scalar_lea.smem %s0, 58
  %s117 = sld [smem:[%s116]]
  %s118 = scalar_lea.smem %s0, 59
  %s119 = sld [smem:[%s118]]
  %s120 = scalar_lea.smem %s0, 60
  %s121 = sld [smem:[%s120]]
  %s122 = scalar_lea.smem %s0, 61
  %s123 = sld [smem:[%s122]]
  %s124 = scalar_lea.smem %s0, 62
  %s125 = sld [smem:[%s124]]
  %s126 = scalar_lea.smem %s0, 63
  %s127 = sld [smem:[%s126]]
  %s128 = scalar_lea.smem %s0, 64
  %s129 = sld [smem:[%s128]]
  %s130 = scalar_lea.smem %s0, 65
  %s131 = sld [smem:[%s130]]
  %s132 = sld [smem:[#allocation0]]
  $region362: #{tpu_custom_call.1} parent=0
    _
  %s134 = ssub.s32 1, %s132
  %s135 = scalar_select 0, %s134, %s132
  $region1: #{tpu_custom_call.1} parent=0
    #allocation2 [shape = 'u8[512]{0}', space=vmem, size = 0x400, scoped, tag = 'input window, operand 2, single buffered']
    #allocation3 [shape = 's32[1]{0}', space=sflag, size = 0x4, scoped, tag = 'scoped memory for tpu_custom_call.1']
    #allocation4 [shape = 's32[1]{0}', space=sflag, size = 0x4, scoped, tag = 'scoped memory for tpu_custom_call.1']
    #allocation5 [shape = 'u8[512]{0}', space=vmem, size = 0x400, scoped, tag = 'input window, operand 3, single buffered']
    #allocation6 [shape = 's32[1]{0}', space=sflag, size = 0x4, scoped, tag = 'scoped memory for tpu_custom_call.1']
    #allocation7 [shape = 'u8[512]{0}', space=vmem, size = 0x400, scoped, tag = 'input window, operand 4, single buffered']
    #allocation8 [shape = 'u8[512]{0}', space=vmem, size = 0x400, scoped, tag = 'input window, operand 5, single buffered']
    #allocation9 [shape = 's32[1]{0}', space=sflag, size = 0x4, scoped, tag = 'scoped memory for tpu_custom_call.1']
    #allocation10 [shape = 'u8[512]{0}', space=vmem, size = 0x400, scoped, tag = 'input window, operand 6, single buffered']
    #allocation11 [shape = 'u8[512]{0}', space=vmem, size = 0x400, scoped, tag = 'input window, operand 8, single buffered']
    #allocation12 [shape = 's32[1]{0}', space=sflag, size = 0x4, scoped, tag = 'scoped memory for tpu_custom_call.1']
    #allocation13 [shape = 'u8[512]{0}', space=vmem, size = 0x400, scoped, tag = 'input window, operand 11, single buffered']
    #allocation14 [shape = 'u8[512]{0}', space=vmem, size = 0x400, scoped, tag = 'input window, operand 12, single buffered']
    #allocation15 [shape = 's32[1]{0}', space=sflag, size = 0x4, scoped, tag = 'scoped memory for tpu_custom_call.1']
    #allocation16 [shape = 'u8[512]{0}', space=vmem, size = 0x400, scoped, tag = 'input window, operand 13, single buffered']
    #allocation17 [shape = 'u8[512]{0}', space=vmem, size = 0x400, scoped, tag = 'input window, operand 15, single buffered']
    #allocation18 [shape = 's32[1]{0}', space=sflag, size = 0x4, scoped, tag = 'scoped memory for tpu_custom_call.1']
    #allocation19 [shape = 'u8[512]{0}', space=vmem, size = 0x400, scoped, tag = 'input window, operand 17, single buffered']
    #allocation20 [shape = 'u8[512]{0}', space=vmem, size = 0x400, scoped, tag = 'input window, operand 18, single buffered']
    #allocation21 [shape = 's32[1]{0}', space=sflag, size = 0x4, scoped, tag = 'scoped memory for tpu_custom_call.1']
    #allocation22 [shape = 'u8[512]{0}', space=vmem, size = 0x400, scoped, tag = 'input window, operand 19, single buffered']
    #allocation23 [shape = 'u8[512]{0}', space=vmem, size = 0x400, scoped, tag = 'input window, operand 21, single buffered']
    #allocation24 [shape = 's32[1]{0}', space=sflag, size = 0x4, scoped, tag = 'scoped memory for tpu_custom_call.1']
    #allocation25 [shape = 'u8[512]{0}', space=vmem, size = 0x400, scoped, tag = 'input window, operand 24, single buffered']
    #allocation26 [shape = 'u8[512]{0}', space=vmem, size = 0x400, scoped, tag = 'input window, operand 25, single buffered']
    #allocation27 [shape = 's32[1]{0}', space=sflag, size = 0x4, scoped, tag = 'scoped memory for tpu_custom_call.1']
    #allocation28 [shape = 'u8[512]{0}', space=vmem, size = 0x400, scoped, tag = 'input window, operand 26, single buffered']
    #allocation29 [shape = 'u8[512]{0}', space=vmem, size = 0x400, scoped, tag = 'input window, operand 28, single buffered']
    #allocation30 [shape = 's32[1]{0}', space=sflag, size = 0x4, scoped, tag = 'scoped memory for tpu_custom_call.1']
    #allocation31 [shape = 'u8[512]{0}', space=vmem, size = 0x400, scoped, tag = 'input window, operand 31, single buffered']
    #allocation32 [shape = 'u8[512]{0}', space=vmem, size = 0x400, scoped, tag = 'input window, operand 32, single buffered']
    #allocation33 [shape = 's32[1]{0}', space=sflag, size = 0x4, scoped, tag = 'scoped memory for tpu_custom_call.1']
    #allocation34 [shape = 'u8[512]{0}', space=vmem, size = 0x400, scoped, tag = 'input window, operand 60, single buffered']
    #allocation35 [shape = 'u8[512]{0}', space=vmem, size = 0x400, scoped, tag = 'input window, operand 61, single buffered']
    #allocation36 [shape = 's32[1]{0}', space=sflag, size = 0x4, scoped, tag = 'scoped memory for tpu_custom_call.1']
    #allocation37 [shape = 'u8[512]{0}', space=vmem, size = 0x400, scoped, tag = 'input window, operand 64, single buffered']
    #allocation38 [shape = 'u8[1024]{0}', space=vmem, size = 0x400, scoped, tag = 'output window, operand 0, single buffered']
    %136 = vsyncpa [#allocation3], 0
    %137 = vsyncpa [#allocation6], 0
    %138 = vsyncpa [#allocation9], 0
    %139 = vsyncpa [#allocation12], 0
    %140 = vsyncpa [#allocation15], 0
    %141 = vsyncpa [#allocation18], 0
    %142 = vsyncpa [#allocation21], 0
    %143 = vsyncpa [#allocation24], 0
    %144 = vsyncpa [#allocation27], 0
    %145 = vsyncpa [#allocation30], 0
    %146 = vsyncpa [#allocation33], 0
    %147 = vsyncpa [#allocation36], 0
    %148 = vsyncpa [#allocation4], 0
    // Predicated region
    $region2: #{tpu_custom_call.1} parent=1 // pred_check
      _
    $region3: #{tpu_custom_call.1} parent=1 // pred_check_branch
      %150 = sbr.rel (0) target = $region5
    $region4: #{tpu_custom_call.1} parent=1 // pred_region
      _
    $region5: #{tpu_custom_call.1} parent=1 // pred_fallthru
      _
    // Predicated region
    $region6: #{tpu_custom_call.1} parent=1 // pred_check
      _
    $region7: #{tpu_custom_call.1} parent=1 // pred_check_branch
      %152 = sbr.rel (0) target = $region9
    $region8: #{tpu_custom_call.1} parent=1 // pred_region
      _
    $region9: #{tpu_custom_call.1} parent=1 // pred_fallthru
      _
    // Predicated region
    $region10: #{tpu_custom_call.1} parent=1 // pred_check
      _
    $region11: #{tpu_custom_call.1} parent=1 // pred_check_branch
      %154 = sbr.rel (0) target = $region13
    $region12: #{tpu_custom_call.1} parent=1 // pred_region
      %s156 = ssub.s32 16, 16
      %157 = vsyncadd [#allocation3], %s156
      %s159 = sshll.u32 [#allocation2], 4
      %s160 = int_to_ptr.vmem [resolvable:$true] %s159
      %162 = dma.hbm_to_vmem [thread:$0]  %s5, 16, %s160, [#allocation3]
    $region13: #{tpu_custom_call.1} parent=1 // pred_fallthru
      _
    // Predicated region
    $region14: #{tpu_custom_call.1} parent=1 // pred_check
      _
    $region15: #{tpu_custom_call.1} parent=1 // pred_check_branch
      %164 = sbr.rel (0) target = $region17
    $region16: #{tpu_custom_call.1} parent=1 // pred_region
      %s166 = ssub.s32 16, 16
      %167 = vsyncadd [#allocation6], %s166
      %s169 = sshll.u32 [#allocation5], 4
      %s170 = int_to_ptr.vmem [resolvable:$true] %s169
      %172 = dma.hbm_to_vmem [thread:$0]  %s7, 16, %s170, [#allocation6]
    $region17: #{tpu_custom_call.1} parent=1 // pred_fallthru
      _
    // Predicated region
    $region18: #{tpu_custom_call.1} parent=1 // pred_check
      _
    $region19: #{tpu_custom_call.1} parent=1 // pred_check_branch
      %174 = sbr.rel (0) target = $region21
    $region20: #{tpu_custom_call.1} parent=1 // pred_region
      %s176 = ssub.s32 16, 16
      %177 = vsyncadd [#allocation6], %s176
      %s179 = sshll.u32 [#allocation7], 4
      %s180 = int_to_ptr.vmem [resolvable:$true] %s179
      %182 = dma.hbm_to_vmem [thread:$0]  %s9, 16, %s180, [#allocation6]
    $region21: #{tpu_custom_call.1} parent=1 // pred_fallthru
      _
    // Predicated region
    $region22: #{tpu_custom_call.1} parent=1 // pred_check
      _
    $region23: #{tpu_custom_call.1} parent=1 // pred_check_branch
      %184 = sbr.rel (0) target = $region25
    $region24: #{tpu_custom_call.1} parent=1 // pred_region
      %s186 = ssub.s32 16, 16
      %187 = vsyncadd [#allocation9], %s186
      %s189 = sshll.u32 [#allocation8], 4
      %s190 = int_to_ptr.vmem [resolvable:$true] %s189
      %192 = dma.hbm_to_vmem [thread:$0]  %s11, 16, %s190, [#allocation9]
    $region25: #{tpu_custom_call.1} parent=1 // pred_fallthru
      _
    // Predicated region
    $region26: #{tpu_custom_call.1} parent=1 // pred_check
      _
    $region27: #{tpu_custom_call.1} parent=1 // pred_check_branch
      %194 = sbr.rel (0) target = $region29
    $region28: #{tpu_custom_call.1} parent=1 // pred_region
      %s196 = ssub.s32 16, 16
      %197 = vsyncadd [#allocation9], %s196
      %s199 = sshll.u32 [#allocation10], 4
      %s200 = int_to_ptr.vmem [resolvable:$true] %s199
      %202 = dma.hbm_to_vmem [thread:$0]  %s13, 16, %s200, [#allocation9]
    $region29: #{tpu_custom_call.1} parent=1 // pred_fallthru
      _
    // Predicated region
    $region30: #{tpu_custom_call.1} parent=1 // pred_check
      _
    $region31: #{tpu_custom_call.1} parent=1 // pred_check_branch
      %204 = sbr.rel (0) target = $region33
    $region32: #{tpu_custom_call.1} parent=1 // pred_region
      _
    $region33: #{tpu_custom_call.1} parent=1 // pred_fallthru
      _
    // Predicated region
    $region34: #{tpu_custom_call.1} parent=1 // pred_check
      _
    $region35: #{tpu_custom_call.1} parent=1 // pred_check_branch
      %206 = sbr.rel (0) target = $region37
    $region36: #{tpu_custom_call.1} parent=1 // pred_region
      %s208 = ssub.s32 16, 16
      %209 = vsyncadd [#allocation12], %s208
      %s211 = sshll.u32 [#allocation11], 4
      %s212 = int_to_ptr.vmem [resolvable:$true] %s211
      %214 = dma.hbm_to_vmem [thread:$0]  %s17, 16, %s212, [#allocation12]
    $region37: #{tpu_custom_call.1} parent=1 // pred_fallthru
      _
    // Predicated region
    $region38: #{tpu_custom_call.1} parent=1 // pred_check
      _
    $region39: #{tpu_custom_call.1} parent=1 // pred_check_branch
      %216 = sbr.rel (0) target = $region41
    $region40: #{tpu_custom_call.1} parent=1 // pred_region
      _
    $region41: #{tpu_custom_call.1} parent=1 // pred_fallthru
      _
    // Predicated region
    $region42: #{tpu_custom_call.1} parent=1 // pred_check
      _
    $region43: #{tpu_custom_call.1} parent=1 // pred_check_branch
      %218 = sbr.rel (0) target = $region45
    $region44: #{tpu_custom_call.1} parent=1 // pred_region
      _
    $region45: #{tpu_custom_call.1} parent=1 // pred_fallthru
      _
    // Predicated region
    $region46: #{tpu_custom_call.1} parent=1 // pred_check
      _
    $region47: #{tpu_custom_call.1} parent=1 // pred_check_branch
      %220 = sbr.rel (0) target = $region49
    $region48: #{tpu_custom_call.1} parent=1 // pred_region
      %s222 = ssub.s32 16, 16
      %223 = vsyncadd [#allocation12], %s222
      %s225 = sshll.u32 [#allocation13], 4
      %s226 = int_to_ptr.vmem [resolvable:$true] %s225
      %228 = dma.hbm_to_vmem [thread:$0]  %s23, 16, %s226, [#allocation12]
    $region49: #{tpu_custom_call.1} parent=1 // pred_fallthru
      _
    // Predicated region
    $region50: #{tpu_custom_call.1} parent=1 // pred_check
      _
    $region51: #{tpu_custom_call.1} parent=1 // pred_check_branch
      %230 = sbr.rel (0) target = $region53
    $region52: #{tpu_custom_call.1} parent=1 // pred_region
      %s232 = ssub.s32 16, 16
      %233 = vsyncadd [#allocation15], %s232
      %s235 = sshll.u32 [#allocation14], 4
      %s236 = int_to_ptr.vmem [resolvable:$true] %s235
      %238 = dma.hbm_to_vmem [thread:$0]  %s25, 16, %s236, [#allocation15]
    $region53: #{tpu_custom_call.1} parent=1 // pred_fallthru
      _
    // Predicated region
    $region54: #{tpu_custom_call.1} parent=1 // pred_check
      _
    $region55: #{tpu_custom_call.1} parent=1 // pred_check_branch
      %240 = sbr.rel (0) target = $region57
    $region56: #{tpu_custom_call.1} parent=1 // pred_region
      %s242 = ssub.s32 16, 16
      %243 = vsyncadd [#allocation15], %s242
      %s245 = sshll.u32 [#allocation16], 4
      %s246 = int_to_ptr.vmem [resolvable:$true] %s245
      %248 = dma.hbm_to_vmem [thread:$0]  %s27, 16, %s246, [#allocation15]
    $region57: #{tpu_custom_call.1} parent=1 // pred_fallthru
      _
    // Predicated region
    $region58: #{tpu_custom_call.1} parent=1 // pred_check
      _
    $region59: #{tpu_custom_call.1} parent=1 // pred_check_branch
      %250 = sbr.rel (0) target = $region61
    $region60: #{tpu_custom_call.1} parent=1 // pred_region
      _
    $region61: #{tpu_custom_call.1} parent=1 // pred_fallthru
      _
    // Predicated region
    $region62: #{tpu_custom_call.1} parent=1 // pred_check
      _
    $region63: #{tpu_custom_call.1} parent=1 // pred_check_branch
      %252 = sbr.rel (0) target = $region65
    $region64: #{tpu_custom_call.1} parent=1 // pred_region
      %s254 = ssub.s32 16, 16
      %255 = vsyncadd [#allocation18], %s254
      %s257 = sshll.u32 [#allocation17], 4
      %s258 = int_to_ptr.vmem [resolvable:$true] %s257
      %260 = dma.hbm_to_vmem [thread:$0]  %s31, 16, %s258, [#allocation18]
    $region65: #{tpu_custom_call.1} parent=1 // pred_fallthru
      _
    // Predicated region
    $region66: #{tpu_custom_call.1} parent=1 // pred_check
      _
    $region67: #{tpu_custom_call.1} parent=1 // pred_check_branch
      %262 = sbr.rel (0) target = $region69
    $region68: #{tpu_custom_call.1} parent=1 // pred_region
      _
    $region69: #{tpu_custom_call.1} parent=1 // pred_fallthru
      _
    // Predicated region
    $region70: #{tpu_custom_call.1} parent=1 // pred_check
      _
    $region71: #{tpu_custom_call.1} parent=1 // pred_check_branch
      %264 = sbr.rel (0) target = $region73
    $region72: #{tpu_custom_call.1} parent=1 // pred_region
      %s266 = ssub.s32 16, 16
      %267 = vsyncadd [#allocation18], %s266
      %s269 = sshll.u32 [#allocation19], 4
      %s270 = int_to_ptr.vmem [resolvable:$true] %s269
      %272 = dma.hbm_to_vmem [thread:$0]  %s35, 16, %s270, [#allocation18]
    $region73: #{tpu_custom_call.1} parent=1 // pred_fallthru
      _
    // Predicated region
    $region74: #{tpu_custom_call.1} parent=1 // pred_check
      _
    $region75: #{tpu_custom_call.1} parent=1 // pred_check_branch
      %274 = sbr.rel (0) target = $region77
    $region76: #{tpu_custom_call.1} parent=1 // pred_region
      %s276 = ssub.s32 16, 16
      %277 = vsyncadd [#allocation21], %s276
      %s279 = sshll.u32 [#allocation20], 4
      %s280 = int_to_ptr.vmem [resolvable:$true] %s279
      %282 = dma.hbm_to_vmem [thread:$0]  %s37, 16, %s280, [#allocation21]
    $region77: #{tpu_custom_call.1} parent=1 // pred_fallthru
      _
    // Predicated region
    $region78: #{tpu_custom_call.1} parent=1 // pred_check
      _
    $region79: #{tpu_custom_call.1} parent=1 // pred_check_branch
      %284 = sbr.rel (0) target = $region81
    $region80: #{tpu_custom_call.1} parent=1 // pred_region
      %s286 = ssub.s32 16, 16
      %287 = vsyncadd [#allocation21], %s286
      %s289 = sshll.u32 [#allocation22], 4
      %s290 = int_to_ptr.vmem [resolvable:$true] %s289
      %292 = dma.hbm_to_vmem [thread:$0]  %s39, 16, %s290, [#allocation21]
    $region81: #{tpu_custom_call.1} parent=1 // pred_fallthru
      _
    // Predicated region
    $region82: #{tpu_custom_call.1} parent=1 // pred_check
      _
    $region83: #{tpu_custom_call.1} parent=1 // pred_check_branch
      %294 = sbr.rel (0) target = $region85
    $region84: #{tpu_custom_call.1} parent=1 // pred_region
      _
    $region85: #{tpu_custom_call.1} parent=1 // pred_fallthru
      _
    // Predicated region
    $region86: #{tpu_custom_call.1} parent=1 // pred_check
      _
    $region87: #{tpu_custom_call.1} parent=1 // pred_check_branch
      %296 = sbr.rel (0) target = $region89
    $region88: #{tpu_custom_call.1} parent=1 // pred_region
      %s298 = ssub.s32 16, 16
      %299 = vsyncadd [#allocation24], %s298
      %s301 = sshll.u32 [#allocation23], 4
      %s302 = int_to_ptr.vmem [resolvable:$true] %s301
      %304 = dma.hbm_to_vmem [thread:$0]  %s43, 16, %s302, [#allocation24]
    $region89: #{tpu_custom_call.1} parent=1 // pred_fallthru
      _
    // Predicated region
    $region90: #{tpu_custom_call.1} parent=1 // pred_check
      _
    $region91: #{tpu_custom_call.1} parent=1 // pred_check_branch
      %306 = sbr.rel (0) target = $region93
    $region92: #{tpu_custom_call.1} parent=1 // pred_region
      _
    $region93: #{tpu_custom_call.1} parent=1 // pred_fallthru
      _
    // Predicated region
    $region94: #{tpu_custom_call.1} parent=1 // pred_check
      _
    $region95: #{tpu_custom_call.1} parent=1 // pred_check_branch
      %308 = sbr.rel (0) target = $region97
    $region96: #{tpu_custom_call.1} parent=1 // pred_region
      _
    $region97: #{tpu_custom_call.1} parent=1 // pred_fallthru
      _
    // Predicated region
    $region98: #{tpu_custom_call.1} parent=1 // pred_check
      _
    $region99: #{tpu_custom_call.1} parent=1 // pred_check_branch
      %310 = sbr.rel (0) target = $region101
    $region100: #{tpu_custom_call.1} parent=1 // pred_region
      %s312 = ssub.s32 16, 16
      %313 = vsyncadd [#allocation24], %s312
      %s315 = sshll.u32 [#allocation25], 4
      %s316 = int_to_ptr.vmem [resolvable:$true] %s315
      %318 = dma.hbm_to_vmem [thread:$0]  %s49, 16, %s316, [#allocation24]
    $region101: #{tpu_custom_call.1} parent=1 // pred_fallthru
      _
    // Predicated region
    $region102: #{tpu_custom_call.1} parent=1 // pred_check
      _
    $region103: #{tpu_custom_call.1} parent=1 // pred_check_branch
      %320 = sbr.rel (0) target = $region105
    $region104: #{tpu_custom_call.1} parent=1 // pred_region
      %s322 = ssub.s32 16, 16
      %323 = vsyncadd [#allocation27], %s322
      %s325 = sshll.u32 [#allocation26], 4
      %s326 = int_to_ptr.vmem [resolvable:$true] %s325
      %328 = dma.hbm_to_vmem [thread:$0]  %s51, 16, %s326, [#allocation27]
    $region105: #{tpu_custom_call.1} parent=1 // pred_fallthru
      _
    // Predicated region
    $region106: #{tpu_custom_call.1} parent=1 // pred_check
      _
    $region107: #{tpu_custom_call.1} parent=1 // pred_check_branch
      %330 = sbr.rel (0) target = $region109
    $region108: #{tpu_custom_call.1} parent=1 // pred_region
      %s332 = ssub.s32 16, 16
      %333 = vsyncadd [#allocation27], %s332
      %s335 = sshll.u32 [#allocation28], 4
      %s336 = int_to_ptr.vmem [resolvable:$true] %s335
      %338 = dma.hbm_to_vmem [thread:$0]  %s53, 16, %s336, [#allocation27]
    $region109: #{tpu_custom_call.1} parent=1 // pred_fallthru
      _
    // Predicated region
    $region110: #{tpu_custom_call.1} parent=1 // pred_check
      _
    $region111: #{tpu_custom_call.1} parent=1 // pred_check_branch
      %340 = sbr.rel (0) target = $region113
    $region112: #{tpu_custom_call.1} parent=1 // pred_region
      _
    $region113: #{tpu_custom_call.1} parent=1 // pred_fallthru
      _
    // Predicated region
    $region114: #{tpu_custom_call.1} parent=1 // pred_check
      _
    $region115: #{tpu_custom_call.1} parent=1 // pred_check_branch
      %342 = sbr.rel (0) target = $region117
    $region116: #{tpu_custom_call.1} parent=1 // pred_region
      %s344 = ssub.s32 16, 16
      %345 = vsyncadd [#allocation30], %s344
      %s347 = sshll.u32 [#allocation29], 4
      %s348 = int_to_ptr.vmem [resolvable:$true] %s347
      %350 = dma.hbm_to_vmem [thread:$0]  %s57, 16, %s348, [#allocation30]
    $region117: #{tpu_custom_call.1} parent=1 // pred_fallthru
      _
    // Predicated region
    $region118: #{tpu_custom_call.1} parent=1 // pred_check
      _
    $region119: #{tpu_custom_call.1} parent=1 // pred_check_branch
      %352 = sbr.rel (0) target = $region121
    $region120: #{tpu_custom_call.1} parent=1 // pred_region
      _
    $region121: #{tpu_custom_call.1} parent=1 // pred_fallthru
      _
    // Predicated region
    $region122: #{tpu_custom_call.1} parent=1 // pred_check
      _
    $region123: #{tpu_custom_call.1} parent=1 // pred_check_branch
      %354 = sbr.rel (0) target = $region125
    $region124: #{tpu_custom_call.1} parent=1 // pred_region
      _
    $region125: #{tpu_custom_call.1} parent=1 // pred_fallthru
      _
    // Predicated region
    $region126: #{tpu_custom_call.1} parent=1 // pred_check
      _
    $region127: #{tpu_custom_call.1} parent=1 // pred_check_branch
      %356 = sbr.rel (0) target = $region129
    $region128: #{tpu_custom_call.1} parent=1 // pred_region
      %s358 = ssub.s32 16, 16
      %359 = vsyncadd [#allocation30], %s358
      %s361 = sshll.u32 [#allocation31], 4
      %s362 = int_to_ptr.vmem [resolvable:$true] %s361
      %364 = dma.hbm_to_vmem [thread:$0]  %s63, 16, %s362, [#allocation30]
    $region129: #{tpu_custom_call.1} parent=1 // pred_fallthru
      _
    // Predicated region
    $region130: #{tpu_custom_call.1} parent=1 // pred_check
      _
    $region131: #{tpu_custom_call.1} parent=1 // pred_check_branch
      %366 = sbr.rel (0) target = $region133
    $region132: #{tpu_custom_call.1} parent=1 // pred_region
      %s368 = ssub.s32 16, 16
      %369 = vsyncadd [#allocation33], %s368
      %s371 = sshll.u32 [#allocation32], 4
      %s372 = int_to_ptr.vmem [resolvable:$true] %s371
      %374 = dma.hbm_to_vmem [thread:$0]  %s65, 16, %s372, [#allocation33]
    $region133: #{tpu_custom_call.1} parent=1 // pred_fallthru
      _
    // Predicated region
    $region134: #{tpu_custom_call.1} parent=1 // pred_check
      _
    $region135: #{tpu_custom_call.1} parent=1 // pred_check_branch
      %376 = sbr.rel (0) target = $region137
    $region136: #{tpu_custom_call.1} parent=1 // pred_region
      _
    $region137: #{tpu_custom_call.1} parent=1 // pred_fallthru
      _
    // Predicated region
    $region138: #{tpu_custom_call.1} parent=1 // pred_check
      _
    $region139: #{tpu_custom_call.1} parent=1 // pred_check_branch
      %378 = sbr.rel (0) target = $region141
    $region140: #{tpu_custom_call.1} parent=1 // pred_region
      _
    $region141: #{tpu_custom_call.1} parent=1 // pred_fallthru
      _
    // Predicated region
    $region142: #{tpu_custom_call.1} parent=1 // pred_check
      _
    $region143: #{tpu_custom_call.1} parent=1 // pred_check_branch
      %380 = sbr.rel (0) target = $region145
    $region144: #{tpu_custom_call.1} parent=1 // pred_region
      _
    $region145: #{tpu_custom_call.1} parent=1 // pred_fallthru
      _
    // Predicated region
    $region146: #{tpu_custom_call.1} parent=1 // pred_check
      _
    $region147: #{tpu_custom_call.1} parent=1 // pred_check_branch
      %382 = sbr.rel (0) target = $region149
    $region148: #{tpu_custom_call.1} parent=1 // pred_region
      _
    $region149: #{tpu_custom_call.1} parent=1 // pred_fallthru
      _
    // Predicated region
    $region150: #{tpu_custom_call.1} parent=1 // pred_check
      _
    $region151: #{tpu_custom_call.1} parent=1 // pred_check_branch
      %384 = sbr.rel (0) target = $region153
    $region152: #{tpu_custom_call.1} parent=1 // pred_region
      _
    $region153: #{tpu_custom_call.1} parent=1 // pred_fallthru
      _
    // Predicated region
    $region154: #{tpu_custom_call.1} parent=1 // pred_check
      _
    $region155: #{tpu_custom_call.1} parent=1 // pred_check_branch
      %386 = sbr.rel (0) target = $region157
    $region156: #{tpu_custom_call.1} parent=1 // pred_region
      _
    $region157: #{tpu_custom_call.1} parent=1 // pred_fallthru
      _
    // Predicated region
    $region158: #{tpu_custom_call.1} parent=1 // pred_check
      _
    $region159: #{tpu_custom_call.1} parent=1 // pred_check_branch
      %388 = sbr.rel (0) target = $region161
    $region160: #{tpu_custom_call.1} parent=1 // pred_region
      _
    $region161: #{tpu_custom_call.1} parent=1 // pred_fallthru
      _
    // Predicated region
    $region162: #{tpu_custom_call.1} parent=1 // pred_check
      _
    $region163: #{tpu_custom_call.1} parent=1 // pred_check_branch
      %390 = sbr.rel (0) target = $region165
    $region164: #{tpu_custom_call.1} parent=1 // pred_region
      _
    $region165: #{tpu_custom_call.1} parent=1 // pred_fallthru
      _
    // Predicated region
    $region166: #{tpu_custom_call.1} parent=1 // pred_check
      _
    $region167: #{tpu_custom_call.1} parent=1 // pred_check_branch
      %392 = sbr.rel (0) target = $region169
    $region168: #{tpu_custom_call.1} parent=1 // pred_region
      _
    $region169: #{tpu_custom_call.1} parent=1 // pred_fallthru
      _
    // Predicated region
    $region170: #{tpu_custom_call.1} parent=1 // pred_check
      _
    $region171: #{tpu_custom_call.1} parent=1 // pred_check_branch
      %394 = sbr.rel (0) target = $region173
    $region172: #{tpu_custom_call.1} parent=1 // pred_region
      _
    $region173: #{tpu_custom_call.1} parent=1 // pred_fallthru
      _
    // Predicated region
    $region174: #{tpu_custom_call.1} parent=1 // pred_check
      _
    $region175: #{tpu_custom_call.1} parent=1 // pred_check_branch
      %396 = sbr.rel (0) target = $region177
    $region176: #{tpu_custom_call.1} parent=1 // pred_region
      _
    $region177: #{tpu_custom_call.1} parent=1 // pred_fallthru
      _
    // Predicated region
    $region178: #{tpu_custom_call.1} parent=1 // pred_check
      _
    $region179: #{tpu_custom_call.1} parent=1 // pred_check_branch
      %398 = sbr.rel (0) target = $region181
    $region180: #{tpu_custom_call.1} parent=1 // pred_region
      _
    $region181: #{tpu_custom_call.1} parent=1 // pred_fallthru
      _
    // Predicated region
    $region182: #{tpu_custom_call.1} parent=1 // pred_check
      _
    $region183: #{tpu_custom_call.1} parent=1 // pred_check_branch
      %400 = sbr.rel (0) target = $region185
    $region184: #{tpu_custom_call.1} parent=1 // pred_region
      _
    $region185: #{tpu_custom_call.1} parent=1 // pred_fallthru
      _
    // Predicated region
    $region186: #{tpu_custom_call.1} parent=1 // pred_check
      _
    $region187: #{tpu_custom_call.1} parent=1 // pred_check_branch
      %402 = sbr.rel (0) target = $region189
    $region188: #{tpu_custom_call.1} parent=1 // pred_region
      _
    $region189: #{tpu_custom_call.1} parent=1 // pred_fallthru
      _
    // Predicated region
    $region190: #{tpu_custom_call.1} parent=1 // pred_check
      _
    $region191: #{tpu_custom_call.1} parent=1 // pred_check_branch
      %404 = sbr.rel (0) target = $region193
    $region192: #{tpu_custom_call.1} parent=1 // pred_region
      _
    $region193: #{tpu_custom_call.1} parent=1 // pred_fallthru
      _
    // Predicated region
    $region194: #{tpu_custom_call.1} parent=1 // pred_check
      _
    $region195: #{tpu_custom_call.1} parent=1 // pred_check_branch
      %406 = sbr.rel (0) target = $region197
    $region196: #{tpu_custom_call.1} parent=1 // pred_region
      _
    $region197: #{tpu_custom_call.1} parent=1 // pred_fallthru
      _
    // Predicated region
    $region198: #{tpu_custom_call.1} parent=1 // pred_check
      _
    $region199: #{tpu_custom_call.1} parent=1 // pred_check_branch
      %408 = sbr.rel (0) target = $region201
    $region200: #{tpu_custom_call.1} parent=1 // pred_region
      _
    $region201: #{tpu_custom_call.1} parent=1 // pred_fallthru
      _
    // Predicated region
    $region202: #{tpu_custom_call.1} parent=1 // pred_check
      _
    $region203: #{tpu_custom_call.1} parent=1 // pred_check_branch
      %410 = sbr.rel (0) target = $region205
    $region204: #{tpu_custom_call.1} parent=1 // pred_region
      _
    $region205: #{tpu_custom_call.1} parent=1 // pred_fallthru
      _
    // Predicated region
    $region206: #{tpu_custom_call.1} parent=1 // pred_check
      _
    $region207: #{tpu_custom_call.1} parent=1 // pred_check_branch
      %412 = sbr.rel (0) target = $region209
    $region208: #{tpu_custom_call.1} parent=1 // pred_region
      _
    $region209: #{tpu_custom_call.1} parent=1 // pred_fallthru
      _
    // Predicated region
    $region210: #{tpu_custom_call.1} parent=1 // pred_check
      _
    $region211: #{tpu_custom_call.1} parent=1 // pred_check_branch
      %414 = sbr.rel (0) target = $region213
    $region212: #{tpu_custom_call.1} parent=1 // pred_region
      _
    $region213: #{tpu_custom_call.1} parent=1 // pred_fallthru
      _
    // Predicated region
    $region214: #{tpu_custom_call.1} parent=1 // pred_check
      _
    $region215: #{tpu_custom_call.1} parent=1 // pred_check_branch
      %416 = sbr.rel (0) target = $region217
    $region216: #{tpu_custom_call.1} parent=1 // pred_region
      _
    $region217: #{tpu_custom_call.1} parent=1 // pred_fallthru
      _
    // Predicated region
    $region218: #{tpu_custom_call.1} parent=1 // pred_check
      _
    $region219: #{tpu_custom_call.1} parent=1 // pred_check_branch
      %418 = sbr.rel (0) target = $region221
    $region220: #{tpu_custom_call.1} parent=1 // pred_region
      _
    $region221: #{tpu_custom_call.1} parent=1 // pred_fallthru
      _
    // Predicated region
    $region222: #{tpu_custom_call.1} parent=1 // pred_check
      _
    $region223: #{tpu_custom_call.1} parent=1 // pred_check_branch
      %420 = sbr.rel (0) target = $region225
    $region224: #{tpu_custom_call.1} parent=1 // pred_region
      _
    $region225: #{tpu_custom_call.1} parent=1 // pred_fallthru
      _
    // Predicated region
    $region226: #{tpu_custom_call.1} parent=1 // pred_check
      _
    $region227: #{tpu_custom_call.1} parent=1 // pred_check_branch
      %422 = sbr.rel (0) target = $region229
    $region228: #{tpu_custom_call.1} parent=1 // pred_region
      _
    $region229: #{tpu_custom_call.1} parent=1 // pred_fallthru
      _
    // Predicated region
    $region230: #{tpu_custom_call.1} parent=1 // pred_check
      _
    $region231: #{tpu_custom_call.1} parent=1 // pred_check_branch
      %424 = sbr.rel (0) target = $region233
    $region232: #{tpu_custom_call.1} parent=1 // pred_region
      _
    $region233: #{tpu_custom_call.1} parent=1 // pred_fallthru
      _
    // Predicated region
    $region234: #{tpu_custom_call.1} parent=1 // pred_check
      _
    $region235: #{tpu_custom_call.1} parent=1 // pred_check_branch
      %426 = sbr.rel (0) target = $region237
    $region236: #{tpu_custom_call.1} parent=1 // pred_region
      _
    $region237: #{tpu_custom_call.1} parent=1 // pred_fallthru
      _
    // Predicated region
    $region238: #{tpu_custom_call.1} parent=1 // pred_check
      _
    $region239: #{tpu_custom_call.1} parent=1 // pred_check_branch
      %428 = sbr.rel (0) target = $region241
    $region240: #{tpu_custom_call.1} parent=1 // pred_region
      _
    $region241: #{tpu_custom_call.1} parent=1 // pred_fallthru
      _
    // Predicated region
    $region242: #{tpu_custom_call.1} parent=1 // pred_check
      _
    $region243: #{tpu_custom_call.1} parent=1 // pred_check_branch
      %430 = sbr.rel (0) target = $region245
    $region244: #{tpu_custom_call.1} parent=1 // pred_region
      %s432 = ssub.s32 16, 16
      %433 = vsyncadd [#allocation33], %s432
      %s435 = sshll.u32 [#allocation34], 4
      %s436 = int_to_ptr.vmem [resolvable:$true] %s435
      %438 = dma.hbm_to_vmem [thread:$0]  %s121, 16, %s436, [#allocation33]
    $region245: #{tpu_custom_call.1} parent=1 // pred_fallthru
      _
    // Predicated region
    $region246: #{tpu_custom_call.1} parent=1 // pred_check
      _
    $region247: #{tpu_custom_call.1} parent=1 // pred_check_branch
      %440 = sbr.rel (0) target = $region249
    $region248: #{tpu_custom_call.1} parent=1 // pred_region
      %s442 = ssub.s32 16, 16
      %443 = vsyncadd [#allocation36], %s442
      %s445 = sshll.u32 [#allocation35], 4
      %s446 = int_to_ptr.vmem [resolvable:$true] %s445
      %448 = dma.hbm_to_vmem [thread:$0]  %s123, 16, %s446, [#allocation36]
    $region249: #{tpu_custom_call.1} parent=1 // pred_fallthru
      _
    // Predicated region
    $region250: #{tpu_custom_call.1} parent=1 // pred_check
      _
    $region251: #{tpu_custom_call.1} parent=1 // pred_check_branch
      %450 = sbr.rel (0) target = $region253
    $region252: #{tpu_custom_call.1} parent=1 // pred_region
      _
    $region253: #{tpu_custom_call.1} parent=1 // pred_fallthru
      _
    // Predicated region
    $region254: #{tpu_custom_call.1} parent=1 // pred_check
      _
    $region255: #{tpu_custom_call.1} parent=1 // pred_check_branch
      %452 = sbr.rel (0) target = $region257
    $region256: #{tpu_custom_call.1} parent=1 // pred_region
      _
    $region257: #{tpu_custom_call.1} parent=1 // pred_fallthru
      _
    // Predicated region
    $region258: #{tpu_custom_call.1} parent=1 // pred_check
      _
    $region259: #{tpu_custom_call.1} parent=1 // pred_check_branch
      %454 = sbr.rel (0) target = $region261
    $region260: #{tpu_custom_call.1} parent=1 // pred_region
      %s456 = ssub.s32 16, 16
      %457 = vsyncadd [#allocation36], %s456
      %s459 = sshll.u32 [#allocation37], 4
      %s460 = int_to_ptr.vmem [resolvable:$true] %s459
      %462 = dma.hbm_to_vmem [thread:$0]  %s129, 16, %s460, [#allocation36]
    $region261: #{tpu_custom_call.1} parent=1 // pred_fallthru
      _
    // Predicated region
    $region262: #{tpu_custom_call.1} parent=1 // pred_check
      _
    $region263: #{tpu_custom_call.1} parent=1 // pred_check_branch
      %464 = sbr.rel (0) target = $region265
    $region264: #{tpu_custom_call.1} parent=1 // pred_region
      %465 = dma.done [#allocation3], 16
    $region265: #{tpu_custom_call.1} parent=1 // pred_fallthru
      _
    // Predicated region
    $region266: #{tpu_custom_call.1} parent=1 // pred_check
      _
    $region267: #{tpu_custom_call.1} parent=1 // pred_check_branch
      %467 = sbr.rel (0) target = $region269
    $region268: #{tpu_custom_call.1} parent=1 // pred_region
      %468 = dma.done [#allocation6], 16
    $region269: #{tpu_custom_call.1} parent=1 // pred_fallthru
      _
    // Predicated region
    $region270: #{tpu_custom_call.1} parent=1 // pred_check
      _
    $region271: #{tpu_custom_call.1} parent=1 // pred_check_branch
      %470 = sbr.rel (0) target = $region273
    $region272: #{tpu_custom_call.1} parent=1 // pred_region
      %471 = dma.done [#allocation6], 16
    $region273: #{tpu_custom_call.1} parent=1 // pred_fallthru
      _
    // Predicated region
    $region274: #{tpu_custom_call.1} parent=1 // pred_check
      _
    $region275: #{tpu_custom_call.1} parent=1 // pred_check_branch
      %473 = sbr.rel (0) target = $region277
    $region276: #{tpu_custom_call.1} parent=1 // pred_region
      %474 = dma.done [#allocation9], 16
    $region277: #{tpu_custom_call.1} parent=1 // pred_fallthru
      _
    // Predicated region
    $region278: #{tpu_custom_call.1} parent=1 // pred_check
      _
    $region279: #{tpu_custom_call.1} parent=1 // pred_check_branch
      %476 = sbr.rel (0) target = $region281
    $region280: #{tpu_custom_call.1} parent=1 // pred_region
      %477 = dma.done [#allocation9], 16
    $region281: #{tpu_custom_call.1} parent=1 // pred_fallthru
      _
    // Predicated region
    $region282: #{tpu_custom_call.1} parent=1 // pred_check
      _
    $region283: #{tpu_custom_call.1} parent=1 // pred_check_branch
      %479 = sbr.rel (0) target = $region285
    $region284: #{tpu_custom_call.1} parent=1 // pred_region
      %480 = dma.done [#allocation12], 16
    $region285: #{tpu_custom_call.1} parent=1 // pred_fallthru
      _
    // Predicated region
    $region286: #{tpu_custom_call.1} parent=1 // pred_check
      _
    $region287: #{tpu_custom_call.1} parent=1 // pred_check_branch
      %482 = sbr.rel (0) target = $region289
    $region288: #{tpu_custom_call.1} parent=1 // pred_region
      %483 = dma.done [#allocation12], 16
    $region289: #{tpu_custom_call.1} parent=1 // pred_fallthru
      _
    // Predicated region
    $region290: #{tpu_custom_call.1} parent=1 // pred_check
      _
    $region291: #{tpu_custom_call.1} parent=1 // pred_check_branch
      %485 = sbr.rel (0) target = $region293
    $region292: #{tpu_custom_call.1} parent=1 // pred_region
      %486 = dma.done [#allocation15], 16
    $region293: #{tpu_custom_call.1} parent=1 // pred_fallthru
      _
    // Predicated region
    $region294: #{tpu_custom_call.1} parent=1 // pred_check
      _
    $region295: #{tpu_custom_call.1} parent=1 // pred_check_branch
      %488 = sbr.rel (0) target = $region297
    $region296: #{tpu_custom_call.1} parent=1 // pred_region
      %489 = dma.done [#allocation15], 16
    $region297: #{tpu_custom_call.1} parent=1 // pred_fallthru
      _
    // Predicated region
    $region298: #{tpu_custom_call.1} parent=1 // pred_check
      _
    $region299: #{tpu_custom_call.1} parent=1 // pred_check_branch
      %491 = sbr.rel (0) target = $region301
    $region300: #{tpu_custom_call.1} parent=1 // pred_region
      %492 = dma.done [#allocation18], 16
    $region301: #{tpu_custom_call.1} parent=1 // pred_fallthru
      _
    // Predicated region
    $region302: #{tpu_custom_call.1} parent=1 // pred_check
      _
    $region303: #{tpu_custom_call.1} parent=1 // pred_check_branch
      %494 = sbr.rel (0) target = $region305
    $region304: #{tpu_custom_call.1} parent=1 // pred_region
      %495 = dma.done [#allocation18], 16
    $region305: #{tpu_custom_call.1} parent=1 // pred_fallthru
      _
    // Predicated region
    $region306: #{tpu_custom_call.1} parent=1 // pred_check
      _
    $region307: #{tpu_custom_call.1} parent=1 // pred_check_branch
      %497 = sbr.rel (0) target = $region309
    $region308: #{tpu_custom_call.1} parent=1 // pred_region
      %498 = dma.done [#allocation21], 16
    $region309: #{tpu_custom_call.1} parent=1 // pred_fallthru
      _
    // Predicated region
    $region310: #{tpu_custom_call.1} parent=1 // pred_check
      _
    $region311: #{tpu_custom_call.1} parent=1 // pred_check_branch
      %500 = sbr.rel (0) target = $region313
    $region312: #{tpu_custom_call.1} parent=1 // pred_region
      %501 = dma.done [#allocation21], 16
    $region313: #{tpu_custom_call.1} parent=1 // pred_fallthru
      _
    // Predicated region
    $region314: #{tpu_custom_call.1} parent=1 // pred_check
      _
    $region315: #{tpu_custom_call.1} parent=1 // pred_check_branch
      %503 = sbr.rel (0) target = $region317
    $region316: #{tpu_custom_call.1} parent=1 // pred_region
      %504 = dma.done [#allocation24], 16
    $region317: #{tpu_custom_call.1} parent=1 // pred_fallthru
      _
    // Predicated region
    $region318: #{tpu_custom_call.1} parent=1 // pred_check
      _
    $region319: #{tpu_custom_call.1} parent=1 // pred_check_branch
      %506 = sbr.rel (0) target = $region321
    $region320: #{tpu_custom_call.1} parent=1 // pred_region
      %507 = dma.done [#allocation24], 16
    $region321: #{tpu_custom_call.1} parent=1 // pred_fallthru
      _
    // Predicated region
    $region322: #{tpu_custom_call.1} parent=1 // pred_check
      _
    $region323: #{tpu_custom_call.1} parent=1 // pred_check_branch
      %509 = sbr.rel (0) target = $region325
    $region324: #{tpu_custom_call.1} parent=1 // pred_region
      %510 = dma.done [#allocation27], 16
    $region325: #{tpu_custom_call.1} parent=1 // pred_fallthru
      _
    // Predicated region
    $region326: #{tpu_custom_call.1} parent=1 // pred_check
      _
    $region327: #{tpu_custom_call.1} parent=1 // pred_check_branch
      %512 = sbr.rel (0) target = $region329
    $region328: #{tpu_custom_call.1} parent=1 // pred_region
      %513 = dma.done [#allocation27], 16
    $region329: #{tpu_custom_call.1} parent=1 // pred_fallthru
      _
    // Predicated region
    $region330: #{tpu_custom_call.1} parent=1 // pred_check
      _
    $region331: #{tpu_custom_call.1} parent=1 // pred_check_branch
      %515 = sbr.rel (0) target = $region333
    $region332: #{tpu_custom_call.1} parent=1 // pred_region
      %516 = dma.done [#allocation30], 16
    $region333: #{tpu_custom_call.1} parent=1 // pred_fallthru
      _
    // Predicated region
    $region334: #{tpu_custom_call.1} parent=1 // pred_check
      _
    $region335: #{tpu_custom_call.1} parent=1 // pred_check_branch
      %518 = sbr.rel (0) target = $region337
    $region336: #{tpu_custom_call.1} parent=1 // pred_region
      %519 = dma.done [#allocation30], 16
    $region337: #{tpu_custom_call.1} parent=1 // pred_fallthru
      _
    // Predicated region
    $region338: #{tpu_custom_call.1} parent=1 // pred_check
      _
    $region339: #{tpu_custom_call.1} parent=1 // pred_check_branch
      %521 = sbr.rel (0) target = $region341
    $region340: #{tpu_custom_call.1} parent=1 // pred_region
      %522 = dma.done [#allocation33], 16
    $region341: #{tpu_custom_call.1} parent=1 // pred_fallthru
      _
    // Predicated region
    $region342: #{tpu_custom_call.1} parent=1 // pred_check
      _
    $region343: #{tpu_custom_call.1} parent=1 // pred_check_branch
      %524 = sbr.rel (0) target = $region345
    $region344: #{tpu_custom_call.1} parent=1 // pred_region
      %525 = dma.done [#allocation33], 16
    $region345: #{tpu_custom_call.1} parent=1 // pred_fallthru
      _
    // Predicated region
    $region346: #{tpu_custom_call.1} parent=1 // pred_check
      _
    $region347: #{tpu_custom_call.1} parent=1 // pred_check_branch
      %527 = sbr.rel (0) target = $region349
    $region348: #{tpu_custom_call.1} parent=1 // pred_region
      %528 = dma.done [#allocation36], 16
    $region349: #{tpu_custom_call.1} parent=1 // pred_fallthru
      _
    // Predicated region
    $region350: #{tpu_custom_call.1} parent=1 // pred_check
      _
    $region351: #{tpu_custom_call.1} parent=1 // pred_check_branch
      %530 = sbr.rel (0) target = $region353
    $region352: #{tpu_custom_call.1} parent=1 // pred_region
      %531 = dma.done [#allocation36], 16
    $region353: #{tpu_custom_call.1} parent=1 // pred_fallthru
      _
    %v533 = vld [vmem:[%s1] sm:$0xff]
    %v534 = vld [vmem:[%s1 + $0x8] sm:$0xff]
    %v535 = vld [vmem:[%s1 + $0x10] sm:$0xff]
    %v536 = vld [vmem:[%s1 + $0x18] sm:$0xff]
    %v537 = vld [vmem:[%s3] sm:$0xf]
    %v538 = vld [vmem:[%s3 + $0x4] sm:$0xf]
    %v539 = vld [vmem:[%s3 + $0x8] sm:$0xf]
    %v540 = vld [vmem:[%s3 + $0xc] sm:$0xf]
    %v541 = vld [vmem:[%s3 + $0x10] sm:$0xf]
    %v542 = vld [vmem:[%s3 + $0x14] sm:$0xf]
    %v543 = vld [vmem:[#allocation2] sm:$0x1]
    %v544 = vld [vmem:[#allocation5] sm:$0x1]
    %v545 = vld [vmem:[#allocation7] sm:$0x1]
    %v546 = vpack.c.bf16 %v534, %v533
    %v547 = vpack.c.bf16 %v536, %v535
    %v549 = vlaneseq
    %v550 = vshrl.u32 %v549, 7
    %v551 = vsub.s32 0, %v550
    %v552 = vrot.slane %v543, %v551
    %v560 = vunpack.c.l.b16 %v537
    %v561 = vunpack.c.l.b16 %v538
    %v562 = vunpack.c.l.b16 %v539
    %v563 = vunpack.c.l.b16 %v540
    %v564 = vunpack.c.l.b16 %v541
    %v565 = vunpack.c.l.b16 %v542
    %v566 = vpack.c.b16 %v561, %v560
    %v567 = vpack.c.b16 %v563, %v562
    %v568 = vpack.c.b16 %v565, %v564
    %vm572 = vcmask 392192
    %v574 = vsel %vm572, %v546, 0
    %v577 = vsel %vm572, %v547, 0
    %579 = vmatprep.subr.bf16.mxu0 0
    %580 = vmatpush1.bf16.msra.mxu0 %v566
    %581 = vmatprep.subr.bf16.mxu0 0
    %582 = vmatpush1.bf16.msra.mxu0 %v567
    %583 = vmatprep.subr.bf16.mxu0 0
    %584 = vmatpush1.bf16.msra.mxu0 %v568
    %585 = vmatprep.subr.bf16.mxu0 0
    %586 = vmatpush1.bf16.msra.mxu0 0
    %587 = vmatprep.subr.bf16.mxu0 0
    %588 = vmatpush1.bf16.msra.mxu0 0
    %589 = vmatprep.subr.bf16.mxu0 0
    %590 = vmatpush1.bf16.msra.mxu0 0
    %591 = vmatprep.subr.bf16.mxu0 0
    %592 = vmatpush1.bf16.msra.mxu0 0
    %593 = vmatprep.subr.bf16.mxu0 0
    %594 = vmatpush1.bf16.msra.mxu0 0
    %595 = vmatprep.subr.bf16.mxu0 0
    %596 = vmatpush1.bf16.msra.mxu0 0
    %597 = vmatprep.subr.bf16.mxu0 0
    %598 = vmatpush1.bf16.msra.mxu0 0
    %599 = vmatprep.subr.bf16.mxu0 0
    %600 = vmatpush1.bf16.msra.mxu0 0
    %601 = vmatprep.subr.bf16.mxu0 0
    %602 = vmatpush1.bf16.msra.mxu0 0
    %603 = vmatprep.subr.bf16.mxu0 0
    %604 = vmatpush1.bf16.msra.mxu0 0
    %605 = vmatprep.subr.bf16.mxu0 0
    %606 = vmatpush1.bf16.msra.mxu0 0
    %607 = vmatprep.subr.bf16.mxu0 0
    %608 = vmatpush1.bf16.msra.mxu0 0
    %609 = vmatprep.subr.bf16.mxu0 0
    %610 = vmatpush1.bf16.msra.mxu0 0
    %611 = vmatprep.mubr.bf16.mxu0 0
    %612 = vmatmul.mubr.bf16.gmra.mrb[0].mxu0 %v574
    %v613 = vpop.f32.mrb[0].mxu0
    %v614 = vadd.f32 %v552, %v613
    %v615 = vpop.f32.mrb[0].mxu0
    %v616 = vpop.f32.mrb[0].mxu0
    %v617 = vadd.f32 %v552, %v616
    %v618 = vpop.f32.mrb[0].mxu0
    %619 = vmatprep.mubr.bf16.mxu0 0
    %620 = vmatmul.mubr.bf16.gmra.mrb[0].mxu0 %v577
    %v621 = vpop.f32.mrb[0].mxu0
    %v622 = vadd.f32 %v552, %v621
    %v623 = vpop.f32.mrb[0].mxu0
    %v624 = vpop.f32.mrb[0].mxu0
    %v625 = vadd.f32 %v552, %v624
    %v626 = vpop.f32.mrb[0].mxu0
    %627 = vdwg.mxu0
    %vm628 = vcmask 261120
    %v629 = vsel %vm628, %v614, 0.0
    %630 = vadd.xlane.f32.xlu0 %v629
    %v631 = vpop.xlane.xlu0 %630
    %v632 = vsel %vm628, %v617, 0.0
    %633 = vadd.xlane.f32.xlu0 %v632
    %v634 = vpop.xlane.xlu0 %633
    %v635 = vsel %vm628, %v622, 0.0
    %636 = vadd.xlane.f32.xlu0 %v635
    %v637 = vpop.xlane.xlu0 %636
    %v638 = vsel %vm628, %v625, 0.0
    %639 = vadd.xlane.f32.xlu0 %v638
    %v640 = vpop.xlane.xlu0 %639
    %v641 = vrcp.pop 32.0
    %v642 = vmul.f32 %v631, %v641
    %v643 = vmul.f32 %v634, %v641
    %v644 = vmul.f32 %v637, %v641
    %v645 = vmul.f32 %v640, %v641
    %v646 = vsub.f32 %v614, %v642
    %v647 = vsub.f32 %v617, %v643
    %v648 = vsub.f32 %v622, %v644
    %v649 = vsub.f32 %v625, %v645
    %v650 = vmul.f32 %v646, %v646
    %v651 = vmul.f32 %v647, %v647
    %v652 = vmul.f32 %v648, %v648
    %v653 = vmul.f32 %v649, %v649
    %v654 = vsel %vm628, %v650, 0.0
    %655 = vadd.xlane.f32.xlu0 %v654
    %v656 = vpop.xlane.xlu0 %655
    %v657 = vsel %vm628, %v651, 0.0
    %658 = vadd.xlane.f32.xlu0 %v657
    %v659 = vpop.xlane.xlu0 %658
    %v660 = vsel %vm628, %v652, 0.0
    %661 = vadd.xlane.f32.xlu0 %v660
    %v662 = vpop.xlane.xlu0 %661
    %v663 = vsel %vm628, %v653, 0.0
    %664 = vadd.xlane.f32.xlu0 %v663
    %v665 = vpop.xlane.xlu0 %664
    %v666 = vmul.f32 %v656, %v641
    %v667 = vmul.f32 %v659, %v641
    %v668 = vmul.f32 %v662, %v641
    %v669 = vmul.f32 %v665, %v641
    %v670 = vadd.f32 %v666, 1e-05
    %v671 = vadd.f32 %v667, 1e-05
    %v672 = vadd.f32 %v668, 1e-05
    %v673 = vadd.f32 %v669, 1e-05
    %v674 = vrsqrt.pop %v670
    %v675 = vrsqrt.pop %v671
    %v676 = vrsqrt.pop %v672
    %v677 = vrsqrt.pop %v673
    %v678 = vmul.f32 %v646, %v674
    %v679 = vmul.f32 %v647, %v675
    %v680 = vmul.f32 %v648, %v676
    %v681 = vmul.f32 %v649, %v677
    %v683 = vlaneseq
    %v684 = vshrl.u32 %v683, 7
    %v685 = vsub.s32 0, %v684
    %v686 = vrot.slane %v544, %v685
    %v688 = vmul.f32 %v678, %v686
    %v689 = vmul.f32 %v679, %v686
    %v690 = vmul.f32 %v680, %v686
    %v691 = vmul.f32 %v681, %v686
    %v693 = vlaneseq
    %v694 = vshrl.u32 %v693, 7
    %v695 = vsub.s32 0, %v694
    %v696 = vrot.slane %v545, %v695
    %v698 = vadd.f32 %v688, %v696
    %v699 = vadd.f32 %v689, %v696
    %v700 = vadd.f32 %v690, %v696
    %v701 = vadd.f32 %v691, %v696
    %v702 = vld [vmem:[#allocation8] sm:$0x1]
    %v703 = vld [vmem:[#allocation10] sm:$0x1]
    %v704 = vld [vmem:[%s15] sm:$0xf]
    %v705 = vld [vmem:[%s15 + $0x4] sm:$0xf]
    %v706 = vld [vmem:[%s15 + $0x8] sm:$0xf]
    %v707 = vld [vmem:[%s15 + $0xc] sm:$0xf]
    %v708 = vld [vmem:[#allocation11] sm:$0x1]
    %v709 = vld [vmem:[%s21] sm:$0xf]
    %v710 = vld [vmem:[%s21 + $0x4] sm:$0xf]
    %v711 = vld [vmem:[%s21 + $0x8] sm:$0xf]
    %v712 = vld [vmem:[%s21 + $0xc] sm:$0xf]
    %v713 = vld [vmem:[#allocation13] sm:$0x1]
    %v714 = vld [vmem:[#allocation14] sm:$0x1]
    %v715 = vld [vmem:[#allocation16] sm:$0x1]
    %v716 = vld [vmem:[%s29] sm:$0xf]
    %v717 = vld [vmem:[%s29 + $0x4] sm:$0xf]
    %v718 = vld [vmem:[%s29 + $0x8] sm:$0xf]
    %v719 = vld [vmem:[%s29 + $0xc] sm:$0xf]
    %v720 = vld [vmem:[#allocation17] sm:$0x1]
    %v721 = vld [vmem:[%s33] sm:$0xf]
    %v722 = vld [vmem:[%s33 + $0x4] sm:$0xf]
    %v723 = vld [vmem:[%s33 + $0x8] sm:$0xf]
    %v724 = vld [vmem:[%s33 + $0xc] sm:$0xf]
    %v725 = vld [vmem:[%s33 + $0x10] sm:$0xf]
    %v726 = vld [vmem:[%s33 + $0x14] sm:$0xf]
    %v727 = vld [vmem:[%s33 + $0x18] sm:$0xf]
    %v728 = vld [vmem:[%s33 + $0x1c] sm:$0xf]
    %v729 = vld [vmem:[%s33 + $0x20] sm:$0xf]
    %v730 = vld [vmem:[%s33 + $0x24] sm:$0xf]
    %v731 = vld [vmem:[%s33 + $0x28] sm:$0xf]
    %v732 = vld [vmem:[%s33 + $0x2c] sm:$0xf]
    %v733 = vld [vmem:[%s33 + $0x30] sm:$0xf]
    %v734 = vld [vmem:[%s33 + $0x34] sm:$0xf]
    %v735 = vld [vmem:[%s33 + $0x38] sm:$0xf]
    %v736 = vld [vmem:[%s33 + $0x3c] sm:$0xf]
    %v737 = vld [vmem:[#allocation19] sm:$0x1]
    %v738 = vsel %vm628, %v698, 0.0
    %739 = vadd.xlane.f32.xlu0 %v738
    %v740 = vpop.xlane.xlu0 %739
    %v741 = vsel %vm628, %v699, 0.0
    %742 = vadd.xlane.f32.xlu0 %v741
    %v743 = vpop.xlane.xlu0 %742
    %v744 = vsel %vm628, %v700, 0.0
    %745 = vadd.xlane.f32.xlu0 %v744
    %v746 = vpop.xlane.xlu0 %745
    %v747 = vsel %vm628, %v701, 0.0
    %748 = vadd.xlane.f32.xlu0 %v747
    %v749 = vpop.xlane.xlu0 %748
    %v750 = vmul.f32 %v740, %v641
    %v751 = vmul.f32 %v743, %v641
    %v752 = vmul.f32 %v746, %v641
    %v753 = vmul.f32 %v749, %v641
    %v754 = vsub.f32 %v698, %v750
    %v755 = vsub.f32 %v699, %v751
    %v756 = vsub.f32 %v700, %v752
    %v757 = vsub.f32 %v701, %v753
    %v758 = vmul.f32 %v754, %v754
    %v759 = vmul.f32 %v755, %v755
    %v760 = vmul.f32 %v756, %v756
    %v761 = vmul.f32 %v757, %v757
    %v762 = vsel %vm628, %v758, 0.0
    %763 = vadd.xlane.f32.xlu0 %v762
    %v764 = vpop.xlane.xlu0 %763
    %v765 = vsel %vm628, %v759, 0.0
    %766 = vadd.xlane.f32.xlu0 %v765
    %v767 = vpop.xlane.xlu0 %766
    %v768 = vsel %vm628, %v760, 0.0
    %769 = vadd.xlane.f32.xlu0 %v768
    %v770 = vpop.xlane.xlu0 %769
    %v771 = vsel %vm628, %v761, 0.0
    %772 = vadd.xlane.f32.xlu0 %v771
    %v773 = vpop.xlane.xlu0 %772
    %v774 = vmul.f32 %v764, %v641
    %v775 = vmul.f32 %v767, %v641
    %v776 = vmul.f32 %v770, %v641
    %v777 = vmul.f32 %v773, %v641
    %v778 = vadd.f32 %v774, 1e-05
    %v779 = vadd.f32 %v775, 1e-05
    %v780 = vadd.f32 %v776, 1e-05
    %v781 = vadd.f32 %v777, 1e-05
    %v782 = vrsqrt.pop %v778
    %v783 = vrsqrt.pop %v779
    %v784 = vrsqrt.pop %v780
    %v785 = vrsqrt.pop %v781
    %v786 = vmul.f32 %v754, %v782
    %v787 = vmul.f32 %v755, %v783
    %v788 = vmul.f32 %v756, %v784
    %v789 = vmul.f32 %v757, %v785
    %v791 = vlaneseq
    %v792 = vshrl.u32 %v791, 7
    %v793 = vsub.s32 0, %v792
    %v794 = vrot.slane %v702, %v793
    %v796 = vmul.f32 %v786, %v794
    %v797 = vmul.f32 %v787, %v794
    %v798 = vmul.f32 %v788, %v794
    %v799 = vmul.f32 %v789, %v794
    %v801 = vlaneseq
    %v802 = vshrl.u32 %v801, 7
    %v803 = vsub.s32 0, %v802
    %v804 = vrot.slane %v703, %v803
    %v806 = vadd.f32 %v796, %v804
    %v807 = vadd.f32 %v797, %v804
    %v808 = vadd.f32 %v798, %v804
    %v809 = vadd.f32 %v799, %v804
    %v810 = vpack.c.bf16 %v807, %v806
    %v811 = vpack.c.bf16 %v809, %v808
    %v813 = vlaneseq
    %v814 = vshrl.u32 %v813, 7
    %v815 = vsub.s32 0, %v814
    %v816 = vrot.slane %v708, %v815
    %v822 = vunpack.c.l.b16 %v704
    %v823 = vunpack.c.l.b16 %v705
    %v824 = vunpack.c.l.b16 %v706
    %v825 = vunpack.c.l.b16 %v707
    %v826 = vpack.c.b16 %v823, %v822
    %v827 = vpack.c.b16 %v825, %v824
    %v831 = vsel %vm628, %v810, 0
    %v834 = vsel %vm628, %v811, 0
    %836 = vmatprep.subr.bf16.mxu0 0
    %837 = vmatpush1.bf16.msra.mxu0 %v826
    %838 = vmatprep.subr.bf16.mxu0 0
    %839 = vmatpush1.bf16.msra.mxu0 %v827
    %840 = vmatprep.subr.bf16.mxu0 0
    %841 = vmatpush1.bf16.msra.mxu0 0
    %842 = vmatprep.subr.bf16.mxu0 0
    %843 = vmatpush1.bf16.msra.mxu0 0
    %844 = vmatprep.subr.bf16.mxu0 0
    %845 = vmatpush1.bf16.msra.mxu0 0
    %846 = vmatprep.subr.bf16.mxu0 0
    %847 = vmatpush1.bf16.msra.mxu0 0
    %848 = vmatprep.subr.bf16.mxu0 0
    %849 = vmatpush1.bf16.msra.mxu0 0
    %850 = vmatprep.subr.bf16.mxu0 0
    %851 = vmatpush1.bf16.msra.mxu0 0
    %852 = vmatprep.subr.bf16.mxu0 0
    %853 = vmatpush1.bf16.msra.mxu0 0
    %854 = vmatprep.subr.bf16.mxu0 0
    %855 = vmatpush1.bf16.msra.mxu0 0
    %856 = vmatprep.subr.bf16.mxu0 0
    %857 = vmatpush1.bf16.msra.mxu0 0
    %858 = vmatprep.subr.bf16.mxu0 0
    %859 = vmatpush1.bf16.msra.mxu0 0
    %860 = vmatprep.subr.bf16.mxu0 0
    %861 = vmatpush1.bf16.msra.mxu0 0
    %862 = vmatprep.subr.bf16.mxu0 0
    %863 = vmatpush1.bf16.msra.mxu0 0
    %864 = vmatprep.subr.bf16.mxu0 0
    %865 = vmatpush1.bf16.msra.mxu0 0
    %866 = vmatprep.subr.bf16.mxu0 0
    %867 = vmatpush1.bf16.msra.mxu0 0
    %868 = vmatprep.mubr.bf16.mxu0 0
    %869 = vmatmul.mubr.bf16.gmra.mrb[0].mxu0 %v831
    %v870 = vpop.f32.mrb[0].mxu0
    %v871 = vadd.f32 %v816, %v870
    %v872 = vpop.f32.mrb[0].mxu0
    %v873 = vpop.f32.mrb[0].mxu0
    %v874 = vadd.f32 %v816, %v873
    %v875 = vpop.f32.mrb[0].mxu0
    %876 = vmatprep.mubr.bf16.mxu0 0
    %877 = vmatmul.mubr.bf16.gmra.mrb[0].mxu0 %v834
    %v878 = vpop.f32.mrb[0].mxu0
    %v879 = vadd.f32 %v816, %v878
    %v880 = vpop.f32.mrb[0].mxu0
    %v881 = vpop.f32.mrb[0].mxu0
    %v882 = vadd.f32 %v816, %v881
    %v883 = vpop.f32.mrb[0].mxu0
    %884 = vdwg.mxu0
    %v885 = vpack.c.bf16 %v874, %v871
    %v886 = vpack.c.bf16 %v882, %v879
    %889 = vrot.lane.b32.xlu0 %v885, 96
    %v890 = vpop.permute.xlu0 %889
    %891 = vrot.lane.b32.xlu0 %v886, 96
    %v892 = vpop.permute.xlu0 %891
    %vm893 = vcmask 130048
    %v895 = vsel %vm893, %v885, 0
    %v898 = vsel %vm893, %v886, 0
    %v901 = vsel %vm893, %v890, 0
    %v904 = vsel %vm893, %v892, 0
    %906 = vmatprep.subr.bf16.mxu0 0
    %907 = vmatpush1.bf16.xpose.msra.mxu0 %v901
    %908 = vmatprep.subr.bf16.mxu0 0
    %909 = vmatpush1.bf16.xpose.msra.mxu0 %v904
    %910 = vmatprep.subr.bf16.mxu0 0
    %911 = vmatpush1.bf16.xpose.msra.mxu0 0
    %912 = vmatprep.subr.bf16.mxu0 0
    %913 = vmatpush1.bf16.xpose.msra.mxu0 0
    %914 = vmatprep.subr.bf16.mxu0 0
    %915 = vmatpush1.bf16.xpose.msra.mxu0 0
    %916 = vmatprep.subr.bf16.mxu0 0
    %917 = vmatpush1.bf16.xpose.msra.mxu0 0
    %918 = vmatprep.subr.bf16.mxu0 0
    %919 = vmatpush1.bf16.xpose.msra.mxu0 0
    %920 = vmatprep.subr.bf16.mxu0 0
    %921 = vmatpush1.bf16.xpose.msra.mxu0 0
    %922 = vmatprep.subr.bf16.mxu0 0
    %923 = vmatpush1.bf16.xpose.msra.mxu0 0
    %924 = vmatprep.subr.bf16.mxu0 0
    %925 = vmatpush1.bf16.xpose.msra.mxu0 0
    %926 = vmatprep.subr.bf16.mxu0 0
    %927 = vmatpush1.bf16.xpose.msra.mxu0 0
    %928 = vmatprep.subr.bf16.mxu0 0
    %929 = vmatpush1.bf16.xpose.msra.mxu0 0
    %930 = vmatprep.subr.bf16.mxu0 0
    %931 = vmatpush1.bf16.xpose.msra.mxu0 0
    %932 = vmatprep.subr.bf16.mxu0 0
    %933 = vmatpush1.bf16.xpose.msra.mxu0 0
    %934 = vmatprep.subr.bf16.mxu0 0
    %935 = vmatpush1.bf16.xpose.msra.mxu0 0
    %936 = vmatprep.subr.bf16.mxu0 0
    %937 = vmatpush1.bf16.xpose.msra.mxu0 0
    %938 = vmatprep.mubr.bf16.mxu0 0
    %939 = vmatmul.mubr.bf16.gmra.mrb[0].mxu0 %v895
    %v940 = vpop.f32.mrb[0].mxu0
    %v941 = vadd.f32 0.0, %v940
    %v942 = vpop.f32.mrb[0].mxu0
    %v943 = vpop.f32.mrb[0].mxu0
    %v944 = vadd.f32 0.0, %v943
    %v945 = vpop.f32.mrb[0].mxu0
    %946 = vmatprep.mubr.bf16.mxu0 0
    %947 = vmatmul.mubr.bf16.gmra.mrb[0].mxu0 %v898
    %v948 = vpop.f32.mrb[0].mxu0
    %v949 = vadd.f32 0.0, %v948
    %v950 = vpop.f32.mrb[0].mxu0
    %v951 = vpop.f32.mrb[0].mxu0
    %v952 = vadd.f32 0.0, %v951
    %v953 = vpop.f32.mrb[0].mxu0
    %954 = vdwg.mxu0
    %v955 = vmul.f32 %v941, 0.25
    %v956 = vmul.f32 %v944, 0.25
    %v957 = vmul.f32 %v949, 0.25
    %v958 = vmul.f32 %v952, 0.25
    %v959 = vld [vmem:[%s19] sm:$0xff]
    %v960 = vld [vmem:[%s19 + $0x8] sm:$0xff]
    %v961 = vld [vmem:[%s19 + $0x10] sm:$0xff]
    %v962 = vld [vmem:[%s19 + $0x18] sm:$0xff]
    %v963 = vadd.f32 %v955, %v959
    %v964 = vadd.f32 %v956, %v960
    %v965 = vadd.f32 %v957, %v961
    %v966 = vadd.f32 %v958, %v962
    %v967 = vsel %vm628, %v963, -inf
    %968 = vmax.xlane.f32.xlu0 %v967
    %v969 = vpop.xlane.xlu0 %968
    %v970 = vsel %vm628, %v964, -inf
    %971 = vmax.xlane.f32.xlu0 %v970
    %v972 = vpop.xlane.xlu0 %971
    %v973 = vsel %vm628, %v965, -inf
    %974 = vmax.xlane.f32.xlu0 %v973
    %v975 = vpop.xlane.xlu0 %974
    %v976 = vsel %vm628, %v966, -inf
    %977 = vmax.xlane.f32.xlu0 %v976
    %v978 = vpop.xlane.xlu0 %977
    %v979 = vsub.f32 %v963, %v969
    %v980 = vsub.f32 %v964, %v972
    %v981 = vsub.f32 %v965, %v975
    %v982 = vsub.f32 %v966, %v978
    %v983 = vmul.f32 %v979, 1.442695
    %v984 = vpow.pop %v983
    %v985 = vmul.f32 %v980, 1.442695
    %v986 = vpow.pop %v985
    %v987 = vmul.f32 %v981, 1.442695
    %v988 = vpow.pop %v987
    %v989 = vmul.f32 %v982, 1.442695
    %v990 = vpow.pop %v989
    %v991 = vsel %vm628, %v984, 0.0
    %992 = vadd.xlane.f32.xlu0 %v991
    %v993 = vpop.xlane.xlu0 %992
    %v994 = vsel %vm628, %v986, 0.0
    %995 = vadd.xlane.f32.xlu0 %v994
    %v996 = vpop.xlane.xlu0 %995
    %v997 = vsel %vm628, %v988, 0.0
    %998 = vadd.xlane.f32.xlu0 %v997
    %v999 = vpop.xlane.xlu0 %998
    %v1000 = vsel %vm628, %v990, 0.0
    %1001 = vadd.xlane.f32.xlu0 %v1000
    %v1002 = vpop.xlane.xlu0 %1001
    %v1003 = vrcp.pop %v993
    %v1004 = vmul.f32 %v984, %v1003
    %v1005 = vrcp.pop %v996
    %v1006 = vmul.f32 %v986, %v1005
    %v1007 = vrcp.pop %v999
    %v1008 = vmul.f32 %v988, %v1007
    %v1009 = vrcp.pop %v1002
    %v1010 = vmul.f32 %v990, %v1009
    %v1011 = vpack.c.bf16 %v1006, %v1004
    %v1012 = vpack.c.bf16 %v1010, %v1008
    %1013 = vrot.lane.b32.xlu0 %v885, 64
    %v1014 = vpop.permute.xlu0 %1013
    %1015 = vrot.lane.b32.xlu0 %v886, 64
    %v1016 = vpop.permute.xlu0 %1015
    %v1020 = vsel %vm628, %v1011, 0
    %v1023 = vsel %vm628, %v1012, 0
    %1025 = vmatprep.subr.bf16.mxu0 0
    %1026 = vmatpush1.bf16.msra.mxu0 %v1014
    %1027 = vmatprep.subr.bf16.mxu0 0
    %1028 = vmatpush1.bf16.msra.mxu0 %v1016
    %1029 = vmatprep.subr.bf16.mxu0 0
    %1030 = vmatpush1.bf16.msra.mxu0 0
    %1031 = vmatprep.subr.bf16.mxu0 0
    %1032 = vmatpush1.bf16.msra.mxu0 0
    %1033 = vmatprep.subr.bf16.mxu0 0
    %1034 = vmatpush1.bf16.msra.mxu0 0
    %1035 = vmatprep.subr.bf16.mxu0 0
    %1036 = vmatpush1.bf16.msra.mxu0 0
    %1037 = vmatprep.subr.bf16.mxu0 0
    %1038 = vmatpush1.bf16.msra.mxu0 0
    %1039 = vmatprep.subr.bf16.mxu0 0
    %1040 = vmatpush1.bf16.msra.mxu0 0
    %1041 = vmatprep.subr.bf16.mxu0 0
    %1042 = vmatpush1.bf16.msra.mxu0 0
    %1043 = vmatprep.subr.bf16.mxu0 0
    %1044 = vmatpush1.bf16.msra.mxu0 0
    %1045 = vmatprep.subr.bf16.mxu0 0
    %1046 = vmatpush1.bf16.msra.mxu0 0
    %1047 = vmatprep.subr.bf16.mxu0 0
    %1048 = vmatpush1.bf16.msra.mxu0 0
    %1049 = vmatprep.subr.bf16.mxu0 0
    %1050 = vmatpush1.bf16.msra.mxu0 0
    %1051 = vmatprep.subr.bf16.mxu0 0
    %1052 = vmatpush1.bf16.msra.mxu0 0
    %1053 = vmatprep.subr.bf16.mxu0 0
    %1054 = vmatpush1.bf16.msra.mxu0 0
    %1055 = vmatprep.subr.bf16.mxu0 0
    %1056 = vmatpush1.bf16.msra.mxu0 0
    %1057 = vmatprep.mubr.bf16.mxu0 0
    %1058 = vmatmul.mubr.bf16.gmra.mrb[0].mxu0 %v1020
    %v1059 = vpop.f32.mrb[0].mxu0
    %v1060 = vadd.f32 0.0, %v1059
    %v1061 = vpop.f32.mrb[0].mxu0
    %v1062 = vpop.f32.mrb[0].mxu0
    %v1063 = vadd.f32 0.0, %v1062
    %v1064 = vpop.f32.mrb[0].mxu0
    %1065 = vmatprep.mubr.bf16.mxu0 0
    %1066 = vmatmul.mubr.bf16.gmra.mrb[0].mxu0 %v1023
    %v1067 = vpop.f32.mrb[0].mxu0
    %v1068 = vadd.f32 0.0, %v1067
    %v1069 = vpop.f32.mrb[0].mxu0
    %v1070 = vpop.f32.mrb[0].mxu0
    %v1071 = vadd.f32 0.0, %v1070
    %v1072 = vpop.f32.mrb[0].mxu0
    %1073 = vdwg.mxu0
    %1074 = vrot.lane.b32.xlu0 %v885, 112
    %v1075 = vpop.permute.xlu0 %1074
    %1076 = vrot.lane.b32.xlu0 %v886, 112
    %v1077 = vpop.permute.xlu0 %1076
    %1078 = vrot.lane.b32.xlu0 %v885, 80
    %v1079 = vpop.permute.xlu0 %1078
    %1080 = vrot.lane.b32.xlu0 %v886, 80
    %v1081 = vpop.permute.xlu0 %1080
    %v1083 = vsel %vm893, %v1075, 0
    %v1086 = vsel %vm893, %v1077, 0
    %v1089 = vsel %vm893, %v1079, 0
    %v1092 = vsel %vm893, %v1081, 0
    %1094 = vmatprep.subr.bf16.mxu0 0
    %1095 = vmatpush1.bf16.xpose.msra.mxu0 %v1089
    %1096 = vmatprep.subr.bf16.mxu0 0
    %1097 = vmatpush1.bf16.xpose.msra.mxu0 %v1092
    %1098 = vmatprep.subr.bf16.mxu0 0
    %1099 = vmatpush1.bf16.xpose.msra.mxu0 0
    %1100 = vmatprep.subr.bf16.mxu0 0
    %1101 = vmatpush1.bf16.xpose.msra.mxu0 0
    %1102 = vmatprep.subr.bf16.mxu0 0
    %1103 = vmatpush1.bf16.xpose.msra.mxu0 0
    %1104 = vmatprep.subr.bf16.mxu0 0
    %1105 = vmatpush1.bf16.xpose.msra.mxu0 0
    %1106 = vmatprep.subr.bf16.mxu0 0
    %1107 = vmatpush1.bf16.xpose.msra.mxu0 0
    %1108 = vmatprep.subr.bf16.mxu0 0
    %1109 = vmatpush1.bf16.xpose.msra.mxu0 0
    %1110 = vmatprep.subr.bf16.mxu0 0
    %1111 = vmatpush1.bf16.xpose.msra.mxu0 0
    %1112 = vmatprep.subr.bf16.mxu0 0
    %1113 = vmatpush1.bf16.xpose.msra.mxu0 0
    %1114 = vmatprep.subr.bf16.mxu0 0
    %1115 = vmatpush1.bf16.xpose.msra.mxu0 0
    %1116 = vmatprep.subr.bf16.mxu0 0
    %1117 = vmatpush1.bf16.xpose.msra.mxu0 0
    %1118 = vmatprep.subr.bf16.mxu0 0
    %1119 = vmatpush1.bf16.xpose.msra.mxu0 0
    %1120 = vmatprep.subr.bf16.mxu0 0
    %1121 = vmatpush1.bf16.xpose.msra.mxu0 0
    %1122 = vmatprep.subr.bf16.mxu0 0
    %1123 = vmatpush1.bf16.xpose.msra.mxu0 0
    %1124 = vmatprep.subr.bf16.mxu0 0
    %1125 = vmatpush1.bf16.xpose.msra.mxu0 0
    %1126 = vmatprep.mubr.bf16.mxu0 0
    %1127 = vmatmul.mubr.bf16.gmra.mrb[0].mxu0 %v1083
    %v1128 = vpop.f32.mrb[0].mxu0
    %v1129 = vadd.f32 0.0, %v1128
    %v1130 = vpop.f32.mrb[0].mxu0
    %v1131 = vpop.f32.mrb[0].mxu0
    %v1132 = vadd.f32 0.0, %v1131
    %v1133 = vpop.f32.mrb[0].mxu0
    %1134 = vmatprep.mubr.bf16.mxu0 0
    %1135 = vmatmul.mubr.bf16.gmra.mrb[0].mxu0 %v1086
    %v1136 = vpop.f32.mrb[0].mxu0
    %v1137 = vadd.f32 0.0, %v1136
    %v1138 = vpop.f32.mrb[0].mxu0
    %v1139 = vpop.f32.mrb[0].mxu0
    %v1140 = vadd.f32 0.0, %v1139
    %v1141 = vpop.f32.mrb[0].mxu0
    %1142 = vdwg.mxu0
    %v1143 = vmul.f32 %v1129, 0.25
    %v1144 = vmul.f32 %v1132, 0.25
    %v1145 = vmul.f32 %v1137, 0.25
    %v1146 = vmul.f32 %v1140, 0.25
    %s1147 = scalar_lea.vmem %s19, 32
    %v1148 = vld [vmem:[%s1147] sm:$0xff]
    %v1149 = vld [vmem:[%s1147 + $0x8] sm:$0xff]
    %v1150 = vld [vmem:[%s1147 + $0x10] sm:$0xff]
    %v1151 = vld [vmem:[%s1147 + $0x18] sm:$0xff]
    %v1152 = vadd.f32 %v1143, %v1148
    %v1153 = vadd.f32 %v1144, %v1149
    %v1154 = vadd.f32 %v1145, %v1150
    %v1155 = vadd.f32 %v1146, %v1151
    %v1156 = vsel %vm628, %v1152, -inf
    %1157 = vmax.xlane.f32.xlu0 %v1156
    %v1158 = vpop.xlane.xlu0 %1157
    %v1159 = vsel %vm628, %v1153, -inf
    %1160 = vmax.xlane.f32.xlu0 %v1159
    %v1161 = vpop.xlane.xlu0 %1160
    %v1162 = vsel %vm628, %v1154, -inf
    %1163 = vmax.xlane.f32.xlu0 %v1162
    %v1164 = vpop.xlane.xlu0 %1163
    %v1165 = vsel %vm628, %v1155, -inf
    %1166 = vmax.xlane.f32.xlu0 %v1165
    %v1167 = vpop.xlane.xlu0 %1166
    %v1168 = vsub.f32 %v1152, %v1158
    %v1169 = vsub.f32 %v1153, %v1161
    %v1170 = vsub.f32 %v1154, %v1164
    %v1171 = vsub.f32 %v1155, %v1167
    %v1172 = vmul.f32 %v1168, 1.442695
    %v1173 = vpow.pop %v1172
    %v1174 = vmul.f32 %v1169, 1.442695
    %v1175 = vpow.pop %v1174
    %v1176 = vmul.f32 %v1170, 1.442695
    %v1177 = vpow.pop %v1176
    %v1178 = vmul.f32 %v1171, 1.442695
    %v1179 = vpow.pop %v1178
    %v1180 = vsel %vm628, %v1173, 0.0
    %1181 = vadd.xlane.f32.xlu0 %v1180
    %v1182 = vpop.xlane.xlu0 %1181
    %v1183 = vsel %vm628, %v1175, 0.0
    %1184 = vadd.xlane.f32.xlu0 %v1183
    %v1185 = vpop.xlane.xlu0 %1184
    %v1186 = vsel %vm628, %v1177, 0.0
    %1187 = vadd.xlane.f32.xlu0 %v1186
    %v1188 = vpop.xlane.xlu0 %1187
    %v1189 = vsel %vm628, %v1179, 0.0
    %1190 = vadd.xlane.f32.xlu0 %v1189
    %v1191 = vpop.xlane.xlu0 %1190
    %v1192 = vrcp.pop %v1182
    %v1193 = vmul.f32 %v1173, %v1192
    %v1194 = vrcp.pop %v1185
    %v1195 = vmul.f32 %v1175, %v1194
    %v1196 = vrcp.pop %v1188
    %v1197 = vmul.f32 %v1177, %v1196
    %v1198 = vrcp.pop %v1191
    %v1199 = vmul.f32 %v1179, %v1198
    %v1200 = vpack.c.bf16 %v1195, %v1193
    %v1201 = vpack.c.bf16 %v1199, %v1197
    %1202 = vrot.lane.b32.xlu0 %v885, 48
    %v1203 = vpop.permute.xlu0 %1202
    %1204 = vrot.lane.b32.xlu0 %v886, 48
    %v1205 = vpop.permute.xlu0 %1204
    %v1209 = vsel %vm628, %v1200, 0
    %v1212 = vsel %vm628, %v1201, 0
    %1214 = vmatprep.subr.bf16.mxu0 0
    %1215 = vmatpush1.bf16.msra.mxu0 %v1203
    %1216 = vmatprep.subr.bf16.mxu0 0
    %1217 = vmatpush1.bf16.msra.mxu0 %v1205
    %1218 = vmatprep.subr.bf16.mxu0 0
    %1219 = vmatpush1.bf16.msra.mxu0 0
    %1220 = vmatprep.subr.bf16.mxu0 0
    %1221 = vmatpush1.bf16.msra.mxu0 0
    %1222 = vmatprep.subr.bf16.mxu0 0
    %1223 = vmatpush1.bf16.msra.mxu0 0
    %1224 = vmatprep.subr.bf16.mxu0 0
    %1225 = vmatpush1.bf16.msra.mxu0 0
    %1226 = vmatprep.subr.bf16.mxu0 0
    %1227 = vmatpush1.bf16.msra.mxu0 0
    %1228 = vmatprep.subr.bf16.mxu0 0
    %1229 = vmatpush1.bf16.msra.mxu0 0
    %1230 = vmatprep.subr.bf16.mxu0 0
    %1231 = vmatpush1.bf16.msra.mxu0 0
    %1232 = vmatprep.subr.bf16.mxu0 0
    %1233 = vmatpush1.bf16.msra.mxu0 0
    %1234 = vmatprep.subr.bf16.mxu0 0
    %1235 = vmatpush1.bf16.msra.mxu0 0
    %1236 = vmatprep.subr.bf16.mxu0 0
    %1237 = vmatpush1.bf16.msra.mxu0 0
    %1238 = vmatprep.subr.bf16.mxu0 0
    %1239 = vmatpush1.bf16.msra.mxu0 0
    %1240 = vmatprep.subr.bf16.mxu0 0
    %1241 = vmatpush1.bf16.msra.mxu0 0
    %1242 = vmatprep.subr.bf16.mxu0 0
    %1243 = vmatpush1.bf16.msra.mxu0 0
    %1244 = vmatprep.subr.bf16.mxu0 0
    %1245 = vmatpush1.bf16.msra.mxu0 0
    %1246 = vmatprep.mubr.bf16.mxu0 0
    %1247 = vmatmul.mubr.bf16.gmra.mrb[0].mxu0 %v1209
    %v1248 = vpop.f32.mrb[0].mxu0
    %v1249 = vadd.f32 0.0, %v1248
    %v1250 = vpop.f32.mrb[0].mxu0
    %v1251 = vpop.f32.mrb[0].mxu0
    %v1252 = vadd.f32 0.0, %v1251
    %v1253 = vpop.f32.mrb[0].mxu0
    %1254 = vmatprep.mubr.bf16.mxu0 0
    %1255 = vmatmul.mubr.bf16.gmra.mrb[0].mxu0 %v1212
    %v1256 = vpop.f32.mrb[0].mxu0
    %v1257 = vadd.f32 0.0, %v1256
    %v1258 = vpop.f32.mrb[0].mxu0
    %v1259 = vpop.f32.mrb[0].mxu0
    %v1260 = vadd.f32 0.0, %v1259
    %v1261 = vpop.f32.mrb[0].mxu0
    %1262 = vdwg.mxu0
    %1267 = vrot.lane.b32.xlu0 %v1249, 16
    %v1268 = vpop.permute.xlu0 %1267
    %1269 = vrot.lane.b32.xlu0 %v1252, 16
    %v1270 = vpop.permute.xlu0 %1269
    %1271 = vrot.lane.b32.xlu0 %v1257, 16
    %v1272 = vpop.permute.xlu0 %1271
    %1273 = vrot.lane.b32.xlu0 %v1260, 16
    %v1274 = vpop.permute.xlu0 %1273
    %v1279 = vsel %vm893, %v1060, %v1268
    %v1280 = vsel %vm893, %v1063, %v1270
    %v1281 = vsel %vm893, %v1068, %v1272
    %v1282 = vsel %vm893, %v1071, %v1274
    %v1283 = vpack.c.bf16 %v1280, %v1279
    %v1284 = vpack.c.bf16 %v1282, %v1281
    %v1286 = vlaneseq
    %v1287 = vshrl.u32 %v1286, 7
    %v1288 = vsub.s32 0, %v1287
    %v1289 = vrot.slane %v713, %v1288
    %v1295 = vunpack.c.l.b16 %v709
    %v1296 = vunpack.c.l.b16 %v710
    %v1297 = vunpack.c.l.b16 %v711
    %v1298 = vunpack.c.l.b16 %v712
    %v1299 = vpack.c.b16 %v1296, %v1295
    %v1300 = vpack.c.b16 %v1298, %v1297
    %v1304 = vsel %vm628, %v1283, 0
    %v1307 = vsel %vm628, %v1284, 0
    %1309 = vmatprep.subr.bf16.mxu0 0
    %1310 = vmatpush1.bf16.msra.mxu0 %v1299
    %1311 = vmatprep.subr.bf16.mxu0 0
    %1312 = vmatpush1.bf16.msra.mxu0 %v1300
    %1313 = vmatprep.subr.bf16.mxu0 0
    %1314 = vmatpush1.bf16.msra.mxu0 0
    %1315 = vmatprep.subr.bf16.mxu0 0
    %1316 = vmatpush1.bf16.msra.mxu0 0
    %1317 = vmatprep.subr.bf16.mxu0 0
    %1318 = vmatpush1.bf16.msra.mxu0 0
    %1319 = vmatprep.subr.bf16.mxu0 0
    %1320 = vmatpush1.bf16.msra.mxu0 0
    %1321 = vmatprep.subr.bf16.mxu0 0
    %1322 = vmatpush1.bf16.msra.mxu0 0
    %1323 = vmatprep.subr.bf16.mxu0 0
    %1324 = vmatpush1.bf16.msra.mxu0 0
    %1325 = vmatprep.subr.bf16.mxu0 0
    %1326 = vmatpush1.bf16.msra.mxu0 0
    %1327 = vmatprep.subr.bf16.mxu0 0
    %1328 = vmatpush1.bf16.msra.mxu0 0
    %1329 = vmatprep.subr.bf16.mxu0 0
    %1330 = vmatpush1.bf16.msra.mxu0 0
    %1331 = vmatprep.subr.bf16.mxu0 0
    %1332 = vmatpush1.bf16.msra.mxu0 0
    %1333 = vmatprep.subr.bf16.mxu0 0
    %1334 = vmatpush1.bf16.msra.mxu0 0
    %1335 = vmatprep.subr.bf16.mxu0 0
    %1336 = vmatpush1.bf16.msra.mxu0 0
    %1337 = vmatprep.subr.bf16.mxu0 0
    %1338 = vmatpush1.bf16.msra.mxu0 0
    %1339 = vmatprep.subr.bf16.mxu0 0
    %1340 = vmatpush1.bf16.msra.mxu0 0
    %1341 = vmatprep.mubr.bf16.mxu0 0
    %1342 = vmatmul.mubr.bf16.gmra.mrb[0].mxu0 %v1304
    %v1343 = vpop.f32.mrb[0].mxu0
    %v1344 = vadd.f32 %v1289, %v1343
    %v1345 = vpop.f32.mrb[0].mxu0
    %v1346 = vpop.f32.mrb[0].mxu0
    %v1347 = vadd.f32 %v1289, %v1346
    %v1348 = vpop.f32.mrb[0].mxu0
    %1349 = vmatprep.mubr.bf16.mxu0 0
    %1350 = vmatmul.mubr.bf16.gmra.mrb[0].mxu0 %v1307
    %v1351 = vpop.f32.mrb[0].mxu0
    %v1352 = vadd.f32 %v1289, %v1351
    %v1353 = vpop.f32.mrb[0].mxu0
    %v1354 = vpop.f32.mrb[0].mxu0
    %v1355 = vadd.f32 %v1289, %v1354
    %v1356 = vpop.f32.mrb[0].mxu0
    %1357 = vdwg.mxu0
    %v1358 = vadd.f32 %v698, %v1344
    %v1359 = vadd.f32 %v699, %v1347
    %v1360 = vadd.f32 %v700, %v1352
    %v1361 = vadd.f32 %v701, %v1355
    %v1362 = vsel %vm628, %v1358, 0.0
    %1363 = vadd.xlane.f32.xlu0 %v1362
    %v1364 = vpop.xlane.xlu0 %1363
    %v1365 = vsel %vm628, %v1359, 0.0
    %1366 = vadd.xlane.f32.xlu0 %v1365
    %v1367 = vpop.xlane.xlu0 %1366
    %v1368 = vsel %vm628, %v1360, 0.0
    %1369 = vadd.xlane.f32.xlu0 %v1368
    %v1370 = vpop.xlane.xlu0 %1369
    %v1371 = vsel %vm628, %v1361, 0.0
    %1372 = vadd.xlane.f32.xlu0 %v1371
    %v1373 = vpop.xlane.xlu0 %1372
    %v1374 = vmul.f32 %v1364, %v641
    %v1375 = vmul.f32 %v1367, %v641
    %v1376 = vmul.f32 %v1370, %v641
    %v1377 = vmul.f32 %v1373, %v641
    %v1378 = vsub.f32 %v1358, %v1374
    %v1379 = vsub.f32 %v1359, %v1375
    %v1380 = vsub.f32 %v1360, %v1376
    %v1381 = vsub.f32 %v1361, %v1377
    %v1382 = vmul.f32 %v1378, %v1378
    %v1383 = vmul.f32 %v1379, %v1379
    %v1384 = vmul.f32 %v1380, %v1380
    %v1385 = vmul.f32 %v1381, %v1381
    %v1386 = vsel %vm628, %v1382, 0.0
    %1387 = vadd.xlane.f32.xlu0 %v1386
    %v1388 = vpop.xlane.xlu0 %1387
    %v1389 = vsel %vm628, %v1383, 0.0
    %1390 = vadd.xlane.f32.xlu0 %v1389
    %v1391 = vpop.xlane.xlu0 %1390
    %v1392 = vsel %vm628, %v1384, 0.0
    %1393 = vadd.xlane.f32.xlu0 %v1392
    %v1394 = vpop.xlane.xlu0 %1393
    %v1395 = vsel %vm628, %v1385, 0.0
    %1396 = vadd.xlane.f32.xlu0 %v1395
    %v1397 = vpop.xlane.xlu0 %1396
    %v1398 = vmul.f32 %v1388, %v641
    %v1399 = vmul.f32 %v1391, %v641
    %v1400 = vmul.f32 %v1394, %v641
    %v1401 = vmul.f32 %v1397, %v641
    %v1402 = vadd.f32 %v1398, 1e-05
    %v1403 = vadd.f32 %v1399, 1e-05
    %v1404 = vadd.f32 %v1400, 1e-05
    %v1405 = vadd.f32 %v1401, 1e-05
    %v1406 = vrsqrt.pop %v1402
    %v1407 = vrsqrt.pop %v1403
    %v1408 = vrsqrt.pop %v1404
    %v1409 = vrsqrt.pop %v1405
    %v1410 = vmul.f32 %v1378, %v1406
    %v1411 = vmul.f32 %v1379, %v1407
    %v1412 = vmul.f32 %v1380, %v1408
    %v1413 = vmul.f32 %v1381, %v1409
    %v1415 = vlaneseq
    %v1416 = vshrl.u32 %v1415, 7
    %v1417 = vsub.s32 0, %v1416
    %v1418 = vrot.slane %v714, %v1417
    %v1420 = vmul.f32 %v1410, %v1418
    %v1421 = vmul.f32 %v1411, %v1418
    %v1422 = vmul.f32 %v1412, %v1418
    %v1423 = vmul.f32 %v1413, %v1418
    %v1425 = vlaneseq
    %v1426 = vshrl.u32 %v1425, 7
    %v1427 = vsub.s32 0, %v1426
    %v1428 = vrot.slane %v715, %v1427
    %v1430 = vadd.f32 %v1420, %v1428
    %v1431 = vadd.f32 %v1421, %v1428
    %v1432 = vadd.f32 %v1422, %v1428
    %v1433 = vadd.f32 %v1423, %v1428
    %v1434 = vpack.c.bf16 %v1431, %v1430
    %v1435 = vpack.c.bf16 %v1433, %v1432
    %v1437 = vlaneseq
    %v1438 = vshrl.u32 %v1437, 7
    %v1439 = vsub.s32 0, %v1438
    %v1440 = vrot.slane %v720, %v1439
    %v1446 = vunpack.c.l.b16 %v716
    %v1447 = vunpack.c.l.b16 %v717
    %v1448 = vunpack.c.l.b16 %v718
    %v1449 = vunpack.c.l.b16 %v719
    %v1450 = vpack.c.b16 %v1447, %v1446
    %v1451 = vpack.c.b16 %v1449, %v1448
    %v1455 = vsel %vm628, %v1434, 0
    %v1458 = vsel %vm628, %v1435, 0
    %1460 = vmatprep.subr.bf16.mxu0 0
    %1461 = vmatpush1.bf16.msra.mxu0 %v1450
    %1462 = vmatprep.subr.bf16.mxu0 0
    %1463 = vmatpush1.bf16.msra.mxu0 %v1451
    %1464 = vmatprep.subr.bf16.mxu0 0
    %1465 = vmatpush1.bf16.msra.mxu0 0
    %1466 = vmatprep.subr.bf16.mxu0 0
    %1467 = vmatpush1.bf16.msra.mxu0 0
    %1468 = vmatprep.subr.bf16.mxu0 0
    %1469 = vmatpush1.bf16.msra.mxu0 0
    %1470 = vmatprep.subr.bf16.mxu0 0
    %1471 = vmatpush1.bf16.msra.mxu0 0
    %1472 = vmatprep.subr.bf16.mxu0 0
    %1473 = vmatpush1.bf16.msra.mxu0 0
    %1474 = vmatprep.subr.bf16.mxu0 0
    %1475 = vmatpush1.bf16.msra.mxu0 0
    %1476 = vmatprep.subr.bf16.mxu0 0
    %1477 = vmatpush1.bf16.msra.mxu0 0
    %1478 = vmatprep.subr.bf16.mxu0 0
    %1479 = vmatpush1.bf16.msra.mxu0 0
    %1480 = vmatprep.subr.bf16.mxu0 0
    %1481 = vmatpush1.bf16.msra.mxu0 0
    %1482 = vmatprep.subr.bf16.mxu0 0
    %1483 = vmatpush1.bf16.msra.mxu0 0
    %1484 = vmatprep.subr.bf16.mxu0 0
    %1485 = vmatpush1.bf16.msra.mxu0 0
    %1486 = vmatprep.subr.bf16.mxu0 0
    %1487 = vmatpush1.bf16.msra.mxu0 0
    %1488 = vmatprep.subr.bf16.mxu0 0
    %1489 = vmatpush1.bf16.msra.mxu0 0
    %1490 = vmatprep.subr.bf16.mxu0 0
    %1491 = vmatpush1.bf16.msra.mxu0 0
    %1492 = vmatprep.mubr.bf16.mxu0 0
    %1493 = vmatmul.mubr.bf16.gmra.mrb[0].mxu0 %v1455
    %v1494 = vpop.f32.mrb[0].mxu0
    %v1495 = vadd.f32 %v1440, %v1494
    %v1496 = vpop.f32.mrb[0].mxu0
    %v1497 = vpop.f32.mrb[0].mxu0
    %v1498 = vadd.f32 %v1440, %v1497
    %v1499 = vpop.f32.mrb[0].mxu0
    %1500 = vmatprep.mubr.bf16.mxu0 0
    %1501 = vmatmul.mubr.bf16.gmra.mrb[0].mxu0 %v1458
    %v1502 = vpop.f32.mrb[0].mxu0
    %v1503 = vadd.f32 %v1440, %v1502
    %v1504 = vpop.f32.mrb[0].mxu0
    %v1505 = vpop.f32.mrb[0].mxu0
    %v1506 = vadd.f32 %v1440, %v1505
    %v1507 = vpop.f32.mrb[0].mxu0
    %1508 = vdwg.mxu0
    %v1509 = vmul.f32 %v1495, 0.70710677
    %v1510 = vmul.f32 %v1498, 0.70710677
    %v1511 = vmul.f32 %v1503, 0.70710677
    %v1512 = vmul.f32 %v1506, 0.70710677
    %v1513 = vand.u32 2147483647, %v1509
    %v1514 = vand.u32 2147483647, %v1510
    %v1515 = vand.u32 2147483647, %v1511
    %v1516 = vand.u32 2147483647, %v1512
    %v1517 = vmul.f32 %v1513, 0.3275911
    %v1518 = vmul.f32 %v1514, 0.3275911
    %v1519 = vmul.f32 %v1515, 0.3275911
    %v1520 = vmul.f32 %v1516, 0.3275911
    %v1521 = vadd.f32 %v1517, 1.0
    %v1522 = vadd.f32 %v1518, 1.0
    %v1523 = vadd.f32 %v1519, 1.0
    %v1524 = vadd.f32 %v1520, 1.0
    %v1525 = vrcp.pop %v1521
    %v1526 = vmul.f32 1.0, %v1525
    %v1527 = vrcp.pop %v1522
    %v1528 = vmul.f32 1.0, %v1527
    %v1529 = vrcp.pop %v1523
    %v1530 = vmul.f32 1.0, %v1529
    %v1531 = vrcp.pop %v1524
    %v1532 = vmul.f32 1.0, %v1531
    %v1533 = vmul.f32 %v1526, 1.0614054
    %v1534 = vmul.f32 %v1528, 1.0614054
    %v1535 = vmul.f32 %v1530, 1.0614054
    %v1536 = vmul.f32 %v1532, 1.0614054
    %v1537 = vadd.f32 %v1533, -1.4531521
    %v1538 = vadd.f32 %v1534, -1.4531521
    %v1539 = vadd.f32 %v1535, -1.4531521
    %v1540 = vadd.f32 %v1536, -1.4531521
    %v1541 = vmul.f32 %v1537, %v1526
    %v1542 = vmul.f32 %v1538, %v1528
    %v1543 = vmul.f32 %v1539, %v1530
    %v1544 = vmul.f32 %v1540, %v1532
    %v1545 = vadd.f32 %v1541, 1.4214138
    %v1546 = vadd.f32 %v1542, 1.4214138
    %v1547 = vadd.f32 %v1543, 1.4214138
    %v1548 = vadd.f32 %v1544, 1.4214138
    %v1549 = vmul.f32 %v1545, %v1526
    %v1550 = vmul.f32 %v1546, %v1528
    %v1551 = vmul.f32 %v1547, %v1530
    %v1552 = vmul.f32 %v1548, %v1532
    %v1553 = vadd.f32 %v1549, -0.28449672
    %v1554 = vadd.f32 %v1550, -0.28449672
    %v1555 = vadd.f32 %v1551, -0.28449672
    %v1556 = vadd.f32 %v1552, -0.28449672
    %v1557 = vmul.f32 %v1553, %v1526
    %v1558 = vmul.f32 %v1554, %v1528
    %v1559 = vmul.f32 %v1555, %v1530
    %v1560 = vmul.f32 %v1556, %v1532
    %v1561 = vadd.f32 %v1557, 0.2548296
    %v1562 = vadd.f32 %v1558, 0.2548296
    %v1563 = vadd.f32 %v1559, 0.2548296
    %v1564 = vadd.f32 %v1560, 0.2548296
    %v1565 = vmul.f32 %v1561, %v1526
    %v1566 = vmul.f32 %v1562, %v1528
    %v1567 = vmul.f32 %v1563, %v1530
    %v1568 = vmul.f32 %v1564, %v1532
    %v1569 = vsub.f32 0.0, %v1513
    %v1570 = vsub.f32 0.0, %v1514
    %v1571 = vsub.f32 0.0, %v1515
    %v1572 = vsub.f32 0.0, %v1516
    %v1573 = vmul.f32 %v1569, %v1513
    %v1574 = vmul.f32 %v1570, %v1514
    %v1575 = vmul.f32 %v1571, %v1515
    %v1576 = vmul.f32 %v1572, %v1516
    %v1577 = vmul.f32 %v1573, 1.442695
    %v1578 = vpow.pop %v1577
    %v1579 = vmul.f32 %v1574, 1.442695
    %v1580 = vpow.pop %v1579
    %v1581 = vmul.f32 %v1575, 1.442695
    %v1582 = vpow.pop %v1581
    %v1583 = vmul.f32 %v1576, 1.442695
    %v1584 = vpow.pop %v1583
    %v1585 = vmul.f32 %v1565, %v1578
    %v1586 = vmul.f32 %v1566, %v1580
    %v1587 = vmul.f32 %v1567, %v1582
    %v1588 = vmul.f32 %v1568, %v1584
    %v1589 = vsub.f32 1.0, %v1585
    %v1590 = vsub.f32 1.0, %v1586
    %v1591 = vsub.f32 1.0, %v1587
    %v1592 = vsub.f32 1.0, %v1588
    %vm1593 = vcmp.ge.f32.partialorder %v1509, 0.0
    %vm1594 = vcmp.ge.f32.partialorder %v1510, 0.0
    %vm1595 = vcmp.ge.f32.partialorder %v1511, 0.0
    %vm1596 = vcmp.ge.f32.partialorder %v1512, 0.0
    %v1597 = vsub.f32 0.0, %v1589
    %v1598 = vsub.f32 0.0, %v1590
    %v1599 = vsub.f32 0.0, %v1591
    %v1600 = vsub.f32 0.0, %v1592
    %v1601 = vsel %vm1593, %v1589, %v1597
    %v1602 = vsel %vm1594, %v1590, %v1598
    %v1603 = vsel %vm1595, %v1591, %v1599
    %v1604 = vsel %vm1596, %v1592, %v1600
    %v1605 = vmul.f32 %v1495, 0.5
    %v1606 = vmul.f32 %v1498, 0.5
    %v1607 = vmul.f32 %v1503, 0.5
    %v1608 = vmul.f32 %v1506, 0.5
    %v1609 = vadd.f32 %v1601, 1.0
    %v1610 = vadd.f32 %v1602, 1.0
    %v1611 = vadd.f32 %v1603, 1.0
    %v1612 = vadd.f32 %v1604, 1.0
    %v1613 = vmul.f32 %v1605, %v1609
    %v1614 = vmul.f32 %v1606, %v1610
    %v1615 = vmul.f32 %v1607, %v1611
    %v1616 = vmul.f32 %v1608, %v1612
    %v1617 = vpack.c.bf16 %v1614, %v1613
    %v1618 = vpack.c.bf16 %v1616, %v1615
    %v1620 = vlaneseq
    %v1621 = vshrl.u32 %v1620, 7
    %v1622 = vsub.s32 0, %v1621
    %v1623 = vrot.slane %v737, %v1622
    %v1641 = vunpack.c.l.b16 %v721
    %v1642 = vunpack.c.l.b16 %v722
    %v1643 = vunpack.c.l.b16 %v723
    %v1644 = vunpack.c.l.b16 %v724
    %v1645 = vunpack.c.l.b16 %v725
    %v1646 = vunpack.c.l.b16 %v726
    %v1647 = vunpack.c.l.b16 %v727
    %v1648 = vunpack.c.l.b16 %v728
    %v1649 = vunpack.c.l.b16 %v729
    %v1650 = vunpack.c.l.b16 %v730
    %v1651 = vunpack.c.l.b16 %v731
    %v1652 = vunpack.c.l.b16 %v732
    %v1653 = vunpack.c.l.b16 %v733
    %v1654 = vunpack.c.l.b16 %v734
    %v1655 = vunpack.c.l.b16 %v735
    %v1656 = vunpack.c.l.b16 %v736
    %v1657 = vpack.c.b16 %v1642, %v1641
    %v1658 = vpack.c.b16 %v1644, %v1643
    %v1659 = vpack.c.b16 %v1646, %v1645
    %v1660 = vpack.c.b16 %v1648, %v1647
    %v1661 = vpack.c.b16 %v1650, %v1649
    %v1662 = vpack.c.b16 %v1652, %v1651
    %v1663 = vpack.c.b16 %v1654, %v1653
    %v1664 = vpack.c.b16 %v1656, %v1655
    %1673 = vmatprep.subr.bf16.mxu0 0
    %1674 = vmatpush1.bf16.msra.mxu0 %v1657
    %1675 = vmatprep.subr.bf16.mxu0 0
    %1676 = vmatpush1.bf16.msra.mxu0 %v1658
    %1677 = vmatprep.subr.bf16.mxu0 0
    %1678 = vmatpush1.bf16.msra.mxu0 %v1659
    %1679 = vmatprep.subr.bf16.mxu0 0
    %1680 = vmatpush1.bf16.msra.mxu0 %v1660
    %1681 = vmatprep.subr.bf16.mxu0 0
    %1682 = vmatpush1.bf16.msra.mxu0 %v1661
    %1683 = vmatprep.subr.bf16.mxu0 0
    %1684 = vmatpush1.bf16.msra.mxu0 %v1662
    %1685 = vmatprep.subr.bf16.mxu0 0
    %1686 = vmatpush1.bf16.msra.mxu0 %v1663
    %1687 = vmatprep.subr.bf16.mxu0 0
    %1688 = vmatpush1.bf16.msra.mxu0 %v1664
    %1689 = vmatprep.subr.bf16.mxu0 0
    %1690 = vmatpush1.bf16.msra.mxu0 0
    %1691 = vmatprep.subr.bf16.mxu0 0
    %1692 = vmatpush1.bf16.msra.mxu0 0
    %1693 = vmatprep.subr.bf16.mxu0 0
    %1694 = vmatpush1.bf16.msra.mxu0 0
    %1695 = vmatprep.subr.bf16.mxu0 0
    %1696 = vmatpush1.bf16.msra.mxu0 0
    %1697 = vmatprep.subr.bf16.mxu0 0
    %1698 = vmatpush1.bf16.msra.mxu0 0
    %1699 = vmatprep.subr.bf16.mxu0 0
    %1700 = vmatpush1.bf16.msra.mxu0 0
    %1701 = vmatprep.subr.bf16.mxu0 0
    %1702 = vmatpush1.bf16.msra.mxu0 0
    %1703 = vmatprep.subr.bf16.mxu0 0
    %1704 = vmatpush1.bf16.msra.mxu0 0
    %1705 = vmatprep.mubr.bf16.mxu0 0
    %1706 = vmatmul.mubr.bf16.gmra.mrb[0].mxu0 %v1617
    %v1707 = vpop.f32.mrb[0].mxu0
    %v1708 = vadd.f32 %v1623, %v1707
    %v1709 = vpop.f32.mrb[0].mxu0
    %v1710 = vpop.f32.mrb[0].mxu0
    %v1711 = vadd.f32 %v1623, %v1710
    %v1712 = vpop.f32.mrb[0].mxu0
    %1713 = vmatprep.mubr.bf16.mxu0 0
    %1714 = vmatmul.mubr.bf16.gmra.mrb[0].mxu0 %v1618
    %v1715 = vpop.f32.mrb[0].mxu0
    %v1716 = vadd.f32 %v1623, %v1715
    %v1717 = vpop.f32.mrb[0].mxu0
    %v1718 = vpop.f32.mrb[0].mxu0
    %v1719 = vadd.f32 %v1623, %v1718
    %v1720 = vpop.f32.mrb[0].mxu0
    %1721 = vdwg.mxu0
    %v1722 = vadd.f32 %v1358, %v1708
    %v1723 = vadd.f32 %v1359, %v1711
    %v1724 = vadd.f32 %v1360, %v1716
    %v1725 = vadd.f32 %v1361, %v1719
    %v1726 = vld [vmem:[#allocation20] sm:$0x1]
    %v1727 = vld [vmem:[#allocation22] sm:$0x1]
    %v1728 = vld [vmem:[%s41] sm:$0xf]
    %v1729 = vld [vmem:[%s41 + $0x4] sm:$0xf]
    %v1730 = vld [vmem:[%s41 + $0x8] sm:$0xf]
    %v1731 = vld [vmem:[%s41 + $0xc] sm:$0xf]
    %v1732 = vld [vmem:[#allocation23] sm:$0x1]
    %v1733 = vld [vmem:[%s47] sm:$0xf]
    %v1734 = vld [vmem:[%s47 + $0x4] sm:$0xf]
    %v1735 = vld [vmem:[%s47 + $0x8] sm:$0xf]
    %v1736 = vld [vmem:[%s47 + $0xc] sm:$0xf]
    %v1737 = vld [vmem:[#allocation25] sm:$0x1]
    %v1738 = vld [vmem:[#allocation26] sm:$0x1]
    %v1739 = vld [vmem:[#allocation28] sm:$0x1]
    %v1740 = vld [vmem:[%s55] sm:$0xf]
    %v1741 = vld [vmem:[%s55 + $0x4] sm:$0xf]
    %v1742 = vld [vmem:[%s55 + $0x8] sm:$0xf]
    %v1743 = vld [vmem:[%s55 + $0xc] sm:$0xf]
    %v1744 = vld [vmem:[#allocation29] sm:$0x1]
    %v1745 = vld [vmem:[%s59] sm:$0xf]
    %v1746 = vld [vmem:[%s59 + $0x4] sm:$0xf]
    %v1747 = vld [vmem:[%s59 + $0x8] sm:$0xf]
    %v1748 = vld [vmem:[%s59 + $0xc] sm:$0xf]
    %v1749 = vld [vmem:[%s59 + $0x10] sm:$0xf]
    %v1750 = vld [vmem:[%s59 + $0x14] sm:$0xf]
    %v1751 = vld [vmem:[%s59 + $0x18] sm:$0xf]
    %v1752 = vld [vmem:[%s59 + $0x1c] sm:$0xf]
    %v1753 = vld [vmem:[%s59 + $0x20] sm:$0xf]
    %v1754 = vld [vmem:[%s59 + $0x24] sm:$0xf]
    %v1755 = vld [vmem:[%s59 + $0x28] sm:$0xf]
    %v1756 = vld [vmem:[%s59 + $0x2c] sm:$0xf]
    %v1757 = vld [vmem:[%s59 + $0x30] sm:$0xf]
    %v1758 = vld [vmem:[%s59 + $0x34] sm:$0xf]
    %v1759 = vld [vmem:[%s59 + $0x38] sm:$0xf]
    %v1760 = vld [vmem:[%s59 + $0x3c] sm:$0xf]
    %v1761 = vld [vmem:[%s61] sm:$0x1]
    %v1762 = vsel %vm628, %v1722, 0.0
    %1763 = vadd.xlane.f32.xlu0 %v1762
    %v1764 = vpop.xlane.xlu0 %1763
    %v1765 = vsel %vm628, %v1723, 0.0
    %1766 = vadd.xlane.f32.xlu0 %v1765
    %v1767 = vpop.xlane.xlu0 %1766
    %v1768 = vsel %vm628, %v1724, 0.0
    %1769 = vadd.xlane.f32.xlu0 %v1768
    %v1770 = vpop.xlane.xlu0 %1769
    %v1771 = vsel %vm628, %v1725, 0.0
    %1772 = vadd.xlane.f32.xlu0 %v1771
    %v1773 = vpop.xlane.xlu0 %1772
    %v1774 = vmul.f32 %v1764, %v641
    %v1775 = vmul.f32 %v1767, %v641
    %v1776 = vmul.f32 %v1770, %v641
    %v1777 = vmul.f32 %v1773, %v641
    %v1778 = vsub.f32 %v1722, %v1774
    %v1779 = vsub.f32 %v1723, %v1775
    %v1780 = vsub.f32 %v1724, %v1776
    %v1781 = vsub.f32 %v1725, %v1777
    %v1782 = vmul.f32 %v1778, %v1778
    %v1783 = vmul.f32 %v1779, %v1779
    %v1784 = vmul.f32 %v1780, %v1780
    %v1785 = vmul.f32 %v1781, %v1781
    %v1786 = vsel %vm628, %v1782, 0.0
    %1787 = vadd.xlane.f32.xlu0 %v1786
    %v1788 = vpop.xlane.xlu0 %1787
    %v1789 = vsel %vm628, %v1783, 0.0
    %1790 = vadd.xlane.f32.xlu0 %v1789
    %v1791 = vpop.xlane.xlu0 %1790
    %v1792 = vsel %vm628, %v1784, 0.0
    %1793 = vadd.xlane.f32.xlu0 %v1792
    %v1794 = vpop.xlane.xlu0 %1793
    %v1795 = vsel %vm628, %v1785, 0.0
    %1796 = vadd.xlane.f32.xlu0 %v1795
    %v1797 = vpop.xlane.xlu0 %1796
    %v1798 = vmul.f32 %v1788, %v641
    %v1799 = vmul.f32 %v1791, %v641
    %v1800 = vmul.f32 %v1794, %v641
    %v1801 = vmul.f32 %v1797, %v641
    %v1802 = vadd.f32 %v1798, 1e-05
    %v1803 = vadd.f32 %v1799, 1e-05
    %v1804 = vadd.f32 %v1800, 1e-05
    %v1805 = vadd.f32 %v1801, 1e-05
    %v1806 = vrsqrt.pop %v1802
    %v1807 = vrsqrt.pop %v1803
    %v1808 = vrsqrt.pop %v1804
    %v1809 = vrsqrt.pop %v1805
    %v1810 = vmul.f32 %v1778, %v1806
    %v1811 = vmul.f32 %v1779, %v1807
    %v1812 = vmul.f32 %v1780, %v1808
    %v1813 = vmul.f32 %v1781, %v1809
    %v1815 = vlaneseq
    %v1816 = vshrl.u32 %v1815, 7
    %v1817 = vsub.s32 0, %v1816
    %v1818 = vrot.slane %v1726, %v1817
    %v1820 = vmul.f32 %v1810, %v1818
    %v1821 = vmul.f32 %v1811, %v1818
    %v1822 = vmul.f32 %v1812, %v1818
    %v1823 = vmul.f32 %v1813, %v1818
    %v1825 = vlaneseq
    %v1826 = vshrl.u32 %v1825, 7
    %v1827 = vsub.s32 0, %v1826
    %v1828 = vrot.slane %v1727, %v1827
    %v1830 = vadd.f32 %v1820, %v1828
    %v1831 = vadd.f32 %v1821, %v1828
    %v1832 = vadd.f32 %v1822, %v1828
    %v1833 = vadd.f32 %v1823, %v1828
    %v1834 = vpack.c.bf16 %v1831, %v1830
    %v1835 = vpack.c.bf16 %v1833, %v1832
    %v1837 = vlaneseq
    %v1838 = vshrl.u32 %v1837, 7
    %v1839 = vsub.s32 0, %v1838
    %v1840 = vrot.slane %v1732, %v1839
    %v1846 = vunpack.c.l.b16 %v1728
    %v1847 = vunpack.c.l.b16 %v1729
    %v1848 = vunpack.c.l.b16 %v1730
    %v1849 = vunpack.c.l.b16 %v1731
    %v1850 = vpack.c.b16 %v1847, %v1846
    %v1851 = vpack.c.b16 %v1849, %v1848
    %v1855 = vsel %vm628, %v1834, 0
    %v1858 = vsel %vm628, %v1835, 0
    %1860 = vmatprep.subr.bf16.mxu0 0
    %1861 = vmatpush1.bf16.msra.mxu0 %v1850
    %1862 = vmatprep.subr.bf16.mxu0 0
    %1863 = vmatpush1.bf16.msra.mxu0 %v1851
    %1864 = vmatprep.subr.bf16.mxu0 0
    %1865 = vmatpush1.bf16.msra.mxu0 0
    %1866 = vmatprep.subr.bf16.mxu0 0
    %1867 = vmatpush1.bf16.msra.mxu0 0
    %1868 = vmatprep.subr.bf16.mxu0 0
    %1869 = vmatpush1.bf16.msra.mxu0 0
    %1870 = vmatprep.subr.bf16.mxu0 0
    %1871 = vmatpush1.bf16.msra.mxu0 0
    %1872 = vmatprep.subr.bf16.mxu0 0
    %1873 = vmatpush1.bf16.msra.mxu0 0
    %1874 = vmatprep.subr.bf16.mxu0 0
    %1875 = vmatpush1.bf16.msra.mxu0 0
    %1876 = vmatprep.subr.bf16.mxu0 0
    %1877 = vmatpush1.bf16.msra.mxu0 0
    %1878 = vmatprep.subr.bf16.mxu0 0
    %1879 = vmatpush1.bf16.msra.mxu0 0
    %1880 = vmatprep.subr.bf16.mxu0 0
    %1881 = vmatpush1.bf16.msra.mxu0 0
    %1882 = vmatprep.subr.bf16.mxu0 0
    %1883 = vmatpush1.bf16.msra.mxu0 0
    %1884 = vmatprep.subr.bf16.mxu0 0
    %1885 = vmatpush1.bf16.msra.mxu0 0
    %1886 = vmatprep.subr.bf16.mxu0 0
    %1887 = vmatpush1.bf16.msra.mxu0 0
    %1888 = vmatprep.subr.bf16.mxu0 0
    %1889 = vmatpush1.bf16.msra.mxu0 0
    %1890 = vmatprep.subr.bf16.mxu0 0
    %1891 = vmatpush1.bf16.msra.mxu0 0
    %1892 = vmatprep.mubr.bf16.mxu0 0
    %1893 = vmatmul.mubr.bf16.gmra.mrb[0].mxu0 %v1855
    %v1894 = vpop.f32.mrb[0].mxu0
    %v1895 = vadd.f32 %v1840, %v1894
    %v1896 = vpop.f32.mrb[0].mxu0
    %v1897 = vpop.f32.mrb[0].mxu0
    %v1898 = vadd.f32 %v1840, %v1897
    %v1899 = vpop.f32.mrb[0].mxu0
    %1900 = vmatprep.mubr.bf16.mxu0 0
    %1901 = vmatmul.mubr.bf16.gmra.mrb[0].mxu0 %v1858
    %v1902 = vpop.f32.mrb[0].mxu0
    %v1903 = vadd.f32 %v1840, %v1902
    %v1904 = vpop.f32.mrb[0].mxu0
    %v1905 = vpop.f32.mrb[0].mxu0
    %v1906 = vadd.f32 %v1840, %v1905
    %v1907 = vpop.f32.mrb[0].mxu0
    %1908 = vdwg.mxu0
    %v1909 = vpack.c.bf16 %v1898, %v1895
    %v1910 = vpack.c.bf16 %v1906, %v1903
    %1913 = vrot.lane.b32.xlu0 %v1909, 96
    %v1914 = vpop.permute.xlu0 %1913
    %1915 = vrot.lane.b32.xlu0 %v1910, 96
    %v1916 = vpop.permute.xlu0 %1915
    %v1918 = vsel %vm893, %v1909, 0
    %v1921 = vsel %vm893, %v1910, 0
    %v1924 = vsel %vm893, %v1914, 0
    %v1927 = vsel %vm893, %v1916, 0
    %1929 = vmatprep.subr.bf16.mxu0 0
    %1930 = vmatpush1.bf16.xpose.msra.mxu0 %v1924
    %1931 = vmatprep.subr.bf16.mxu0 0
    %1932 = vmatpush1.bf16.xpose.msra.mxu0 %v1927
    %1933 = vmatprep.subr.bf16.mxu0 0
    %1934 = vmatpush1.bf16.xpose.msra.mxu0 0
    %1935 = vmatprep.subr.bf16.mxu0 0
    %1936 = vmatpush1.bf16.xpose.msra.mxu0 0
    %1937 = vmatprep.subr.bf16.mxu0 0
    %1938 = vmatpush1.bf16.xpose.msra.mxu0 0
    %1939 = vmatprep.subr.bf16.mxu0 0
    %1940 = vmatpush1.bf16.xpose.msra.mxu0 0
    %1941 = vmatprep.subr.bf16.mxu0 0
    %1942 = vmatpush1.bf16.xpose.msra.mxu0 0
    %1943 = vmatprep.subr.bf16.mxu0 0
    %1944 = vmatpush1.bf16.xpose.msra.mxu0 0
    %1945 = vmatprep.subr.bf16.mxu0 0
    %1946 = vmatpush1.bf16.xpose.msra.mxu0 0
    %1947 = vmatprep.subr.bf16.mxu0 0
    %1948 = vmatpush1.bf16.xpose.msra.mxu0 0
    %1949 = vmatprep.subr.bf16.mxu0 0
    %1950 = vmatpush1.bf16.xpose.msra.mxu0 0
    %1951 = vmatprep.subr.bf16.mxu0 0
    %1952 = vmatpush1.bf16.xpose.msra.mxu0 0
    %1953 = vmatprep.subr.bf16.mxu0 0
    %1954 = vmatpush1.bf16.xpose.msra.mxu0 0
    %1955 = vmatprep.subr.bf16.mxu0 0
    %1956 = vmatpush1.bf16.xpose.msra.mxu0 0
    %1957 = vmatprep.subr.bf16.mxu0 0
    %1958 = vmatpush1.bf16.xpose.msra.mxu0 0
    %1959 = vmatprep.subr.bf16.mxu0 0
    %1960 = vmatpush1.bf16.xpose.msra.mxu0 0
    %1961 = vmatprep.mubr.bf16.mxu0 0
    %1962 = vmatmul.mubr.bf16.gmra.mrb[0].mxu0 %v1918
    %v1963 = vpop.f32.mrb[0].mxu0
    %v1964 = vadd.f32 0.0, %v1963
    %v1965 = vpop.f32.mrb[0].mxu0
    %v1966 = vpop.f32.mrb[0].mxu0
    %v1967 = vadd.f32 0.0, %v1966
    %v1968 = vpop.f32.mrb[0].mxu0
    %1969 = vmatprep.mubr.bf16.mxu0 0
    %1970 = vmatmul.mubr.bf16.gmra.mrb[0].mxu0 %v1921
    %v1971 = vpop.f32.mrb[0].mxu0
    %v1972 = vadd.f32 0.0, %v1971
    %v1973 = vpop.f32.mrb[0].mxu0
    %v1974 = vpop.f32.mrb[0].mxu0
    %v1975 = vadd.f32 0.0, %v1974
    %v1976 = vpop.f32.mrb[0].mxu0
    %1977 = vdwg.mxu0
    %v1978 = vmul.f32 %v1964, 0.25
    %v1979 = vmul.f32 %v1967, 0.25
    %v1980 = vmul.f32 %v1972, 0.25
    %v1981 = vmul.f32 %v1975, 0.25
    %v1982 = vld [vmem:[%s45] sm:$0xff]
    %v1983 = vld [vmem:[%s45 + $0x8] sm:$0xff]
    %v1984 = vld [vmem:[%s45 + $0x10] sm:$0xff]
    %v1985 = vld [vmem:[%s45 + $0x18] sm:$0xff]
    %v1986 = vadd.f32 %v1978, %v1982
    %v1987 = vadd.f32 %v1979, %v1983
    %v1988 = vadd.f32 %v1980, %v1984
    %v1989 = vadd.f32 %v1981, %v1985
    %v1990 = vsel %vm628, %v1986, -inf
    %1991 = vmax.xlane.f32.xlu0 %v1990
    %v1992 = vpop.xlane.xlu0 %1991
    %v1993 = vsel %vm628, %v1987, -inf
    %1994 = vmax.xlane.f32.xlu0 %v1993
    %v1995 = vpop.xlane.xlu0 %1994
    %v1996 = vsel %vm628, %v1988, -inf
    %1997 = vmax.xlane.f32.xlu0 %v1996
    %v1998 = vpop.xlane.xlu0 %1997
    %v1999 = vsel %vm628, %v1989, -inf
    %2000 = vmax.xlane.f32.xlu0 %v1999
    %v2001 = vpop.xlane.xlu0 %2000
    %v2002 = vsub.f32 %v1986, %v1992
    %v2003 = vsub.f32 %v1987, %v1995
    %v2004 = vsub.f32 %v1988, %v1998
    %v2005 = vsub.f32 %v1989, %v2001
    %v2006 = vmul.f32 %v2002, 1.442695
    %v2007 = vpow.pop %v2006
    %v2008 = vmul.f32 %v2003, 1.442695
    %v2009 = vpow.pop %v2008
    %v2010 = vmul.f32 %v2004, 1.442695
    %v2011 = vpow.pop %v2010
    %v2012 = vmul.f32 %v2005, 1.442695
    %v2013 = vpow.pop %v2012
    %v2014 = vsel %vm628, %v2007, 0.0
    %2015 = vadd.xlane.f32.xlu0 %v2014
    %v2016 = vpop.xlane.xlu0 %2015
    %v2017 = vsel %vm628, %v2009, 0.0
    %2018 = vadd.xlane.f32.xlu0 %v2017
    %v2019 = vpop.xlane.xlu0 %2018
    %v2020 = vsel %vm628, %v2011, 0.0
    %2021 = vadd.xlane.f32.xlu0 %v2020
    %v2022 = vpop.xlane.xlu0 %2021
    %v2023 = vsel %vm628, %v2013, 0.0
    %2024 = vadd.xlane.f32.xlu0 %v2023
    %v2025 = vpop.xlane.xlu0 %2024
    %v2026 = vrcp.pop %v2016
    %v2027 = vmul.f32 %v2007, %v2026
    %v2028 = vrcp.pop %v2019
    %v2029 = vmul.f32 %v2009, %v2028
    %v2030 = vrcp.pop %v2022
    %v2031 = vmul.f32 %v2011, %v2030
    %v2032 = vrcp.pop %v2025
    %v2033 = vmul.f32 %v2013, %v2032
    %v2034 = vpack.c.bf16 %v2029, %v2027
    %v2035 = vpack.c.bf16 %v2033, %v2031
    %2036 = vrot.lane.b32.xlu0 %v1909, 64
    %v2037 = vpop.permute.xlu0 %2036
    %2038 = vrot.lane.b32.xlu0 %v1910, 64
    %v2039 = vpop.permute.xlu0 %2038
    %v2043 = vsel %vm628, %v2034, 0
    %v2046 = vsel %vm628, %v2035, 0
    %2048 = vmatprep.subr.bf16.mxu0 0
    %2049 = vmatpush1.bf16.msra.mxu0 %v2037
    %2050 = vmatprep.subr.bf16.mxu0 0
    %2051 = vmatpush1.bf16.msra.mxu0 %v2039
    %2052 = vmatprep.subr.bf16.mxu0 0
    %2053 = vmatpush1.bf16.msra.mxu0 0
    %2054 = vmatprep.subr.bf16.mxu0 0
    %2055 = vmatpush1.bf16.msra.mxu0 0
    %2056 = vmatprep.subr.bf16.mxu0 0
    %2057 = vmatpush1.bf16.msra.mxu0 0
    %2058 = vmatprep.subr.bf16.mxu0 0
    %2059 = vmatpush1.bf16.msra.mxu0 0
    %2060 = vmatprep.subr.bf16.mxu0 0
    %2061 = vmatpush1.bf16.msra.mxu0 0
    %2062 = vmatprep.subr.bf16.mxu0 0
    %2063 = vmatpush1.bf16.msra.mxu0 0
    %2064 = vmatprep.subr.bf16.mxu0 0
    %2065 = vmatpush1.bf16.msra.mxu0 0
    %2066 = vmatprep.subr.bf16.mxu0 0
    %2067 = vmatpush1.bf16.msra.mxu0 0
    %2068 = vmatprep.subr.bf16.mxu0 0
    %2069 = vmatpush1.bf16.msra.mxu0 0
    %2070 = vmatprep.subr.bf16.mxu0 0
    %2071 = vmatpush1.bf16.msra.mxu0 0
    %2072 = vmatprep.subr.bf16.mxu0 0
    %2073 = vmatpush1.bf16.msra.mxu0 0
    %2074 = vmatprep.subr.bf16.mxu0 0
    %2075 = vmatpush1.bf16.msra.mxu0 0
    %2076 = vmatprep.subr.bf16.mxu0 0
    %2077 = vmatpush1.bf16.msra.mxu0 0
    %2078 = vmatprep.subr.bf16.mxu0 0
    %2079 = vmatpush1.bf16.msra.mxu0 0
    %2080 = vmatprep.mubr.bf16.mxu0 0
    %2081 = vmatmul.mubr.bf16.gmra.mrb[0].mxu0 %v2043
    %v2082 = vpop.f32.mrb[0].mxu0
    %v2083 = vadd.f32 0.0, %v2082
    %v2084 = vpop.f32.mrb[0].mxu0
    %v2085 = vpop.f32.mrb[0].mxu0
    %v2086 = vadd.f32 0.0, %v2085
    %v2087 = vpop.f32.mrb[0].mxu0
    %2088 = vmatprep.mubr.bf16.mxu0 0
    %2089 = vmatmul.mubr.bf16.gmra.mrb[0].mxu0 %v2046
    %v2090 = vpop.f32.mrb[0].mxu0
    %v2091 = vadd.f32 0.0, %v2090
    %v2092 = vpop.f32.mrb[0].mxu0
    %v2093 = vpop.f32.mrb[0].mxu0
    %v2094 = vadd.f32 0.0, %v2093
    %v2095 = vpop.f32.mrb[0].mxu0
    %2096 = vdwg.mxu0
    %2097 = vrot.lane.b32.xlu0 %v1909, 112
    %v2098 = vpop.permute.xlu0 %2097
    %2099 = vrot.lane.b32.xlu0 %v1910, 112
    %v2100 = vpop.permute.xlu0 %2099
    %2101 = vrot.lane.b32.xlu0 %v1909, 80
    %v2102 = vpop.permute.xlu0 %2101
    %2103 = vrot.lane.b32.xlu0 %v1910, 80
    %v2104 = vpop.permute.xlu0 %2103
    %v2106 = vsel %vm893, %v2098, 0
    %v2109 = vsel %vm893, %v2100, 0
    %v2112 = vsel %vm893, %v2102, 0
    %v2115 = vsel %vm893, %v2104, 0
    %2117 = vmatprep.subr.bf16.mxu0 0
    %2118 = vmatpush1.bf16.xpose.msra.mxu0 %v2112
    %2119 = vmatprep.subr.bf16.mxu0 0
    %2120 = vmatpush1.bf16.xpose.msra.mxu0 %v2115
    %2121 = vmatprep.subr.bf16.mxu0 0
    %2122 = vmatpush1.bf16.xpose.msra.mxu0 0
    %2123 = vmatprep.subr.bf16.mxu0 0
    %2124 = vmatpush1.bf16.xpose.msra.mxu0 0
    %2125 = vmatprep.subr.bf16.mxu0 0
    %2126 = vmatpush1.bf16.xpose.msra.mxu0 0
    %2127 = vmatprep.subr.bf16.mxu0 0
    %2128 = vmatpush1.bf16.xpose.msra.mxu0 0
    %2129 = vmatprep.subr.bf16.mxu0 0
    %2130 = vmatpush1.bf16.xpose.msra.mxu0 0
    %2131 = vmatprep.subr.bf16.mxu0 0
    %2132 = vmatpush1.bf16.xpose.msra.mxu0 0
    %2133 = vmatprep.subr.bf16.mxu0 0
    %2134 = vmatpush1.bf16.xpose.msra.mxu0 0
    %2135 = vmatprep.subr.bf16.mxu0 0
    %2136 = vmatpush1.bf16.xpose.msra.mxu0 0
    %2137 = vmatprep.subr.bf16.mxu0 0
    %2138 = vmatpush1.bf16.xpose.msra.mxu0 0
    %2139 = vmatprep.subr.bf16.mxu0 0
    %2140 = vmatpush1.bf16.xpose.msra.mxu0 0
    %2141 = vmatprep.subr.bf16.mxu0 0
    %2142 = vmatpush1.bf16.xpose.msra.mxu0 0
    %2143 = vmatprep.subr.bf16.mxu0 0
    %2144 = vmatpush1.bf16.xpose.msra.mxu0 0
    %2145 = vmatprep.subr.bf16.mxu0 0
    %2146 = vmatpush1.bf16.xpose.msra.mxu0 0
    %2147 = vmatprep.subr.bf16.mxu0 0
    %2148 = vmatpush1.bf16.xpose.msra.mxu0 0
    %2149 = vmatprep.mubr.bf16.mxu0 0
    %2150 = vmatmul.mubr.bf16.gmra.mrb[0].mxu0 %v2106
    %v2151 = vpop.f32.mrb[0].mxu0
    %v2152 = vadd.f32 0.0, %v2151
    %v2153 = vpop.f32.mrb[0].mxu0
    %v2154 = vpop.f32.mrb[0].mxu0
    %v2155 = vadd.f32 0.0, %v2154
    %v2156 = vpop.f32.mrb[0].mxu0
    %2157 = vmatprep.mubr.bf16.mxu0 0
    %2158 = vmatmul.mubr.bf16.gmra.mrb[0].mxu0 %v2109
    %v2159 = vpop.f32.mrb[0].mxu0
    %v2160 = vadd.f32 0.0, %v2159
    %v2161 = vpop.f32.mrb[0].mxu0
    %v2162 = vpop.f32.mrb[0].mxu0
    %v2163 = vadd.f32 0.0, %v2162
    %v2164 = vpop.f32.mrb[0].mxu0
    %2165 = vdwg.mxu0
    %v2166 = vmul.f32 %v2152, 0.25
    %v2167 = vmul.f32 %v2155, 0.25
    %v2168 = vmul.f32 %v2160, 0.25
    %v2169 = vmul.f32 %v2163, 0.25
    %s2170 = scalar_lea.vmem %s45, 32
    %v2171 = vld [vmem:[%s2170] sm:$0xff]
    %v2172 = vld [vmem:[%s2170 + $0x8] sm:$0xff]
    %v2173 = vld [vmem:[%s2170 + $0x10] sm:$0xff]
    %v2174 = vld [vmem:[%s2170 + $0x18] sm:$0xff]
    %v2175 = vadd.f32 %v2166, %v2171
    %v2176 = vadd.f32 %v2167, %v2172
    %v2177 = vadd.f32 %v2168, %v2173
    %v2178 = vadd.f32 %v2169, %v2174
    %v2179 = vsel %vm628, %v2175, -inf
    %2180 = vmax.xlane.f32.xlu0 %v2179
    %v2181 = vpop.xlane.xlu0 %2180
    %v2182 = vsel %vm628, %v2176, -inf
    %2183 = vmax.xlane.f32.xlu0 %v2182
    %v2184 = vpop.xlane.xlu0 %2183
    %v2185 = vsel %vm628, %v2177, -inf
    %2186 = vmax.xlane.f32.xlu0 %v2185
    %v2187 = vpop.xlane.xlu0 %2186
    %v2188 = vsel %vm628, %v2178, -inf
    %2189 = vmax.xlane.f32.xlu0 %v2188
    %v2190 = vpop.xlane.xlu0 %2189
    %v2191 = vsub.f32 %v2175, %v2181
    %v2192 = vsub.f32 %v2176, %v2184
    %v2193 = vsub.f32 %v2177, %v2187
    %v2194 = vsub.f32 %v2178, %v2190
    %v2195 = vmul.f32 %v2191, 1.442695
    %v2196 = vpow.pop %v2195
    %v2197 = vmul.f32 %v2192, 1.442695
    %v2198 = vpow.pop %v2197
    %v2199 = vmul.f32 %v2193, 1.442695
    %v2200 = vpow.pop %v2199
    %v2201 = vmul.f32 %v2194, 1.442695
    %v2202 = vpow.pop %v2201
    %v2203 = vsel %vm628, %v2196, 0.0
    %2204 = vadd.xlane.f32.xlu0 %v2203
    %v2205 = vpop.xlane.xlu0 %2204
    %v2206 = vsel %vm628, %v2198, 0.0
    %2207 = vadd.xlane.f32.xlu0 %v2206
    %v2208 = vpop.xlane.xlu0 %2207
    %v2209 = vsel %vm628, %v2200, 0.0
    %2210 = vadd.xlane.f32.xlu0 %v2209
    %v2211 = vpop.xlane.xlu0 %2210
    %v2212 = vsel %vm628, %v2202, 0.0
    %2213 = vadd.xlane.f32.xlu0 %v2212
    %v2214 = vpop.xlane.xlu0 %2213
    %v2215 = vrcp.pop %v2205
    %v2216 = vmul.f32 %v2196, %v2215
    %v2217 = vrcp.pop %v2208
    %v2218 = vmul.f32 %v2198, %v2217
    %v2219 = vrcp.pop %v2211
    %v2220 = vmul.f32 %v2200, %v2219
    %v2221 = vrcp.pop %v2214
    %v2222 = vmul.f32 %v2202, %v2221
    %v2223 = vpack.c.bf16 %v2218, %v2216
    %v2224 = vpack.c.bf16 %v2222, %v2220
    %2225 = vrot.lane.b32.xlu0 %v1909, 48
    %v2226 = vpop.permute.xlu0 %2225
    %2227 = vrot.lane.b32.xlu0 %v1910, 48
    %v2228 = vpop.permute.xlu0 %2227
    %v2232 = vsel %vm628, %v2223, 0
    %v2235 = vsel %vm628, %v2224, 0
    %2237 = vmatprep.subr.bf16.mxu0 0
    %2238 = vmatpush1.bf16.msra.mxu0 %v2226
    %2239 = vmatprep.subr.bf16.mxu0 0
    %2240 = vmatpush1.bf16.msra.mxu0 %v2228
    %2241 = vmatprep.subr.bf16.mxu0 0
    %2242 = vmatpush1.bf16.msra.mxu0 0
    %2243 = vmatprep.subr.bf16.mxu0 0
    %2244 = vmatpush1.bf16.msra.mxu0 0
    %2245 = vmatprep.subr.bf16.mxu0 0
    %2246 = vmatpush1.bf16.msra.mxu0 0
    %2247 = vmatprep.subr.bf16.mxu0 0
    %2248 = vmatpush1.bf16.msra.mxu0 0
    %2249 = vmatprep.subr.bf16.mxu0 0
    %2250 = vmatpush1.bf16.msra.mxu0 0
    %2251 = vmatprep.subr.bf16.mxu0 0
    %2252 = vmatpush1.bf16.msra.mxu0 0
    %2253 = vmatprep.subr.bf16.mxu0 0
    %2254 = vmatpush1.bf16.msra.mxu0 0
    %2255 = vmatprep.subr.bf16.mxu0 0
    %2256 = vmatpush1.bf16.msra.mxu0 0
    %2257 = vmatprep.subr.bf16.mxu0 0
    %2258 = vmatpush1.bf16.msra.mxu0 0
    %2259 = vmatprep.subr.bf16.mxu0 0
    %2260 = vmatpush1.bf16.msra.mxu0 0
    %2261 = vmatprep.subr.bf16.mxu0 0
    %2262 = vmatpush1.bf16.msra.mxu0 0
    %2263 = vmatprep.subr.bf16.mxu0 0
    %2264 = vmatpush1.bf16.msra.mxu0 0
    %2265 = vmatprep.subr.bf16.mxu0 0
    %2266 = vmatpush1.bf16.msra.mxu0 0
    %2267 = vmatprep.subr.bf16.mxu0 0
    %2268 = vmatpush1.bf16.msra.mxu0 0
    %2269 = vmatprep.mubr.bf16.mxu0 0
    %2270 = vmatmul.mubr.bf16.gmra.mrb[0].mxu0 %v2232
    %v2271 = vpop.f32.mrb[0].mxu0
    %v2272 = vadd.f32 0.0, %v2271
    %v2273 = vpop.f32.mrb[0].mxu0
    %v2274 = vpop.f32.mrb[0].mxu0
    %v2275 = vadd.f32 0.0, %v2274
    %v2276 = vpop.f32.mrb[0].mxu0
    %2277 = vmatprep.mubr.bf16.mxu0 0
    %2278 = vmatmul.mubr.bf16.gmra.mrb[0].mxu0 %v2235
    %v2279 = vpop.f32.mrb[0].mxu0
    %v2280 = vadd.f32 0.0, %v2279
    %v2281 = vpop.f32.mrb[0].mxu0
    %v2282 = vpop.f32.mrb[0].mxu0
    %v2283 = vadd.f32 0.0, %v2282
    %v2284 = vpop.f32.mrb[0].mxu0
    %2285 = vdwg.mxu0
    %2290 = vrot.lane.b32.xlu0 %v2272, 16
    %v2291 = vpop.permute.xlu0 %2290
    %2292 = vrot.lane.b32.xlu0 %v2275, 16
    %v2293 = vpop.permute.xlu0 %2292
    %2294 = vrot.lane.b32.xlu0 %v2280, 16
    %v2295 = vpop.permute.xlu0 %2294
    %2296 = vrot.lane.b32.xlu0 %v2283, 16
    %v2297 = vpop.permute.xlu0 %2296
    %v2302 = vsel %vm893, %v2083, %v2291
    %v2303 = vsel %vm893, %v2086, %v2293
    %v2304 = vsel %vm893, %v2091, %v2295
    %v2305 = vsel %vm893, %v2094, %v2297
    %v2306 = vpack.c.bf16 %v2303, %v2302
    %v2307 = vpack.c.bf16 %v2305, %v2304
    %v2309 = vlaneseq
    %v2310 = vshrl.u32 %v2309, 7
    %v2311 = vsub.s32 0, %v2310
    %v2312 = vrot.slane %v1737, %v2311
    %v2318 = vunpack.c.l.b16 %v1733
    %v2319 = vunpack.c.l.b16 %v1734
    %v2320 = vunpack.c.l.b16 %v1735
    %v2321 = vunpack.c.l.b16 %v1736
    %v2322 = vpack.c.b16 %v2319, %v2318
    %v2323 = vpack.c.b16 %v2321, %v2320
    %v2327 = vsel %vm628, %v2306, 0
    %v2330 = vsel %vm628, %v2307, 0
    %2332 = vmatprep.subr.bf16.mxu0 0
    %2333 = vmatpush1.bf16.msra.mxu0 %v2322
    %2334 = vmatprep.subr.bf16.mxu0 0
    %2335 = vmatpush1.bf16.msra.mxu0 %v2323
    %2336 = vmatprep.subr.bf16.mxu0 0
    %2337 = vmatpush1.bf16.msra.mxu0 0
    %2338 = vmatprep.subr.bf16.mxu0 0
    %2339 = vmatpush1.bf16.msra.mxu0 0
    %2340 = vmatprep.subr.bf16.mxu0 0
    %2341 = vmatpush1.bf16.msra.mxu0 0
    %2342 = vmatprep.subr.bf16.mxu0 0
    %2343 = vmatpush1.bf16.msra.mxu0 0
    %2344 = vmatprep.subr.bf16.mxu0 0
    %2345 = vmatpush1.bf16.msra.mxu0 0
    %2346 = vmatprep.subr.bf16.mxu0 0
    %2347 = vmatpush1.bf16.msra.mxu0 0
    %2348 = vmatprep.subr.bf16.mxu0 0
    %2349 = vmatpush1.bf16.msra.mxu0 0
    %2350 = vmatprep.subr.bf16.mxu0 0
    %2351 = vmatpush1.bf16.msra.mxu0 0
    %2352 = vmatprep.subr.bf16.mxu0 0
    %2353 = vmatpush1.bf16.msra.mxu0 0
    %2354 = vmatprep.subr.bf16.mxu0 0
    %2355 = vmatpush1.bf16.msra.mxu0 0
    %2356 = vmatprep.subr.bf16.mxu0 0
    %2357 = vmatpush1.bf16.msra.mxu0 0
    %2358 = vmatprep.subr.bf16.mxu0 0
    %2359 = vmatpush1.bf16.msra.mxu0 0
    %2360 = vmatprep.subr.bf16.mxu0 0
    %2361 = vmatpush1.bf16.msra.mxu0 0
    %2362 = vmatprep.subr.bf16.mxu0 0
    %2363 = vmatpush1.bf16.msra.mxu0 0
    %2364 = vmatprep.mubr.bf16.mxu0 0
    %2365 = vmatmul.mubr.bf16.gmra.mrb[0].mxu0 %v2327
    %v2366 = vpop.f32.mrb[0].mxu0
    %v2367 = vadd.f32 %v2312, %v2366
    %v2368 = vpop.f32.mrb[0].mxu0
    %v2369 = vpop.f32.mrb[0].mxu0
    %v2370 = vadd.f32 %v2312, %v2369
    %v2371 = vpop.f32.mrb[0].mxu0
    %2372 = vmatprep.mubr.bf16.mxu0 0
    %2373 = vmatmul.mubr.bf16.gmra.mrb[0].mxu0 %v2330
    %v2374 = vpop.f32.mrb[0].mxu0
    %v2375 = vadd.f32 %v2312, %v2374
    %v2376 = vpop.f32.mrb[0].mxu0
    %v2377 = vpop.f32.mrb[0].mxu0
    %v2378 = vadd.f32 %v2312, %v2377
    %v2379 = vpop.f32.mrb[0].mxu0
    %2380 = vdwg.mxu0
    %v2381 = vadd.f32 %v1722, %v2367
    %v2382 = vadd.f32 %v1723, %v2370
    %v2383 = vadd.f32 %v1724, %v2375
    %v2384 = vadd.f32 %v1725, %v2378
    %v2385 = vsel %vm628, %v2381, 0.0
    %2386 = vadd.xlane.f32.xlu0 %v2385
    %v2387 = vpop.xlane.xlu0 %2386
    %v2388 = vsel %vm628, %v2382, 0.0
    %2389 = vadd.xlane.f32.xlu0 %v2388
    %v2390 = vpop.xlane.xlu0 %2389
    %v2391 = vsel %vm628, %v2383, 0.0
    %2392 = vadd.xlane.f32.xlu0 %v2391
    %v2393 = vpop.xlane.xlu0 %2392
    %v2394 = vsel %vm628, %v2384, 0.0
    %2395 = vadd.xlane.f32.xlu0 %v2394
    %v2396 = vpop.xlane.xlu0 %2395
    %v2397 = vmul.f32 %v2387, %v641
    %v2398 = vmul.f32 %v2390, %v641
    %v2399 = vmul.f32 %v2393, %v641
    %v2400 = vmul.f32 %v2396, %v641
    %v2401 = vsub.f32 %v2381, %v2397
    %v2402 = vsub.f32 %v2382, %v2398
    %v2403 = vsub.f32 %v2383, %v2399
    %v2404 = vsub.f32 %v2384, %v2400
    %v2405 = vmul.f32 %v2401, %v2401
    %v2406 = vmul.f32 %v2402, %v2402
    %v2407 = vmul.f32 %v2403, %v2403
    %v2408 = vmul.f32 %v2404, %v2404
    %v2409 = vsel %vm628, %v2405, 0.0
    %2410 = vadd.xlane.f32.xlu0 %v2409
    %v2411 = vpop.xlane.xlu0 %2410
    %v2412 = vsel %vm628, %v2406, 0.0
    %2413 = vadd.xlane.f32.xlu0 %v2412
    %v2414 = vpop.xlane.xlu0 %2413
    %v2415 = vsel %vm628, %v2407, 0.0
    %2416 = vadd.xlane.f32.xlu0 %v2415
    %v2417 = vpop.xlane.xlu0 %2416
    %v2418 = vsel %vm628, %v2408, 0.0
    %2419 = vadd.xlane.f32.xlu0 %v2418
    %v2420 = vpop.xlane.xlu0 %2419
    %v2421 = vmul.f32 %v2411, %v641
    %v2422 = vmul.f32 %v2414, %v641
    %v2423 = vmul.f32 %v2417, %v641
    %v2424 = vmul.f32 %v2420, %v641
    %v2425 = vadd.f32 %v2421, 1e-05
    %v2426 = vadd.f32 %v2422, 1e-05
    %v2427 = vadd.f32 %v2423, 1e-05
    %v2428 = vadd.f32 %v2424, 1e-05
    %v2429 = vrsqrt.pop %v2425
    %v2430 = vrsqrt.pop %v2426
    %v2431 = vrsqrt.pop %v2427
    %v2432 = vrsqrt.pop %v2428
    %v2433 = vmul.f32 %v2401, %v2429
    %v2434 = vmul.f32 %v2402, %v2430
    %v2435 = vmul.f32 %v2403, %v2431
    %v2436 = vmul.f32 %v2404, %v2432
    %v2438 = vlaneseq
    %v2439 = vshrl.u32 %v2438, 7
    %v2440 = vsub.s32 0, %v2439
    %v2441 = vrot.slane %v1738, %v2440
    %v2443 = vmul.f32 %v2433, %v2441
    %v2444 = vmul.f32 %v2434, %v2441
    %v2445 = vmul.f32 %v2435, %v2441
    %v2446 = vmul.f32 %v2436, %v2441
    %v2448 = vlaneseq
    %v2449 = vshrl.u32 %v2448, 7
    %v2450 = vsub.s32 0, %v2449
    %v2451 = vrot.slane %v1739, %v2450
    %v2453 = vadd.f32 %v2443, %v2451
    %v2454 = vadd.f32 %v2444, %v2451
    %v2455 = vadd.f32 %v2445, %v2451
    %v2456 = vadd.f32 %v2446, %v2451
    %v2457 = vpack.c.bf16 %v2454, %v2453
    %v2458 = vpack.c.bf16 %v2456, %v2455
    %v2460 = vlaneseq
    %v2461 = vshrl.u32 %v2460, 7
    %v2462 = vsub.s32 0, %v2461
    %v2463 = vrot.slane %v1744, %v2462
    %v2469 = vunpack.c.l.b16 %v1740
    %v2470 = vunpack.c.l.b16 %v1741
    %v2471 = vunpack.c.l.b16 %v1742
    %v2472 = vunpack.c.l.b16 %v1743
    %v2473 = vpack.c.b16 %v2470, %v2469
    %v2474 = vpack.c.b16 %v2472, %v2471
    %v2478 = vsel %vm628, %v2457, 0
    %v2481 = vsel %vm628, %v2458, 0
    %2483 = vmatprep.subr.bf16.mxu0 0
    %2484 = vmatpush1.bf16.msra.mxu0 %v2473
    %2485 = vmatprep.subr.bf16.mxu0 0
    %2486 = vmatpush1.bf16.msra.mxu0 %v2474
    %2487 = vmatprep.subr.bf16.mxu0 0
    %2488 = vmatpush1.bf16.msra.mxu0 0
    %2489 = vmatprep.subr.bf16.mxu0 0
    %2490 = vmatpush1.bf16.msra.mxu0 0
    %2491 = vmatprep.subr.bf16.mxu0 0
    %2492 = vmatpush1.bf16.msra.mxu0 0
    %2493 = vmatprep.subr.bf16.mxu0 0
    %2494 = vmatpush1.bf16.msra.mxu0 0
    %2495 = vmatprep.subr.bf16.mxu0 0
    %2496 = vmatpush1.bf16.msra.mxu0 0
    %2497 = vmatprep.subr.bf16.mxu0 0
    %2498 = vmatpush1.bf16.msra.mxu0 0
    %2499 = vmatprep.subr.bf16.mxu0 0
    %2500 = vmatpush1.bf16.msra.mxu0 0
    %2501 = vmatprep.subr.bf16.mxu0 0
    %2502 = vmatpush1.bf16.msra.mxu0 0
    %2503 = vmatprep.subr.bf16.mxu0 0
    %2504 = vmatpush1.bf16.msra.mxu0 0
    %2505 = vmatprep.subr.bf16.mxu0 0
    %2506 = vmatpush1.bf16.msra.mxu0 0
    %2507 = vmatprep.subr.bf16.mxu0 0
    %2508 = vmatpush1.bf16.msra.mxu0 0
    %2509 = vmatprep.subr.bf16.mxu0 0
    %2510 = vmatpush1.bf16.msra.mxu0 0
    %2511 = vmatprep.subr.bf16.mxu0 0
    %2512 = vmatpush1.bf16.msra.mxu0 0
    %2513 = vmatprep.subr.bf16.mxu0 0
    %2514 = vmatpush1.bf16.msra.mxu0 0
    %2515 = vmatprep.mubr.bf16.mxu0 0
    %2516 = vmatmul.mubr.bf16.gmra.mrb[0].mxu0 %v2478
    %v2517 = vpop.f32.mrb[0].mxu0
    %v2518 = vadd.f32 %v2463, %v2517
    %v2519 = vpop.f32.mrb[0].mxu0
    %v2520 = vpop.f32.mrb[0].mxu0
    %v2521 = vadd.f32 %v2463, %v2520
    %v2522 = vpop.f32.mrb[0].mxu0
    %2523 = vmatprep.mubr.bf16.mxu0 0
    %2524 = vmatmul.mubr.bf16.gmra.mrb[0].mxu0 %v2481
    %v2525 = vpop.f32.mrb[0].mxu0
    %v2526 = vadd.f32 %v2463, %v2525
    %v2527 = vpop.f32.mrb[0].mxu0
    %v2528 = vpop.f32.mrb[0].mxu0
    %v2529 = vadd.f32 %v2463, %v2528
    %v2530 = vpop.f32.mrb[0].mxu0
    %2531 = vdwg.mxu0
    %v2532 = vmul.f32 %v2518, 0.70710677
    %v2533 = vmul.f32 %v2521, 0.70710677
    %v2534 = vmul.f32 %v2526, 0.70710677
    %v2535 = vmul.f32 %v2529, 0.70710677
    %v2536 = vand.u32 2147483647, %v2532
    %v2537 = vand.u32 2147483647, %v2533
    %v2538 = vand.u32 2147483647, %v2534
    %v2539 = vand.u32 2147483647, %v2535
    %v2540 = vmul.f32 %v2536, 0.3275911
    %v2541 = vmul.f32 %v2537, 0.3275911
    %v2542 = vmul.f32 %v2538, 0.3275911
    %v2543 = vmul.f32 %v2539, 0.3275911
    %v2544 = vadd.f32 %v2540, 1.0
    %v2545 = vadd.f32 %v2541, 1.0
    %v2546 = vadd.f32 %v2542, 1.0
    %v2547 = vadd.f32 %v2543, 1.0
    %v2548 = vrcp.pop %v2544
    %v2549 = vmul.f32 1.0, %v2548
    %v2550 = vrcp.pop %v2545
    %v2551 = vmul.f32 1.0, %v2550
    %v2552 = vrcp.pop %v2546
    %v2553 = vmul.f32 1.0, %v2552
    %v2554 = vrcp.pop %v2547
    %v2555 = vmul.f32 1.0, %v2554
    %v2556 = vmul.f32 %v2549, 1.0614054
    %v2557 = vmul.f32 %v2551, 1.0614054
    %v2558 = vmul.f32 %v2553, 1.0614054
    %v2559 = vmul.f32 %v2555, 1.0614054
    %v2560 = vadd.f32 %v2556, -1.4531521
    %v2561 = vadd.f32 %v2557, -1.4531521
    %v2562 = vadd.f32 %v2558, -1.4531521
    %v2563 = vadd.f32 %v2559, -1.4531521
    %v2564 = vmul.f32 %v2560, %v2549
    %v2565 = vmul.f32 %v2561, %v2551
    %v2566 = vmul.f32 %v2562, %v2553
    %v2567 = vmul.f32 %v2563, %v2555
    %v2568 = vadd.f32 %v2564, 1.4214138
    %v2569 = vadd.f32 %v2565, 1.4214138
    %v2570 = vadd.f32 %v2566, 1.4214138
    %v2571 = vadd.f32 %v2567, 1.4214138
    %v2572 = vmul.f32 %v2568, %v2549
    %v2573 = vmul.f32 %v2569, %v2551
    %v2574 = vmul.f32 %v2570, %v2553
    %v2575 = vmul.f32 %v2571, %v2555
    %v2576 = vadd.f32 %v2572, -0.28449672
    %v2577 = vadd.f32 %v2573, -0.28449672
    %v2578 = vadd.f32 %v2574, -0.28449672
    %v2579 = vadd.f32 %v2575, -0.28449672
    %v2580 = vmul.f32 %v2576, %v2549
    %v2581 = vmul.f32 %v2577, %v2551
    %v2582 = vmul.f32 %v2578, %v2553
    %v2583 = vmul.f32 %v2579, %v2555
    %v2584 = vadd.f32 %v2580, 0.2548296
    %v2585 = vadd.f32 %v2581, 0.2548296
    %v2586 = vadd.f32 %v2582, 0.2548296
    %v2587 = vadd.f32 %v2583, 0.2548296
    %v2588 = vmul.f32 %v2584, %v2549
    %v2589 = vmul.f32 %v2585, %v2551
    %v2590 = vmul.f32 %v2586, %v2553
    %v2591 = vmul.f32 %v2587, %v2555
    %v2592 = vsub.f32 0.0, %v2536
    %v2593 = vsub.f32 0.0, %v2537
    %v2594 = vsub.f32 0.0, %v2538
    %v2595 = vsub.f32 0.0, %v2539
    %v2596 = vmul.f32 %v2592, %v2536
    %v2597 = vmul.f32 %v2593, %v2537
    %v2598 = vmul.f32 %v2594, %v2538
    %v2599 = vmul.f32 %v2595, %v2539
    %v2600 = vmul.f32 %v2596, 1.442695
    %v2601 = vpow.pop %v2600
    %v2602 = vmul.f32 %v2597, 1.442695
    %v2603 = vpow.pop %v2602
    %v2604 = vmul.f32 %v2598, 1.442695
    %v2605 = vpow.pop %v2604
    %v2606 = vmul.f32 %v2599, 1.442695
    %v2607 = vpow.pop %v2606
    %v2608 = vmul.f32 %v2588, %v2601
    %v2609 = vmul.f32 %v2589, %v2603
    %v2610 = vmul.f32 %v2590, %v2605
    %v2611 = vmul.f32 %v2591, %v2607
    %v2612 = vsub.f32 1.0, %v2608
    %v2613 = vsub.f32 1.0, %v2609
    %v2614 = vsub.f32 1.0, %v2610
    %v2615 = vsub.f32 1.0, %v2611
    %vm2616 = vcmp.ge.f32.partialorder %v2532, 0.0
    %vm2617 = vcmp.ge.f32.partialorder %v2533, 0.0
    %vm2618 = vcmp.ge.f32.partialorder %v2534, 0.0
    %vm2619 = vcmp.ge.f32.partialorder %v2535, 0.0
    %v2620 = vsub.f32 0.0, %v2612
    %v2621 = vsub.f32 0.0, %v2613
    %v2622 = vsub.f32 0.0, %v2614
    %v2623 = vsub.f32 0.0, %v2615
    %v2624 = vsel %vm2616, %v2612, %v2620
    %v2625 = vsel %vm2617, %v2613, %v2621
    %v2626 = vsel %vm2618, %v2614, %v2622
    %v2627 = vsel %vm2619, %v2615, %v2623
    %v2628 = vmul.f32 %v2518, 0.5
    %v2629 = vmul.f32 %v2521, 0.5
    %v2630 = vmul.f32 %v2526, 0.5
    %v2631 = vmul.f32 %v2529, 0.5
    %v2632 = vadd.f32 %v2624, 1.0
    %v2633 = vadd.f32 %v2625, 1.0
    %v2634 = vadd.f32 %v2626, 1.0
    %v2635 = vadd.f32 %v2627, 1.0
    %v2636 = vmul.f32 %v2628, %v2632
    %v2637 = vmul.f32 %v2629, %v2633
    %v2638 = vmul.f32 %v2630, %v2634
    %v2639 = vmul.f32 %v2631, %v2635
    %v2640 = vpack.c.bf16 %v2637, %v2636
    %v2641 = vpack.c.bf16 %v2639, %v2638
    %v2643 = vlaneseq
    %v2644 = vshrl.u32 %v2643, 7
    %v2645 = vsub.s32 0, %v2644
    %v2646 = vrot.slane %v1761, %v2645
    %v2664 = vunpack.c.l.b16 %v1745
    %v2665 = vunpack.c.l.b16 %v1746
    %v2666 = vunpack.c.l.b16 %v1747
    %v2667 = vunpack.c.l.b16 %v1748
    %v2668 = vunpack.c.l.b16 %v1749
    %v2669 = vunpack.c.l.b16 %v1750
    %v2670 = vunpack.c.l.b16 %v1751
    %v2671 = vunpack.c.l.b16 %v1752
    %v2672 = vunpack.c.l.b16 %v1753
    %v2673 = vunpack.c.l.b16 %v1754
    %v2674 = vunpack.c.l.b16 %v1755
    %v2675 = vunpack.c.l.b16 %v1756
    %v2676 = vunpack.c.l.b16 %v1757
    %v2677 = vunpack.c.l.b16 %v1758
    %v2678 = vunpack.c.l.b16 %v1759
    %v2679 = vunpack.c.l.b16 %v1760
    %v2680 = vpack.c.b16 %v2665, %v2664
    %v2681 = vpack.c.b16 %v2667, %v2666
    %v2682 = vpack.c.b16 %v2669, %v2668
    %v2683 = vpack.c.b16 %v2671, %v2670
    %v2684 = vpack.c.b16 %v2673, %v2672
    %v2685 = vpack.c.b16 %v2675, %v2674
    %v2686 = vpack.c.b16 %v2677, %v2676
    %v2687 = vpack.c.b16 %v2679, %v2678
    %2696 = vmatprep.subr.bf16.mxu0 0
    %2697 = vmatpush1.bf16.msra.mxu0 %v2680
    %2698 = vmatprep.subr.bf16.mxu0 0
    %2699 = vmatpush1.bf16.msra.mxu0 %v2681
    %2700 = vmatprep.subr.bf16.mxu0 0
    %2701 = vmatpush1.bf16.msra.mxu0 %v2682
    %2702 = vmatprep.subr.bf16.mxu0 0
    %2703 = vmatpush1.bf16.msra.mxu0 %v2683
    %2704 = vmatprep.subr.bf16.mxu0 0
    %2705 = vmatpush1.bf16.msra.mxu0 %v2684
    %2706 = vmatprep.subr.bf16.mxu0 0
    %2707 = vmatpush1.bf16.msra.mxu0 %v2685
    %2708 = vmatprep.subr.bf16.mxu0 0
    %2709 = vmatpush1.bf16.msra.mxu0 %v2686
    %2710 = vmatprep.subr.bf16.mxu0 0
    %2711 = vmatpush1.bf16.msra.mxu0 %v2687
    %2712 = vmatprep.subr.bf16.mxu0 0
    %2713 = vmatpush1.bf16.msra.mxu0 0
    %2714 = vmatprep.subr.bf16.mxu0 0
    %2715 = vmatpush1.bf16.msra.mxu0 0
    %2716 = vmatprep.subr.bf16.mxu0 0
    %2717 = vmatpush1.bf16.msra.mxu0 0
    %2718 = vmatprep.subr.bf16.mxu0 0
    %2719 = vmatpush1.bf16.msra.mxu0 0
    %2720 = vmatprep.subr.bf16.mxu0 0
    %2721 = vmatpush1.bf16.msra.mxu0 0
    %2722 = vmatprep.subr.bf16.mxu0 0
    %2723 = vmatpush1.bf16.msra.mxu0 0
    %2724 = vmatprep.subr.bf16.mxu0 0
    %2725 = vmatpush1.bf16.msra.mxu0 0
    %2726 = vmatprep.subr.bf16.mxu0 0
    %2727 = vmatpush1.bf16.msra.mxu0 0
    %2728 = vmatprep.mubr.bf16.mxu0 0
    %2729 = vmatmul.mubr.bf16.gmra.mrb[0].mxu0 %v2640
    %v2730 = vpop.f32.mrb[0].mxu0
    %v2731 = vadd.f32 %v2646, %v2730
    %v2732 = vpop.f32.mrb[0].mxu0
    %v2733 = vpop.f32.mrb[0].mxu0
    %v2734 = vadd.f32 %v2646, %v2733
    %v2735 = vpop.f32.mrb[0].mxu0
    %2736 = vmatprep.mubr.bf16.mxu0 0
    %2737 = vmatmul.mubr.bf16.gmra.mrb[0].mxu0 %v2641
    %v2738 = vpop.f32.mrb[0].mxu0
    %v2739 = vadd.f32 %v2646, %v2738
    %v2740 = vpop.f32.mrb[0].mxu0
    %v2741 = vpop.f32.mrb[0].mxu0
    %v2742 = vadd.f32 %v2646, %v2741
    %v2743 = vpop.f32.mrb[0].mxu0
    %2744 = vdwg.mxu0
    %v2745 = vadd.f32 %v2381, %v2731
    %v2746 = vadd.f32 %v2382, %v2734
    %v2747 = vadd.f32 %v2383, %v2739
    %v2748 = vadd.f32 %v2384, %v2742
    %v2749 = vld [vmem:[#allocation31] sm:$0x1]
    %v2750 = vld [vmem:[#allocation32] sm:$0x1]
    %v2751 = vld [vmem:[%s67] sm:$0xf]
    %v2752 = vld [vmem:[%s67 + $0x4] sm:$0xf]
    %v2753 = vld [vmem:[%s67 + $0x8] sm:$0xf]
    %v2754 = vld [vmem:[%s67 + $0xc] sm:$0xf]
    %v2755 = vld [vmem:[%s67 + $0x10] sm:$0xf]
    %v2756 = vld [vmem:[%s67 + $0x14] sm:$0xf]
    %v2757 = vld [vmem:[%s67 + $0x18] sm:$0xf]
    %v2758 = vld [vmem:[%s67 + $0x1c] sm:$0xf]
    %v2759 = vld [vmem:[%s67 + $0x20] sm:$0xf]
    %v2760 = vld [vmem:[%s67 + $0x24] sm:$0xf]
    %v2761 = vld [vmem:[%s67 + $0x28] sm:$0xf]
    %v2762 = vld [vmem:[%s67 + $0x2c] sm:$0xf]
    %v2763 = vld [vmem:[%s67 + $0x30] sm:$0xf]
    %v2764 = vld [vmem:[%s67 + $0x34] sm:$0xf]
    %v2765 = vld [vmem:[%s67 + $0x38] sm:$0xf]
    %v2766 = vld [vmem:[%s67 + $0x3c] sm:$0xf]
    %v2768 = vrot.slane %v2745, 4
    %2769 = vrot.lane.b32.xlu0 %v2768, 32
    %v2770 = vpop.permute.xlu0 %2769
    %v2772 = vrot.slane %v2745, 1
    %2773 = vrot.lane.b32.xlu0 %v2772, 64
    %v2774 = vpop.permute.xlu0 %2773
    %v2776 = vrot.slane %v2745, 5
    %2777 = vrot.lane.b32.xlu0 %v2776, 96
    %v2778 = vpop.permute.xlu0 %2777
    %v2780 = vsel %vm628, %v2745, %v2770
    %vm2781 = vcmask 523264
    %v2782 = vsel %vm2781, %v2780, %v2774
    %vm2783 = vcmask 785408
    %v2784 = vsel %vm2783, %v2782, %v2778
    %v2786 = vrot.slane %v2746, 4
    %2787 = vrot.lane.b32.xlu0 %v2786, 32
    %v2788 = vpop.permute.xlu0 %2787
    %v2790 = vrot.slane %v2746, 1
    %2791 = vrot.lane.b32.xlu0 %v2790, 64
    %v2792 = vpop.permute.xlu0 %2791
    %v2794 = vrot.slane %v2746, 5
    %2795 = vrot.lane.b32.xlu0 %v2794, 96
    %v2796 = vpop.permute.xlu0 %2795
    %v2798 = vsel %vm628, %v2746, %v2788
    %v2799 = vsel %vm2781, %v2798, %v2792
    %v2800 = vsel %vm2783, %v2799, %v2796
    %v2802 = vrot.slane %v2747, 4
    %2803 = vrot.lane.b32.xlu0 %v2802, 32
    %v2804 = vpop.permute.xlu0 %2803
    %v2806 = vrot.slane %v2747, 1
    %2807 = vrot.lane.b32.xlu0 %v2806, 64
    %v2808 = vpop.permute.xlu0 %2807
    %v2810 = vrot.slane %v2747, 5
    %2811 = vrot.lane.b32.xlu0 %v2810, 96
    %v2812 = vpop.permute.xlu0 %2811
    %v2814 = vsel %vm628, %v2747, %v2804
    %v2815 = vsel %vm2781, %v2814, %v2808
    %v2816 = vsel %vm2783, %v2815, %v2812
    %v2818 = vrot.slane %v2748, 4
    %2819 = vrot.lane.b32.xlu0 %v2818, 32
    %v2820 = vpop.permute.xlu0 %2819
    %v2822 = vrot.slane %v2748, 1
    %2823 = vrot.lane.b32.xlu0 %v2822, 64
    %v2824 = vpop.permute.xlu0 %2823
    %v2826 = vrot.slane %v2748, 5
    %2827 = vrot.lane.b32.xlu0 %v2826, 96
    %v2828 = vpop.permute.xlu0 %2827
    %v2830 = vsel %vm628, %v2748, %v2820
    %v2831 = vsel %vm2781, %v2830, %v2824
    %v2832 = vsel %vm2783, %v2831, %v2828
    %v2834 = vrot.slane %v2784, 1
    %v2837 = vrot.slane %v2800, 6
    %v2839 = vrot.slane %v2800, 7
    %v2842 = vrot.slane %v2816, 4
    %v2844 = vrot.slane %v2816, 5
    %v2847 = vrot.slane %v2832, 2
    %v2849 = vrot.slane %v2832, 3
    %vm2851 = vcmask 1040384
    %v2852 = vsel %vm2851, %v2784, %v2834
    %vm2853 = vcmask 1041408
    %v2854 = vsel %vm2853, %v2852, %v2837
    %vm2855 = vcmask 1042432
    %v2856 = vsel %vm2855, %v2854, %v2839
    %vm2857 = vcmask 1043456
    %v2858 = vsel %vm2857, %v2856, %v2842
    %vm2859 = vcmask 1044480
    %v2860 = vsel %vm2859, %v2858, %v2844
    %vm2861 = vcmask 1045504
    %v2862 = vsel %vm2861, %v2860, %v2847
    %vm2863 = vcmask 1046528
    %v2864 = vsel %vm2863, %v2862, %v2849
    %2865 = vadd.xlane.f32.xlu0 %v2864
    %v2866 = vpop.xlane.xlu0 %2865
    %v2867 = vrcp.pop 128.0
    %v2868 = vmul.f32 %v2866, %v2867
    %v2869 = vsub.f32 %v2864, %v2868
    %v2870 = vmul.f32 %v2869, %v2869
    %2871 = vadd.xlane.f32.xlu0 %v2870
    %v2872 = vpop.xlane.xlu0 %2871
    %v2873 = vmul.f32 %v2872, %v2867
    %v2874 = vadd.f32 %v2873, 1e-05
    %v2875 = vrsqrt.pop %v2874
    %v2876 = vmul.f32 %v2869, %v2875
    %v2878 = vlaneseq
    %v2879 = vshrl.u32 %v2878, 7
    %v2880 = vsub.s32 0, %v2879
    %v2881 = vrot.slane %v2749, %v2880
    %v2883 = vmul.f32 %v2876, %v2881
    %v2885 = vlaneseq
    %v2886 = vshrl.u32 %v2885, 7
    %v2887 = vsub.s32 0, %v2886
    %v2888 = vrot.slane %v2750, %v2887
    %v2890 = vadd.f32 %v2883, %v2888
    %v2891 = vpack.c.bf16 %v2890, %v2890
    %v2908 = vunpack.c.l.b16 %v2751
    %v2909 = vunpack.c.l.b16 %v2752
    %v2910 = vunpack.c.l.b16 %v2753
    %v2911 = vunpack.c.l.b16 %v2754
    %v2912 = vunpack.c.l.b16 %v2755
    %v2913 = vunpack.c.l.b16 %v2756
    %v2914 = vunpack.c.l.b16 %v2757
    %v2915 = vunpack.c.l.b16 %v2758
    %v2916 = vunpack.c.l.b16 %v2759
    %v2917 = vunpack.c.l.b16 %v2760
    %v2918 = vunpack.c.l.b16 %v2761
    %v2919 = vunpack.c.l.b16 %v2762
    %v2920 = vunpack.c.l.b16 %v2763
    %v2921 = vunpack.c.l.b16 %v2764
    %v2922 = vunpack.c.l.b16 %v2765
    %v2923 = vunpack.c.l.b16 %v2766
    %v2924 = vpack.c.b16 %v2909, %v2908
    %v2925 = vpack.c.b16 %v2911, %v2910
    %v2926 = vpack.c.b16 %v2913, %v2912
    %v2927 = vpack.c.b16 %v2915, %v2914
    %v2928 = vpack.c.b16 %v2917, %v2916
    %v2929 = vpack.c.b16 %v2919, %v2918
    %v2930 = vpack.c.b16 %v2921, %v2920
    %v2931 = vpack.c.b16 %v2923, %v2922
    %2940 = vmatprep.subr.bf16.mxu0 0
    %2941 = vmatpush1.bf16.msra.mxu0 %v2924
    %2942 = vmatprep.subr.bf16.mxu0 0
    %2943 = vmatpush1.bf16.msra.mxu0 %v2925
    %2944 = vmatprep.subr.bf16.mxu0 0
    %2945 = vmatpush1.bf16.msra.mxu0 %v2926
    %2946 = vmatprep.subr.bf16.mxu0 0
    %2947 = vmatpush1.bf16.msra.mxu0 %v2927
    %2948 = vmatprep.subr.bf16.mxu0 0
    %2949 = vmatpush1.bf16.msra.mxu0 %v2928
    %2950 = vmatprep.subr.bf16.mxu0 0
    %2951 = vmatpush1.bf16.msra.mxu0 %v2929
    %2952 = vmatprep.subr.bf16.mxu0 0
    %2953 = vmatpush1.bf16.msra.mxu0 %v2930
    %2954 = vmatprep.subr.bf16.mxu0 0
    %2955 = vmatpush1.bf16.msra.mxu0 %v2931
    %2956 = vmatprep.subr.bf16.mxu0 0
    %2957 = vmatpush1.bf16.msra.mxu0 0
    %2958 = vmatprep.subr.bf16.mxu0 0
    %2959 = vmatpush1.bf16.msra.mxu0 0
    %2960 = vmatprep.subr.bf16.mxu0 0
    %2961 = vmatpush1.bf16.msra.mxu0 0
    %2962 = vmatprep.subr.bf16.mxu0 0
    %2963 = vmatpush1.bf16.msra.mxu0 0
    %2964 = vmatprep.subr.bf16.mxu0 0
    %2965 = vmatpush1.bf16.msra.mxu0 0
    %2966 = vmatprep.subr.bf16.mxu0 0
    %2967 = vmatpush1.bf16.msra.mxu0 0
    %2968 = vmatprep.subr.bf16.mxu0 0
    %2969 = vmatpush1.bf16.msra.mxu0 0
    %2970 = vmatprep.subr.bf16.mxu0 0
    %2971 = vmatpush1.bf16.msra.mxu0 0
    %2972 = vmatprep.mubr.bf16.mxu0 0
    %2973 = vmatmul.mubr.bf16.gmra.mrb[0].mxu0 %v2891
    %v2974 = vpop.f32.mrb[0].mxu0
    %v2975 = vadd.f32 0.0, %v2974
    %v2976 = vpop.f32.mrb[0].mxu0
    %v2977 = vpop.f32.mrb[0].mxu0
    %v2978 = vpop.f32.mrb[0].mxu0
    %2979 = vdwg.mxu0
    %v2980 = vld [vmem:[%s69] sm:$0x1]
    %v2981 = vld [vmem:[%s71] sm:$0x1]
    %v2982 = vld [vmem:[%s73] sm:$0xff]
    %v2983 = vld [vmem:[%s73 + $0x8] sm:$0xff]
    %v2984 = vld [vmem:[%s73 + $0x10] sm:$0xff]
    %v2985 = vld [vmem:[%s73 + $0x18] sm:$0xff]
    %v2986 = vld [vmem:[%s73 + $0x20] sm:$0xff]
    %v2987 = vld [vmem:[%s73 + $0x28] sm:$0xff]
    %v2988 = vld [vmem:[%s73 + $0x30] sm:$0xff]
    %v2989 = vld [vmem:[%s73 + $0x38] sm:$0xff]
    %v2990 = vld [vmem:[%s75] sm:$0x3]
    %v2991 = vld [vmem:[%s79] sm:$0xf]
    %v2992 = vld [vmem:[%s79 + $0x4] sm:$0xf]
    %v2993 = vld [vmem:[%s79 + $0x8] sm:$0xf]
    %v2994 = vld [vmem:[%s79 + $0xc] sm:$0xf]
    %v2995 = vld [vmem:[%s79 + $0x10] sm:$0xf]
    %v2996 = vld [vmem:[%s79 + $0x14] sm:$0xf]
    %v2997 = vld [vmem:[%s79 + $0x18] sm:$0xf]
    %v2998 = vld [vmem:[%s79 + $0x1c] sm:$0xf]
    %v2999 = vld [vmem:[%s81] sm:$0x1]
    %v3000 = vld [vmem:[%s83] sm:$0x1]
    %v3001 = vld [vmem:[%s85] sm:$0x1]
    %v3002 = vld [vmem:[%s87] sm:$0xff]
    %v3003 = vld [vmem:[%s87 + $0x8] sm:$0xff]
    %v3004 = vld [vmem:[%s87 + $0x10] sm:$0xff]
    %v3005 = vld [vmem:[%s87 + $0x18] sm:$0xff]
    %v3006 = vld [vmem:[%s87 + $0x20] sm:$0xff]
    %v3007 = vld [vmem:[%s87 + $0x28] sm:$0xff]
    %v3008 = vld [vmem:[%s87 + $0x30] sm:$0xff]
    %v3009 = vld [vmem:[%s87 + $0x38] sm:$0xff]
    %v3010 = vld [vmem:[%s89] sm:$0x3]
    %v3011 = vld [vmem:[%s91] sm:$0xf]
    %v3012 = vld [vmem:[%s91 + $0x4] sm:$0xf]
    %v3013 = vld [vmem:[%s91 + $0x8] sm:$0xf]
    %v3014 = vld [vmem:[%s91 + $0xc] sm:$0xf]
    %v3015 = vld [vmem:[%s91 + $0x10] sm:$0xf]
    %v3016 = vld [vmem:[%s91 + $0x14] sm:$0xf]
    %v3017 = vld [vmem:[%s91 + $0x18] sm:$0xf]
    %v3018 = vld [vmem:[%s91 + $0x1c] sm:$0xf]
    %v3019 = vld [vmem:[%s91 + $0x20] sm:$0xf]
    %v3020 = vld [vmem:[%s91 + $0x24] sm:$0xf]
    %v3021 = vld [vmem:[%s91 + $0x28] sm:$0xf]
    %v3022 = vld [vmem:[%s91 + $0x2c] sm:$0xf]
    %v3023 = vld [vmem:[%s91 + $0x30] sm:$0xf]
    %v3024 = vld [vmem:[%s91 + $0x34] sm:$0xf]
    %v3025 = vld [vmem:[%s91 + $0x38] sm:$0xf]
    %v3026 = vld [vmem:[%s91 + $0x3c] sm:$0xf]
    %v3027 = vld [vmem:[%s91 + $0x40] sm:$0xf]
    %v3028 = vld [vmem:[%s91 + $0x44] sm:$0xf]
    %v3029 = vld [vmem:[%s91 + $0x48] sm:$0xf]
    %v3030 = vld [vmem:[%s91 + $0x4c] sm:$0xf]
    %v3031 = vld [vmem:[%s91 + $0x50] sm:$0xf]
    %v3032 = vld [vmem:[%s91 + $0x54] sm:$0xf]
    %v3033 = vld [vmem:[%s91 + $0x58] sm:$0xf]
    %v3034 = vld [vmem:[%s91 + $0x5c] sm:$0xf]
    %v3035 = vld [vmem:[%s91 + $0x60] sm:$0xf]
    %v3036 = vld [vmem:[%s91 + $0x64] sm:$0xf]
    %v3037 = vld [vmem:[%s91 + $0x68] sm:$0xf]
    %v3038 = vld [vmem:[%s91 + $0x6c] sm:$0xf]
    %v3039 = vld [vmem:[%s91 + $0x70] sm:$0xf]
    %v3040 = vld [vmem:[%s91 + $0x74] sm:$0xf]
    %v3041 = vld [vmem:[%s91 + $0x78] sm:$0xf]
    %v3042 = vld [vmem:[%s91 + $0x7c] sm:$0xf]
    %v3043 = vld [vmem:[%s93] sm:$0x1]
    %v3044 = vsel %vm2781, %v2975, 0.0
    %3045 = vadd.xlane.f32.xlu0 %v3044
    %v3046 = vpop.xlane.xlu0 %3045
    %v3047 = vrcp.pop 64.0
    %v3048 = vmul.f32 %v3046, %v3047
    %v3049 = vsub.f32 %v2975, %v3048
    %v3050 = vmul.f32 %v3049, %v3049
    %v3051 = vsel %vm2781, %v3050, 0.0
    %3052 = vadd.xlane.f32.xlu0 %v3051
    %v3053 = vpop.xlane.xlu0 %3052
    %v3054 = vmul.f32 %v3053, %v3047
    %v3055 = vadd.f32 %v3054, 1e-05
    %v3056 = vrsqrt.pop %v3055
    %v3057 = vmul.f32 %v3049, %v3056
    %v3059 = vlaneseq
    %v3060 = vshrl.u32 %v3059, 7
    %v3061 = vsub.s32 0, %v3060
    %v3062 = vrot.slane %v2980, %v3061
    %v3064 = vmul.f32 %v3057, %v3062
    %v3066 = vlaneseq
    %v3067 = vshrl.u32 %v3066, 7
    %v3068 = vsub.s32 0, %v3067
    %v3069 = vrot.slane %v2981, %v3068
    %v3071 = vadd.f32 %v3064, %v3069
    %v3072 = vpack.c.bf16 %v3071, %v3071
    %v3074 = vlaneseq
    %v3075 = vshrl.u32 %v3074, 7
    %v3076 = vsub.s32 0, %v3075
    %v3077 = vrot.slane %v2990, %v3076
    %v3078 = vlaneseq
    %v3079 = vshrl.u32 %v3078, 7
    %v3080 = vsub.s32 1, %v3079
    %v3081 = vrot.slane %v2990, %v3080
    %v3092 = vunpack.c.l.b16 %v2982
    %v3093 = vunpack.c.h.b16 %v2982
    %v3094 = vunpack.c.l.b16 %v2983
    %v3095 = vunpack.c.h.b16 %v2983
    %v3096 = vunpack.c.l.b16 %v2984
    %v3097 = vunpack.c.h.b16 %v2984
    %v3098 = vunpack.c.l.b16 %v2985
    %v3099 = vunpack.c.h.b16 %v2985
    %v3100 = vunpack.c.l.b16 %v2986
    %v3101 = vunpack.c.h.b16 %v2986
    %v3102 = vunpack.c.l.b16 %v2987
    %v3103 = vunpack.c.h.b16 %v2987
    %v3104 = vunpack.c.l.b16 %v2988
    %v3105 = vunpack.c.h.b16 %v2988
    %v3106 = vunpack.c.l.b16 %v2989
    %v3107 = vunpack.c.h.b16 %v2989
    %v3108 = vpack.c.b16 %v3094, %v3092
    %v3109 = vpack.c.b16 %v3095, %v3093
    %v3110 = vpack.c.b16 %v3098, %v3096
    %v3111 = vpack.c.b16 %v3099, %v3097
    %v3112 = vpack.c.b16 %v3102, %v3100
    %v3113 = vpack.c.b16 %v3103, %v3101
    %v3114 = vpack.c.b16 %v3106, %v3104
    %v3115 = vpack.c.b16 %v3107, %v3105
    %v3125 = vsel %vm2781, %v3072, 0
    %3127 = vmatprep.subr.bf16.mxu0 %v3109
    %3128 = vmatpush1.bf16.msra.mxu0 %v3108
    %3129 = vmatprep.subr.bf16.mxu0 %v3111
    %3130 = vmatpush1.bf16.msra.mxu0 %v3110
    %3131 = vmatprep.subr.bf16.mxu0 %v3113
    %3132 = vmatpush1.bf16.msra.mxu0 %v3112
    %3133 = vmatprep.subr.bf16.mxu0 %v3115
    %3134 = vmatpush1.bf16.msra.mxu0 %v3114
    %3135 = vmatprep.subr.bf16.mxu0 0
    %3136 = vmatpush1.bf16.msra.mxu0 0
    %3137 = vmatprep.subr.bf16.mxu0 0
    %3138 = vmatpush1.bf16.msra.mxu0 0
    %3139 = vmatprep.subr.bf16.mxu0 0
    %3140 = vmatpush1.bf16.msra.mxu0 0
    %3141 = vmatprep.subr.bf16.mxu0 0
    %3142 = vmatpush1.bf16.msra.mxu0 0
    %3143 = vmatprep.subr.bf16.mxu0 0
    %3144 = vmatpush1.bf16.msra.mxu0 0
    %3145 = vmatprep.subr.bf16.mxu0 0
    %3146 = vmatpush1.bf16.msra.mxu0 0
    %3147 = vmatprep.subr.bf16.mxu0 0
    %3148 = vmatpush1.bf16.msra.mxu0 0
    %3149 = vmatprep.subr.bf16.mxu0 0
    %3150 = vmatpush1.bf16.msra.mxu0 0
    %3151 = vmatprep.subr.bf16.mxu0 0
    %3152 = vmatpush1.bf16.msra.mxu0 0
    %3153 = vmatprep.subr.bf16.mxu0 0
    %3154 = vmatpush1.bf16.msra.mxu0 0
    %3155 = vmatprep.subr.bf16.mxu0 0
    %3156 = vmatpush1.bf16.msra.mxu0 0
    %3157 = vmatprep.subr.bf16.mxu0 0
    %3158 = vmatpush1.bf16.msra.mxu0 0
    %3159 = vmatprep.mubr.bf16.mxu0 0
    %3160 = vmatmul.mubr.bf16.gmra.mrb[0].mxu0 %v3125
    %v3161 = vpop.f32.mrb[0].mxu0
    %v3162 = vadd.f32 %v3077, %v3161
    %v3163 = vpop.f32.mrb[0].mxu0
    %v3164 = vadd.f32 %v3081, %v3163
    %v3165 = vpop.f32.mrb[0].mxu0
    %v3166 = vpop.f32.mrb[0].mxu0
    %3167 = vdwg.mxu0
    %v3168 = vpack.c.bf16 %v3162, %v3162
    %3170 = vrot.lane.b32.xlu0 %v3168, 64
    %v3171 = vpop.permute.xlu0 %3170
    %v3173 = vsel %vm893, %v3168, 0
    %v3176 = vsel %vm893, %v3171, 0
    %3178 = vmatprep.subr.bf16.mxu0 0
    %3179 = vmatpush1.bf16.xpose.msra.mxu0 %v3176
    %3180 = vmatprep.subr.bf16.mxu0 0
    %3181 = vmatpush1.bf16.xpose.msra.mxu0 0
    %3182 = vmatprep.subr.bf16.mxu0 0
    %3183 = vmatpush1.bf16.xpose.msra.mxu0 0
    %3184 = vmatprep.subr.bf16.mxu0 0
    %3185 = vmatpush1.bf16.xpose.msra.mxu0 0
    %3186 = vmatprep.subr.bf16.mxu0 0
    %3187 = vmatpush1.bf16.xpose.msra.mxu0 0
    %3188 = vmatprep.subr.bf16.mxu0 0
    %3189 = vmatpush1.bf16.xpose.msra.mxu0 0
    %3190 = vmatprep.subr.bf16.mxu0 0
    %3191 = vmatpush1.bf16.xpose.msra.mxu0 0
    %3192 = vmatprep.subr.bf16.mxu0 0
    %3193 = vmatpush1.bf16.xpose.msra.mxu0 0
    %3194 = vmatprep.subr.bf16.mxu0 0
    %3195 = vmatpush1.bf16.xpose.msra.mxu0 0
    %3196 = vmatprep.subr.bf16.mxu0 0
    %3197 = vmatpush1.bf16.xpose.msra.mxu0 0
    %3198 = vmatprep.subr.bf16.mxu0 0
    %3199 = vmatpush1.bf16.xpose.msra.mxu0 0
    %3200 = vmatprep.subr.bf16.mxu0 0
    %3201 = vmatpush1.bf16.xpose.msra.mxu0 0
    %3202 = vmatprep.subr.bf16.mxu0 0
    %3203 = vmatpush1.bf16.xpose.msra.mxu0 0
    %3204 = vmatprep.subr.bf16.mxu0 0
    %3205 = vmatpush1.bf16.xpose.msra.mxu0 0
    %3206 = vmatprep.subr.bf16.mxu0 0
    %3207 = vmatpush1.bf16.xpose.msra.mxu0 0
    %3208 = vmatprep.subr.bf16.mxu0 0
    %3209 = vmatpush1.bf16.xpose.msra.mxu0 0
    %3210 = vmatprep.mubr.bf16.mxu0 0
    %3211 = vmatmul.mubr.bf16.gmra.mrb[0].mxu0 %v3173
    %v3212 = vpop.f32.mrb[0].mxu0
    %v3213 = vadd.f32 0.0, %v3212
    %v3214 = vpop.f32.mrb[0].mxu0
    %v3215 = vpop.f32.mrb[0].mxu0
    %v3216 = vpop.f32.mrb[0].mxu0
    %3217 = vdwg.mxu0
    %v3218 = vmul.f32 %v3213, 0.25
    %v3219 = vld [vmem:[%s77] sm:$0xff]
    %v3220 = vadd.f32 %v3218, %v3219
    %vm3221 = vcmask 64512
    %v3222 = vsel %vm3221, %v3220, -inf
    %3223 = vmax.xlane.f32.xlu0 %v3222
    %v3224 = vpop.xlane.xlu0 %3223
    %v3225 = vsub.f32 %v3220, %v3224
    %v3226 = vmul.f32 %v3225, 1.442695
    %v3227 = vpow.pop %v3226
    %v3228 = vsel %vm3221, %v3227, 0.0
    %3229 = vadd.xlane.f32.xlu0 %v3228
    %v3230 = vpop.xlane.xlu0 %3229
    %v3231 = vrcp.pop %v3230
    %v3232 = vmul.f32 %v3227, %v3231
    %v3233 = vpack.c.bf16 %v3232, %v3232
    %v3234 = vpack.c.bf16 %v3164, %v3164
    %v3236 = vsel %vm3221, %v3233, 0
    %v3239 = vsel %vm2857, %v3234, 0
    %3241 = vmatprep.subr.bf16.mxu0 0
    %3242 = vmatpush1.bf16.msra.mxu0 %v3239
    %3243 = vmatprep.subr.bf16.mxu0 0
    %3244 = vmatpush1.bf16.msra.mxu0 0
    %3245 = vmatprep.subr.bf16.mxu0 0
    %3246 = vmatpush1.bf16.msra.mxu0 0
    %3247 = vmatprep.subr.bf16.mxu0 0
    %3248 = vmatpush1.bf16.msra.mxu0 0
    %3249 = vmatprep.subr.bf16.mxu0 0
    %3250 = vmatpush1.bf16.msra.mxu0 0
    %3251 = vmatprep.subr.bf16.mxu0 0
    %3252 = vmatpush1.bf16.msra.mxu0 0
    %3253 = vmatprep.subr.bf16.mxu0 0
    %3254 = vmatpush1.bf16.msra.mxu0 0
    %3255 = vmatprep.subr.bf16.mxu0 0
    %3256 = vmatpush1.bf16.msra.mxu0 0
    %3257 = vmatprep.subr.bf16.mxu0 0
    %3258 = vmatpush1.bf16.msra.mxu0 0
    %3259 = vmatprep.subr.bf16.mxu0 0
    %3260 = vmatpush1.bf16.msra.mxu0 0
    %3261 = vmatprep.subr.bf16.mxu0 0
    %3262 = vmatpush1.bf16.msra.mxu0 0
    %3263 = vmatprep.subr.bf16.mxu0 0
    %3264 = vmatpush1.bf16.msra.mxu0 0
    %3265 = vmatprep.subr.bf16.mxu0 0
    %3266 = vmatpush1.bf16.msra.mxu0 0
    %3267 = vmatprep.subr.bf16.mxu0 0
    %3268 = vmatpush1.bf16.msra.mxu0 0
    %3269 = vmatprep.subr.bf16.mxu0 0
    %3270 = vmatpush1.bf16.msra.mxu0 0
    %3271 = vmatprep.subr.bf16.mxu0 0
    %3272 = vmatpush1.bf16.msra.mxu0 0
    %3273 = vmatprep.mubr.bf16.mxu0 0
    %3274 = vmatmul.mubr.bf16.gmra.mrb[0].mxu0 %v3236
    %v3275 = vpop.f32.mrb[0].mxu0
    %v3276 = vadd.f32 0.0, %v3275
    %v3277 = vpop.f32.mrb[0].mxu0
    %v3278 = vpop.f32.mrb[0].mxu0
    %v3279 = vpop.f32.mrb[0].mxu0
    %3280 = vdwg.mxu0
    %3281 = vrot.lane.b32.xlu0 %v3168, 112
    %v3282 = vpop.permute.xlu0 %3281
    %3283 = vrot.lane.b32.xlu0 %v3168, 48
    %v3284 = vpop.permute.xlu0 %3283
    %v3286 = vsel %vm893, %v3282, 0
    %v3289 = vsel %vm893, %v3284, 0
    %3291 = vmatprep.subr.bf16.mxu0 0
    %3292 = vmatpush1.bf16.xpose.msra.mxu0 %v3289
    %3293 = vmatprep.subr.bf16.mxu0 0
    %3294 = vmatpush1.bf16.xpose.msra.mxu0 0
    %3295 = vmatprep.subr.bf16.mxu0 0
    %3296 = vmatpush1.bf16.xpose.msra.mxu0 0
    %3297 = vmatprep.subr.bf16.mxu0 0
    %3298 = vmatpush1.bf16.xpose.msra.mxu0 0
    %3299 = vmatprep.subr.bf16.mxu0 0
    %3300 = vmatpush1.bf16.xpose.msra.mxu0 0
    %3301 = vmatprep.subr.bf16.mxu0 0
    %3302 = vmatpush1.bf16.xpose.msra.mxu0 0
    %3303 = vmatprep.subr.bf16.mxu0 0
    %3304 = vmatpush1.bf16.xpose.msra.mxu0 0
    %3305 = vmatprep.subr.bf16.mxu0 0
    %3306 = vmatpush1.bf16.xpose.msra.mxu0 0
    %3307 = vmatprep.subr.bf16.mxu0 0
    %3308 = vmatpush1.bf16.xpose.msra.mxu0 0
    %3309 = vmatprep.subr.bf16.mxu0 0
    %3310 = vmatpush1.bf16.xpose.msra.mxu0 0
    %3311 = vmatprep.subr.bf16.mxu0 0
    %3312 = vmatpush1.bf16.xpose.msra.mxu0 0
    %3313 = vmatprep.subr.bf16.mxu0 0
    %3314 = vmatpush1.bf16.xpose.msra.mxu0 0
    %3315 = vmatprep.subr.bf16.mxu0 0
    %3316 = vmatpush1.bf16.xpose.msra.mxu0 0
    %3317 = vmatprep.subr.bf16.mxu0 0
    %3318 = vmatpush1.bf16.xpose.msra.mxu0 0
    %3319 = vmatprep.subr.bf16.mxu0 0
    %3320 = vmatpush1.bf16.xpose.msra.mxu0 0
    %3321 = vmatprep.subr.bf16.mxu0 0
    %3322 = vmatpush1.bf16.xpose.msra.mxu0 0
    %3323 = vmatprep.mubr.bf16.mxu0 0
    %3324 = vmatmul.mubr.bf16.gmra.mrb[0].mxu0 %v3286
    %v3325 = vpop.f32.mrb[0].mxu0
    %v3326 = vadd.f32 0.0, %v3325
    %v3327 = vpop.f32.mrb[0].mxu0
    %v3328 = vpop.f32.mrb[0].mxu0
    %v3329 = vpop.f32.mrb[0].mxu0
    %3330 = vdwg.mxu0
    %v3331 = vmul.f32 %v3326, 0.25
    %s3332 = scalar_lea.vmem %s77, 8
    %v3333 = vld [vmem:[%s3332] sm:$0xff]
    %v3334 = vadd.f32 %v3331, %v3333
    %v3335 = vsel %vm3221, %v3334, -inf
    %3336 = vmax.xlane.f32.xlu0 %v3335
    %v3337 = vpop.xlane.xlu0 %3336
    %v3338 = vsub.f32 %v3334, %v3337
    %v3339 = vmul.f32 %v3338, 1.442695
    %v3340 = vpow.pop %v3339
    %v3341 = vsel %vm3221, %v3340, 0.0
    %3342 = vadd.xlane.f32.xlu0 %v3341
    %v3343 = vpop.xlane.xlu0 %3342
    %v3344 = vrcp.pop %v3343
    %v3345 = vmul.f32 %v3340, %v3344
    %v3346 = vpack.c.bf16 %v3345, %v3345
    %3348 = vrot.lane.b32.xlu0 %v3234, 112
    %v3349 = vpop.permute.xlu0 %3348
    %v3351 = vsel %vm3221, %v3346, 0
    %v3354 = vsel %vm2857, %v3349, 0
    %3356 = vmatprep.subr.bf16.mxu0 0
    %3357 = vmatpush1.bf16.msra.mxu0 %v3354
    %3358 = vmatprep.subr.bf16.mxu0 0
    %3359 = vmatpush1.bf16.msra.mxu0 0
    %3360 = vmatprep.subr.bf16.mxu0 0
    %3361 = vmatpush1.bf16.msra.mxu0 0
    %3362 = vmatprep.subr.bf16.mxu0 0
    %3363 = vmatpush1.bf16.msra.mxu0 0
    %3364 = vmatprep.subr.bf16.mxu0 0
    %3365 = vmatpush1.bf16.msra.mxu0 0
    %3366 = vmatprep.subr.bf16.mxu0 0
    %3367 = vmatpush1.bf16.msra.mxu0 0
    %3368 = vmatprep.subr.bf16.mxu0 0
    %3369 = vmatpush1.bf16.msra.mxu0 0
    %3370 = vmatprep.subr.bf16.mxu0 0
    %3371 = vmatpush1.bf16.msra.mxu0 0
    %3372 = vmatprep.subr.bf16.mxu0 0
    %3373 = vmatpush1.bf16.msra.mxu0 0
    %3374 = vmatprep.subr.bf16.mxu0 0
    %3375 = vmatpush1.bf16.msra.mxu0 0
    %3376 = vmatprep.subr.bf16.mxu0 0
    %3377 = vmatpush1.bf16.msra.mxu0 0
    %3378 = vmatprep.subr.bf16.mxu0 0
    %3379 = vmatpush1.bf16.msra.mxu0 0
    %3380 = vmatprep.subr.bf16.mxu0 0
    %3381 = vmatpush1.bf16.msra.mxu0 0
    %3382 = vmatprep.subr.bf16.mxu0 0
    %3383 = vmatpush1.bf16.msra.mxu0 0
    %3384 = vmatprep.subr.bf16.mxu0 0
    %3385 = vmatpush1.bf16.msra.mxu0 0
    %3386 = vmatprep.subr.bf16.mxu0 0
    %3387 = vmatpush1.bf16.msra.mxu0 0
    %3388 = vmatprep.mubr.bf16.mxu0 0
    %3389 = vmatmul.mubr.bf16.gmra.mrb[0].mxu0 %v3351
    %v3390 = vpop.f32.mrb[0].mxu0
    %v3391 = vadd.f32 0.0, %v3390
    %v3392 = vpop.f32.mrb[0].mxu0
    %v3393 = vpop.f32.mrb[0].mxu0
    %v3394 = vpop.f32.mrb[0].mxu0
    %3395 = vdwg.mxu0
    %3396 = vrot.lane.b32.xlu0 %v3168, 96
    %v3397 = vpop.permute.xlu0 %3396
    %3398 = vrot.lane.b32.xlu0 %v3168, 32
    %v3399 = vpop.permute.xlu0 %3398
    %v3401 = vsel %vm893, %v3397, 0
    %v3404 = vsel %vm893, %v3399, 0
    %3406 = vmatprep.subr.bf16.mxu0 0
    %3407 = vmatpush1.bf16.xpose.msra.mxu0 %v3404
    %3408 = vmatprep.subr.bf16.mxu0 0
    %3409 = vmatpush1.bf16.xpose.msra.mxu0 0
    %3410 = vmatprep.subr.bf16.mxu0 0
    %3411 = vmatpush1.bf16.xpose.msra.mxu0 0
    %3412 = vmatprep.subr.bf16.mxu0 0
    %3413 = vmatpush1.bf16.xpose.msra.mxu0 0
    %3414 = vmatprep.subr.bf16.mxu0 0
    %3415 = vmatpush1.bf16.xpose.msra.mxu0 0
    %3416 = vmatprep.subr.bf16.mxu0 0
    %3417 = vmatpush1.bf16.xpose.msra.mxu0 0
    %3418 = vmatprep.subr.bf16.mxu0 0
    %3419 = vmatpush1.bf16.xpose.msra.mxu0 0
    %3420 = vmatprep.subr.bf16.mxu0 0
    %3421 = vmatpush1.bf16.xpose.msra.mxu0 0
    %3422 = vmatprep.subr.bf16.mxu0 0
    %3423 = vmatpush1.bf16.xpose.msra.mxu0 0
    %3424 = vmatprep.subr.bf16.mxu0 0
    %3425 = vmatpush1.bf16.xpose.msra.mxu0 0
    %3426 = vmatprep.subr.bf16.mxu0 0
    %3427 = vmatpush1.bf16.xpose.msra.mxu0 0
    %3428 = vmatprep.subr.bf16.mxu0 0
    %3429 = vmatpush1.bf16.xpose.msra.mxu0 0
    %3430 = vmatprep.subr.bf16.mxu0 0
    %3431 = vmatpush1.bf16.xpose.msra.mxu0 0
    %3432 = vmatprep.subr.bf16.mxu0 0
    %3433 = vmatpush1.bf16.xpose.msra.mxu0 0
    %3434 = vmatprep.subr.bf16.mxu0 0
    %3435 = vmatpush1.bf16.xpose.msra.mxu0 0
    %3436 = vmatprep.subr.bf16.mxu0 0
    %3437 = vmatpush1.bf16.xpose.msra.mxu0 0
    %3438 = vmatprep.mubr.bf16.mxu0 0
    %3439 = vmatmul.mubr.bf16.gmra.mrb[0].mxu0 %v3401
    %v3440 = vpop.f32.mrb[0].mxu0
    %v3441 = vadd.f32 0.0, %v3440
    %v3442 = vpop.f32.mrb[0].mxu0
    %v3443 = vpop.f32.mrb[0].mxu0
    %v3444 = vpop.f32.mrb[0].mxu0
    %3445 = vdwg.mxu0
    %v3446 = vmul.f32 %v3441, 0.25
    %s3447 = scalar_lea.vmem %s77, 16
    %v3448 = vld [vmem:[%s3447] sm:$0xff]
    %v3449 = vadd.f32 %v3446, %v3448
    %v3450 = vsel %vm3221, %v3449, -inf
    %3451 = vmax.xlane.f32.xlu0 %v3450
    %v3452 = vpop.xlane.xlu0 %3451
    %v3453 = vsub.f32 %v3449, %v3452
    %v3454 = vmul.f32 %v3453, 1.442695
    %v3455 = vpow.pop %v3454
    %v3456 = vsel %vm3221, %v3455, 0.0
    %3457 = vadd.xlane.f32.xlu0 %v3456
    %v3458 = vpop.xlane.xlu0 %3457
    %v3459 = vrcp.pop %v3458
    %v3460 = vmul.f32 %v3455, %v3459
    %v3461 = vpack.c.bf16 %v3460, %v3460
    %3462 = vrot.lane.b32.xlu0 %v3234, 96
    %v3463 = vpop.permute.xlu0 %3462
    %v3465 = vsel %vm3221, %v3461, 0
    %v3468 = vsel %vm2857, %v3463, 0
    %3470 = vmatprep.subr.bf16.mxu0 0
    %3471 = vmatpush1.bf16.msra.mxu0 %v3468
    %3472 = vmatprep.subr.bf16.mxu0 0
    %3473 = vmatpush1.bf16.msra.mxu0 0
    %3474 = vmatprep.subr.bf16.mxu0 0
    %3475 = vmatpush1.bf16.msra.mxu0 0
    %3476 = vmatprep.subr.bf16.mxu0 0
    %3477 = vmatpush1.bf16.msra.mxu0 0
    %3478 = vmatprep.subr.bf16.mxu0 0
    %3479 = vmatpush1.bf16.msra.mxu0 0
    %3480 = vmatprep.subr.bf16.mxu0 0
    %3481 = vmatpush1.bf16.msra.mxu0 0
    %3482 = vmatprep.subr.bf16.mxu0 0
    %3483 = vmatpush1.bf16.msra.mxu0 0
    %3484 = vmatprep.subr.bf16.mxu0 0
    %3485 = vmatpush1.bf16.msra.mxu0 0
    %3486 = vmatprep.subr.bf16.mxu0 0
    %3487 = vmatpush1.bf16.msra.mxu0 0
    %3488 = vmatprep.subr.bf16.mxu0 0
    %3489 = vmatpush1.bf16.msra.mxu0 0
    %3490 = vmatprep.subr.bf16.mxu0 0
    %3491 = vmatpush1.bf16.msra.mxu0 0
    %3492 = vmatprep.subr.bf16.mxu0 0
    %3493 = vmatpush1.bf16.msra.mxu0 0
    %3494 = vmatprep.subr.bf16.mxu0 0
    %3495 = vmatpush1.bf16.msra.mxu0 0
    %3496 = vmatprep.subr.bf16.mxu0 0
    %3497 = vmatpush1.bf16.msra.mxu0 0
    %3498 = vmatprep.subr.bf16.mxu0 0
    %3499 = vmatpush1.bf16.msra.mxu0 0
    %3500 = vmatprep.subr.bf16.mxu0 0
    %3501 = vmatpush1.bf16.msra.mxu0 0
    %3502 = vmatprep.mubr.bf16.mxu0 0
    %3503 = vmatmul.mubr.bf16.gmra.mrb[0].mxu0 %v3465
    %v3504 = vpop.f32.mrb[0].mxu0
    %v3505 = vadd.f32 0.0, %v3504
    %v3506 = vpop.f32.mrb[0].mxu0
    %v3507 = vpop.f32.mrb[0].mxu0
    %v3508 = vpop.f32.mrb[0].mxu0
    %3509 = vdwg.mxu0
    %3510 = vrot.lane.b32.xlu0 %v3168, 80
    %v3511 = vpop.permute.xlu0 %3510
    %3512 = vrot.lane.b32.xlu0 %v3168, 16
    %v3513 = vpop.permute.xlu0 %3512
    %v3515 = vsel %vm893, %v3511, 0
    %v3518 = vsel %vm893, %v3513, 0
    %3520 = vmatprep.subr.bf16.mxu0 0
    %3521 = vmatpush1.bf16.xpose.msra.mxu0 %v3518
    %3522 = vmatprep.subr.bf16.mxu0 0
    %3523 = vmatpush1.bf16.xpose.msra.mxu0 0
    %3524 = vmatprep.subr.bf16.mxu0 0
    %3525 = vmatpush1.bf16.xpose.msra.mxu0 0
    %3526 = vmatprep.subr.bf16.mxu0 0
    %3527 = vmatpush1.bf16.xpose.msra.mxu0 0
    %3528 = vmatprep.subr.bf16.mxu0 0
    %3529 = vmatpush1.bf16.xpose.msra.mxu0 0
    %3530 = vmatprep.subr.bf16.mxu0 0
    %3531 = vmatpush1.bf16.xpose.msra.mxu0 0
    %3532 = vmatprep.subr.bf16.mxu0 0
    %3533 = vmatpush1.bf16.xpose.msra.mxu0 0
    %3534 = vmatprep.subr.bf16.mxu0 0
    %3535 = vmatpush1.bf16.xpose.msra.mxu0 0
    %3536 = vmatprep.subr.bf16.mxu0 0
    %3537 = vmatpush1.bf16.xpose.msra.mxu0 0
    %3538 = vmatprep.subr.bf16.mxu0 0
    %3539 = vmatpush1.bf16.xpose.msra.mxu0 0
    %3540 = vmatprep.subr.bf16.mxu0 0
    %3541 = vmatpush1.bf16.xpose.msra.mxu0 0
    %3542 = vmatprep.subr.bf16.mxu0 0
    %3543 = vmatpush1.bf16.xpose.msra.mxu0 0
    %3544 = vmatprep.subr.bf16.mxu0 0
    %3545 = vmatpush1.bf16.xpose.msra.mxu0 0
    %3546 = vmatprep.subr.bf16.mxu0 0
    %3547 = vmatpush1.bf16.xpose.msra.mxu0 0
    %3548 = vmatprep.subr.bf16.mxu0 0
    %3549 = vmatpush1.bf16.xpose.msra.mxu0 0
    %3550 = vmatprep.subr.bf16.mxu0 0
    %3551 = vmatpush1.bf16.xpose.msra.mxu0 0
    %3552 = vmatprep.mubr.bf16.mxu0 0
    %3553 = vmatmul.mubr.bf16.gmra.mrb[0].mxu0 %v3515
    %v3554 = vpop.f32.mrb[0].mxu0
    %v3555 = vadd.f32 0.0, %v3554
    %v3556 = vpop.f32.mrb[0].mxu0
    %v3557 = vpop.f32.mrb[0].mxu0
    %v3558 = vpop.f32.mrb[0].mxu0
    %3559 = vdwg.mxu0
    %v3560 = vmul.f32 %v3555, 0.25
    %s3561 = scalar_lea.vmem %s77, 24
    %v3562 = vld [vmem:[%s3561] sm:$0xff]
    %v3563 = vadd.f32 %v3560, %v3562
    %v3564 = vsel %vm3221, %v3563, -inf
    %3565 = vmax.xlane.f32.xlu0 %v3564
    %v3566 = vpop.xlane.xlu0 %3565
    %v3567 = vsub.f32 %v3563, %v3566
    %v3568 = vmul.f32 %v3567, 1.442695
    %v3569 = vpow.pop %v3568
    %v3570 = vsel %vm3221, %v3569, 0.0
    %3571 = vadd.xlane.f32.xlu0 %v3570
    %v3572 = vpop.xlane.xlu0 %3571
    %v3573 = vrcp.pop %v3572
    %v3574 = vmul.f32 %v3569, %v3573
    %v3575 = vpack.c.bf16 %v3574, %v3574
    %3576 = vrot.lane.b32.xlu0 %v3234, 80
    %v3577 = vpop.permute.xlu0 %3576
    %v3579 = vsel %vm3221, %v3575, 0
    %v3582 = vsel %vm2857, %v3577, 0
    %3584 = vmatprep.subr.bf16.mxu0 0
    %3585 = vmatpush1.bf16.msra.mxu0 %v3582
    %3586 = vmatprep.subr.bf16.mxu0 0
    %3587 = vmatpush1.bf16.msra.mxu0 0
    %3588 = vmatprep.subr.bf16.mxu0 0
    %3589 = vmatpush1.bf16.msra.mxu0 0
    %3590 = vmatprep.subr.bf16.mxu0 0
    %3591 = vmatpush1.bf16.msra.mxu0 0
    %3592 = vmatprep.subr.bf16.mxu0 0
    %3593 = vmatpush1.bf16.msra.mxu0 0
    %3594 = vmatprep.subr.bf16.mxu0 0
    %3595 = vmatpush1.bf16.msra.mxu0 0
    %3596 = vmatprep.subr.bf16.mxu0 0
    %3597 = vmatpush1.bf16.msra.mxu0 0
    %3598 = vmatprep.subr.bf16.mxu0 0
    %3599 = vmatpush1.bf16.msra.mxu0 0
    %3600 = vmatprep.subr.bf16.mxu0 0
    %3601 = vmatpush1.bf16.msra.mxu0 0
    %3602 = vmatprep.subr.bf16.mxu0 0
    %3603 = vmatpush1.bf16.msra.mxu0 0
    %3604 = vmatprep.subr.bf16.mxu0 0
    %3605 = vmatpush1.bf16.msra.mxu0 0
    %3606 = vmatprep.subr.bf16.mxu0 0
    %3607 = vmatpush1.bf16.msra.mxu0 0
    %3608 = vmatprep.subr.bf16.mxu0 0
    %3609 = vmatpush1.bf16.msra.mxu0 0
    %3610 = vmatprep.subr.bf16.mxu0 0
    %3611 = vmatpush1.bf16.msra.mxu0 0
    %3612 = vmatprep.subr.bf16.mxu0 0
    %3613 = vmatpush1.bf16.msra.mxu0 0
    %3614 = vmatprep.subr.bf16.mxu0 0
    %3615 = vmatpush1.bf16.msra.mxu0 0
    %3616 = vmatprep.mubr.bf16.mxu0 0
    %3617 = vmatmul.mubr.bf16.gmra.mrb[0].mxu0 %v3579
    %v3618 = vpop.f32.mrb[0].mxu0
    %v3619 = vadd.f32 0.0, %v3618
    %v3620 = vpop.f32.mrb[0].mxu0
    %v3621 = vpop.f32.mrb[0].mxu0
    %v3622 = vpop.f32.mrb[0].mxu0
    %3623 = vdwg.mxu0
    %3625 = vrot.lane.b32.xlu0 %v3391, 16
    %v3626 = vpop.permute.xlu0 %3625
    %3629 = vrot.lane.b32.xlu0 %v3505, 32
    %v3630 = vpop.permute.xlu0 %3629
    %3633 = vrot.lane.b32.xlu0 %v3619, 48
    %v3634 = vpop.permute.xlu0 %3633
    %v3636 = vsel %vm893, %v3276, %v3626
    %v3637 = vsel %vm628, %v3636, %v3630
    %v3638 = vsel %vm572, %v3637, %v3634
    %v3639 = vpack.c.bf16 %v3638, %v3638
    %v3641 = vlaneseq
    %v3642 = vshrl.u32 %v3641, 7
    %v3643 = vsub.s32 0, %v3642
    %v3644 = vrot.slane %v2999, %v3643
    %v3654 = vunpack.c.l.b16 %v2991
    %v3655 = vunpack.c.l.b16 %v2992
    %v3656 = vunpack.c.l.b16 %v2993
    %v3657 = vunpack.c.l.b16 %v2994
    %v3658 = vunpack.c.l.b16 %v2995
    %v3659 = vunpack.c.l.b16 %v2996
    %v3660 = vunpack.c.l.b16 %v2997
    %v3661 = vunpack.c.l.b16 %v2998
    %v3662 = vpack.c.b16 %v3655, %v3654
    %v3663 = vpack.c.b16 %v3657, %v3656
    %v3664 = vpack.c.b16 %v3659, %v3658
    %v3665 = vpack.c.b16 %v3661, %v3660
    %v3671 = vsel %vm2781, %v3639, 0
    %3673 = vmatprep.subr.bf16.mxu0 0
    %3674 = vmatpush1.bf16.msra.mxu0 %v3662
    %3675 = vmatprep.subr.bf16.mxu0 0
    %3676 = vmatpush1.bf16.msra.mxu0 %v3663
    %3677 = vmatprep.subr.bf16.mxu0 0
    %3678 = vmatpush1.bf16.msra.mxu0 %v3664
    %3679 = vmatprep.subr.bf16.mxu0 0
    %3680 = vmatpush1.bf16.msra.mxu0 %v3665
    %3681 = vmatprep.subr.bf16.mxu0 0
    %3682 = vmatpush1.bf16.msra.mxu0 0
    %3683 = vmatprep.subr.bf16.mxu0 0
    %3684 = vmatpush1.bf16.msra.mxu0 0
    %3685 = vmatprep.subr.bf16.mxu0 0
    %3686 = vmatpush1.bf16.msra.mxu0 0
    %3687 = vmatprep.subr.bf16.mxu0 0
    %3688 = vmatpush1.bf16.msra.mxu0 0
    %3689 = vmatprep.subr.bf16.mxu0 0
    %3690 = vmatpush1.bf16.msra.mxu0 0
    %3691 = vmatprep.subr.bf16.mxu0 0
    %3692 = vmatpush1.bf16.msra.mxu0 0
    %3693 = vmatprep.subr.bf16.mxu0 0
    %3694 = vmatpush1.bf16.msra.mxu0 0
    %3695 = vmatprep.subr.bf16.mxu0 0
    %3696 = vmatpush1.bf16.msra.mxu0 0
    %3697 = vmatprep.subr.bf16.mxu0 0
    %3698 = vmatpush1.bf16.msra.mxu0 0
    %3699 = vmatprep.subr.bf16.mxu0 0
    %3700 = vmatpush1.bf16.msra.mxu0 0
    %3701 = vmatprep.subr.bf16.mxu0 0
    %3702 = vmatpush1.bf16.msra.mxu0 0
    %3703 = vmatprep.subr.bf16.mxu0 0
    %3704 = vmatpush1.bf16.msra.mxu0 0
    %3705 = vmatprep.mubr.bf16.mxu0 0
    %3706 = vmatmul.mubr.bf16.gmra.mrb[0].mxu0 %v3671
    %v3707 = vpop.f32.mrb[0].mxu0
    %v3708 = vadd.f32 %v3644, %v3707
    %v3709 = vpop.f32.mrb[0].mxu0
    %v3710 = vpop.f32.mrb[0].mxu0
    %v3711 = vpop.f32.mrb[0].mxu0
    %3712 = vdwg.mxu0
    %v3713 = vadd.f32 %v2975, %v3708
    %v3714 = vsel %vm2781, %v3713, 0.0
    %3715 = vadd.xlane.f32.xlu0 %v3714
    %v3716 = vpop.xlane.xlu0 %3715
    %v3717 = vmul.f32 %v3716, %v3047
    %v3718 = vsub.f32 %v3713, %v3717
    %v3719 = vmul.f32 %v3718, %v3718
    %v3720 = vsel %vm2781, %v3719, 0.0
    %3721 = vadd.xlane.f32.xlu0 %v3720
    %v3722 = vpop.xlane.xlu0 %3721
    %v3723 = vmul.f32 %v3722, %v3047
    %v3724 = vadd.f32 %v3723, 1e-05
    %v3725 = vrsqrt.pop %v3724
    %v3726 = vmul.f32 %v3718, %v3725
    %v3728 = vlaneseq
    %v3729 = vshrl.u32 %v3728, 7
    %v3730 = vsub.s32 0, %v3729
    %v3731 = vrot.slane %v3000, %v3730
    %v3733 = vmul.f32 %v3726, %v3731
    %v3735 = vlaneseq
    %v3736 = vshrl.u32 %v3735, 7
    %v3737 = vsub.s32 0, %v3736
    %v3738 = vrot.slane %v3001, %v3737
    %v3740 = vadd.f32 %v3733, %v3738
    %v3741 = vpack.c.bf16 %v3740, %v3740
    %v3743 = vlaneseq
    %v3744 = vshrl.u32 %v3743, 7
    %v3745 = vsub.s32 0, %v3744
    %v3746 = vrot.slane %v3010, %v3745
    %v3747 = vlaneseq
    %v3748 = vshrl.u32 %v3747, 7
    %v3749 = vsub.s32 1, %v3748
    %v3750 = vrot.slane %v3010, %v3749
    %v3761 = vunpack.c.l.b16 %v3002
    %v3762 = vunpack.c.h.b16 %v3002
    %v3763 = vunpack.c.l.b16 %v3003
    %v3764 = vunpack.c.h.b16 %v3003
    %v3765 = vunpack.c.l.b16 %v3004
    %v3766 = vunpack.c.h.b16 %v3004
    %v3767 = vunpack.c.l.b16 %v3005
    %v3768 = vunpack.c.h.b16 %v3005
    %v3769 = vunpack.c.l.b16 %v3006
    %v3770 = vunpack.c.h.b16 %v3006
    %v3771 = vunpack.c.l.b16 %v3007
    %v3772 = vunpack.c.h.b16 %v3007
    %v3773 = vunpack.c.l.b16 %v3008
    %v3774 = vunpack.c.h.b16 %v3008
    %v3775 = vunpack.c.l.b16 %v3009
    %v3776 = vunpack.c.h.b16 %v3009
    %v3777 = vpack.c.b16 %v3763, %v3761
    %v3778 = vpack.c.b16 %v3764, %v3762
    %v3779 = vpack.c.b16 %v3767, %v3765
    %v3780 = vpack.c.b16 %v3768, %v3766
    %v3781 = vpack.c.b16 %v3771, %v3769
    %v3782 = vpack.c.b16 %v3772, %v3770
    %v3783 = vpack.c.b16 %v3775, %v3773
    %v3784 = vpack.c.b16 %v3776, %v3774
    %v3794 = vsel %vm2781, %v3741, 0
    %3796 = vmatprep.subr.bf16.mxu0 %v3778
    %3797 = vmatpush1.bf16.msra.mxu0 %v3777
    %3798 = vmatprep.subr.bf16.mxu0 %v3780
    %3799 = vmatpush1.bf16.msra.mxu0 %v3779
    %3800 = vmatprep.subr.bf16.mxu0 %v3782
    %3801 = vmatpush1.bf16.msra.mxu0 %v3781
    %3802 = vmatprep.subr.bf16.mxu0 %v3784
    %3803 = vmatpush1.bf16.msra.mxu0 %v3783
    %3804 = vmatprep.subr.bf16.mxu0 0
    %3805 = vmatpush1.bf16.msra.mxu0 0
    %3806 = vmatprep.subr.bf16.mxu0 0
    %3807 = vmatpush1.bf16.msra.mxu0 0
    %3808 = vmatprep.subr.bf16.mxu0 0
    %3809 = vmatpush1.bf16.msra.mxu0 0
    %3810 = vmatprep.subr.bf16.mxu0 0
    %3811 = vmatpush1.bf16.msra.mxu0 0
    %3812 = vmatprep.subr.bf16.mxu0 0
    %3813 = vmatpush1.bf16.msra.mxu0 0
    %3814 = vmatprep.subr.bf16.mxu0 0
    %3815 = vmatpush1.bf16.msra.mxu0 0
    %3816 = vmatprep.subr.bf16.mxu0 0
    %3817 = vmatpush1.bf16.msra.mxu0 0
    %3818 = vmatprep.subr.bf16.mxu0 0
    %3819 = vmatpush1.bf16.msra.mxu0 0
    %3820 = vmatprep.subr.bf16.mxu0 0
    %3821 = vmatpush1.bf16.msra.mxu0 0
    %3822 = vmatprep.subr.bf16.mxu0 0
    %3823 = vmatpush1.bf16.msra.mxu0 0
    %3824 = vmatprep.subr.bf16.mxu0 0
    %3825 = vmatpush1.bf16.msra.mxu0 0
    %3826 = vmatprep.subr.bf16.mxu0 0
    %3827 = vmatpush1.bf16.msra.mxu0 0
    %3828 = vmatprep.mubr.bf16.mxu0 0
    %3829 = vmatmul.mubr.bf16.gmra.mrb[0].mxu0 %v3794
    %v3830 = vpop.f32.mrb[0].mxu0
    %v3831 = vadd.f32 %v3746, %v3830
    %v3832 = vpop.f32.mrb[0].mxu0
    %v3833 = vadd.f32 %v3750, %v3832
    %v3834 = vpop.f32.mrb[0].mxu0
    %v3835 = vpop.f32.mrb[0].mxu0
    %3836 = vdwg.mxu0
    %v3837 = vmul.f32 %v3831, 0.70710677
    %v3838 = vmul.f32 %v3833, 0.70710677
    %v3839 = vand.u32 2147483647, %v3837
    %v3840 = vand.u32 2147483647, %v3838
    %v3841 = vmul.f32 %v3839, 0.3275911
    %v3842 = vmul.f32 %v3840, 0.3275911
    %v3843 = vadd.f32 %v3841, 1.0
    %v3844 = vadd.f32 %v3842, 1.0
    %v3845 = vrcp.pop %v3843
    %v3846 = vmul.f32 1.0, %v3845
    %v3847 = vrcp.pop %v3844
    %v3848 = vmul.f32 1.0, %v3847
    %v3849 = vmul.f32 %v3846, 1.0614054
    %v3850 = vmul.f32 %v3848, 1.0614054
    %v3851 = vadd.f32 %v3849, -1.4531521
    %v3852 = vadd.f32 %v3850, -1.4531521
    %v3853 = vmul.f32 %v3851, %v3846
    %v3854 = vmul.f32 %v3852, %v3848
    %v3855 = vadd.f32 %v3853, 1.4214138
    %v3856 = vadd.f32 %v3854, 1.4214138
    %v3857 = vmul.f32 %v3855, %v3846
    %v3858 = vmul.f32 %v3856, %v3848
    %v3859 = vadd.f32 %v3857, -0.28449672
    %v3860 = vadd.f32 %v3858, -0.28449672
    %v3861 = vmul.f32 %v3859, %v3846
    %v3862 = vmul.f32 %v3860, %v3848
    %v3863 = vadd.f32 %v3861, 0.2548296
    %v3864 = vadd.f32 %v3862, 0.2548296
    %v3865 = vmul.f32 %v3863, %v3846
    %v3866 = vmul.f32 %v3864, %v3848
    %v3867 = vsub.f32 0.0, %v3839
    %v3868 = vsub.f32 0.0, %v3840
    %v3869 = vmul.f32 %v3867, %v3839
    %v3870 = vmul.f32 %v3868, %v3840
    %v3871 = vmul.f32 %v3869, 1.442695
    %v3872 = vpow.pop %v3871
    %v3873 = vmul.f32 %v3870, 1.442695
    %v3874 = vpow.pop %v3873
    %v3875 = vmul.f32 %v3865, %v3872
    %v3876 = vmul.f32 %v3866, %v3874
    %v3877 = vsub.f32 1.0, %v3875
    %v3878 = vsub.f32 1.0, %v3876
    %vm3879 = vcmp.ge.f32.partialorder %v3837, 0.0
    %vm3880 = vcmp.ge.f32.partialorder %v3838, 0.0
    %v3881 = vsub.f32 0.0, %v3877
    %v3882 = vsub.f32 0.0, %v3878
    %v3883 = vsel %vm3879, %v3877, %v3881
    %v3884 = vsel %vm3880, %v3878, %v3882
    %v3885 = vmul.f32 %v3831, 0.5
    %v3886 = vmul.f32 %v3833, 0.5
    %v3887 = vadd.f32 %v3883, 1.0
    %v3888 = vadd.f32 %v3884, 1.0
    %v3889 = vmul.f32 %v3885, %v3887
    %v3890 = vmul.f32 %v3886, %v3888
    %v3891 = vpack.c.bf16 %v3889, %v3889
    %v3892 = vpack.c.bf16 %v3890, %v3890
    %v3894 = vlaneseq
    %v3895 = vshrl.u32 %v3894, 7
    %v3896 = vsub.s32 0, %v3895
    %v3897 = vrot.slane %v3043, %v3896
    %v3931 = vunpack.c.l.b16 %v3011
    %v3932 = vunpack.c.l.b16 %v3012
    %v3933 = vunpack.c.l.b16 %v3013
    %v3934 = vunpack.c.l.b16 %v3014
    %v3935 = vunpack.c.l.b16 %v3015
    %v3936 = vunpack.c.l.b16 %v3016
    %v3937 = vunpack.c.l.b16 %v3017
    %v3938 = vunpack.c.l.b16 %v3018
    %v3939 = vunpack.c.l.b16 %v3019
    %v3940 = vunpack.c.l.b16 %v3020
    %v3941 = vunpack.c.l.b16 %v3021
    %v3942 = vunpack.c.l.b16 %v3022
    %v3943 = vunpack.c.l.b16 %v3023
    %v3944 = vunpack.c.l.b16 %v3024
    %v3945 = vunpack.c.l.b16 %v3025
    %v3946 = vunpack.c.l.b16 %v3026
    %v3947 = vunpack.c.l.b16 %v3027
    %v3948 = vunpack.c.l.b16 %v3028
    %v3949 = vunpack.c.l.b16 %v3029
    %v3950 = vunpack.c.l.b16 %v3030
    %v3951 = vunpack.c.l.b16 %v3031
    %v3952 = vunpack.c.l.b16 %v3032
    %v3953 = vunpack.c.l.b16 %v3033
    %v3954 = vunpack.c.l.b16 %v3034
    %v3955 = vunpack.c.l.b16 %v3035
    %v3956 = vunpack.c.l.b16 %v3036
    %v3957 = vunpack.c.l.b16 %v3037
    %v3958 = vunpack.c.l.b16 %v3038
    %v3959 = vunpack.c.l.b16 %v3039
    %v3960 = vunpack.c.l.b16 %v3040
    %v3961 = vunpack.c.l.b16 %v3041
    %v3962 = vunpack.c.l.b16 %v3042
    %v3963 = vpack.c.b16 %v3932, %v3931
    %v3964 = vpack.c.b16 %v3934, %v3933
    %v3965 = vpack.c.b16 %v3936, %v3935
    %v3966 = vpack.c.b16 %v3938, %v3937
    %v3967 = vpack.c.b16 %v3940, %v3939
    %v3968 = vpack.c.b16 %v3942, %v3941
    %v3969 = vpack.c.b16 %v3944, %v3943
    %v3970 = vpack.c.b16 %v3946, %v3945
    %v3971 = vpack.c.b16 %v3948, %v3947
    %v3972 = vpack.c.b16 %v3950, %v3949
    %v3973 = vpack.c.b16 %v3952, %v3951
    %v3974 = vpack.c.b16 %v3954, %v3953
    %v3975 = vpack.c.b16 %v3956, %v3955
    %v3976 = vpack.c.b16 %v3958, %v3957
    %v3977 = vpack.c.b16 %v3960, %v3959
    %v3978 = vpack.c.b16 %v3962, %v3961
    %3995 = vmatprep.subr.bf16.mxu0 0
    %3996 = vmatpush1.bf16.msra.mxu0 %v3963
    %3997 = vmatprep.subr.bf16.mxu0 0
    %3998 = vmatpush1.bf16.msra.mxu0 %v3964
    %3999 = vmatprep.subr.bf16.mxu0 0
    %4000 = vmatpush1.bf16.msra.mxu0 %v3965
    %4001 = vmatprep.subr.bf16.mxu0 0
    %4002 = vmatpush1.bf16.msra.mxu0 %v3966
    %4003 = vmatprep.subr.bf16.mxu0 0
    %4004 = vmatpush1.bf16.msra.mxu0 %v3967
    %4005 = vmatprep.subr.bf16.mxu0 0
    %4006 = vmatpush1.bf16.msra.mxu0 %v3968
    %4007 = vmatprep.subr.bf16.mxu0 0
    %4008 = vmatpush1.bf16.msra.mxu0 %v3969
    %4009 = vmatprep.subr.bf16.mxu0 0
    %4010 = vmatpush1.bf16.msra.mxu0 %v3970
    %4011 = vmatprep.subr.bf16.mxu0 0
    %4012 = vmatpush1.bf16.msra.mxu0 %v3971
    %4013 = vmatprep.subr.bf16.mxu0 0
    %4014 = vmatpush1.bf16.msra.mxu0 %v3972
    %4015 = vmatprep.subr.bf16.mxu0 0
    %4016 = vmatpush1.bf16.msra.mxu0 %v3973
    %4017 = vmatprep.subr.bf16.mxu0 0
    %4018 = vmatpush1.bf16.msra.mxu0 %v3974
    %4019 = vmatprep.subr.bf16.mxu0 0
    %4020 = vmatpush1.bf16.msra.mxu0 %v3975
    %4021 = vmatprep.subr.bf16.mxu0 0
    %4022 = vmatpush1.bf16.msra.mxu0 %v3976
    %4023 = vmatprep.subr.bf16.mxu0 0
    %4024 = vmatpush1.bf16.msra.mxu0 %v3977
    %4025 = vmatprep.subr.bf16.mxu0 0
    %4026 = vmatpush1.bf16.msra.mxu0 %v3978
    %4027 = vmatprep.mubr.bf16.mxu0 %v3892
    %4028 = vmatmul.mubr.bf16.gmra.mrb[0].mxu0 %v3891
    %v4029 = vpop.f32.mrb[0].mxu0
    %v4030 = vadd.f32 %v3897, %v4029
    %v4031 = vpop.f32.mrb[0].mxu0
    %v4032 = vpop.f32.mrb[0].mxu0
    %v4033 = vpop.f32.mrb[0].mxu0
    %4034 = vdwg.mxu0
    %v4035 = vadd.f32 %v3713, %v4030
    %v4036 = vld [vmem:[%s95] sm:$0x1]
    %v4037 = vld [vmem:[%s97] sm:$0x1]
    %v4038 = vld [vmem:[%s99] sm:$0xff]
    %v4039 = vld [vmem:[%s99 + $0x8] sm:$0xff]
    %v4040 = vld [vmem:[%s99 + $0x10] sm:$0xff]
    %v4041 = vld [vmem:[%s99 + $0x18] sm:$0xff]
    %v4042 = vld [vmem:[%s99 + $0x20] sm:$0xff]
    %v4043 = vld [vmem:[%s99 + $0x28] sm:$0xff]
    %v4044 = vld [vmem:[%s99 + $0x30] sm:$0xff]
    %v4045 = vld [vmem:[%s99 + $0x38] sm:$0xff]
    %v4046 = vld [vmem:[%s101] sm:$0x3]
    %v4047 = vld [vmem:[%s105] sm:$0xf]
    %v4048 = vld [vmem:[%s105 + $0x4] sm:$0xf]
    %v4049 = vld [vmem:[%s105 + $0x8] sm:$0xf]
    %v4050 = vld [vmem:[%s105 + $0xc] sm:$0xf]
    %v4051 = vld [vmem:[%s105 + $0x10] sm:$0xf]
    %v4052 = vld [vmem:[%s105 + $0x14] sm:$0xf]
    %v4053 = vld [vmem:[%s105 + $0x18] sm:$0xf]
    %v4054 = vld [vmem:[%s105 + $0x1c] sm:$0xf]
    %v4055 = vld [vmem:[%s107] sm:$0x1]
    %v4056 = vld [vmem:[%s109] sm:$0x1]
    %v4057 = vld [vmem:[%s111] sm:$0x1]
    %v4058 = vld [vmem:[%s113] sm:$0xff]
    %v4059 = vld [vmem:[%s113 + $0x8] sm:$0xff]
    %v4060 = vld [vmem:[%s113 + $0x10] sm:$0xff]
    %v4061 = vld [vmem:[%s113 + $0x18] sm:$0xff]
    %v4062 = vld [vmem:[%s113 + $0x20] sm:$0xff]
    %v4063 = vld [vmem:[%s113 + $0x28] sm:$0xff]
    %v4064 = vld [vmem:[%s113 + $0x30] sm:$0xff]
    %v4065 = vld [vmem:[%s113 + $0x38] sm:$0xff]
    %v4066 = vld [vmem:[%s115] sm:$0x3]
    %v4067 = vld [vmem:[%s117] sm:$0xf]
    %v4068 = vld [vmem:[%s117 + $0x4] sm:$0xf]
    %v4069 = vld [vmem:[%s117 + $0x8] sm:$0xf]
    %v4070 = vld [vmem:[%s117 + $0xc] sm:$0xf]
    %v4071 = vld [vmem:[%s117 + $0x10] sm:$0xf]
    %v4072 = vld [vmem:[%s117 + $0x14] sm:$0xf]
    %v4073 = vld [vmem:[%s117 + $0x18] sm:$0xf]
    %v4074 = vld [vmem:[%s117 + $0x1c] sm:$0xf]
    %v4075 = vld [vmem:[%s117 + $0x20] sm:$0xf]
    %v4076 = vld [vmem:[%s117 + $0x24] sm:$0xf]
    %v4077 = vld [vmem:[%s117 + $0x28] sm:$0xf]
    %v4078 = vld [vmem:[%s117 + $0x2c] sm:$0xf]
    %v4079 = vld [vmem:[%s117 + $0x30] sm:$0xf]
    %v4080 = vld [vmem:[%s117 + $0x34] sm:$0xf]
    %v4081 = vld [vmem:[%s117 + $0x38] sm:$0xf]
    %v4082 = vld [vmem:[%s117 + $0x3c] sm:$0xf]
    %v4083 = vld [vmem:[%s117 + $0x40] sm:$0xf]
    %v4084 = vld [vmem:[%s117 + $0x44] sm:$0xf]
    %v4085 = vld [vmem:[%s117 + $0x48] sm:$0xf]
    %v4086 = vld [vmem:[%s117 + $0x4c] sm:$0xf]
    %v4087 = vld [vmem:[%s117 + $0x50] sm:$0xf]
    %v4088 = vld [vmem:[%s117 + $0x54] sm:$0xf]
    %v4089 = vld [vmem:[%s117 + $0x58] sm:$0xf]
    %v4090 = vld [vmem:[%s117 + $0x5c] sm:$0xf]
    %v4091 = vld [vmem:[%s117 + $0x60] sm:$0xf]
    %v4092 = vld [vmem:[%s117 + $0x64] sm:$0xf]
    %v4093 = vld [vmem:[%s117 + $0x68] sm:$0xf]
    %v4094 = vld [vmem:[%s117 + $0x6c] sm:$0xf]
    %v4095 = vld [vmem:[%s117 + $0x70] sm:$0xf]
    %v4096 = vld [vmem:[%s117 + $0x74] sm:$0xf]
    %v4097 = vld [vmem:[%s117 + $0x78] sm:$0xf]
    %v4098 = vld [vmem:[%s117 + $0x7c] sm:$0xf]
    %v4099 = vld [vmem:[%s119] sm:$0x1]
    %v4100 = vsel %vm2781, %v4035, 0.0
    %4101 = vadd.xlane.f32.xlu0 %v4100
    %v4102 = vpop.xlane.xlu0 %4101
    %v4103 = vmul.f32 %v4102, %v3047
    %v4104 = vsub.f32 %v4035, %v4103
    %v4105 = vmul.f32 %v4104, %v4104
    %v4106 = vsel %vm2781, %v4105, 0.0
    %4107 = vadd.xlane.f32.xlu0 %v4106
    %v4108 = vpop.xlane.xlu0 %4107
    %v4109 = vmul.f32 %v4108, %v3047
    %v4110 = vadd.f32 %v4109, 1e-05
    %v4111 = vrsqrt.pop %v4110
    %v4112 = vmul.f32 %v4104, %v4111
    %v4114 = vlaneseq
    %v4115 = vshrl.u32 %v4114, 7
    %v4116 = vsub.s32 0, %v4115
    %v4117 = vrot.slane %v4036, %v4116
    %v4119 = vmul.f32 %v4112, %v4117
    %v4121 = vlaneseq
    %v4122 = vshrl.u32 %v4121, 7
    %v4123 = vsub.s32 0, %v4122
    %v4124 = vrot.slane %v4037, %v4123
    %v4126 = vadd.f32 %v4119, %v4124
    %v4127 = vpack.c.bf16 %v4126, %v4126
    %v4129 = vlaneseq
    %v4130 = vshrl.u32 %v4129, 7
    %v4131 = vsub.s32 0, %v4130
    %v4132 = vrot.slane %v4046, %v4131
    %v4133 = vlaneseq
    %v4134 = vshrl.u32 %v4133, 7
    %v4135 = vsub.s32 1, %v4134
    %v4136 = vrot.slane %v4046, %v4135
    %v4147 = vunpack.c.l.b16 %v4038
    %v4148 = vunpack.c.h.b16 %v4038
    %v4149 = vunpack.c.l.b16 %v4039
    %v4150 = vunpack.c.h.b16 %v4039
    %v4151 = vunpack.c.l.b16 %v4040
    %v4152 = vunpack.c.h.b16 %v4040
    %v4153 = vunpack.c.l.b16 %v4041
    %v4154 = vunpack.c.h.b16 %v4041
    %v4155 = vunpack.c.l.b16 %v4042
    %v4156 = vunpack.c.h.b16 %v4042
    %v4157 = vunpack.c.l.b16 %v4043
    %v4158 = vunpack.c.h.b16 %v4043
    %v4159 = vunpack.c.l.b16 %v4044
    %v4160 = vunpack.c.h.b16 %v4044
    %v4161 = vunpack.c.l.b16 %v4045
    %v4162 = vunpack.c.h.b16 %v4045
    %v4163 = vpack.c.b16 %v4149, %v4147
    %v4164 = vpack.c.b16 %v4150, %v4148
    %v4165 = vpack.c.b16 %v4153, %v4151
    %v4166 = vpack.c.b16 %v4154, %v4152
    %v4167 = vpack.c.b16 %v4157, %v4155
    %v4168 = vpack.c.b16 %v4158, %v4156
    %v4169 = vpack.c.b16 %v4161, %v4159
    %v4170 = vpack.c.b16 %v4162, %v4160
    %v4180 = vsel %vm2781, %v4127, 0
    %4182 = vmatprep.subr.bf16.mxu0 %v4164
    %4183 = vmatpush1.bf16.msra.mxu0 %v4163
    %4184 = vmatprep.subr.bf16.mxu0 %v4166
    %4185 = vmatpush1.bf16.msra.mxu0 %v4165
    %4186 = vmatprep.subr.bf16.mxu0 %v4168
    %4187 = vmatpush1.bf16.msra.mxu0 %v4167
    %4188 = vmatprep.subr.bf16.mxu0 %v4170
    %4189 = vmatpush1.bf16.msra.mxu0 %v4169
    %4190 = vmatprep.subr.bf16.mxu0 0
    %4191 = vmatpush1.bf16.msra.mxu0 0
    %4192 = vmatprep.subr.bf16.mxu0 0
    %4193 = vmatpush1.bf16.msra.mxu0 0
    %4194 = vmatprep.subr.bf16.mxu0 0
    %4195 = vmatpush1.bf16.msra.mxu0 0
    %4196 = vmatprep.subr.bf16.mxu0 0
    %4197 = vmatpush1.bf16.msra.mxu0 0
    %4198 = vmatprep.subr.bf16.mxu0 0
    %4199 = vmatpush1.bf16.msra.mxu0 0
    %4200 = vmatprep.subr.bf16.mxu0 0
    %4201 = vmatpush1.bf16.msra.mxu0 0
    %4202 = vmatprep.subr.bf16.mxu0 0
    %4203 = vmatpush1.bf16.msra.mxu0 0
    %4204 = vmatprep.subr.bf16.mxu0 0
    %4205 = vmatpush1.bf16.msra.mxu0 0
    %4206 = vmatprep.subr.bf16.mxu0 0
    %4207 = vmatpush1.bf16.msra.mxu0 0
    %4208 = vmatprep.subr.bf16.mxu0 0
    %4209 = vmatpush1.bf16.msra.mxu0 0
    %4210 = vmatprep.subr.bf16.mxu0 0
    %4211 = vmatpush1.bf16.msra.mxu0 0
    %4212 = vmatprep.subr.bf16.mxu0 0
    %4213 = vmatpush1.bf16.msra.mxu0 0
    %4214 = vmatprep.mubr.bf16.mxu0 0
    %4215 = vmatmul.mubr.bf16.gmra.mrb[0].mxu0 %v4180
    %v4216 = vpop.f32.mrb[0].mxu0
    %v4217 = vadd.f32 %v4132, %v4216
    %v4218 = vpop.f32.mrb[0].mxu0
    %v4219 = vadd.f32 %v4136, %v4218
    %v4220 = vpop.f32.mrb[0].mxu0
    %v4221 = vpop.f32.mrb[0].mxu0
    %4222 = vdwg.mxu0
    %v4223 = vpack.c.bf16 %v4217, %v4217
    %4225 = vrot.lane.b32.xlu0 %v4223, 64
    %v4226 = vpop.permute.xlu0 %4225
    %v4228 = vsel %vm893, %v4223, 0
    %v4231 = vsel %vm893, %v4226, 0
    %4233 = vmatprep.subr.bf16.mxu0 0
    %4234 = vmatpush1.bf16.xpose.msra.mxu0 %v4231
    %4235 = vmatprep.subr.bf16.mxu0 0
    %4236 = vmatpush1.bf16.xpose.msra.mxu0 0
    %4237 = vmatprep.subr.bf16.mxu0 0
    %4238 = vmatpush1.bf16.xpose.msra.mxu0 0
    %4239 = vmatprep.subr.bf16.mxu0 0
    %4240 = vmatpush1.bf16.xpose.msra.mxu0 0
    %4241 = vmatprep.subr.bf16.mxu0 0
    %4242 = vmatpush1.bf16.xpose.msra.mxu0 0
    %4243 = vmatprep.subr.bf16.mxu0 0
    %4244 = vmatpush1.bf16.xpose.msra.mxu0 0
    %4245 = vmatprep.subr.bf16.mxu0 0
    %4246 = vmatpush1.bf16.xpose.msra.mxu0 0
    %4247 = vmatprep.subr.bf16.mxu0 0
    %4248 = vmatpush1.bf16.xpose.msra.mxu0 0
    %4249 = vmatprep.subr.bf16.mxu0 0
    %4250 = vmatpush1.bf16.xpose.msra.mxu0 0
    %4251 = vmatprep.subr.bf16.mxu0 0
    %4252 = vmatpush1.bf16.xpose.msra.mxu0 0
    %4253 = vmatprep.subr.bf16.mxu0 0
    %4254 = vmatpush1.bf16.xpose.msra.mxu0 0
    %4255 = vmatprep.subr.bf16.mxu0 0
    %4256 = vmatpush1.bf16.xpose.msra.mxu0 0
    %4257 = vmatprep.subr.bf16.mxu0 0
    %4258 = vmatpush1.bf16.xpose.msra.mxu0 0
    %4259 = vmatprep.subr.bf16.mxu0 0
    %4260 = vmatpush1.bf16.xpose.msra.mxu0 0
    %4261 = vmatprep.subr.bf16.mxu0 0
    %4262 = vmatpush1.bf16.xpose.msra.mxu0 0
    %4263 = vmatprep.subr.bf16.mxu0 0
    %4264 = vmatpush1.bf16.xpose.msra.mxu0 0
    %4265 = vmatprep.mubr.bf16.mxu0 0
    %4266 = vmatmul.mubr.bf16.gmra.mrb[0].mxu0 %v4228
    %v4267 = vpop.f32.mrb[0].mxu0
    %v4268 = vadd.f32 0.0, %v4267
    %v4269 = vpop.f32.mrb[0].mxu0
    %v4270 = vpop.f32.mrb[0].mxu0
    %v4271 = vpop.f32.mrb[0].mxu0
    %4272 = vdwg.mxu0
    %v4273 = vmul.f32 %v4268, 0.25
    %v4274 = vld [vmem:[%s103] sm:$0xff]
    %v4275 = vadd.f32 %v4273, %v4274
    %v4276 = vsel %vm3221, %v4275, -inf
    %4277 = vmax.xlane.f32.xlu0 %v4276
    %v4278 = vpop.xlane.xlu0 %4277
    %v4279 = vsub.f32 %v4275, %v4278
    %v4280 = vmul.f32 %v4279, 1.442695
    %v4281 = vpow.pop %v4280
    %v4282 = vsel %vm3221, %v4281, 0.0
    %4283 = vadd.xlane.f32.xlu0 %v4282
    %v4284 = vpop.xlane.xlu0 %4283
    %v4285 = vrcp.pop %v4284
    %v4286 = vmul.f32 %v4281, %v4285
    %v4287 = vpack.c.bf16 %v4286, %v4286
    %v4288 = vpack.c.bf16 %v4219, %v4219
    %v4290 = vsel %vm3221, %v4287, 0
    %v4293 = vsel %vm2857, %v4288, 0
    %4295 = vmatprep.subr.bf16.mxu0 0
    %4296 = vmatpush1.bf16.msra.mxu0 %v4293
    %4297 = vmatprep.subr.bf16.mxu0 0
    %4298 = vmatpush1.bf16.msra.mxu0 0
    %4299 = vmatprep.subr.bf16.mxu0 0
    %4300 = vmatpush1.bf16.msra.mxu0 0
    %4301 = vmatprep.subr.bf16.mxu0 0
    %4302 = vmatpush1.bf16.msra.mxu0 0
    %4303 = vmatprep.subr.bf16.mxu0 0
    %4304 = vmatpush1.bf16.msra.mxu0 0
    %4305 = vmatprep.subr.bf16.mxu0 0
    %4306 = vmatpush1.bf16.msra.mxu0 0
    %4307 = vmatprep.subr.bf16.mxu0 0
    %4308 = vmatpush1.bf16.msra.mxu0 0
    %4309 = vmatprep.subr.bf16.mxu0 0
    %4310 = vmatpush1.bf16.msra.mxu0 0
    %4311 = vmatprep.subr.bf16.mxu0 0
    %4312 = vmatpush1.bf16.msra.mxu0 0
    %4313 = vmatprep.subr.bf16.mxu0 0
    %4314 = vmatpush1.bf16.msra.mxu0 0
    %4315 = vmatprep.subr.bf16.mxu0 0
    %4316 = vmatpush1.bf16.msra.mxu0 0
    %4317 = vmatprep.subr.bf16.mxu0 0
    %4318 = vmatpush1.bf16.msra.mxu0 0
    %4319 = vmatprep.subr.bf16.mxu0 0
    %4320 = vmatpush1.bf16.msra.mxu0 0
    %4321 = vmatprep.subr.bf16.mxu0 0
    %4322 = vmatpush1.bf16.msra.mxu0 0
    %4323 = vmatprep.subr.bf16.mxu0 0
    %4324 = vmatpush1.bf16.msra.mxu0 0
    %4325 = vmatprep.subr.bf16.mxu0 0
    %4326 = vmatpush1.bf16.msra.mxu0 0
    %4327 = vmatprep.mubr.bf16.mxu0 0
    %4328 = vmatmul.mubr.bf16.gmra.mrb[0].mxu0 %v4290
    %v4329 = vpop.f32.mrb[0].mxu0
    %v4330 = vadd.f32 0.0, %v4329
    %v4331 = vpop.f32.mrb[0].mxu0
    %v4332 = vpop.f32.mrb[0].mxu0
    %v4333 = vpop.f32.mrb[0].mxu0
    %4334 = vdwg.mxu0
    %4335 = vrot.lane.b32.xlu0 %v4223, 112
    %v4336 = vpop.permute.xlu0 %4335
    %4337 = vrot.lane.b32.xlu0 %v4223, 48
    %v4338 = vpop.permute.xlu0 %4337
    %v4340 = vsel %vm893, %v4336, 0
    %v4343 = vsel %vm893, %v4338, 0
    %4345 = vmatprep.subr.bf16.mxu0 0
    %4346 = vmatpush1.bf16.xpose.msra.mxu0 %v4343
    %4347 = vmatprep.subr.bf16.mxu0 0
    %4348 = vmatpush1.bf16.xpose.msra.mxu0 0
    %4349 = vmatprep.subr.bf16.mxu0 0
    %4350 = vmatpush1.bf16.xpose.msra.mxu0 0
    %4351 = vmatprep.subr.bf16.mxu0 0
    %4352 = vmatpush1.bf16.xpose.msra.mxu0 0
    %4353 = vmatprep.subr.bf16.mxu0 0
    %4354 = vmatpush1.bf16.xpose.msra.mxu0 0
    %4355 = vmatprep.subr.bf16.mxu0 0
    %4356 = vmatpush1.bf16.xpose.msra.mxu0 0
    %4357 = vmatprep.subr.bf16.mxu0 0
    %4358 = vmatpush1.bf16.xpose.msra.mxu0 0
    %4359 = vmatprep.subr.bf16.mxu0 0
    %4360 = vmatpush1.bf16.xpose.msra.mxu0 0
    %4361 = vmatprep.subr.bf16.mxu0 0
    %4362 = vmatpush1.bf16.xpose.msra.mxu0 0
    %4363 = vmatprep.subr.bf16.mxu0 0
    %4364 = vmatpush1.bf16.xpose.msra.mxu0 0
    %4365 = vmatprep.subr.bf16.mxu0 0
    %4366 = vmatpush1.bf16.xpose.msra.mxu0 0
    %4367 = vmatprep.subr.bf16.mxu0 0
    %4368 = vmatpush1.bf16.xpose.msra.mxu0 0
    %4369 = vmatprep.subr.bf16.mxu0 0
    %4370 = vmatpush1.bf16.xpose.msra.mxu0 0
    %4371 = vmatprep.subr.bf16.mxu0 0
    %4372 = vmatpush1.bf16.xpose.msra.mxu0 0
    %4373 = vmatprep.subr.bf16.mxu0 0
    %4374 = vmatpush1.bf16.xpose.msra.mxu0 0
    %4375 = vmatprep.subr.bf16.mxu0 0
    %4376 = vmatpush1.bf16.xpose.msra.mxu0 0
    %4377 = vmatprep.mubr.bf16.mxu0 0
    %4378 = vmatmul.mubr.bf16.gmra.mrb[0].mxu0 %v4340
    %v4379 = vpop.f32.mrb[0].mxu0
    %v4380 = vadd.f32 0.0, %v4379
    %v4381 = vpop.f32.mrb[0].mxu0
    %v4382 = vpop.f32.mrb[0].mxu0
    %v4383 = vpop.f32.mrb[0].mxu0
    %4384 = vdwg.mxu0
    %v4385 = vmul.f32 %v4380, 0.25
    %s4386 = scalar_lea.vmem %s103, 8
    %v4387 = vld [vmem:[%s4386] sm:$0xff]
    %v4388 = vadd.f32 %v4385, %v4387
    %v4389 = vsel %vm3221, %v4388, -inf
    %4390 = vmax.xlane.f32.xlu0 %v4389
    %v4391 = vpop.xlane.xlu0 %4390
    %v4392 = vsub.f32 %v4388, %v4391
    %v4393 = vmul.f32 %v4392, 1.442695
    %v4394 = vpow.pop %v4393
    %v4395 = vsel %vm3221, %v4394, 0.0
    %4396 = vadd.xlane.f32.xlu0 %v4395
    %v4397 = vpop.xlane.xlu0 %4396
    %v4398 = vrcp.pop %v4397
    %v4399 = vmul.f32 %v4394, %v4398
    %v4400 = vpack.c.bf16 %v4399, %v4399
    %4402 = vrot.lane.b32.xlu0 %v4288, 112
    %v4403 = vpop.permute.xlu0 %4402
    %v4405 = vsel %vm3221, %v4400, 0
    %v4408 = vsel %vm2857, %v4403, 0
    %4410 = vmatprep.subr.bf16.mxu0 0
    %4411 = vmatpush1.bf16.msra.mxu0 %v4408
    %4412 = vmatprep.subr.bf16.mxu0 0
    %4413 = vmatpush1.bf16.msra.mxu0 0
    %4414 = vmatprep.subr.bf16.mxu0 0
    %4415 = vmatpush1.bf16.msra.mxu0 0
    %4416 = vmatprep.subr.bf16.mxu0 0
    %4417 = vmatpush1.bf16.msra.mxu0 0
    %4418 = vmatprep.subr.bf16.mxu0 0
    %4419 = vmatpush1.bf16.msra.mxu0 0
    %4420 = vmatprep.subr.bf16.mxu0 0
    %4421 = vmatpush1.bf16.msra.mxu0 0
    %4422 = vmatprep.subr.bf16.mxu0 0
    %4423 = vmatpush1.bf16.msra.mxu0 0
    %4424 = vmatprep.subr.bf16.mxu0 0
    %4425 = vmatpush1.bf16.msra.mxu0 0
    %4426 = vmatprep.subr.bf16.mxu0 0
    %4427 = vmatpush1.bf16.msra.mxu0 0
    %4428 = vmatprep.subr.bf16.mxu0 0
    %4429 = vmatpush1.bf16.msra.mxu0 0
    %4430 = vmatprep.subr.bf16.mxu0 0
    %4431 = vmatpush1.bf16.msra.mxu0 0
    %4432 = vmatprep.subr.bf16.mxu0 0
    %4433 = vmatpush1.bf16.msra.mxu0 0
    %4434 = vmatprep.subr.bf16.mxu0 0
    %4435 = vmatpush1.bf16.msra.mxu0 0
    %4436 = vmatprep.subr.bf16.mxu0 0
    %4437 = vmatpush1.bf16.msra.mxu0 0
    %4438 = vmatprep.subr.bf16.mxu0 0
    %4439 = vmatpush1.bf16.msra.mxu0 0
    %4440 = vmatprep.subr.bf16.mxu0 0
    %4441 = vmatpush1.bf16.msra.mxu0 0
    %4442 = vmatprep.mubr.bf16.mxu0 0
    %4443 = vmatmul.mubr.bf16.gmra.mrb[0].mxu0 %v4405
    %v4444 = vpop.f32.mrb[0].mxu0
    %v4445 = vadd.f32 0.0, %v4444
    %v4446 = vpop.f32.mrb[0].mxu0
    %v4447 = vpop.f32.mrb[0].mxu0
    %v4448 = vpop.f32.mrb[0].mxu0
    %4449 = vdwg.mxu0
    %4450 = vrot.lane.b32.xlu0 %v4223, 96
    %v4451 = vpop.permute.xlu0 %4450
    %4452 = vrot.lane.b32.xlu0 %v4223, 32
    %v4453 = vpop.permute.xlu0 %4452
    %v4455 = vsel %vm893, %v4451, 0
    %v4458 = vsel %vm893, %v4453, 0
    %4460 = vmatprep.subr.bf16.mxu0 0
    %4461 = vmatpush1.bf16.xpose.msra.mxu0 %v4458
    %4462 = vmatprep.subr.bf16.mxu0 0
    %4463 = vmatpush1.bf16.xpose.msra.mxu0 0
    %4464 = vmatprep.subr.bf16.mxu0 0
    %4465 = vmatpush1.bf16.xpose.msra.mxu0 0
    %4466 = vmatprep.subr.bf16.mxu0 0
    %4467 = vmatpush1.bf16.xpose.msra.mxu0 0
    %4468 = vmatprep.subr.bf16.mxu0 0
    %4469 = vmatpush1.bf16.xpose.msra.mxu0 0
    %4470 = vmatprep.subr.bf16.mxu0 0
    %4471 = vmatpush1.bf16.xpose.msra.mxu0 0
    %4472 = vmatprep.subr.bf16.mxu0 0
    %4473 = vmatpush1.bf16.xpose.msra.mxu0 0
    %4474 = vmatprep.subr.bf16.mxu0 0
    %4475 = vmatpush1.bf16.xpose.msra.mxu0 0
    %4476 = vmatprep.subr.bf16.mxu0 0
    %4477 = vmatpush1.bf16.xpose.msra.mxu0 0
    %4478 = vmatprep.subr.bf16.mxu0 0
    %4479 = vmatpush1.bf16.xpose.msra.mxu0 0
    %4480 = vmatprep.subr.bf16.mxu0 0
    %4481 = vmatpush1.bf16.xpose.msra.mxu0 0
    %4482 = vmatprep.subr.bf16.mxu0 0
    %4483 = vmatpush1.bf16.xpose.msra.mxu0 0
    %4484 = vmatprep.subr.bf16.mxu0 0
    %4485 = vmatpush1.bf16.xpose.msra.mxu0 0
    %4486 = vmatprep.subr.bf16.mxu0 0
    %4487 = vmatpush1.bf16.xpose.msra.mxu0 0
    %4488 = vmatprep.subr.bf16.mxu0 0
    %4489 = vmatpush1.bf16.xpose.msra.mxu0 0
    %4490 = vmatprep.subr.bf16.mxu0 0
    %4491 = vmatpush1.bf16.xpose.msra.mxu0 0
    %4492 = vmatprep.mubr.bf16.mxu0 0
    %4493 = vmatmul.mubr.bf16.gmra.mrb[0].mxu0 %v4455
    %v4494 = vpop.f32.mrb[0].mxu0
    %v4495 = vadd.f32 0.0, %v4494
    %v4496 = vpop.f32.mrb[0].mxu0
    %v4497 = vpop.f32.mrb[0].mxu0
    %v4498 = vpop.f32.mrb[0].mxu0
    %4499 = vdwg.mxu0
    %v4500 = vmul.f32 %v4495, 0.25
    %s4501 = scalar_lea.vmem %s103, 16
    %v4502 = vld [vmem:[%s4501] sm:$0xff]
    %v4503 = vadd.f32 %v4500, %v4502
    %v4504 = vsel %vm3221, %v4503, -inf
    %4505 = vmax.xlane.f32.xlu0 %v4504
    %v4506 = vpop.xlane.xlu0 %4505
    %v4507 = vsub.f32 %v4503, %v4506
    %v4508 = vmul.f32 %v4507, 1.442695
    %v4509 = vpow.pop %v4508
    %v4510 = vsel %vm3221, %v4509, 0.0
    %4511 = vadd.xlane.f32.xlu0 %v4510
    %v4512 = vpop.xlane.xlu0 %4511
    %v4513 = vrcp.pop %v4512
    %v4514 = vmul.f32 %v4509, %v4513
    %v4515 = vpack.c.bf16 %v4514, %v4514
    %4516 = vrot.lane.b32.xlu0 %v4288, 96
    %v4517 = vpop.permute.xlu0 %4516
    %v4519 = vsel %vm3221, %v4515, 0
    %v4522 = vsel %vm2857, %v4517, 0
    %4524 = vmatprep.subr.bf16.mxu0 0
    %4525 = vmatpush1.bf16.msra.mxu0 %v4522
    %4526 = vmatprep.subr.bf16.mxu0 0
    %4527 = vmatpush1.bf16.msra.mxu0 0
    %4528 = vmatprep.subr.bf16.mxu0 0
    %4529 = vmatpush1.bf16.msra.mxu0 0
    %4530 = vmatprep.subr.bf16.mxu0 0
    %4531 = vmatpush1.bf16.msra.mxu0 0
    %4532 = vmatprep.subr.bf16.mxu0 0
    %4533 = vmatpush1.bf16.msra.mxu0 0
    %4534 = vmatprep.subr.bf16.mxu0 0
    %4535 = vmatpush1.bf16.msra.mxu0 0
    %4536 = vmatprep.subr.bf16.mxu0 0
    %4537 = vmatpush1.bf16.msra.mxu0 0
    %4538 = vmatprep.subr.bf16.mxu0 0
    %4539 = vmatpush1.bf16.msra.mxu0 0
    %4540 = vmatprep.subr.bf16.mxu0 0
    %4541 = vmatpush1.bf16.msra.mxu0 0
    %4542 = vmatprep.subr.bf16.mxu0 0
    %4543 = vmatpush1.bf16.msra.mxu0 0
    %4544 = vmatprep.subr.bf16.mxu0 0
    %4545 = vmatpush1.bf16.msra.mxu0 0
    %4546 = vmatprep.subr.bf16.mxu0 0
    %4547 = vmatpush1.bf16.msra.mxu0 0
    %4548 = vmatprep.subr.bf16.mxu0 0
    %4549 = vmatpush1.bf16.msra.mxu0 0
    %4550 = vmatprep.subr.bf16.mxu0 0
    %4551 = vmatpush1.bf16.msra.mxu0 0
    %4552 = vmatprep.subr.bf16.mxu0 0
    %4553 = vmatpush1.bf16.msra.mxu0 0
    %4554 = vmatprep.subr.bf16.mxu0 0
    %4555 = vmatpush1.bf16.msra.mxu0 0
    %4556 = vmatprep.mubr.bf16.mxu0 0
    %4557 = vmatmul.mubr.bf16.gmra.mrb[0].mxu0 %v4519
    %v4558 = vpop.f32.mrb[0].mxu0
    %v4559 = vadd.f32 0.0, %v4558
    %v4560 = vpop.f32.mrb[0].mxu0
    %v4561 = vpop.f32.mrb[0].mxu0
    %v4562 = vpop.f32.mrb[0].mxu0
    %4563 = vdwg.mxu0
    %4564 = vrot.lane.b32.xlu0 %v4223, 80
    %v4565 = vpop.permute.xlu0 %4564
    %4566 = vrot.lane.b32.xlu0 %v4223, 16
    %v4567 = vpop.permute.xlu0 %4566
    %v4569 = vsel %vm893, %v4565, 0
    %v4572 = vsel %vm893, %v4567, 0
    %4574 = vmatprep.subr.bf16.mxu0 0
    %4575 = vmatpush1.bf16.xpose.msra.mxu0 %v4572
    %4576 = vmatprep.subr.bf16.mxu0 0
    %4577 = vmatpush1.bf16.xpose.msra.mxu0 0
    %4578 = vmatprep.subr.bf16.mxu0 0
    %4579 = vmatpush1.bf16.xpose.msra.mxu0 0
    %4580 = vmatprep.subr.bf16.mxu0 0
    %4581 = vmatpush1.bf16.xpose.msra.mxu0 0
    %4582 = vmatprep.subr.bf16.mxu0 0
    %4583 = vmatpush1.bf16.xpose.msra.mxu0 0
    %4584 = vmatprep.subr.bf16.mxu0 0
    %4585 = vmatpush1.bf16.xpose.msra.mxu0 0
    %4586 = vmatprep.subr.bf16.mxu0 0
    %4587 = vmatpush1.bf16.xpose.msra.mxu0 0
    %4588 = vmatprep.subr.bf16.mxu0 0
    %4589 = vmatpush1.bf16.xpose.msra.mxu0 0
    %4590 = vmatprep.subr.bf16.mxu0 0
    %4591 = vmatpush1.bf16.xpose.msra.mxu0 0
    %4592 = vmatprep.subr.bf16.mxu0 0
    %4593 = vmatpush1.bf16.xpose.msra.mxu0 0
    %4594 = vmatprep.subr.bf16.mxu0 0
    %4595 = vmatpush1.bf16.xpose.msra.mxu0 0
    %4596 = vmatprep.subr.bf16.mxu0 0
    %4597 = vmatpush1.bf16.xpose.msra.mxu0 0
    %4598 = vmatprep.subr.bf16.mxu0 0
    %4599 = vmatpush1.bf16.xpose.msra.mxu0 0
    %4600 = vmatprep.subr.bf16.mxu0 0
    %4601 = vmatpush1.bf16.xpose.msra.mxu0 0
    %4602 = vmatprep.subr.bf16.mxu0 0
    %4603 = vmatpush1.bf16.xpose.msra.mxu0 0
    %4604 = vmatprep.subr.bf16.mxu0 0
    %4605 = vmatpush1.bf16.xpose.msra.mxu0 0
    %4606 = vmatprep.mubr.bf16.mxu0 0
    %4607 = vmatmul.mubr.bf16.gmra.mrb[0].mxu0 %v4569
    %v4608 = vpop.f32.mrb[0].mxu0
    %v4609 = vadd.f32 0.0, %v4608
    %v4610 = vpop.f32.mrb[0].mxu0
    %v4611 = vpop.f32.mrb[0].mxu0
    %v4612 = vpop.f32.mrb[0].mxu0
    %4613 = vdwg.mxu0
    %v4614 = vmul.f32 %v4609, 0.25
    %s4615 = scalar_lea.vmem %s103, 24
    %v4616 = vld [vmem:[%s4615] sm:$0xff]
    %v4617 = vadd.f32 %v4614, %v4616
    %v4618 = vsel %vm3221, %v4617, -inf
    %4619 = vmax.xlane.f32.xlu0 %v4618
    %v4620 = vpop.xlane.xlu0 %4619
    %v4621 = vsub.f32 %v4617, %v4620
    %v4622 = vmul.f32 %v4621, 1.442695
    %v4623 = vpow.pop %v4622
    %v4624 = vsel %vm3221, %v4623, 0.0
    %4625 = vadd.xlane.f32.xlu0 %v4624
    %v4626 = vpop.xlane.xlu0 %4625
    %v4627 = vrcp.pop %v4626
    %v4628 = vmul.f32 %v4623, %v4627
    %v4629 = vpack.c.bf16 %v4628, %v4628
    %4630 = vrot.lane.b32.xlu0 %v4288, 80
    %v4631 = vpop.permute.xlu0 %4630
    %v4633 = vsel %vm3221, %v4629, 0
    %v4636 = vsel %vm2857, %v4631, 0
    %4638 = vmatprep.subr.bf16.mxu0 0
    %4639 = vmatpush1.bf16.msra.mxu0 %v4636
    %4640 = vmatprep.subr.bf16.mxu0 0
    %4641 = vmatpush1.bf16.msra.mxu0 0
    %4642 = vmatprep.subr.bf16.mxu0 0
    %4643 = vmatpush1.bf16.msra.mxu0 0
    %4644 = vmatprep.subr.bf16.mxu0 0
    %4645 = vmatpush1.bf16.msra.mxu0 0
    %4646 = vmatprep.subr.bf16.mxu0 0
    %4647 = vmatpush1.bf16.msra.mxu0 0
    %4648 = vmatprep.subr.bf16.mxu0 0
    %4649 = vmatpush1.bf16.msra.mxu0 0
    %4650 = vmatprep.subr.bf16.mxu0 0
    %4651 = vmatpush1.bf16.msra.mxu0 0
    %4652 = vmatprep.subr.bf16.mxu0 0
    %4653 = vmatpush1.bf16.msra.mxu0 0
    %4654 = vmatprep.subr.bf16.mxu0 0
    %4655 = vmatpush1.bf16.msra.mxu0 0
    %4656 = vmatprep.subr.bf16.mxu0 0
    %4657 = vmatpush1.bf16.msra.mxu0 0
    %4658 = vmatprep.subr.bf16.mxu0 0
    %4659 = vmatpush1.bf16.msra.mxu0 0
    %4660 = vmatprep.subr.bf16.mxu0 0
    %4661 = vmatpush1.bf16.msra.mxu0 0
    %4662 = vmatprep.subr.bf16.mxu0 0
    %4663 = vmatpush1.bf16.msra.mxu0 0
    %4664 = vmatprep.subr.bf16.mxu0 0
    %4665 = vmatpush1.bf16.msra.mxu0 0
    %4666 = vmatprep.subr.bf16.mxu0 0
    %4667 = vmatpush1.bf16.msra.mxu0 0
    %4668 = vmatprep.subr.bf16.mxu0 0
    %4669 = vmatpush1.bf16.msra.mxu0 0
    %4670 = vmatprep.mubr.bf16.mxu0 0
    %4671 = vmatmul.mubr.bf16.gmra.mrb[0].mxu0 %v4633
    %v4672 = vpop.f32.mrb[0].mxu0
    %v4673 = vadd.f32 0.0, %v4672
    %v4674 = vpop.f32.mrb[0].mxu0
    %v4675 = vpop.f32.mrb[0].mxu0
    %v4676 = vpop.f32.mrb[0].mxu0
    %4677 = vdwg.mxu0
    %4679 = vrot.lane.b32.xlu0 %v4445, 16
    %v4680 = vpop.permute.xlu0 %4679
    %4683 = vrot.lane.b32.xlu0 %v4559, 32
    %v4684 = vpop.permute.xlu0 %4683
    %4687 = vrot.lane.b32.xlu0 %v4673, 48
    %v4688 = vpop.permute.xlu0 %4687
    %v4690 = vsel %vm893, %v4330, %v4680
    %v4691 = vsel %vm628, %v4690, %v4684
    %v4692 = vsel %vm572, %v4691, %v4688
    %v4693 = vpack.c.bf16 %v4692, %v4692
    %v4695 = vlaneseq
    %v4696 = vshrl.u32 %v4695, 7
    %v4697 = vsub.s32 0, %v4696
    %v4698 = vrot.slane %v4055, %v4697
    %v4708 = vunpack.c.l.b16 %v4047
    %v4709 = vunpack.c.l.b16 %v4048
    %v4710 = vunpack.c.l.b16 %v4049
    %v4711 = vunpack.c.l.b16 %v4050
    %v4712 = vunpack.c.l.b16 %v4051
    %v4713 = vunpack.c.l.b16 %v4052
    %v4714 = vunpack.c.l.b16 %v4053
    %v4715 = vunpack.c.l.b16 %v4054
    %v4716 = vpack.c.b16 %v4709, %v4708
    %v4717 = vpack.c.b16 %v4711, %v4710
    %v4718 = vpack.c.b16 %v4713, %v4712
    %v4719 = vpack.c.b16 %v4715, %v4714
    %v4725 = vsel %vm2781, %v4693, 0
    %4727 = vmatprep.subr.bf16.mxu0 0
    %4728 = vmatpush1.bf16.msra.mxu0 %v4716
    %4729 = vmatprep.subr.bf16.mxu0 0
    %4730 = vmatpush1.bf16.msra.mxu0 %v4717
    %4731 = vmatprep.subr.bf16.mxu0 0
    %4732 = vmatpush1.bf16.msra.mxu0 %v4718
    %4733 = vmatprep.subr.bf16.mxu0 0
    %4734 = vmatpush1.bf16.msra.mxu0 %v4719
    %4735 = vmatprep.subr.bf16.mxu0 0
    %4736 = vmatpush1.bf16.msra.mxu0 0
    %4737 = vmatprep.subr.bf16.mxu0 0
    %4738 = vmatpush1.bf16.msra.mxu0 0
    %4739 = vmatprep.subr.bf16.mxu0 0
    %4740 = vmatpush1.bf16.msra.mxu0 0
    %4741 = vmatprep.subr.bf16.mxu0 0
    %4742 = vmatpush1.bf16.msra.mxu0 0
    %4743 = vmatprep.subr.bf16.mxu0 0
    %4744 = vmatpush1.bf16.msra.mxu0 0
    %4745 = vmatprep.subr.bf16.mxu0 0
    %4746 = vmatpush1.bf16.msra.mxu0 0
    %4747 = vmatprep.subr.bf16.mxu0 0
    %4748 = vmatpush1.bf16.msra.mxu0 0
    %4749 = vmatprep.subr.bf16.mxu0 0
    %4750 = vmatpush1.bf16.msra.mxu0 0
    %4751 = vmatprep.subr.bf16.mxu0 0
    %4752 = vmatpush1.bf16.msra.mxu0 0
    %4753 = vmatprep.subr.bf16.mxu0 0
    %4754 = vmatpush1.bf16.msra.mxu0 0
    %4755 = vmatprep.subr.bf16.mxu0 0
    %4756 = vmatpush1.bf16.msra.mxu0 0
    %4757 = vmatprep.subr.bf16.mxu0 0
    %4758 = vmatpush1.bf16.msra.mxu0 0
    %4759 = vmatprep.mubr.bf16.mxu0 0
    %4760 = vmatmul.mubr.bf16.gmra.mrb[0].mxu0 %v4725
    %v4761 = vpop.f32.mrb[0].mxu0
    %v4762 = vadd.f32 %v4698, %v4761
    %v4763 = vpop.f32.mrb[0].mxu0
    %v4764 = vpop.f32.mrb[0].mxu0
    %v4765 = vpop.f32.mrb[0].mxu0
    %4766 = vdwg.mxu0
    %v4767 = vadd.f32 %v4035, %v4762
    %v4768 = vsel %vm2781, %v4767, 0.0
    %4769 = vadd.xlane.f32.xlu0 %v4768
    %v4770 = vpop.xlane.xlu0 %4769
    %v4771 = vmul.f32 %v4770, %v3047
    %v4772 = vsub.f32 %v4767, %v4771
    %v4773 = vmul.f32 %v4772, %v4772
    %v4774 = vsel %vm2781, %v4773, 0.0
    %4775 = vadd.xlane.f32.xlu0 %v4774
    %v4776 = vpop.xlane.xlu0 %4775
    %v4777 = vmul.f32 %v4776, %v3047
    %v4778 = vadd.f32 %v4777, 1e-05
    %v4779 = vrsqrt.pop %v4778
    %v4780 = vmul.f32 %v4772, %v4779
    %v4782 = vlaneseq
    %v4783 = vshrl.u32 %v4782, 7
    %v4784 = vsub.s32 0, %v4783
    %v4785 = vrot.slane %v4056, %v4784
    %v4787 = vmul.f32 %v4780, %v4785
    %v4789 = vlaneseq
    %v4790 = vshrl.u32 %v4789, 7
    %v4791 = vsub.s32 0, %v4790
    %v4792 = vrot.slane %v4057, %v4791
    %v4794 = vadd.f32 %v4787, %v4792
    %v4795 = vpack.c.bf16 %v4794, %v4794
    %v4797 = vlaneseq
    %v4798 = vshrl.u32 %v4797, 7
    %v4799 = vsub.s32 0, %v4798
    %v4800 = vrot.slane %v4066, %v4799
    %v4801 = vlaneseq
    %v4802 = vshrl.u32 %v4801, 7
    %v4803 = vsub.s32 1, %v4802
    %v4804 = vrot.slane %v4066, %v4803
    %v4815 = vunpack.c.l.b16 %v4058
    %v4816 = vunpack.c.h.b16 %v4058
    %v4817 = vunpack.c.l.b16 %v4059
    %v4818 = vunpack.c.h.b16 %v4059
    %v4819 = vunpack.c.l.b16 %v4060
    %v4820 = vunpack.c.h.b16 %v4060
    %v4821 = vunpack.c.l.b16 %v4061
    %v4822 = vunpack.c.h.b16 %v4061
    %v4823 = vunpack.c.l.b16 %v4062
    %v4824 = vunpack.c.h.b16 %v4062
    %v4825 = vunpack.c.l.b16 %v4063
    %v4826 = vunpack.c.h.b16 %v4063
    %v4827 = vunpack.c.l.b16 %v4064
    %v4828 = vunpack.c.h.b16 %v4064
    %v4829 = vunpack.c.l.b16 %v4065
    %v4830 = vunpack.c.h.b16 %v4065
    %v4831 = vpack.c.b16 %v4817, %v4815
    %v4832 = vpack.c.b16 %v4818, %v4816
    %v4833 = vpack.c.b16 %v4821, %v4819
    %v4834 = vpack.c.b16 %v4822, %v4820
    %v4835 = vpack.c.b16 %v4825, %v4823
    %v4836 = vpack.c.b16 %v4826, %v4824
    %v4837 = vpack.c.b16 %v4829, %v4827
    %v4838 = vpack.c.b16 %v4830, %v4828
    %v4848 = vsel %vm2781, %v4795, 0
    %4850 = vmatprep.subr.bf16.mxu0 %v4832
    %4851 = vmatpush1.bf16.msra.mxu0 %v4831
    %4852 = vmatprep.subr.bf16.mxu0 %v4834
    %4853 = vmatpush1.bf16.msra.mxu0 %v4833
    %4854 = vmatprep.subr.bf16.mxu0 %v4836
    %4855 = vmatpush1.bf16.msra.mxu0 %v4835
    %4856 = vmatprep.subr.bf16.mxu0 %v4838
    %4857 = vmatpush1.bf16.msra.mxu0 %v4837
    %4858 = vmatprep.subr.bf16.mxu0 0
    %4859 = vmatpush1.bf16.msra.mxu0 0
    %4860 = vmatprep.subr.bf16.mxu0 0
    %4861 = vmatpush1.bf16.msra.mxu0 0
    %4862 = vmatprep.subr.bf16.mxu0 0
    %4863 = vmatpush1.bf16.msra.mxu0 0
    %4864 = vmatprep.subr.bf16.mxu0 0
    %4865 = vmatpush1.bf16.msra.mxu0 0
    %4866 = vmatprep.subr.bf16.mxu0 0
    %4867 = vmatpush1.bf16.msra.mxu0 0
    %4868 = vmatprep.subr.bf16.mxu0 0
    %4869 = vmatpush1.bf16.msra.mxu0 0
    %4870 = vmatprep.subr.bf16.mxu0 0
    %4871 = vmatpush1.bf16.msra.mxu0 0
    %4872 = vmatprep.subr.bf16.mxu0 0
    %4873 = vmatpush1.bf16.msra.mxu0 0
    %4874 = vmatprep.subr.bf16.mxu0 0
    %4875 = vmatpush1.bf16.msra.mxu0 0
    %4876 = vmatprep.subr.bf16.mxu0 0
    %4877 = vmatpush1.bf16.msra.mxu0 0
    %4878 = vmatprep.subr.bf16.mxu0 0
    %4879 = vmatpush1.bf16.msra.mxu0 0
    %4880 = vmatprep.subr.bf16.mxu0 0
    %4881 = vmatpush1.bf16.msra.mxu0 0
    %4882 = vmatprep.mubr.bf16.mxu0 0
    %4883 = vmatmul.mubr.bf16.gmra.mrb[0].mxu0 %v4848
    %v4884 = vpop.f32.mrb[0].mxu0
    %v4885 = vadd.f32 %v4800, %v4884
    %v4886 = vpop.f32.mrb[0].mxu0
    %v4887 = vadd.f32 %v4804, %v4886
    %v4888 = vpop.f32.mrb[0].mxu0
    %v4889 = vpop.f32.mrb[0].mxu0
    %4890 = vdwg.mxu0
    %v4891 = vmul.f32 %v4885, 0.70710677
    %v4892 = vmul.f32 %v4887, 0.70710677
    %v4893 = vand.u32 2147483647, %v4891
    %v4894 = vand.u32 2147483647, %v4892
    %v4895 = vmul.f32 %v4893, 0.3275911
    %v4896 = vmul.f32 %v4894, 0.3275911
    %v4897 = vadd.f32 %v4895, 1.0
    %v4898 = vadd.f32 %v4896, 1.0
    %v4899 = vrcp.pop %v4897
    %v4900 = vmul.f32 1.0, %v4899
    %v4901 = vrcp.pop %v4898
    %v4902 = vmul.f32 1.0, %v4901
    %v4903 = vmul.f32 %v4900, 1.0614054
    %v4904 = vmul.f32 %v4902, 1.0614054
    %v4905 = vadd.f32 %v4903, -1.4531521
    %v4906 = vadd.f32 %v4904, -1.4531521
    %v4907 = vmul.f32 %v4905, %v4900
    %v4908 = vmul.f32 %v4906, %v4902
    %v4909 = vadd.f32 %v4907, 1.4214138
    %v4910 = vadd.f32 %v4908, 1.4214138
    %v4911 = vmul.f32 %v4909, %v4900
    %v4912 = vmul.f32 %v4910, %v4902
    %v4913 = vadd.f32 %v4911, -0.28449672
    %v4914 = vadd.f32 %v4912, -0.28449672
    %v4915 = vmul.f32 %v4913, %v4900
    %v4916 = vmul.f32 %v4914, %v4902
    %v4917 = vadd.f32 %v4915, 0.2548296
    %v4918 = vadd.f32 %v4916, 0.2548296
    %v4919 = vmul.f32 %v4917, %v4900
    %v4920 = vmul.f32 %v4918, %v4902
    %v4921 = vsub.f32 0.0, %v4893
    %v4922 = vsub.f32 0.0, %v4894
    %v4923 = vmul.f32 %v4921, %v4893
    %v4924 = vmul.f32 %v4922, %v4894
    %v4925 = vmul.f32 %v4923, 1.442695
    %v4926 = vpow.pop %v4925
    %v4927 = vmul.f32 %v4924, 1.442695
    %v4928 = vpow.pop %v4927
    %v4929 = vmul.f32 %v4919, %v4926
    %v4930 = vmul.f32 %v4920, %v4928
    %v4931 = vsub.f32 1.0, %v4929
    %v4932 = vsub.f32 1.0, %v4930
    %vm4933 = vcmp.ge.f32.partialorder %v4891, 0.0
    %vm4934 = vcmp.ge.f32.partialorder %v4892, 0.0
    %v4935 = vsub.f32 0.0, %v4931
    %v4936 = vsub.f32 0.0, %v4932
    %v4937 = vsel %vm4933, %v4931, %v4935
    %v4938 = vsel %vm4934, %v4932, %v4936
    %v4939 = vmul.f32 %v4885, 0.5
    %v4940 = vmul.f32 %v4887, 0.5
    %v4941 = vadd.f32 %v4937, 1.0
    %v4942 = vadd.f32 %v4938, 1.0
    %v4943 = vmul.f32 %v4939, %v4941
    %v4944 = vmul.f32 %v4940, %v4942
    %v4945 = vpack.c.bf16 %v4943, %v4943
    %v4946 = vpack.c.bf16 %v4944, %v4944
    %v4948 = vlaneseq
    %v4949 = vshrl.u32 %v4948, 7
    %v4950 = vsub.s32 0, %v4949
    %v4951 = vrot.slane %v4099, %v4950
    %v4985 = vunpack.c.l.b16 %v4067
    %v4986 = vunpack.c.l.b16 %v4068
    %v4987 = vunpack.c.l.b16 %v4069
    %v4988 = vunpack.c.l.b16 %v4070
    %v4989 = vunpack.c.l.b16 %v4071
    %v4990 = vunpack.c.l.b16 %v4072
    %v4991 = vunpack.c.l.b16 %v4073
    %v4992 = vunpack.c.l.b16 %v4074
    %v4993 = vunpack.c.l.b16 %v4075
    %v4994 = vunpack.c.l.b16 %v4076
    %v4995 = vunpack.c.l.b16 %v4077
    %v4996 = vunpack.c.l.b16 %v4078
    %v4997 = vunpack.c.l.b16 %v4079
    %v4998 = vunpack.c.l.b16 %v4080
    %v4999 = vunpack.c.l.b16 %v4081
    %v5000 = vunpack.c.l.b16 %v4082
    %v5001 = vunpack.c.l.b16 %v4083
    %v5002 = vunpack.c.l.b16 %v4084
    %v5003 = vunpack.c.l.b16 %v4085
    %v5004 = vunpack.c.l.b16 %v4086
    %v5005 = vunpack.c.l.b16 %v4087
    %v5006 = vunpack.c.l.b16 %v4088
    %v5007 = vunpack.c.l.b16 %v4089
    %v5008 = vunpack.c.l.b16 %v4090
    %v5009 = vunpack.c.l.b16 %v4091
    %v5010 = vunpack.c.l.b16 %v4092
    %v5011 = vunpack.c.l.b16 %v4093
    %v5012 = vunpack.c.l.b16 %v4094
    %v5013 = vunpack.c.l.b16 %v4095
    %v5014 = vunpack.c.l.b16 %v4096
    %v5015 = vunpack.c.l.b16 %v4097
    %v5016 = vunpack.c.l.b16 %v4098
    %v5017 = vpack.c.b16 %v4986, %v4985
    %v5018 = vpack.c.b16 %v4988, %v4987
    %v5019 = vpack.c.b16 %v4990, %v4989
    %v5020 = vpack.c.b16 %v4992, %v4991
    %v5021 = vpack.c.b16 %v4994, %v4993
    %v5022 = vpack.c.b16 %v4996, %v4995
    %v5023 = vpack.c.b16 %v4998, %v4997
    %v5024 = vpack.c.b16 %v5000, %v4999
    %v5025 = vpack.c.b16 %v5002, %v5001
    %v5026 = vpack.c.b16 %v5004, %v5003
    %v5027 = vpack.c.b16 %v5006, %v5005
    %v5028 = vpack.c.b16 %v5008, %v5007
    %v5029 = vpack.c.b16 %v5010, %v5009
    %v5030 = vpack.c.b16 %v5012, %v5011
    %v5031 = vpack.c.b16 %v5014, %v5013
    %v5032 = vpack.c.b16 %v5016, %v5015
    %5049 = vmatprep.subr.bf16.mxu0 0
    %5050 = vmatpush1.bf16.msra.mxu0 %v5017
    %5051 = vmatprep.subr.bf16.mxu0 0
    %5052 = vmatpush1.bf16.msra.mxu0 %v5018
    %5053 = vmatprep.subr.bf16.mxu0 0
    %5054 = vmatpush1.bf16.msra.mxu0 %v5019
    %5055 = vmatprep.subr.bf16.mxu0 0
    %5056 = vmatpush1.bf16.msra.mxu0 %v5020
    %5057 = vmatprep.subr.bf16.mxu0 0
    %5058 = vmatpush1.bf16.msra.mxu0 %v5021
    %5059 = vmatprep.subr.bf16.mxu0 0
    %5060 = vmatpush1.bf16.msra.mxu0 %v5022
    %5061 = vmatprep.subr.bf16.mxu0 0
    %5062 = vmatpush1.bf16.msra.mxu0 %v5023
    %5063 = vmatprep.subr.bf16.mxu0 0
    %5064 = vmatpush1.bf16.msra.mxu0 %v5024
    %5065 = vmatprep.subr.bf16.mxu0 0
    %5066 = vmatpush1.bf16.msra.mxu0 %v5025
    %5067 = vmatprep.subr.bf16.mxu0 0
    %5068 = vmatpush1.bf16.msra.mxu0 %v5026
    %5069 = vmatprep.subr.bf16.mxu0 0
    %5070 = vmatpush1.bf16.msra.mxu0 %v5027
    %5071 = vmatprep.subr.bf16.mxu0 0
    %5072 = vmatpush1.bf16.msra.mxu0 %v5028
    %5073 = vmatprep.subr.bf16.mxu0 0
    %5074 = vmatpush1.bf16.msra.mxu0 %v5029
    %5075 = vmatprep.subr.bf16.mxu0 0
    %5076 = vmatpush1.bf16.msra.mxu0 %v5030
    %5077 = vmatprep.subr.bf16.mxu0 0
    %5078 = vmatpush1.bf16.msra.mxu0 %v5031
    %5079 = vmatprep.subr.bf16.mxu0 0
    %5080 = vmatpush1.bf16.msra.mxu0 %v5032
    %5081 = vmatprep.mubr.bf16.mxu0 %v4946
    %5082 = vmatmul.mubr.bf16.gmra.mrb[0].mxu0 %v4945
    %v5083 = vpop.f32.mrb[0].mxu0
    %v5084 = vadd.f32 %v4951, %v5083
    %v5085 = vpop.f32.mrb[0].mxu0
    %v5086 = vpop.f32.mrb[0].mxu0
    %v5087 = vpop.f32.mrb[0].mxu0
    %5088 = vdwg.mxu0
    %v5089 = vadd.f32 %v4767, %v5084
    %v5090 = vld [vmem:[#allocation34] sm:$0x1]
    %v5091 = vld [vmem:[#allocation35] sm:$0x1]
    %v5092 = vld [vmem:[%s125] sm:$0x3]
    %v5093 = vld [vmem:[%s127] sm:$0xf]
    %v5094 = vld [vmem:[%s127 + $0x4] sm:$0xf]
    %v5095 = vld [vmem:[%s127 + $0x8] sm:$0xf]
    %v5096 = vld [vmem:[%s127 + $0xc] sm:$0xf]
    %v5097 = vld [vmem:[%s127 + $0x10] sm:$0xf]
    %v5098 = vld [vmem:[%s127 + $0x14] sm:$0xf]
    %v5099 = vld [vmem:[%s127 + $0x18] sm:$0xf]
    %v5100 = vld [vmem:[%s127 + $0x1c] sm:$0xf]
    %v5101 = vld [vmem:[#allocation37] sm:$0x1]
    %v5102 = vsel %vm2781, %v5089, 0.0
    %5103 = vadd.xlane.f32.xlu0 %v5102
    %v5104 = vpop.xlane.xlu0 %5103
    %v5105 = vmul.f32 %v5104, %v3047
    %v5106 = vsub.f32 %v5089, %v5105
    %v5107 = vmul.f32 %v5106, %v5106
    %v5108 = vsel %vm2781, %v5107, 0.0
    %5109 = vadd.xlane.f32.xlu0 %v5108
    %v5110 = vpop.xlane.xlu0 %5109
    %v5111 = vmul.f32 %v5110, %v3047
    %v5112 = vadd.f32 %v5111, 1e-05
    %v5113 = vrsqrt.pop %v5112
    %v5114 = vmul.f32 %v5106, %v5113
    %v5116 = vlaneseq
    %v5117 = vshrl.u32 %v5116, 7
    %v5118 = vsub.s32 0, %v5117
    %v5119 = vrot.slane %v5090, %v5118
    %v5121 = vmul.f32 %v5114, %v5119
    %v5123 = vlaneseq
    %v5124 = vshrl.u32 %v5123, 7
    %v5125 = vsub.s32 0, %v5124
    %v5126 = vrot.slane %v5091, %v5125
    %v5128 = vadd.f32 %v5121, %v5126
    %v5129 = vpack.c.bf16 %v5092, %v5092
    %v5130 = vpack.c.bf16 %v5128, %v5128
    %v5132 = vsel %vm3221, %v5129, 0
    %v5135 = vsel %vm2857, %v5130, 0
    %5137 = vmatprep.subr.bf16.mxu0 0
    %5138 = vmatpush1.bf16.msra.mxu0 %v5135
    %5139 = vmatprep.subr.bf16.mxu0 0
    %5140 = vmatpush1.bf16.msra.mxu0 0
    %5141 = vmatprep.subr.bf16.mxu0 0
    %5142 = vmatpush1.bf16.msra.mxu0 0
    %5143 = vmatprep.subr.bf16.mxu0 0
    %5144 = vmatpush1.bf16.msra.mxu0 0
    %5145 = vmatprep.subr.bf16.mxu0 0
    %5146 = vmatpush1.bf16.msra.mxu0 0
    %5147 = vmatprep.subr.bf16.mxu0 0
    %5148 = vmatpush1.bf16.msra.mxu0 0
    %5149 = vmatprep.subr.bf16.mxu0 0
    %5150 = vmatpush1.bf16.msra.mxu0 0
    %5151 = vmatprep.subr.bf16.mxu0 0
    %5152 = vmatpush1.bf16.msra.mxu0 0
    %5153 = vmatprep.subr.bf16.mxu0 0
    %5154 = vmatpush1.bf16.msra.mxu0 0
    %5155 = vmatprep.subr.bf16.mxu0 0
    %5156 = vmatpush1.bf16.msra.mxu0 0
    %5157 = vmatprep.subr.bf16.mxu0 0
    %5158 = vmatpush1.bf16.msra.mxu0 0
    %5159 = vmatprep.subr.bf16.mxu0 0
    %5160 = vmatpush1.bf16.msra.mxu0 0
    %5161 = vmatprep.subr.bf16.mxu0 0
    %5162 = vmatpush1.bf16.msra.mxu0 0
    %5163 = vmatprep.subr.bf16.mxu0 0
    %5164 = vmatpush1.bf16.msra.mxu0 0
    %5165 = vmatprep.subr.bf16.mxu0 0
    %5166 = vmatpush1.bf16.msra.mxu0 0
    %5167 = vmatprep.subr.bf16.mxu0 0
    %5168 = vmatpush1.bf16.msra.mxu0 0
    %5169 = vmatprep.mubr.bf16.mxu0 0
    %5170 = vmatmul.mubr.bf16.gmra.mrb[0].mxu0 %v5132
    %v5171 = vpop.f32.mrb[0].mxu0
    %v5172 = vadd.f32 0.0, %v5171
    %v5173 = vpop.f32.mrb[0].mxu0
    %v5174 = vpop.f32.mrb[0].mxu0
    %v5175 = vpop.f32.mrb[0].mxu0
    %5176 = vdwg.mxu0
    %v5177 = vpack.c.bf16 %v5172, %v5172
    %v5179 = vlaneseq
    %v5180 = vshrl.u32 %v5179, 7
    %v5181 = vsub.s32 0, %v5180
    %v5182 = vrot.slane %v5101, %v5181
    %v5192 = vunpack.c.l.b16 %v5093
    %v5193 = vunpack.c.l.b16 %v5094
    %v5194 = vunpack.c.l.b16 %v5095
    %v5195 = vunpack.c.l.b16 %v5096
    %v5196 = vunpack.c.l.b16 %v5097
    %v5197 = vunpack.c.l.b16 %v5098
    %v5198 = vunpack.c.l.b16 %v5099
    %v5199 = vunpack.c.l.b16 %v5100
    %v5200 = vpack.c.b16 %v5193, %v5192
    %v5201 = vpack.c.b16 %v5195, %v5194
    %v5202 = vpack.c.b16 %v5197, %v5196
    %v5203 = vpack.c.b16 %v5199, %v5198
    %v5209 = vsel %vm2781, %v5177, 0
    %5211 = vmatprep.subr.bf16.mxu0 0
    %5212 = vmatpush1.bf16.msra.mxu0 %v5200
    %5213 = vmatprep.subr.bf16.mxu0 0
    %5214 = vmatpush1.bf16.msra.mxu0 %v5201
    %5215 = vmatprep.subr.bf16.mxu0 0
    %5216 = vmatpush1.bf16.msra.mxu0 %v5202
    %5217 = vmatprep.subr.bf16.mxu0 0
    %5218 = vmatpush1.bf16.msra.mxu0 %v5203
    %5219 = vmatprep.subr.bf16.mxu0 0
    %5220 = vmatpush1.bf16.msra.mxu0 0
    %5221 = vmatprep.subr.bf16.mxu0 0
    %5222 = vmatpush1.bf16.msra.mxu0 0
    %5223 = vmatprep.subr.bf16.mxu0 0
    %5224 = vmatpush1.bf16.msra.mxu0 0
    %5225 = vmatprep.subr.bf16.mxu0 0
    %5226 = vmatpush1.bf16.msra.mxu0 0
    %5227 = vmatprep.subr.bf16.mxu0 0
    %5228 = vmatpush1.bf16.msra.mxu0 0
    %5229 = vmatprep.subr.bf16.mxu0 0
    %5230 = vmatpush1.bf16.msra.mxu0 0
    %5231 = vmatprep.subr.bf16.mxu0 0
    %5232 = vmatpush1.bf16.msra.mxu0 0
    %5233 = vmatprep.subr.bf16.mxu0 0
    %5234 = vmatpush1.bf16.msra.mxu0 0
    %5235 = vmatprep.subr.bf16.mxu0 0
    %5236 = vmatpush1.bf16.msra.mxu0 0
    %5237 = vmatprep.subr.bf16.mxu0 0
    %5238 = vmatpush1.bf16.msra.mxu0 0
    %5239 = vmatprep.subr.bf16.mxu0 0
    %5240 = vmatpush1.bf16.msra.mxu0 0
    %5241 = vmatprep.subr.bf16.mxu0 0
    %5242 = vmatpush1.bf16.msra.mxu0 0
    %5243 = vmatprep.mubr.bf16.mxu0 0
    %5244 = vmatmul.mubr.bf16.gmra.mrb[0].mxu0 %v5209
    %v5245 = vpop.f32.mrb[0].mxu0
    %v5246 = vadd.f32 %v5182, %v5245
    %v5247 = vpop.f32.mrb[0].mxu0
    %v5248 = vpop.f32.mrb[0].mxu0
    %v5249 = vpop.f32.mrb[0].mxu0
    %5250 = vdwg.mxu0
    %vm5251 = vcmask 74752
    %5252 = vst.msk [vmem:[#allocation38] sm:$0x3] %vm5251, %v5246
    // Predicated region
    $region354: #{tpu_custom_call.1} parent=1 // pred_check
      _
    $region355: #{tpu_custom_call.1} parent=1 // pred_check_branch
      %5254 = sbr.rel (0) target = $region357
    $region356: #{tpu_custom_call.1} parent=1 // pred_region
      %s5256 = ssub.s32 32, 32
      %5257 = vsyncadd [#allocation4], %s5256
      %s5259 = sshll.u32 [#allocation38], 4
      %s5260 = int_to_ptr.vmem [resolvable:$true] %s5259
      %5262 = dma.vmem_to_hbm [thread:$0]  %s5260, 32, %s131, [#allocation4]
    $region357: #{tpu_custom_call.1} parent=1 // pred_fallthru
      _
    // Predicated region
    $region358: #{tpu_custom_call.1} parent=1 // pred_check
      _
    $region359: #{tpu_custom_call.1} parent=1 // pred_check_branch
      %5264 = sbr.rel (0) target = $region361
    $region360: #{tpu_custom_call.1} parent=1 // pred_region
      %5265 = dma.done [#allocation4], 32
    $region361: #{tpu_custom_call.1} parent=1 // pred_fallthru
      _
    %5266 = vsyncpa [#allocation3], 1
    %5267 = vsyncpa [#allocation6], 1
    %5268 = vsyncpa [#allocation9], 1
    %5269 = vsyncpa [#allocation12], 1
    %5270 = vsyncpa [#allocation15], 1
    %5271 = vsyncpa [#allocation18], 1
    %5272 = vsyncpa [#allocation21], 1
    %5273 = vsyncpa [#allocation24], 1
    %5274 = vsyncpa [#allocation27], 1
    %5275 = vsyncpa [#allocation30], 1
    %5276 = vsyncpa [#allocation33], 1
    %5277 = vsyncpa [#allocation36], 1
    %5278 = vsyncpa [#allocation4], 1

</llo_original>
